<compile_context>
chip_gen: v7x
topology: tpu7x:2x2x1
jax: 0.10.0
libtpu: 0.0.40
codegen_flags: <defaults>
</compile_context>

<pallas_src>
import functools

import jax
import jax.numpy as jnp
from jax.experimental import pallas as pl
from jax.experimental.pallas import tpu as pltpu


_UNROLL_LIMIT = 32  # fully unroll time loops at trace time up to this trip count


def _round_up(n, m):
    return ((n + m - 1) // m) * m


def _timeloop(n, body, carry):
    """Short fixed trip counts: unroll at trace time.  Long: lax.fori_loop."""
    if n <= _UNROLL_LIMIT:
        for t in range(n):
            carry = body(t, carry)
        return carry
    return jax.lax.fori_loop(0, n, body, carry)


# ---------------------------------------------------------------------------
# Fused kernel: 3-layer encoder + autoregressive decoder + Linear, one invocation
# ---------------------------------------------------------------------------
def _fused_lstm_ae_kernel(*refs, num_layers, h_pad, enc_t, dec_t):
    x_ref = refs[0]                                    # (enc_t, Bp, Dp) time-major
    enc_refs = refs[1:1 + 2 * num_layers]              # (W, b) per encoder layer
    wd_ref, bd_ref, wout_ref, bout_ref = refs[1 + 2 * num_layers:5 + 2 * num_layers]
    out_ref = refs[5 + 2 * num_layers]                 # (dec_t, Bp, Dp)

    hp = h_pad
    bp = x_ref.shape[1]

    def lstm_cell(x_t, h, c, w_ref, b_ref):
        # single fused gate matmul: [x_t ; h] @ [W_ih ; W_hh] + b  (gate order i, f, o, g)
        xh = jnp.concatenate([x_t, h], axis=1)
        gates = (jnp.dot(xh, w_ref[...], preferred_element_type=jnp.float32)
                 + b_ref[...])
        sig = jax.nn.sigmoid(gates[:, :3 * hp])        # i, f, o in one contiguous slab
        i = sig[:, 0 * hp:1 * hp]
        f = sig[:, 1 * hp:2 * hp]
        o = sig[:, 2 * hp:3 * hp]
        g = jnp.tanh(gates[:, 3 * hp:4 * hp])
        c = f * c + i * g
        h = o * jnp.tanh(c)
        return h, c

    zeros = jnp.zeros((bp, hp), jnp.float32)

    # ---- encoder: all layers fused per timestep; h/c state stays on-chip ----
    def enc_step(t, carry):
        inp = x_ref[t]
        new_carry = []
        for l in range(num_layers):
            h, c = carry[l]
            h, c = lstm_cell(inp, h, c, enc_refs[2 * l], enc_refs[2 * l + 1])
            new_carry.append((h, c))
            inp = h
        return tuple(new_carry)

    carry = _timeloop(enc_t, enc_step,
                      tuple((zeros, zeros) for _ in range(num_layers)))
    h, c = carry[num_layers - 1]                       # last encoder layer's final state

    # ---- decoder: autoregressive LSTM + fused hidden->input Linear ----
    def dec_step(t, carry):
        h, c, cur = carry
        h, c = lstm_cell(cur, h, c, wd_ref, bd_ref)
        nxt = (jnp.dot(h, wout_ref[...], preferred_element_type=jnp.float32)
               + bout_ref[...])
        out_ref[t] = nxt                               # lane-dense (Bp, Dp) store
        return (h, c, nxt)

    first_input = x_ref[enc_t - 1]                     # last input frame (already padded)
    _timeloop(dec_t, dec_step, (h, c, first_input))


# ---------------------------------------------------------------------------
# Parameter packing: fuse [W_ih ; W_hh], reorder gates (i,f,g,o)->(i,f,o,g), pad dims
# ---------------------------------------------------------------------------
def _pack_gate_cols(w, h, hp):
    """Reorder PyTorch gate columns (i,f,g,o) -> (i,f,o,g) and zero-pad each gate h->hp."""
    rows = w.shape[0]
    w4 = w.reshape(rows, 4, h)[:, (0, 1, 3, 2), :]
    w4 = jnp.pad(w4, ((0, 0), (0, 0), (0, hp - h)))
    return w4.reshape(rows, 4 * hp)


def _pack_lstm(wih, whh, b, din_p, h, hp):
    din = wih.shape[0]
    wih_p = jnp.pad(_pack_gate_cols(wih, h, hp), ((0, din_p - din), (0, 0)))
    whh_p = jnp.pad(_pack_gate_cols(whh, h, hp), ((0, hp - h), (0, 0)))
    w = jnp.concatenate([wih_p, whh_p], axis=0)        # (din_p + hp, 4*hp)
    b_p = _pack_gate_cols(b, h, hp)                    # (1, 4*hp)
    return w, b_p


def _pack_params(params, pose_dim, h_dim, dp, hp):
    packed = []
    for l, (wih, whh, b) in enumerate(params['enc']):
        din_p = dp if l == 0 else hp
        w, bb = _pack_lstm(wih, whh, b, din_p, h_dim, hp)
        packed += [w, bb]
    dec = params['dec']
    wd, bd = _pack_lstm(dec['wih'], dec['whh'], dec['b'], dp, h_dim, hp)
    wout = jnp.pad(dec['wout'], ((0, hp - h_dim), (0, dp - pose_dim)))
    bout = jnp.pad(dec['bout'], ((0, 0), (0, dp - pose_dim)))
    packed += [wd, bd, wout, bout]
    return packed


# ---------------------------------------------------------------------------
# Full LstmAutoEncoder.forward
# ---------------------------------------------------------------------------
def lstm_autoencoder_forward(params, x, dec_seq_len):
    """x: (B, T, pose_dim) batch-first, like the PyTorch module.
    Returns (B, dec_seq_len, pose_dim)."""
    x = x.astype(jnp.float32)
    batch, enc_t, pose_dim = x.shape
    h_dim = params['enc'][0][1].shape[0]
    num_layers = len(params['enc'])

    bp = _round_up(max(batch, 8), 8)          # sublane-aligned batch
    dp = _round_up(pose_dim, 128)             # lane-aligned pose dim
    hp = _round_up(h_dim, 128)                # lane-aligned hidden dim

    # time-major, zero-padded input (padded hidden/cell units provably stay 0)
    x_tbd = jnp.pad(jnp.transpose(x, (1, 0, 2)),
                    ((0, 0), (0, bp - batch), (0, dp - pose_dim)))
    inputs = [x_tbd] + _pack_params(params, pose_dim, h_dim, dp, hp)

    kernel = functools.partial(_fused_lstm_ae_kernel, num_layers=num_layers,
                               h_pad=hp, enc_t=enc_t, dec_t=dec_seq_len)

    zero_maps = {2: lambda i: (0, 0), 3: lambda i: (0, 0, 0)}
    in_specs = [pl.BlockSpec(a.shape, zero_maps[a.ndim]) for a in inputs]

    pred = pl.pallas_call(
        kernel,
        out_shape=jax.ShapeDtypeStruct((dec_seq_len, bp, dp), jnp.float32),
        grid_spec=pltpu.PrefetchScalarGridSpec(
            num_scalar_prefetch=0,
            grid=(1,),                                   # whole recurrence in one step
            in_specs=in_specs,
            out_specs=pl.BlockSpec((dec_seq_len, bp, dp), lambda i: (0, 0, 0)),
        ),
        compiler_params=pltpu.CompilerParams(
            dimension_semantics=("arbitrary",),
            vmem_limit_bytes=64 << 20),
    )(*inputs)

    # back to batch-first, drop batch/feature padding (tiny tensor; cheap transpose)
    return jnp.transpose(pred, (1, 0, 2))[:batch, :, :pose_dim]


# ---------------------------------------------------------------------------
# Deterministic parameter init (shapes per nn.LSTM / nn.Linear in __init__)
# ---------------------------------------------------------------------------
def init_params(key, pose_dim, h_dim, num_layers):
    scale = 1.0 / float(h_dim) ** 0.5

    def unif(k, shape):
        return jax.random.uniform(k, shape, jnp.float32, -scale, scale)

    enc = []
    for l in range(num_layers):
        din = pose_dim if l == 0 else h_dim
        key, k1, k2, k3 = jax.random.split(key, 4)
        enc.append((unif(k1, (din, 4 * h_dim)),      # W_ih^T  (gate order i,f,g,o)
                    unif(k2, (h_dim, 4 * h_dim)),    # W_hh^T
                    unif(k3, (1, 4 * h_dim))))       # b_ih + b_hh combined
    key, k1, k2, k3, k4, k5 = jax.random.split(key, 6)
    dec = dict(wih=unif(k1, (pose_dim, 4 * h_dim)),
               whh=unif(k2, (h_dim, 4 * h_dim)),
               b=unif(k3, (1, 4 * h_dim)),
               wout=unif(k4, (h_dim, pose_dim)),     # Linear weight^T
               bout=unif(k5, (1, pose_dim)))
    return dict(enc=enc, dec=dec), key


# ---------------------------------------------------------------------------
# Pure-JAX reference (unpadded, standard gate order)
# ---------------------------------------------------------------------------
def _ref_lstm_layer(x_tbd, wih, whh, b):
    _, batch, _ = x_tbd.shape
    h_dim = whh.shape[0]

    def step(carry, x_t):
        h, c = carry
        gates = x_t @ wih + h @ whh + b
        i = jax.nn.sigmoid(gates[:, :h_dim])
        f = jax.nn.sigmoid(gates[:, h_dim:2 * h_dim])
        g = jnp.tanh(gates[:, 2 * h_dim:3 * h_dim])
        o = jax.nn.sigmoid(gates[:, 3 * h_dim:])
        c = f * c + i * g
        h = o * jnp.tanh(c)
        return (h, c), h

    init = (jnp.zeros((batch, h_dim), jnp.float32),
            jnp.zeros((batch, h_dim), jnp.float32))
    (h_t, c_t), out = jax.lax.scan(step, init, x_tbd)
    return out, h_t, c_t


def reference_forward(params, x, dec_seq_len):
    x = x.astype(jnp.float32)
    layer_in = jnp.transpose(x, (1, 0, 2))
    h_t = c_t = None
    for (wih, whh, b) in params['enc']:
        layer_in, h_t, c_t = _ref_lstm_layer(layer_in, wih, whh, b)
    dp = params['dec']
    h_dim = h_t.shape[1]
    h, c, cur = h_t, c_t, x[:, -1, :]
    outs = []
    for _ in range(dec_seq_len):
        gates = cur @ dp['wih'] + h @ dp['whh'] + dp['b']
        i = jax.nn.sigmoid(gates[:, :h_dim])
        f = jax.nn.sigmoid(gates[:, h_dim:2 * h_dim])
        g = jnp.tanh(gates[:, 2 * h_dim:3 * h_dim])
        o = jax.nn.sigmoid(gates[:, 3 * h_dim:])
        c = f * c + i * g
        h = o * jnp.tanh(c)
        cur = h @ dp['wout'] + dp['bout']
        outs.append(cur)
    return jnp.stack(outs, axis=1)


# ---------------------------------------------------------------------------
if __name__ == "__main__":
    key = jax.random.PRNGKey(0)

    # config 1: module-like dims (pose_dim=66 as in the PyTorch defaults), lane-aligned H
    # config 2: deliberately unaligned small dims to exercise B / D / H padding paths
    configs = [
        dict(pose_dim=66, h_dim=128, num_layers=3, batch=4, enc_seq=8, dec_seq=6),
        dict(pose_dim=24, h_dim=48, num_layers=3, batch=2, enc_seq=5, dec_seq=4),
    ]

    fwd = jax.jit(lstm_autoencoder_forward, static_argnums=2)

    for cfg in configs:
        params, key = init_params(key, cfg['pose_dim'], cfg['h_dim'], cfg['num_layers'])
        key, xk = jax.random.split(key)
        x = jax.random.normal(xk, (cfg['batch'], cfg['enc_seq'], cfg['pose_dim']),
                              jnp.float32)

        pred = jax.block_until_ready(fwd(params, x, cfg['dec_seq']))
        assert pred.shape == (cfg['batch'], cfg['dec_seq'], cfg['pose_dim']), pred.shape

        ref = jax.block_until_ready(reference_forward(params, x, cfg['dec_seq']))
        max_err = float(jnp.max(jnp.abs(pred - ref)))
        assert jnp.allclose(pred, ref, atol=1e-4, rtol=1e-4), max_err

    print("KERNEL_OK")
</pallas_src>

<mosaic_0001>
module attributes {stable_mosaic.version = 11 : i64} {
  func.func @_fused_lstm_ae_kernel(%arg0: i32, %arg1: memref<8x8x128xf32, #tpu.memory_space<vmem>>, %arg2: memref<256x512xf32, #tpu.memory_space<vmem>>, %arg3: memref<1x512xf32, #tpu.memory_space<vmem>>, %arg4: memref<256x512xf32, #tpu.memory_space<vmem>>, %arg5: memref<1x512xf32, #tpu.memory_space<vmem>>, %arg6: memref<256x512xf32, #tpu.memory_space<vmem>>, %arg7: memref<1x512xf32, #tpu.memory_space<vmem>>, %arg8: memref<256x512xf32, #tpu.memory_space<vmem>>, %arg9: memref<1x512xf32, #tpu.memory_space<vmem>>, %arg10: memref<128x128xf32, #tpu.memory_space<vmem>>, %arg11: memref<1x128xf32, #tpu.memory_space<vmem>>, %arg12: memref<6x8x128xf32, #tpu.memory_space<vmem>>) attributes {dimension_semantics = [#tpu.dimension_semantics<arbitrary>], iteration_bounds = array<i64: 1>, scalar_prefetch = 0 : i64, scratch_operands = 0 : i64, tpu.core_type = #tpu.core_type<tc>, window_params = [{pipeline_mode = #tpu.pipeline_mode<synchronous>, transform_indices = @transform_0, window_bounds = array<i64: 8, 8, 128>}, {pipeline_mode = #tpu.pipeline_mode<synchronous>, transform_indices = @transform_1, window_bounds = array<i64: 256, 512>}, {pipeline_mode = #tpu.pipeline_mode<synchronous>, transform_indices = @transform_2, window_bounds = array<i64: 1, 512>}, {pipeline_mode = #tpu.pipeline_mode<synchronous>, transform_indices = @transform_3, window_bounds = array<i64: 256, 512>}, {pipeline_mode = #tpu.pipeline_mode<synchronous>, transform_indices = @transform_4, window_bounds = array<i64: 1, 512>}, {pipeline_mode = #tpu.pipeline_mode<synchronous>, transform_indices = @transform_5, window_bounds = array<i64: 256, 512>}, {pipeline_mode = #tpu.pipeline_mode<synchronous>, transform_indices = @transform_6, window_bounds = array<i64: 1, 512>}, {pipeline_mode = #tpu.pipeline_mode<synchronous>, transform_indices = @transform_7, window_bounds = array<i64: 256, 512>}, {pipeline_mode = #tpu.pipeline_mode<synchronous>, transform_indices = @transform_8, window_bounds = array<i64: 1, 512>}, {pipeline_mode = #tpu.pipeline_mode<synchronous>, transform_indices = @transform_9, window_bounds = array<i64: 128, 128>}, {pipeline_mode = #tpu.pipeline_mode<synchronous>, transform_indices = @transform_10, window_bounds = array<i64: 1, 128>}, {pipeline_mode = #tpu.pipeline_mode<synchronous>, transform_indices = @transform_11, window_bounds = array<i64: 6, 8, 128>}]} {
    %cst = arith.constant 0.000000e+00 : f32
    %0 = vector.broadcast %cst : f32 to vector<8x128xf32>
    %c0 = arith.constant 0 : index
    %c0_0 = arith.constant 0 : index
    %c0_1 = arith.constant 0 : index
    %1 = vector.load %arg1[%c0, %c0_0, %c0_1] : memref<8x8x128xf32, #tpu.memory_space<vmem>>, vector<1x8x128xf32>
    %2 = vector.shape_cast %1 : vector<1x8x128xf32> to vector<8x128xf32>
    %3 = tpu.concatenate %2, %0 in 1 : vector<8x128xf32>, vector<8x128xf32> -> vector<8x256xf32>
    %c0_2 = arith.constant 0 : index
    %c0_3 = arith.constant 0 : index
    %4 = vector.load %arg2[%c0_2, %c0_3] : memref<256x512xf32, #tpu.memory_space<vmem>>, vector<256x512xf32>
    %cst_4 = arith.constant dense<0.000000e+00> : vector<8x512xf32>
    %5 = tpu.matmul %3, %4, %cst_4 {dimension_numbers = #tpu.dot_dimension_numbers<[1], [0], [0], [1], [0, 0, 1, 1], [], []>} : vector<8x256xf32>, vector<256x512xf32>, vector<8x512xf32> -> vector<8x512xf32>
    %c0_5 = arith.constant 0 : index
    %c0_6 = arith.constant 0 : index
    %6 = vector.load %arg3[%c0_5, %c0_6] : memref<1x512xf32, #tpu.memory_space<vmem>>, vector<1x512xf32>
    %7 = vector.broadcast %6 : vector<1x512xf32> to vector<8x512xf32>
    %8 = arith.addf %5, %7 : vector<8x512xf32>
    %9 = vector.extract_strided_slice %8 {offsets = [0, 0], sizes = [8, 384], strides = [1, 1]} : vector<8x512xf32> to vector<8x384xf32>
    %10 = arith.negf %9 : vector<8x384xf32>
    %11 = math.exp %10 : vector<8x384xf32>
    %cst_7 = arith.constant 1.000000e+00 : f32
    %12 = vector.broadcast %cst_7 : f32 to vector<8x384xf32>
    %13 = arith.addf %12, %11 : vector<8x384xf32>
    %14 = arith.divf %12, %13 : vector<8x384xf32>
    %15 = vector.extract_strided_slice %14 {offsets = [0, 0], sizes = [8, 128], strides = [1, 1]} : vector<8x384xf32> to vector<8x128xf32>
    %16 = vector.extract_strided_slice %14 {offsets = [0, 128], sizes = [8, 128], strides = [1, 1]} : vector<8x384xf32> to vector<8x128xf32>
    %17 = vector.extract_strided_slice %14 {offsets = [0, 256], sizes = [8, 128], strides = [1, 1]} : vector<8x384xf32> to vector<8x128xf32>
    %18 = vector.extract_strided_slice %8 {offsets = [0, 384], sizes = [8, 128], strides = [1, 1]} : vector<8x512xf32> to vector<8x128xf32>
    %19 = math.tanh %18 : vector<8x128xf32>
    %20 = arith.mulf %16, %0 : vector<8x128xf32>
    %21 = arith.mulf %15, %19 : vector<8x128xf32>
    %22 = arith.addf %20, %21 : vector<8x128xf32>
    %23 = math.tanh %22 : vector<8x128xf32>
    %24 = arith.mulf %17, %23 : vector<8x128xf32>
    %25 = tpu.concatenate %24, %0 in 1 : vector<8x128xf32>, vector<8x128xf32> -> vector<8x256xf32>
    %c0_8 = arith.constant 0 : index
    %c0_9 = arith.constant 0 : index
    %26 = vector.load %arg4[%c0_8, %c0_9] : memref<256x512xf32, #tpu.memory_space<vmem>>, vector<256x512xf32>
    %cst_10 = arith.constant dense<0.000000e+00> : vector<8x512xf32>
    %27 = tpu.matmul %25, %26, %cst_10 {dimension_numbers = #tpu.dot_dimension_numbers<[1], [0], [0], [1], [0, 0, 1, 1], [], []>} : vector<8x256xf32>, vector<256x512xf32>, vector<8x512xf32> -> vector<8x512xf32>
    %c0_11 = arith.constant 0 : index
    %c0_12 = arith.constant 0 : index
    %28 = vector.load %arg5[%c0_11, %c0_12] : memref<1x512xf32, #tpu.memory_space<vmem>>, vector<1x512xf32>
    %29 = vector.broadcast %28 : vector<1x512xf32> to vector<8x512xf32>
    %30 = arith.addf %27, %29 : vector<8x512xf32>
    %31 = vector.extract_strided_slice %30 {offsets = [0, 0], sizes = [8, 384], strides = [1, 1]} : vector<8x512xf32> to vector<8x384xf32>
    %32 = arith.negf %31 : vector<8x384xf32>
    %33 = math.exp %32 : vector<8x384xf32>
    %cst_13 = arith.constant 1.000000e+00 : f32
    %34 = vector.broadcast %cst_13 : f32 to vector<8x384xf32>
    %35 = arith.addf %34, %33 : vector<8x384xf32>
    %36 = arith.divf %34, %35 : vector<8x384xf32>
    %37 = vector.extract_strided_slice %36 {offsets = [0, 0], sizes = [8, 128], strides = [1, 1]} : vector<8x384xf32> to vector<8x128xf32>
    %38 = vector.extract_strided_slice %36 {offsets = [0, 128], sizes = [8, 128], strides = [1, 1]} : vector<8x384xf32> to vector<8x128xf32>
    %39 = vector.extract_strided_slice %36 {offsets = [0, 256], sizes = [8, 128], strides = [1, 1]} : vector<8x384xf32> to vector<8x128xf32>
    %40 = vector.extract_strided_slice %30 {offsets = [0, 384], sizes = [8, 128], strides = [1, 1]} : vector<8x512xf32> to vector<8x128xf32>
    %41 = math.tanh %40 : vector<8x128xf32>
    %42 = arith.mulf %38, %0 : vector<8x128xf32>
    %43 = arith.mulf %37, %41 : vector<8x128xf32>
    %44 = arith.addf %42, %43 : vector<8x128xf32>
    %45 = math.tanh %44 : vector<8x128xf32>
    %46 = arith.mulf %39, %45 : vector<8x128xf32>
    %47 = tpu.concatenate %46, %0 in 1 : vector<8x128xf32>, vector<8x128xf32> -> vector<8x256xf32>
    %c0_14 = arith.constant 0 : index
    %c0_15 = arith.constant 0 : index
    %48 = vector.load %arg6[%c0_14, %c0_15] : memref<256x512xf32, #tpu.memory_space<vmem>>, vector<256x512xf32>
    %cst_16 = arith.constant dense<0.000000e+00> : vector<8x512xf32>
    %49 = tpu.matmul %47, %48, %cst_16 {dimension_numbers = #tpu.dot_dimension_numbers<[1], [0], [0], [1], [0, 0, 1, 1], [], []>} : vector<8x256xf32>, vector<256x512xf32>, vector<8x512xf32> -> vector<8x512xf32>
    %c0_17 = arith.constant 0 : index
    %c0_18 = arith.constant 0 : index
    %50 = vector.load %arg7[%c0_17, %c0_18] : memref<1x512xf32, #tpu.memory_space<vmem>>, vector<1x512xf32>
    %51 = vector.broadcast %50 : vector<1x512xf32> to vector<8x512xf32>
    %52 = arith.addf %49, %51 : vector<8x512xf32>
    %53 = vector.extract_strided_slice %52 {offsets = [0, 0], sizes = [8, 384], strides = [1, 1]} : vector<8x512xf32> to vector<8x384xf32>
    %54 = arith.negf %53 : vector<8x384xf32>
    %55 = math.exp %54 : vector<8x384xf32>
    %cst_19 = arith.constant 1.000000e+00 : f32
    %56 = vector.broadcast %cst_19 : f32 to vector<8x384xf32>
    %57 = arith.addf %56, %55 : vector<8x384xf32>
    %58 = arith.divf %56, %57 : vector<8x384xf32>
    %59 = vector.extract_strided_slice %58 {offsets = [0, 0], sizes = [8, 128], strides = [1, 1]} : vector<8x384xf32> to vector<8x128xf32>
    %60 = vector.extract_strided_slice %58 {offsets = [0, 128], sizes = [8, 128], strides = [1, 1]} : vector<8x384xf32> to vector<8x128xf32>
    %61 = vector.extract_strided_slice %58 {offsets = [0, 256], sizes = [8, 128], strides = [1, 1]} : vector<8x384xf32> to vector<8x128xf32>
    %62 = vector.extract_strided_slice %52 {offsets = [0, 384], sizes = [8, 128], strides = [1, 1]} : vector<8x512xf32> to vector<8x128xf32>
    %63 = math.tanh %62 : vector<8x128xf32>
    %64 = arith.mulf %60, %0 : vector<8x128xf32>
    %65 = arith.mulf %59, %63 : vector<8x128xf32>
    %66 = arith.addf %64, %65 : vector<8x128xf32>
    %67 = math.tanh %66 : vector<8x128xf32>
    %68 = arith.mulf %61, %67 : vector<8x128xf32>
    %c1 = arith.constant 1 : index
    %c0_20 = arith.constant 0 : index
    %c0_21 = arith.constant 0 : index
    %69 = vector.load %arg1[%c1, %c0_20, %c0_21] : memref<8x8x128xf32, #tpu.memory_space<vmem>>, vector<1x8x128xf32>
    %70 = vector.shape_cast %69 : vector<1x8x128xf32> to vector<8x128xf32>
    %71 = tpu.concatenate %70, %24 in 1 : vector<8x128xf32>, vector<8x128xf32> -> vector<8x256xf32>
    %c0_22 = arith.constant 0 : index
    %c0_23 = arith.constant 0 : index
    %72 = vector.load %arg2[%c0_22, %c0_23] : memref<256x512xf32, #tpu.memory_space<vmem>>, vector<256x512xf32>
    %cst_24 = arith.constant dense<0.000000e+00> : vector<8x512xf32>
    %73 = tpu.matmul %71, %72, %cst_24 {dimension_numbers = #tpu.dot_dimension_numbers<[1], [0], [0], [1], [0, 0, 1, 1], [], []>} : vector<8x256xf32>, vector<256x512xf32>, vector<8x512xf32> -> vector<8x512xf32>
    %c0_25 = arith.constant 0 : index
    %c0_26 = arith.constant 0 : index
    %74 = vector.load %arg3[%c0_25, %c0_26] : memref<1x512xf32, #tpu.memory_space<vmem>>, vector<1x512xf32>
    %75 = vector.broadcast %74 : vector<1x512xf32> to vector<8x512xf32>
    %76 = arith.addf %73, %75 : vector<8x512xf32>
    %77 = vector.extract_strided_slice %76 {offsets = [0, 0], sizes = [8, 384], strides = [1, 1]} : vector<8x512xf32> to vector<8x384xf32>
    %78 = arith.negf %77 : vector<8x384xf32>
    %79 = math.exp %78 : vector<8x384xf32>
    %cst_27 = arith.constant 1.000000e+00 : f32
    %80 = vector.broadcast %cst_27 : f32 to vector<8x384xf32>
    %81 = arith.addf %80, %79 : vector<8x384xf32>
    %82 = arith.divf %80, %81 : vector<8x384xf32>
    %83 = vector.extract_strided_slice %82 {offsets = [0, 0], sizes = [8, 128], strides = [1, 1]} : vector<8x384xf32> to vector<8x128xf32>
    %84 = vector.extract_strided_slice %82 {offsets = [0, 128], sizes = [8, 128], strides = [1, 1]} : vector<8x384xf32> to vector<8x128xf32>
    %85 = vector.extract_strided_slice %82 {offsets = [0, 256], sizes = [8, 128], strides = [1, 1]} : vector<8x384xf32> to vector<8x128xf32>
    %86 = vector.extract_strided_slice %76 {offsets = [0, 384], sizes = [8, 128], strides = [1, 1]} : vector<8x512xf32> to vector<8x128xf32>
    %87 = math.tanh %86 : vector<8x128xf32>
    %88 = arith.mulf %84, %22 : vector<8x128xf32>
    %89 = arith.mulf %83, %87 : vector<8x128xf32>
    %90 = arith.addf %88, %89 : vector<8x128xf32>
    %91 = math.tanh %90 : vector<8x128xf32>
    %92 = arith.mulf %85, %91 : vector<8x128xf32>
    %93 = tpu.concatenate %92, %46 in 1 : vector<8x128xf32>, vector<8x128xf32> -> vector<8x256xf32>
    %c0_28 = arith.constant 0 : index
    %c0_29 = arith.constant 0 : index
    %94 = vector.load %arg4[%c0_28, %c0_29] : memref<256x512xf32, #tpu.memory_space<vmem>>, vector<256x512xf32>
    %cst_30 = arith.constant dense<0.000000e+00> : vector<8x512xf32>
    %95 = tpu.matmul %93, %94, %cst_30 {dimension_numbers = #tpu.dot_dimension_numbers<[1], [0], [0], [1], [0, 0, 1, 1], [], []>} : vector<8x256xf32>, vector<256x512xf32>, vector<8x512xf32> -> vector<8x512xf32>
    %c0_31 = arith.constant 0 : index
    %c0_32 = arith.constant 0 : index
    %96 = vector.load %arg5[%c0_31, %c0_32] : memref<1x512xf32, #tpu.memory_space<vmem>>, vector<1x512xf32>
    %97 = vector.broadcast %96 : vector<1x512xf32> to vector<8x512xf32>
    %98 = arith.addf %95, %97 : vector<8x512xf32>
    %99 = vector.extract_strided_slice %98 {offsets = [0, 0], sizes = [8, 384], strides = [1, 1]} : vector<8x512xf32> to vector<8x384xf32>
    %100 = arith.negf %99 : vector<8x384xf32>
    %101 = math.exp %100 : vector<8x384xf32>
    %cst_33 = arith.constant 1.000000e+00 : f32
    %102 = vector.broadcast %cst_33 : f32 to vector<8x384xf32>
    %103 = arith.addf %102, %101 : vector<8x384xf32>
    %104 = arith.divf %102, %103 : vector<8x384xf32>
    %105 = vector.extract_strided_slice %104 {offsets = [0, 0], sizes = [8, 128], strides = [1, 1]} : vector<8x384xf32> to vector<8x128xf32>
    %106 = vector.extract_strided_slice %104 {offsets = [0, 128], sizes = [8, 128], strides = [1, 1]} : vector<8x384xf32> to vector<8x128xf32>
    %107 = vector.extract_strided_slice %104 {offsets = [0, 256], sizes = [8, 128], strides = [1, 1]} : vector<8x384xf32> to vector<8x128xf32>
    %108 = vector.extract_strided_slice %98 {offsets = [0, 384], sizes = [8, 128], strides = [1, 1]} : vector<8x512xf32> to vector<8x128xf32>
    %109 = math.tanh %108 : vector<8x128xf32>
    %110 = arith.mulf %106, %44 : vector<8x128xf32>
    %111 = arith.mulf %105, %109 : vector<8x128xf32>
    %112 = arith.addf %110, %111 : vector<8x128xf32>
    %113 = math.tanh %112 : vector<8x128xf32>
    %114 = arith.mulf %107, %113 : vector<8x128xf32>
    %115 = tpu.concatenate %114, %68 in 1 : vector<8x128xf32>, vector<8x128xf32> -> vector<8x256xf32>
    %c0_34 = arith.constant 0 : index
    %c0_35 = arith.constant 0 : index
    %116 = vector.load %arg6[%c0_34, %c0_35] : memref<256x512xf32, #tpu.memory_space<vmem>>, vector<256x512xf32>
    %cst_36 = arith.constant dense<0.000000e+00> : vector<8x512xf32>
    %117 = tpu.matmul %115, %116, %cst_36 {dimension_numbers = #tpu.dot_dimension_numbers<[1], [0], [0], [1], [0, 0, 1, 1], [], []>} : vector<8x256xf32>, vector<256x512xf32>, vector<8x512xf32> -> vector<8x512xf32>
    %c0_37 = arith.constant 0 : index
    %c0_38 = arith.constant 0 : index
    %118 = vector.load %arg7[%c0_37, %c0_38] : memref<1x512xf32, #tpu.memory_space<vmem>>, vector<1x512xf32>
    %119 = vector.broadcast %118 : vector<1x512xf32> to vector<8x512xf32>
    %120 = arith.addf %117, %119 : vector<8x512xf32>
    %121 = vector.extract_strided_slice %120 {offsets = [0, 0], sizes = [8, 384], strides = [1, 1]} : vector<8x512xf32> to vector<8x384xf32>
    %122 = arith.negf %121 : vector<8x384xf32>
    %123 = math.exp %122 : vector<8x384xf32>
    %cst_39 = arith.constant 1.000000e+00 : f32
    %124 = vector.broadcast %cst_39 : f32 to vector<8x384xf32>
    %125 = arith.addf %124, %123 : vector<8x384xf32>
    %126 = arith.divf %124, %125 : vector<8x384xf32>
    %127 = vector.extract_strided_slice %126 {offsets = [0, 0], sizes = [8, 128], strides = [1, 1]} : vector<8x384xf32> to vector<8x128xf32>
    %128 = vector.extract_strided_slice %126 {offsets = [0, 128], sizes = [8, 128], strides = [1, 1]} : vector<8x384xf32> to vector<8x128xf32>
    %129 = vector.extract_strided_slice %126 {offsets = [0, 256], sizes = [8, 128], strides = [1, 1]} : vector<8x384xf32> to vector<8x128xf32>
    %130 = vector.extract_strided_slice %120 {offsets = [0, 384], sizes = [8, 128], strides = [1, 1]} : vector<8x512xf32> to vector<8x128xf32>
    %131 = math.tanh %130 : vector<8x128xf32>
    %132 = arith.mulf %128, %66 : vector<8x128xf32>
    %133 = arith.mulf %127, %131 : vector<8x128xf32>
    %134 = arith.addf %132, %133 : vector<8x128xf32>
    %135 = math.tanh %134 : vector<8x128xf32>
    %136 = arith.mulf %129, %135 : vector<8x128xf32>
    %c2 = arith.constant 2 : index
    %c0_40 = arith.constant 0 : index
    %c0_41 = arith.constant 0 : index
    %137 = vector.load %arg1[%c2, %c0_40, %c0_41] : memref<8x8x128xf32, #tpu.memory_space<vmem>>, vector<1x8x128xf32>
    %138 = vector.shape_cast %137 : vector<1x8x128xf32> to vector<8x128xf32>
    %139 = tpu.concatenate %138, %92 in 1 : vector<8x128xf32>, vector<8x128xf32> -> vector<8x256xf32>
    %c0_42 = arith.constant 0 : index
    %c0_43 = arith.constant 0 : index
    %140 = vector.load %arg2[%c0_42, %c0_43] : memref<256x512xf32, #tpu.memory_space<vmem>>, vector<256x512xf32>
    %cst_44 = arith.constant dense<0.000000e+00> : vector<8x512xf32>
    %141 = tpu.matmul %139, %140, %cst_44 {dimension_numbers = #tpu.dot_dimension_numbers<[1], [0], [0], [1], [0, 0, 1, 1], [], []>} : vector<8x256xf32>, vector<256x512xf32>, vector<8x512xf32> -> vector<8x512xf32>
    %c0_45 = arith.constant 0 : index
    %c0_46 = arith.constant 0 : index
    %142 = vector.load %arg3[%c0_45, %c0_46] : memref<1x512xf32, #tpu.memory_space<vmem>>, vector<1x512xf32>
    %143 = vector.broadcast %142 : vector<1x512xf32> to vector<8x512xf32>
    %144 = arith.addf %141, %143 : vector<8x512xf32>
    %145 = vector.extract_strided_slice %144 {offsets = [0, 0], sizes = [8, 384], strides = [1, 1]} : vector<8x512xf32> to vector<8x384xf32>
    %146 = arith.negf %145 : vector<8x384xf32>
    %147 = math.exp %146 : vector<8x384xf32>
    %cst_47 = arith.constant 1.000000e+00 : f32
    %148 = vector.broadcast %cst_47 : f32 to vector<8x384xf32>
    %149 = arith.addf %148, %147 : vector<8x384xf32>
    %150 = arith.divf %148, %149 : vector<8x384xf32>
    %151 = vector.extract_strided_slice %150 {offsets = [0, 0], sizes = [8, 128], strides = [1, 1]} : vector<8x384xf32> to vector<8x128xf32>
    %152 = vector.extract_strided_slice %150 {offsets = [0, 128], sizes = [8, 128], strides = [1, 1]} : vector<8x384xf32> to vector<8x128xf32>
    %153 = vector.extract_strided_slice %150 {offsets = [0, 256], sizes = [8, 128], strides = [1, 1]} : vector<8x384xf32> to vector<8x128xf32>
    %154 = vector.extract_strided_slice %144 {offsets = [0, 384], sizes = [8, 128], strides = [1, 1]} : vector<8x512xf32> to vector<8x128xf32>
    %155 = math.tanh %154 : vector<8x128xf32>
    %156 = arith.mulf %152, %90 : vector<8x128xf32>
    %157 = arith.mulf %151, %155 : vector<8x128xf32>
    %158 = arith.addf %156, %157 : vector<8x128xf32>
    %159 = math.tanh %158 : vector<8x128xf32>
    %160 = arith.mulf %153, %159 : vector<8x128xf32>
    %161 = tpu.concatenate %160, %114 in 1 : vector<8x128xf32>, vector<8x128xf32> -> vector<8x256xf32>
    %c0_48 = arith.constant 0 : index
    %c0_49 = arith.constant 0 : index
    %162 = vector.load %arg4[%c0_48, %c0_49] : memref<256x512xf32, #tpu.memory_space<vmem>>, vector<256x512xf32>
    %cst_50 = arith.constant dense<0.000000e+00> : vector<8x512xf32>
    %163 = tpu.matmul %161, %162, %cst_50 {dimension_numbers = #tpu.dot_dimension_numbers<[1], [0], [0], [1], [0, 0, 1, 1], [], []>} : vector<8x256xf32>, vector<256x512xf32>, vector<8x512xf32> -> vector<8x512xf32>
    %c0_51 = arith.constant 0 : index
    %c0_52 = arith.constant 0 : index
    %164 = vector.load %arg5[%c0_51, %c0_52] : memref<1x512xf32, #tpu.memory_space<vmem>>, vector<1x512xf32>
    %165 = vector.broadcast %164 : vector<1x512xf32> to vector<8x512xf32>
    %166 = arith.addf %163, %165 : vector<8x512xf32>
    %167 = vector.extract_strided_slice %166 {offsets = [0, 0], sizes = [8, 384], strides = [1, 1]} : vector<8x512xf32> to vector<8x384xf32>
    %168 = arith.negf %167 : vector<8x384xf32>
    %169 = math.exp %168 : vector<8x384xf32>
    %cst_53 = arith.constant 1.000000e+00 : f32
    %170 = vector.broadcast %cst_53 : f32 to vector<8x384xf32>
    %171 = arith.addf %170, %169 : vector<8x384xf32>
    %172 = arith.divf %170, %171 : vector<8x384xf32>
    %173 = vector.extract_strided_slice %172 {offsets = [0, 0], sizes = [8, 128], strides = [1, 1]} : vector<8x384xf32> to vector<8x128xf32>
    %174 = vector.extract_strided_slice %172 {offsets = [0, 128], sizes = [8, 128], strides = [1, 1]} : vector<8x384xf32> to vector<8x128xf32>
    %175 = vector.extract_strided_slice %172 {offsets = [0, 256], sizes = [8, 128], strides = [1, 1]} : vector<8x384xf32> to vector<8x128xf32>
    %176 = vector.extract_strided_slice %166 {offsets = [0, 384], sizes = [8, 128], strides = [1, 1]} : vector<8x512xf32> to vector<8x128xf32>
    %177 = math.tanh %176 : vector<8x128xf32>
    %178 = arith.mulf %174, %112 : vector<8x128xf32>
    %179 = arith.mulf %173, %177 : vector<8x128xf32>
    %180 = arith.addf %178, %179 : vector<8x128xf32>
    %181 = math.tanh %180 : vector<8x128xf32>
    %182 = arith.mulf %175, %181 : vector<8x128xf32>
    %183 = tpu.concatenate %182, %136 in 1 : vector<8x128xf32>, vector<8x128xf32> -> vector<8x256xf32>
    %c0_54 = arith.constant 0 : index
    %c0_55 = arith.constant 0 : index
    %184 = vector.load %arg6[%c0_54, %c0_55] : memref<256x512xf32, #tpu.memory_space<vmem>>, vector<256x512xf32>
    %cst_56 = arith.constant dense<0.000000e+00> : vector<8x512xf32>
    %185 = tpu.matmul %183, %184, %cst_56 {dimension_numbers = #tpu.dot_dimension_numbers<[1], [0], [0], [1], [0, 0, 1, 1], [], []>} : vector<8x256xf32>, vector<256x512xf32>, vector<8x512xf32> -> vector<8x512xf32>
    %c0_57 = arith.constant 0 : index
    %c0_58 = arith.constant 0 : index
    %186 = vector.load %arg7[%c0_57, %c0_58] : memref<1x512xf32, #tpu.memory_space<vmem>>, vector<1x512xf32>
    %187 = vector.broadcast %186 : vector<1x512xf32> to vector<8x512xf32>
    %188 = arith.addf %185, %187 : vector<8x512xf32>
    %189 = vector.extract_strided_slice %188 {offsets = [0, 0], sizes = [8, 384], strides = [1, 1]} : vector<8x512xf32> to vector<8x384xf32>
    %190 = arith.negf %189 : vector<8x384xf32>
    %191 = math.exp %190 : vector<8x384xf32>
    %cst_59 = arith.constant 1.000000e+00 : f32
    %192 = vector.broadcast %cst_59 : f32 to vector<8x384xf32>
    %193 = arith.addf %192, %191 : vector<8x384xf32>
    %194 = arith.divf %192, %193 : vector<8x384xf32>
    %195 = vector.extract_strided_slice %194 {offsets = [0, 0], sizes = [8, 128], strides = [1, 1]} : vector<8x384xf32> to vector<8x128xf32>
    %196 = vector.extract_strided_slice %194 {offsets = [0, 128], sizes = [8, 128], strides = [1, 1]} : vector<8x384xf32> to vector<8x128xf32>
    %197 = vector.extract_strided_slice %194 {offsets = [0, 256], sizes = [8, 128], strides = [1, 1]} : vector<8x384xf32> to vector<8x128xf32>
    %198 = vector.extract_strided_slice %188 {offsets = [0, 384], sizes = [8, 128], strides = [1, 1]} : vector<8x512xf32> to vector<8x128xf32>
    %199 = math.tanh %198 : vector<8x128xf32>
    %200 = arith.mulf %196, %134 : vector<8x128xf32>
    %201 = arith.mulf %195, %199 : vector<8x128xf32>
    %202 = arith.addf %200, %201 : vector<8x128xf32>
    %203 = math.tanh %202 : vector<8x128xf32>
    %204 = arith.mulf %197, %203 : vector<8x128xf32>
    %c3 = arith.constant 3 : index
    %c0_60 = arith.constant 0 : index
    %c0_61 = arith.constant 0 : index
    %205 = vector.load %arg1[%c3, %c0_60, %c0_61] : memref<8x8x128xf32, #tpu.memory_space<vmem>>, vector<1x8x128xf32>
    %206 = vector.shape_cast %205 : vector<1x8x128xf32> to vector<8x128xf32>
    %207 = tpu.concatenate %206, %160 in 1 : vector<8x128xf32>, vector<8x128xf32> -> vector<8x256xf32>
    %c0_62 = arith.constant 0 : index
    %c0_63 = arith.constant 0 : index
    %208 = vector.load %arg2[%c0_62, %c0_63] : memref<256x512xf32, #tpu.memory_space<vmem>>, vector<256x512xf32>
    %cst_64 = arith.constant dense<0.000000e+00> : vector<8x512xf32>
    %209 = tpu.matmul %207, %208, %cst_64 {dimension_numbers = #tpu.dot_dimension_numbers<[1], [0], [0], [1], [0, 0, 1, 1], [], []>} : vector<8x256xf32>, vector<256x512xf32>, vector<8x512xf32> -> vector<8x512xf32>
    %c0_65 = arith.constant 0 : index
    %c0_66 = arith.constant 0 : index
    %210 = vector.load %arg3[%c0_65, %c0_66] : memref<1x512xf32, #tpu.memory_space<vmem>>, vector<1x512xf32>
    %211 = vector.broadcast %210 : vector<1x512xf32> to vector<8x512xf32>
    %212 = arith.addf %209, %211 : vector<8x512xf32>
    %213 = vector.extract_strided_slice %212 {offsets = [0, 0], sizes = [8, 384], strides = [1, 1]} : vector<8x512xf32> to vector<8x384xf32>
    %214 = arith.negf %213 : vector<8x384xf32>
    %215 = math.exp %214 : vector<8x384xf32>
    %cst_67 = arith.constant 1.000000e+00 : f32
    %216 = vector.broadcast %cst_67 : f32 to vector<8x384xf32>
    %217 = arith.addf %216, %215 : vector<8x384xf32>
    %218 = arith.divf %216, %217 : vector<8x384xf32>
    %219 = vector.extract_strided_slice %218 {offsets = [0, 0], sizes = [8, 128], strides = [1, 1]} : vector<8x384xf32> to vector<8x128xf32>
    %220 = vector.extract_strided_slice %218 {offsets = [0, 128], sizes = [8, 128], strides = [1, 1]} : vector<8x384xf32> to vector<8x128xf32>
    %221 = vector.extract_strided_slice %218 {offsets = [0, 256], sizes = [8, 128], strides = [1, 1]} : vector<8x384xf32> to vector<8x128xf32>
    %222 = vector.extract_strided_slice %212 {offsets = [0, 384], sizes = [8, 128], strides = [1, 1]} : vector<8x512xf32> to vector<8x128xf32>
    %223 = math.tanh %222 : vector<8x128xf32>
    %224 = arith.mulf %220, %158 : vector<8x128xf32>
    %225 = arith.mulf %219, %223 : vector<8x128xf32>
    %226 = arith.addf %224, %225 : vector<8x128xf32>
    %227 = math.tanh %226 : vector<8x128xf32>
    %228 = arith.mulf %221, %227 : vector<8x128xf32>
    %229 = tpu.concatenate %228, %182 in 1 : vector<8x128xf32>, vector<8x128xf32> -> vector<8x256xf32>
    %c0_68 = arith.constant 0 : index
    %c0_69 = arith.constant 0 : index
    %230 = vector.load %arg4[%c0_68, %c0_69] : memref<256x512xf32, #tpu.memory_space<vmem>>, vector<256x512xf32>
    %cst_70 = arith.constant dense<0.000000e+00> : vector<8x512xf32>
    %231 = tpu.matmul %229, %230, %cst_70 {dimension_numbers = #tpu.dot_dimension_numbers<[1], [0], [0], [1], [0, 0, 1, 1], [], []>} : vector<8x256xf32>, vector<256x512xf32>, vector<8x512xf32> -> vector<8x512xf32>
    %c0_71 = arith.constant 0 : index
    %c0_72 = arith.constant 0 : index
    %232 = vector.load %arg5[%c0_71, %c0_72] : memref<1x512xf32, #tpu.memory_space<vmem>>, vector<1x512xf32>
    %233 = vector.broadcast %232 : vector<1x512xf32> to vector<8x512xf32>
    %234 = arith.addf %231, %233 : vector<8x512xf32>
    %235 = vector.extract_strided_slice %234 {offsets = [0, 0], sizes = [8, 384], strides = [1, 1]} : vector<8x512xf32> to vector<8x384xf32>
    %236 = arith.negf %235 : vector<8x384xf32>
    %237 = math.exp %236 : vector<8x384xf32>
    %cst_73 = arith.constant 1.000000e+00 : f32
    %238 = vector.broadcast %cst_73 : f32 to vector<8x384xf32>
    %239 = arith.addf %238, %237 : vector<8x384xf32>
    %240 = arith.divf %238, %239 : vector<8x384xf32>
    %241 = vector.extract_strided_slice %240 {offsets = [0, 0], sizes = [8, 128], strides = [1, 1]} : vector<8x384xf32> to vector<8x128xf32>
    %242 = vector.extract_strided_slice %240 {offsets = [0, 128], sizes = [8, 128], strides = [1, 1]} : vector<8x384xf32> to vector<8x128xf32>
    %243 = vector.extract_strided_slice %240 {offsets = [0, 256], sizes = [8, 128], strides = [1, 1]} : vector<8x384xf32> to vector<8x128xf32>
    %244 = vector.extract_strided_slice %234 {offsets = [0, 384], sizes = [8, 128], strides = [1, 1]} : vector<8x512xf32> to vector<8x128xf32>
    %245 = math.tanh %244 : vector<8x128xf32>
    %246 = arith.mulf %242, %180 : vector<8x128xf32>
    %247 = arith.mulf %241, %245 : vector<8x128xf32>
    %248 = arith.addf %246, %247 : vector<8x128xf32>
    %249 = math.tanh %248 : vector<8x128xf32>
    %250 = arith.mulf %243, %249 : vector<8x128xf32>
    %251 = tpu.concatenate %250, %204 in 1 : vector<8x128xf32>, vector<8x128xf32> -> vector<8x256xf32>
    %c0_74 = arith.constant 0 : index
    %c0_75 = arith.constant 0 : index
    %252 = vector.load %arg6[%c0_74, %c0_75] : memref<256x512xf32, #tpu.memory_space<vmem>>, vector<256x512xf32>
    %cst_76 = arith.constant dense<0.000000e+00> : vector<8x512xf32>
    %253 = tpu.matmul %251, %252, %cst_76 {dimension_numbers = #tpu.dot_dimension_numbers<[1], [0], [0], [1], [0, 0, 1, 1], [], []>} : vector<8x256xf32>, vector<256x512xf32>, vector<8x512xf32> -> vector<8x512xf32>
    %c0_77 = arith.constant 0 : index
    %c0_78 = arith.constant 0 : index
    %254 = vector.load %arg7[%c0_77, %c0_78] : memref<1x512xf32, #tpu.memory_space<vmem>>, vector<1x512xf32>
    %255 = vector.broadcast %254 : vector<1x512xf32> to vector<8x512xf32>
    %256 = arith.addf %253, %255 : vector<8x512xf32>
    %257 = vector.extract_strided_slice %256 {offsets = [0, 0], sizes = [8, 384], strides = [1, 1]} : vector<8x512xf32> to vector<8x384xf32>
    %258 = arith.negf %257 : vector<8x384xf32>
    %259 = math.exp %258 : vector<8x384xf32>
    %cst_79 = arith.constant 1.000000e+00 : f32
    %260 = vector.broadcast %cst_79 : f32 to vector<8x384xf32>
    %261 = arith.addf %260, %259 : vector<8x384xf32>
    %262 = arith.divf %260, %261 : vector<8x384xf32>
    %263 = vector.extract_strided_slice %262 {offsets = [0, 0], sizes = [8, 128], strides = [1, 1]} : vector<8x384xf32> to vector<8x128xf32>
    %264 = vector.extract_strided_slice %262 {offsets = [0, 128], sizes = [8, 128], strides = [1, 1]} : vector<8x384xf32> to vector<8x128xf32>
    %265 = vector.extract_strided_slice %262 {offsets = [0, 256], sizes = [8, 128], strides = [1, 1]} : vector<8x384xf32> to vector<8x128xf32>
    %266 = vector.extract_strided_slice %256 {offsets = [0, 384], sizes = [8, 128], strides = [1, 1]} : vector<8x512xf32> to vector<8x128xf32>
    %267 = math.tanh %266 : vector<8x128xf32>
    %268 = arith.mulf %264, %202 : vector<8x128xf32>
    %269 = arith.mulf %263, %267 : vector<8x128xf32>
    %270 = arith.addf %268, %269 : vector<8x128xf32>
    %271 = math.tanh %270 : vector<8x128xf32>
    %272 = arith.mulf %265, %271 : vector<8x128xf32>
    %c4 = arith.constant 4 : index
    %c0_80 = arith.constant 0 : index
    %c0_81 = arith.constant 0 : index
    %273 = vector.load %arg1[%c4, %c0_80, %c0_81] : memref<8x8x128xf32, #tpu.memory_space<vmem>>, vector<1x8x128xf32>
    %274 = vector.shape_cast %273 : vector<1x8x128xf32> to vector<8x128xf32>
    %275 = tpu.concatenate %274, %228 in 1 : vector<8x128xf32>, vector<8x128xf32> -> vector<8x256xf32>
    %c0_82 = arith.constant 0 : index
    %c0_83 = arith.constant 0 : index
    %276 = vector.load %arg2[%c0_82, %c0_83] : memref<256x512xf32, #tpu.memory_space<vmem>>, vector<256x512xf32>
    %cst_84 = arith.constant dense<0.000000e+00> : vector<8x512xf32>
    %277 = tpu.matmul %275, %276, %cst_84 {dimension_numbers = #tpu.dot_dimension_numbers<[1], [0], [0], [1], [0, 0, 1, 1], [], []>} : vector<8x256xf32>, vector<256x512xf32>, vector<8x512xf32> -> vector<8x512xf32>
    %c0_85 = arith.constant 0 : index
    %c0_86 = arith.constant 0 : index
    %278 = vector.load %arg3[%c0_85, %c0_86] : memref<1x512xf32, #tpu.memory_space<vmem>>, vector<1x512xf32>
    %279 = vector.broadcast %278 : vector<1x512xf32> to vector<8x512xf32>
    %280 = arith.addf %277, %279 : vector<8x512xf32>
    %281 = vector.extract_strided_slice %280 {offsets = [0, 0], sizes = [8, 384], strides = [1, 1]} : vector<8x512xf32> to vector<8x384xf32>
    %282 = arith.negf %281 : vector<8x384xf32>
    %283 = math.exp %282 : vector<8x384xf32>
    %cst_87 = arith.constant 1.000000e+00 : f32
    %284 = vector.broadcast %cst_87 : f32 to vector<8x384xf32>
    %285 = arith.addf %284, %283 : vector<8x384xf32>
    %286 = arith.divf %284, %285 : vector<8x384xf32>
    %287 = vector.extract_strided_slice %286 {offsets = [0, 0], sizes = [8, 128], strides = [1, 1]} : vector<8x384xf32> to vector<8x128xf32>
    %288 = vector.extract_strided_slice %286 {offsets = [0, 128], sizes = [8, 128], strides = [1, 1]} : vector<8x384xf32> to vector<8x128xf32>
    %289 = vector.extract_strided_slice %286 {offsets = [0, 256], sizes = [8, 128], strides = [1, 1]} : vector<8x384xf32> to vector<8x128xf32>
    %290 = vector.extract_strided_slice %280 {offsets = [0, 384], sizes = [8, 128], strides = [1, 1]} : vector<8x512xf32> to vector<8x128xf32>
    %291 = math.tanh %290 : vector<8x128xf32>
    %292 = arith.mulf %288, %226 : vector<8x128xf32>
    %293 = arith.mulf %287, %291 : vector<8x128xf32>
    %294 = arith.addf %292, %293 : vector<8x128xf32>
    %295 = math.tanh %294 : vector<8x128xf32>
    %296 = arith.mulf %289, %295 : vector<8x128xf32>
    %297 = tpu.concatenate %296, %250 in 1 : vector<8x128xf32>, vector<8x128xf32> -> vector<8x256xf32>
    %c0_88 = arith.constant 0 : index
    %c0_89 = arith.constant 0 : index
    %298 = vector.load %arg4[%c0_88, %c0_89] : memref<256x512xf32, #tpu.memory_space<vmem>>, vector<256x512xf32>
    %cst_90 = arith.constant dense<0.000000e+00> : vector<8x512xf32>
    %299 = tpu.matmul %297, %298, %cst_90 {dimension_numbers = #tpu.dot_dimension_numbers<[1], [0], [0], [1], [0, 0, 1, 1], [], []>} : vector<8x256xf32>, vector<256x512xf32>, vector<8x512xf32> -> vector<8x512xf32>
    %c0_91 = arith.constant 0 : index
    %c0_92 = arith.constant 0 : index
    %300 = vector.load %arg5[%c0_91, %c0_92] : memref<1x512xf32, #tpu.memory_space<vmem>>, vector<1x512xf32>
    %301 = vector.broadcast %300 : vector<1x512xf32> to vector<8x512xf32>
    %302 = arith.addf %299, %301 : vector<8x512xf32>
    %303 = vector.extract_strided_slice %302 {offsets = [0, 0], sizes = [8, 384], strides = [1, 1]} : vector<8x512xf32> to vector<8x384xf32>
    %304 = arith.negf %303 : vector<8x384xf32>
    %305 = math.exp %304 : vector<8x384xf32>
    %cst_93 = arith.constant 1.000000e+00 : f32
    %306 = vector.broadcast %cst_93 : f32 to vector<8x384xf32>
    %307 = arith.addf %306, %305 : vector<8x384xf32>
    %308 = arith.divf %306, %307 : vector<8x384xf32>
    %309 = vector.extract_strided_slice %308 {offsets = [0, 0], sizes = [8, 128], strides = [1, 1]} : vector<8x384xf32> to vector<8x128xf32>
    %310 = vector.extract_strided_slice %308 {offsets = [0, 128], sizes = [8, 128], strides = [1, 1]} : vector<8x384xf32> to vector<8x128xf32>
    %311 = vector.extract_strided_slice %308 {offsets = [0, 256], sizes = [8, 128], strides = [1, 1]} : vector<8x384xf32> to vector<8x128xf32>
    %312 = vector.extract_strided_slice %302 {offsets = [0, 384], sizes = [8, 128], strides = [1, 1]} : vector<8x512xf32> to vector<8x128xf32>
    %313 = math.tanh %312 : vector<8x128xf32>
    %314 = arith.mulf %310, %248 : vector<8x128xf32>
    %315 = arith.mulf %309, %313 : vector<8x128xf32>
    %316 = arith.addf %314, %315 : vector<8x128xf32>
    %317 = math.tanh %316 : vector<8x128xf32>
    %318 = arith.mulf %311, %317 : vector<8x128xf32>
    %319 = tpu.concatenate %318, %272 in 1 : vector<8x128xf32>, vector<8x128xf32> -> vector<8x256xf32>
    %c0_94 = arith.constant 0 : index
    %c0_95 = arith.constant 0 : index
    %320 = vector.load %arg6[%c0_94, %c0_95] : memref<256x512xf32, #tpu.memory_space<vmem>>, vector<256x512xf32>
    %cst_96 = arith.constant dense<0.000000e+00> : vector<8x512xf32>
    %321 = tpu.matmul %319, %320, %cst_96 {dimension_numbers = #tpu.dot_dimension_numbers<[1], [0], [0], [1], [0, 0, 1, 1], [], []>} : vector<8x256xf32>, vector<256x512xf32>, vector<8x512xf32> -> vector<8x512xf32>
    %c0_97 = arith.constant 0 : index
    %c0_98 = arith.constant 0 : index
    %322 = vector.load %arg7[%c0_97, %c0_98] : memref<1x512xf32, #tpu.memory_space<vmem>>, vector<1x512xf32>
    %323 = vector.broadcast %322 : vector<1x512xf32> to vector<8x512xf32>
    %324 = arith.addf %321, %323 : vector<8x512xf32>
    %325 = vector.extract_strided_slice %324 {offsets = [0, 0], sizes = [8, 384], strides = [1, 1]} : vector<8x512xf32> to vector<8x384xf32>
    %326 = arith.negf %325 : vector<8x384xf32>
    %327 = math.exp %326 : vector<8x384xf32>
    %cst_99 = arith.constant 1.000000e+00 : f32
    %328 = vector.broadcast %cst_99 : f32 to vector<8x384xf32>
    %329 = arith.addf %328, %327 : vector<8x384xf32>
    %330 = arith.divf %328, %329 : vector<8x384xf32>
    %331 = vector.extract_strided_slice %330 {offsets = [0, 0], sizes = [8, 128], strides = [1, 1]} : vector<8x384xf32> to vector<8x128xf32>
    %332 = vector.extract_strided_slice %330 {offsets = [0, 128], sizes = [8, 128], strides = [1, 1]} : vector<8x384xf32> to vector<8x128xf32>
    %333 = vector.extract_strided_slice %330 {offsets = [0, 256], sizes = [8, 128], strides = [1, 1]} : vector<8x384xf32> to vector<8x128xf32>
    %334 = vector.extract_strided_slice %324 {offsets = [0, 384], sizes = [8, 128], strides = [1, 1]} : vector<8x512xf32> to vector<8x128xf32>
    %335 = math.tanh %334 : vector<8x128xf32>
    %336 = arith.mulf %332, %270 : vector<8x128xf32>
    %337 = arith.mulf %331, %335 : vector<8x128xf32>
    %338 = arith.addf %336, %337 : vector<8x128xf32>
    %339 = math.tanh %338 : vector<8x128xf32>
    %340 = arith.mulf %333, %339 : vector<8x128xf32>
    %c5 = arith.constant 5 : index
    %c0_100 = arith.constant 0 : index
    %c0_101 = arith.constant 0 : index
    %341 = vector.load %arg1[%c5, %c0_100, %c0_101] : memref<8x8x128xf32, #tpu.memory_space<vmem>>, vector<1x8x128xf32>
    %342 = vector.shape_cast %341 : vector<1x8x128xf32> to vector<8x128xf32>
    %343 = tpu.concatenate %342, %296 in 1 : vector<8x128xf32>, vector<8x128xf32> -> vector<8x256xf32>
    %c0_102 = arith.constant 0 : index
    %c0_103 = arith.constant 0 : index
    %344 = vector.load %arg2[%c0_102, %c0_103] : memref<256x512xf32, #tpu.memory_space<vmem>>, vector<256x512xf32>
    %cst_104 = arith.constant dense<0.000000e+00> : vector<8x512xf32>
    %345 = tpu.matmul %343, %344, %cst_104 {dimension_numbers = #tpu.dot_dimension_numbers<[1], [0], [0], [1], [0, 0, 1, 1], [], []>} : vector<8x256xf32>, vector<256x512xf32>, vector<8x512xf32> -> vector<8x512xf32>
    %c0_105 = arith.constant 0 : index
    %c0_106 = arith.constant 0 : index
    %346 = vector.load %arg3[%c0_105, %c0_106] : memref<1x512xf32, #tpu.memory_space<vmem>>, vector<1x512xf32>
    %347 = vector.broadcast %346 : vector<1x512xf32> to vector<8x512xf32>
    %348 = arith.addf %345, %347 : vector<8x512xf32>
    %349 = vector.extract_strided_slice %348 {offsets = [0, 0], sizes = [8, 384], strides = [1, 1]} : vector<8x512xf32> to vector<8x384xf32>
    %350 = arith.negf %349 : vector<8x384xf32>
    %351 = math.exp %350 : vector<8x384xf32>
    %cst_107 = arith.constant 1.000000e+00 : f32
    %352 = vector.broadcast %cst_107 : f32 to vector<8x384xf32>
    %353 = arith.addf %352, %351 : vector<8x384xf32>
    %354 = arith.divf %352, %353 : vector<8x384xf32>
    %355 = vector.extract_strided_slice %354 {offsets = [0, 0], sizes = [8, 128], strides = [1, 1]} : vector<8x384xf32> to vector<8x128xf32>
    %356 = vector.extract_strided_slice %354 {offsets = [0, 128], sizes = [8, 128], strides = [1, 1]} : vector<8x384xf32> to vector<8x128xf32>
    %357 = vector.extract_strided_slice %354 {offsets = [0, 256], sizes = [8, 128], strides = [1, 1]} : vector<8x384xf32> to vector<8x128xf32>
    %358 = vector.extract_strided_slice %348 {offsets = [0, 384], sizes = [8, 128], strides = [1, 1]} : vector<8x512xf32> to vector<8x128xf32>
    %359 = math.tanh %358 : vector<8x128xf32>
    %360 = arith.mulf %356, %294 : vector<8x128xf32>
    %361 = arith.mulf %355, %359 : vector<8x128xf32>
    %362 = arith.addf %360, %361 : vector<8x128xf32>
    %363 = math.tanh %362 : vector<8x128xf32>
    %364 = arith.mulf %357, %363 : vector<8x128xf32>
    %365 = tpu.concatenate %364, %318 in 1 : vector<8x128xf32>, vector<8x128xf32> -> vector<8x256xf32>
    %c0_108 = arith.constant 0 : index
    %c0_109 = arith.constant 0 : index
    %366 = vector.load %arg4[%c0_108, %c0_109] : memref<256x512xf32, #tpu.memory_space<vmem>>, vector<256x512xf32>
    %cst_110 = arith.constant dense<0.000000e+00> : vector<8x512xf32>
    %367 = tpu.matmul %365, %366, %cst_110 {dimension_numbers = #tpu.dot_dimension_numbers<[1], [0], [0], [1], [0, 0, 1, 1], [], []>} : vector<8x256xf32>, vector<256x512xf32>, vector<8x512xf32> -> vector<8x512xf32>
    %c0_111 = arith.constant 0 : index
    %c0_112 = arith.constant 0 : index
    %368 = vector.load %arg5[%c0_111, %c0_112] : memref<1x512xf32, #tpu.memory_space<vmem>>, vector<1x512xf32>
    %369 = vector.broadcast %368 : vector<1x512xf32> to vector<8x512xf32>
    %370 = arith.addf %367, %369 : vector<8x512xf32>
    %371 = vector.extract_strided_slice %370 {offsets = [0, 0], sizes = [8, 384], strides = [1, 1]} : vector<8x512xf32> to vector<8x384xf32>
    %372 = arith.negf %371 : vector<8x384xf32>
    %373 = math.exp %372 : vector<8x384xf32>
    %cst_113 = arith.constant 1.000000e+00 : f32
    %374 = vector.broadcast %cst_113 : f32 to vector<8x384xf32>
    %375 = arith.addf %374, %373 : vector<8x384xf32>
    %376 = arith.divf %374, %375 : vector<8x384xf32>
    %377 = vector.extract_strided_slice %376 {offsets = [0, 0], sizes = [8, 128], strides = [1, 1]} : vector<8x384xf32> to vector<8x128xf32>
    %378 = vector.extract_strided_slice %376 {offsets = [0, 128], sizes = [8, 128], strides = [1, 1]} : vector<8x384xf32> to vector<8x128xf32>
    %379 = vector.extract_strided_slice %376 {offsets = [0, 256], sizes = [8, 128], strides = [1, 1]} : vector<8x384xf32> to vector<8x128xf32>
    %380 = vector.extract_strided_slice %370 {offsets = [0, 384], sizes = [8, 128], strides = [1, 1]} : vector<8x512xf32> to vector<8x128xf32>
    %381 = math.tanh %380 : vector<8x128xf32>
    %382 = arith.mulf %378, %316 : vector<8x128xf32>
    %383 = arith.mulf %377, %381 : vector<8x128xf32>
    %384 = arith.addf %382, %383 : vector<8x128xf32>
    %385 = math.tanh %384 : vector<8x128xf32>
    %386 = arith.mulf %379, %385 : vector<8x128xf32>
    %387 = tpu.concatenate %386, %340 in 1 : vector<8x128xf32>, vector<8x128xf32> -> vector<8x256xf32>
    %c0_114 = arith.constant 0 : index
    %c0_115 = arith.constant 0 : index
    %388 = vector.load %arg6[%c0_114, %c0_115] : memref<256x512xf32, #tpu.memory_space<vmem>>, vector<256x512xf32>
    %cst_116 = arith.constant dense<0.000000e+00> : vector<8x512xf32>
    %389 = tpu.matmul %387, %388, %cst_116 {dimension_numbers = #tpu.dot_dimension_numbers<[1], [0], [0], [1], [0, 0, 1, 1], [], []>} : vector<8x256xf32>, vector<256x512xf32>, vector<8x512xf32> -> vector<8x512xf32>
    %c0_117 = arith.constant 0 : index
    %c0_118 = arith.constant 0 : index
    %390 = vector.load %arg7[%c0_117, %c0_118] : memref<1x512xf32, #tpu.memory_space<vmem>>, vector<1x512xf32>
    %391 = vector.broadcast %390 : vector<1x512xf32> to vector<8x512xf32>
    %392 = arith.addf %389, %391 : vector<8x512xf32>
    %393 = vector.extract_strided_slice %392 {offsets = [0, 0], sizes = [8, 384], strides = [1, 1]} : vector<8x512xf32> to vector<8x384xf32>
    %394 = arith.negf %393 : vector<8x384xf32>
    %395 = math.exp %394 : vector<8x384xf32>
    %cst_119 = arith.constant 1.000000e+00 : f32
    %396 = vector.broadcast %cst_119 : f32 to vector<8x384xf32>
    %397 = arith.addf %396, %395 : vector<8x384xf32>
    %398 = arith.divf %396, %397 : vector<8x384xf32>
    %399 = vector.extract_strided_slice %398 {offsets = [0, 0], sizes = [8, 128], strides = [1, 1]} : vector<8x384xf32> to vector<8x128xf32>
    %400 = vector.extract_strided_slice %398 {offsets = [0, 128], sizes = [8, 128], strides = [1, 1]} : vector<8x384xf32> to vector<8x128xf32>
    %401 = vector.extract_strided_slice %398 {offsets = [0, 256], sizes = [8, 128], strides = [1, 1]} : vector<8x384xf32> to vector<8x128xf32>
    %402 = vector.extract_strided_slice %392 {offsets = [0, 384], sizes = [8, 128], strides = [1, 1]} : vector<8x512xf32> to vector<8x128xf32>
    %403 = math.tanh %402 : vector<8x128xf32>
    %404 = arith.mulf %400, %338 : vector<8x128xf32>
    %405 = arith.mulf %399, %403 : vector<8x128xf32>
    %406 = arith.addf %404, %405 : vector<8x128xf32>
    %407 = math.tanh %406 : vector<8x128xf32>
    %408 = arith.mulf %401, %407 : vector<8x128xf32>
    %c6 = arith.constant 6 : index
    %c0_120 = arith.constant 0 : index
    %c0_121 = arith.constant 0 : index
    %409 = vector.load %arg1[%c6, %c0_120, %c0_121] : memref<8x8x128xf32, #tpu.memory_space<vmem>>, vector<1x8x128xf32>
    %410 = vector.shape_cast %409 : vector<1x8x128xf32> to vector<8x128xf32>
    %411 = tpu.concatenate %410, %364 in 1 : vector<8x128xf32>, vector<8x128xf32> -> vector<8x256xf32>
    %c0_122 = arith.constant 0 : index
    %c0_123 = arith.constant 0 : index
    %412 = vector.load %arg2[%c0_122, %c0_123] : memref<256x512xf32, #tpu.memory_space<vmem>>, vector<256x512xf32>
    %cst_124 = arith.constant dense<0.000000e+00> : vector<8x512xf32>
    %413 = tpu.matmul %411, %412, %cst_124 {dimension_numbers = #tpu.dot_dimension_numbers<[1], [0], [0], [1], [0, 0, 1, 1], [], []>} : vector<8x256xf32>, vector<256x512xf32>, vector<8x512xf32> -> vector<8x512xf32>
    %c0_125 = arith.constant 0 : index
    %c0_126 = arith.constant 0 : index
    %414 = vector.load %arg3[%c0_125, %c0_126] : memref<1x512xf32, #tpu.memory_space<vmem>>, vector<1x512xf32>
    %415 = vector.broadcast %414 : vector<1x512xf32> to vector<8x512xf32>
    %416 = arith.addf %413, %415 : vector<8x512xf32>
    %417 = vector.extract_strided_slice %416 {offsets = [0, 0], sizes = [8, 384], strides = [1, 1]} : vector<8x512xf32> to vector<8x384xf32>
    %418 = arith.negf %417 : vector<8x384xf32>
    %419 = math.exp %418 : vector<8x384xf32>
    %cst_127 = arith.constant 1.000000e+00 : f32
    %420 = vector.broadcast %cst_127 : f32 to vector<8x384xf32>
    %421 = arith.addf %420, %419 : vector<8x384xf32>
    %422 = arith.divf %420, %421 : vector<8x384xf32>
    %423 = vector.extract_strided_slice %422 {offsets = [0, 0], sizes = [8, 128], strides = [1, 1]} : vector<8x384xf32> to vector<8x128xf32>
    %424 = vector.extract_strided_slice %422 {offsets = [0, 128], sizes = [8, 128], strides = [1, 1]} : vector<8x384xf32> to vector<8x128xf32>
    %425 = vector.extract_strided_slice %422 {offsets = [0, 256], sizes = [8, 128], strides = [1, 1]} : vector<8x384xf32> to vector<8x128xf32>
    %426 = vector.extract_strided_slice %416 {offsets = [0, 384], sizes = [8, 128], strides = [1, 1]} : vector<8x512xf32> to vector<8x128xf32>
    %427 = math.tanh %426 : vector<8x128xf32>
    %428 = arith.mulf %424, %362 : vector<8x128xf32>
    %429 = arith.mulf %423, %427 : vector<8x128xf32>
    %430 = arith.addf %428, %429 : vector<8x128xf32>
    %431 = math.tanh %430 : vector<8x128xf32>
    %432 = arith.mulf %425, %431 : vector<8x128xf32>
    %433 = tpu.concatenate %432, %386 in 1 : vector<8x128xf32>, vector<8x128xf32> -> vector<8x256xf32>
    %c0_128 = arith.constant 0 : index
    %c0_129 = arith.constant 0 : index
    %434 = vector.load %arg4[%c0_128, %c0_129] : memref<256x512xf32, #tpu.memory_space<vmem>>, vector<256x512xf32>
    %cst_130 = arith.constant dense<0.000000e+00> : vector<8x512xf32>
    %435 = tpu.matmul %433, %434, %cst_130 {dimension_numbers = #tpu.dot_dimension_numbers<[1], [0], [0], [1], [0, 0, 1, 1], [], []>} : vector<8x256xf32>, vector<256x512xf32>, vector<8x512xf32> -> vector<8x512xf32>
    %c0_131 = arith.constant 0 : index
    %c0_132 = arith.constant 0 : index
    %436 = vector.load %arg5[%c0_131, %c0_132] : memref<1x512xf32, #tpu.memory_space<vmem>>, vector<1x512xf32>
    %437 = vector.broadcast %436 : vector<1x512xf32> to vector<8x512xf32>
    %438 = arith.addf %435, %437 : vector<8x512xf32>
    %439 = vector.extract_strided_slice %438 {offsets = [0, 0], sizes = [8, 384], strides = [1, 1]} : vector<8x512xf32> to vector<8x384xf32>
    %440 = arith.negf %439 : vector<8x384xf32>
    %441 = math.exp %440 : vector<8x384xf32>
    %cst_133 = arith.constant 1.000000e+00 : f32
    %442 = vector.broadcast %cst_133 : f32 to vector<8x384xf32>
    %443 = arith.addf %442, %441 : vector<8x384xf32>
    %444 = arith.divf %442, %443 : vector<8x384xf32>
    %445 = vector.extract_strided_slice %444 {offsets = [0, 0], sizes = [8, 128], strides = [1, 1]} : vector<8x384xf32> to vector<8x128xf32>
    %446 = vector.extract_strided_slice %444 {offsets = [0, 128], sizes = [8, 128], strides = [1, 1]} : vector<8x384xf32> to vector<8x128xf32>
    %447 = vector.extract_strided_slice %444 {offsets = [0, 256], sizes = [8, 128], strides = [1, 1]} : vector<8x384xf32> to vector<8x128xf32>
    %448 = vector.extract_strided_slice %438 {offsets = [0, 384], sizes = [8, 128], strides = [1, 1]} : vector<8x512xf32> to vector<8x128xf32>
    %449 = math.tanh %448 : vector<8x128xf32>
    %450 = arith.mulf %446, %384 : vector<8x128xf32>
    %451 = arith.mulf %445, %449 : vector<8x128xf32>
    %452 = arith.addf %450, %451 : vector<8x128xf32>
    %453 = math.tanh %452 : vector<8x128xf32>
    %454 = arith.mulf %447, %453 : vector<8x128xf32>
    %455 = tpu.concatenate %454, %408 in 1 : vector<8x128xf32>, vector<8x128xf32> -> vector<8x256xf32>
    %c0_134 = arith.constant 0 : index
    %c0_135 = arith.constant 0 : index
    %456 = vector.load %arg6[%c0_134, %c0_135] : memref<256x512xf32, #tpu.memory_space<vmem>>, vector<256x512xf32>
    %cst_136 = arith.constant dense<0.000000e+00> : vector<8x512xf32>
    %457 = tpu.matmul %455, %456, %cst_136 {dimension_numbers = #tpu.dot_dimension_numbers<[1], [0], [0], [1], [0, 0, 1, 1], [], []>} : vector<8x256xf32>, vector<256x512xf32>, vector<8x512xf32> -> vector<8x512xf32>
    %c0_137 = arith.constant 0 : index
    %c0_138 = arith.constant 0 : index
    %458 = vector.load %arg7[%c0_137, %c0_138] : memref<1x512xf32, #tpu.memory_space<vmem>>, vector<1x512xf32>
    %459 = vector.broadcast %458 : vector<1x512xf32> to vector<8x512xf32>
    %460 = arith.addf %457, %459 : vector<8x512xf32>
    %461 = vector.extract_strided_slice %460 {offsets = [0, 0], sizes = [8, 384], strides = [1, 1]} : vector<8x512xf32> to vector<8x384xf32>
    %462 = arith.negf %461 : vector<8x384xf32>
    %463 = math.exp %462 : vector<8x384xf32>
    %cst_139 = arith.constant 1.000000e+00 : f32
    %464 = vector.broadcast %cst_139 : f32 to vector<8x384xf32>
    %465 = arith.addf %464, %463 : vector<8x384xf32>
    %466 = arith.divf %464, %465 : vector<8x384xf32>
    %467 = vector.extract_strided_slice %466 {offsets = [0, 0], sizes = [8, 128], strides = [1, 1]} : vector<8x384xf32> to vector<8x128xf32>
    %468 = vector.extract_strided_slice %466 {offsets = [0, 128], sizes = [8, 128], strides = [1, 1]} : vector<8x384xf32> to vector<8x128xf32>
    %469 = vector.extract_strided_slice %466 {offsets = [0, 256], sizes = [8, 128], strides = [1, 1]} : vector<8x384xf32> to vector<8x128xf32>
    %470 = vector.extract_strided_slice %460 {offsets = [0, 384], sizes = [8, 128], strides = [1, 1]} : vector<8x512xf32> to vector<8x128xf32>
    %471 = math.tanh %470 : vector<8x128xf32>
    %472 = arith.mulf %468, %406 : vector<8x128xf32>
    %473 = arith.mulf %467, %471 : vector<8x128xf32>
    %474 = arith.addf %472, %473 : vector<8x128xf32>
    %475 = math.tanh %474 : vector<8x128xf32>
    %476 = arith.mulf %469, %475 : vector<8x128xf32>
    %c7 = arith.constant 7 : index
    %c0_140 = arith.constant 0 : index
    %c0_141 = arith.constant 0 : index
    %477 = vector.load %arg1[%c7, %c0_140, %c0_141] : memref<8x8x128xf32, #tpu.memory_space<vmem>>, vector<1x8x128xf32>
    %478 = vector.shape_cast %477 : vector<1x8x128xf32> to vector<8x128xf32>
    %479 = tpu.concatenate %478, %432 in 1 : vector<8x128xf32>, vector<8x128xf32> -> vector<8x256xf32>
    %c0_142 = arith.constant 0 : index
    %c0_143 = arith.constant 0 : index
    %480 = vector.load %arg2[%c0_142, %c0_143] : memref<256x512xf32, #tpu.memory_space<vmem>>, vector<256x512xf32>
    %cst_144 = arith.constant dense<0.000000e+00> : vector<8x512xf32>
    %481 = tpu.matmul %479, %480, %cst_144 {dimension_numbers = #tpu.dot_dimension_numbers<[1], [0], [0], [1], [0, 0, 1, 1], [], []>} : vector<8x256xf32>, vector<256x512xf32>, vector<8x512xf32> -> vector<8x512xf32>
    %c0_145 = arith.constant 0 : index
    %c0_146 = arith.constant 0 : index
    %482 = vector.load %arg3[%c0_145, %c0_146] : memref<1x512xf32, #tpu.memory_space<vmem>>, vector<1x512xf32>
    %483 = vector.broadcast %482 : vector<1x512xf32> to vector<8x512xf32>
    %484 = arith.addf %481, %483 : vector<8x512xf32>
    %485 = vector.extract_strided_slice %484 {offsets = [0, 0], sizes = [8, 384], strides = [1, 1]} : vector<8x512xf32> to vector<8x384xf32>
    %486 = arith.negf %485 : vector<8x384xf32>
    %487 = math.exp %486 : vector<8x384xf32>
    %cst_147 = arith.constant 1.000000e+00 : f32
    %488 = vector.broadcast %cst_147 : f32 to vector<8x384xf32>
    %489 = arith.addf %488, %487 : vector<8x384xf32>
    %490 = arith.divf %488, %489 : vector<8x384xf32>
    %491 = vector.extract_strided_slice %490 {offsets = [0, 0], sizes = [8, 128], strides = [1, 1]} : vector<8x384xf32> to vector<8x128xf32>
    %492 = vector.extract_strided_slice %490 {offsets = [0, 128], sizes = [8, 128], strides = [1, 1]} : vector<8x384xf32> to vector<8x128xf32>
    %493 = vector.extract_strided_slice %490 {offsets = [0, 256], sizes = [8, 128], strides = [1, 1]} : vector<8x384xf32> to vector<8x128xf32>
    %494 = vector.extract_strided_slice %484 {offsets = [0, 384], sizes = [8, 128], strides = [1, 1]} : vector<8x512xf32> to vector<8x128xf32>
    %495 = math.tanh %494 : vector<8x128xf32>
    %496 = arith.mulf %492, %430 : vector<8x128xf32>
    %497 = arith.mulf %491, %495 : vector<8x128xf32>
    %498 = arith.addf %496, %497 : vector<8x128xf32>
    %499 = math.tanh %498 : vector<8x128xf32>
    %500 = arith.mulf %493, %499 : vector<8x128xf32>
    %501 = tpu.concatenate %500, %454 in 1 : vector<8x128xf32>, vector<8x128xf32> -> vector<8x256xf32>
    %c0_148 = arith.constant 0 : index
    %c0_149 = arith.constant 0 : index
    %502 = vector.load %arg4[%c0_148, %c0_149] : memref<256x512xf32, #tpu.memory_space<vmem>>, vector<256x512xf32>
    %cst_150 = arith.constant dense<0.000000e+00> : vector<8x512xf32>
    %503 = tpu.matmul %501, %502, %cst_150 {dimension_numbers = #tpu.dot_dimension_numbers<[1], [0], [0], [1], [0, 0, 1, 1], [], []>} : vector<8x256xf32>, vector<256x512xf32>, vector<8x512xf32> -> vector<8x512xf32>
    %c0_151 = arith.constant 0 : index
    %c0_152 = arith.constant 0 : index
    %504 = vector.load %arg5[%c0_151, %c0_152] : memref<1x512xf32, #tpu.memory_space<vmem>>, vector<1x512xf32>
    %505 = vector.broadcast %504 : vector<1x512xf32> to vector<8x512xf32>
    %506 = arith.addf %503, %505 : vector<8x512xf32>
    %507 = vector.extract_strided_slice %506 {offsets = [0, 0], sizes = [8, 384], strides = [1, 1]} : vector<8x512xf32> to vector<8x384xf32>
    %508 = arith.negf %507 : vector<8x384xf32>
    %509 = math.exp %508 : vector<8x384xf32>
    %cst_153 = arith.constant 1.000000e+00 : f32
    %510 = vector.broadcast %cst_153 : f32 to vector<8x384xf32>
    %511 = arith.addf %510, %509 : vector<8x384xf32>
    %512 = arith.divf %510, %511 : vector<8x384xf32>
    %513 = vector.extract_strided_slice %512 {offsets = [0, 0], sizes = [8, 128], strides = [1, 1]} : vector<8x384xf32> to vector<8x128xf32>
    %514 = vector.extract_strided_slice %512 {offsets = [0, 128], sizes = [8, 128], strides = [1, 1]} : vector<8x384xf32> to vector<8x128xf32>
    %515 = vector.extract_strided_slice %512 {offsets = [0, 256], sizes = [8, 128], strides = [1, 1]} : vector<8x384xf32> to vector<8x128xf32>
    %516 = vector.extract_strided_slice %506 {offsets = [0, 384], sizes = [8, 128], strides = [1, 1]} : vector<8x512xf32> to vector<8x128xf32>
    %517 = math.tanh %516 : vector<8x128xf32>
    %518 = arith.mulf %514, %452 : vector<8x128xf32>
    %519 = arith.mulf %513, %517 : vector<8x128xf32>
    %520 = arith.addf %518, %519 : vector<8x128xf32>
    %521 = math.tanh %520 : vector<8x128xf32>
    %522 = arith.mulf %515, %521 : vector<8x128xf32>
    %523 = tpu.concatenate %522, %476 in 1 : vector<8x128xf32>, vector<8x128xf32> -> vector<8x256xf32>
    %c0_154 = arith.constant 0 : index
    %c0_155 = arith.constant 0 : index
    %524 = vector.load %arg6[%c0_154, %c0_155] : memref<256x512xf32, #tpu.memory_space<vmem>>, vector<256x512xf32>
    %cst_156 = arith.constant dense<0.000000e+00> : vector<8x512xf32>
    %525 = tpu.matmul %523, %524, %cst_156 {dimension_numbers = #tpu.dot_dimension_numbers<[1], [0], [0], [1], [0, 0, 1, 1], [], []>} : vector<8x256xf32>, vector<256x512xf32>, vector<8x512xf32> -> vector<8x512xf32>
    %c0_157 = arith.constant 0 : index
    %c0_158 = arith.constant 0 : index
    %526 = vector.load %arg7[%c0_157, %c0_158] : memref<1x512xf32, #tpu.memory_space<vmem>>, vector<1x512xf32>
    %527 = vector.broadcast %526 : vector<1x512xf32> to vector<8x512xf32>
    %528 = arith.addf %525, %527 : vector<8x512xf32>
    %529 = vector.extract_strided_slice %528 {offsets = [0, 0], sizes = [8, 384], strides = [1, 1]} : vector<8x512xf32> to vector<8x384xf32>
    %530 = arith.negf %529 : vector<8x384xf32>
    %531 = math.exp %530 : vector<8x384xf32>
    %cst_159 = arith.constant 1.000000e+00 : f32
    %532 = vector.broadcast %cst_159 : f32 to vector<8x384xf32>
    %533 = arith.addf %532, %531 : vector<8x384xf32>
    %534 = arith.divf %532, %533 : vector<8x384xf32>
    %535 = vector.extract_strided_slice %534 {offsets = [0, 0], sizes = [8, 128], strides = [1, 1]} : vector<8x384xf32> to vector<8x128xf32>
    %536 = vector.extract_strided_slice %534 {offsets = [0, 128], sizes = [8, 128], strides = [1, 1]} : vector<8x384xf32> to vector<8x128xf32>
    %537 = vector.extract_strided_slice %534 {offsets = [0, 256], sizes = [8, 128], strides = [1, 1]} : vector<8x384xf32> to vector<8x128xf32>
    %538 = vector.extract_strided_slice %528 {offsets = [0, 384], sizes = [8, 128], strides = [1, 1]} : vector<8x512xf32> to vector<8x128xf32>
    %539 = math.tanh %538 : vector<8x128xf32>
    %540 = arith.mulf %536, %474 : vector<8x128xf32>
    %541 = arith.mulf %535, %539 : vector<8x128xf32>
    %542 = arith.addf %540, %541 : vector<8x128xf32>
    %543 = math.tanh %542 : vector<8x128xf32>
    %544 = arith.mulf %537, %543 : vector<8x128xf32>
    %c7_160 = arith.constant 7 : index
    %c0_161 = arith.constant 0 : index
    %c0_162 = arith.constant 0 : index
    %545 = vector.load %arg1[%c7_160, %c0_161, %c0_162] : memref<8x8x128xf32, #tpu.memory_space<vmem>>, vector<1x8x128xf32>
    %546 = vector.shape_cast %545 : vector<1x8x128xf32> to vector<8x128xf32>
    %547 = tpu.concatenate %546, %544 in 1 : vector<8x128xf32>, vector<8x128xf32> -> vector<8x256xf32>
    %c0_163 = arith.constant 0 : index
    %c0_164 = arith.constant 0 : index
    %548 = vector.load %arg8[%c0_163, %c0_164] : memref<256x512xf32, #tpu.memory_space<vmem>>, vector<256x512xf32>
    %cst_165 = arith.constant dense<0.000000e+00> : vector<8x512xf32>
    %549 = tpu.matmul %547, %548, %cst_165 {dimension_numbers = #tpu.dot_dimension_numbers<[1], [0], [0], [1], [0, 0, 1, 1], [], []>} : vector<8x256xf32>, vector<256x512xf32>, vector<8x512xf32> -> vector<8x512xf32>
    %c0_166 = arith.constant 0 : index
    %c0_167 = arith.constant 0 : index
    %550 = vector.load %arg9[%c0_166, %c0_167] : memref<1x512xf32, #tpu.memory_space<vmem>>, vector<1x512xf32>
    %551 = vector.broadcast %550 : vector<1x512xf32> to vector<8x512xf32>
    %552 = arith.addf %549, %551 : vector<8x512xf32>
    %553 = vector.extract_strided_slice %552 {offsets = [0, 0], sizes = [8, 384], strides = [1, 1]} : vector<8x512xf32> to vector<8x384xf32>
    %554 = arith.negf %553 : vector<8x384xf32>
    %555 = math.exp %554 : vector<8x384xf32>
    %cst_168 = arith.constant 1.000000e+00 : f32
    %556 = vector.broadcast %cst_168 : f32 to vector<8x384xf32>
    %557 = arith.addf %556, %555 : vector<8x384xf32>
    %558 = arith.divf %556, %557 : vector<8x384xf32>
    %559 = vector.extract_strided_slice %558 {offsets = [0, 0], sizes = [8, 128], strides = [1, 1]} : vector<8x384xf32> to vector<8x128xf32>
    %560 = vector.extract_strided_slice %558 {offsets = [0, 128], sizes = [8, 128], strides = [1, 1]} : vector<8x384xf32> to vector<8x128xf32>
    %561 = vector.extract_strided_slice %558 {offsets = [0, 256], sizes = [8, 128], strides = [1, 1]} : vector<8x384xf32> to vector<8x128xf32>
    %562 = vector.extract_strided_slice %552 {offsets = [0, 384], sizes = [8, 128], strides = [1, 1]} : vector<8x512xf32> to vector<8x128xf32>
    %563 = math.tanh %562 : vector<8x128xf32>
    %564 = arith.mulf %560, %542 : vector<8x128xf32>
    %565 = arith.mulf %559, %563 : vector<8x128xf32>
    %566 = arith.addf %564, %565 : vector<8x128xf32>
    %567 = math.tanh %566 : vector<8x128xf32>
    %568 = arith.mulf %561, %567 : vector<8x128xf32>
    %c0_169 = arith.constant 0 : index
    %c0_170 = arith.constant 0 : index
    %569 = vector.load %arg10[%c0_169, %c0_170] : memref<128x128xf32, #tpu.memory_space<vmem>>, vector<128x128xf32>
    %cst_171 = arith.constant dense<0.000000e+00> : vector<8x128xf32>
    %570 = tpu.matmul %568, %569, %cst_171 {dimension_numbers = #tpu.dot_dimension_numbers<[1], [0], [0], [1], [0, 0, 1, 1], [], []>} : vector<8x128xf32>, vector<128x128xf32>, vector<8x128xf32> -> vector<8x128xf32>
    %c0_172 = arith.constant 0 : index
    %c0_173 = arith.constant 0 : index
    %571 = vector.load %arg11[%c0_172, %c0_173] : memref<1x128xf32, #tpu.memory_space<vmem>>, vector<1x128xf32>
    %572 = vector.broadcast %571 : vector<1x128xf32> to vector<8x128xf32>
    %573 = arith.addf %570, %572 : vector<8x128xf32>
    %c0_174 = arith.constant 0 : index
    %c0_175 = arith.constant 0 : index
    %c0_176 = arith.constant 0 : index
    %574 = vector.load %arg12[%c0_174, %c0_175, %c0_176] : memref<6x8x128xf32, #tpu.memory_space<vmem>>, vector<1x8x128xf32>
    %575 = vector.shape_cast %574 : vector<1x8x128xf32> to vector<8x128xf32>
    %576 = vector.shape_cast %573 : vector<8x128xf32> to vector<1x8x128xf32>
    tpu.vector_store %arg12[%c0_174, %c0_175, %c0_176], %576 {strides = array<i32>} : memref<6x8x128xf32, #tpu.memory_space<vmem>>, vector<1x8x128xf32>,
    %577 = tpu.concatenate %573, %568 in 1 : vector<8x128xf32>, vector<8x128xf32> -> vector<8x256xf32>
    %c0_177 = arith.constant 0 : index
    %c0_178 = arith.constant 0 : index
    %578 = vector.load %arg8[%c0_177, %c0_178] : memref<256x512xf32, #tpu.memory_space<vmem>>, vector<256x512xf32>
    %cst_179 = arith.constant dense<0.000000e+00> : vector<8x512xf32>
    %579 = tpu.matmul %577, %578, %cst_179 {dimension_numbers = #tpu.dot_dimension_numbers<[1], [0], [0], [1], [0, 0, 1, 1], [], []>} : vector<8x256xf32>, vector<256x512xf32>, vector<8x512xf32> -> vector<8x512xf32>
    %c0_180 = arith.constant 0 : index
    %c0_181 = arith.constant 0 : index
    %580 = vector.load %arg9[%c0_180, %c0_181] : memref<1x512xf32, #tpu.memory_space<vmem>>, vector<1x512xf32>
    %581 = vector.broadcast %580 : vector<1x512xf32> to vector<8x512xf32>
    %582 = arith.addf %579, %581 : vector<8x512xf32>
    %583 = vector.extract_strided_slice %582 {offsets = [0, 0], sizes = [8, 384], strides = [1, 1]} : vector<8x512xf32> to vector<8x384xf32>
    %584 = arith.negf %583 : vector<8x384xf32>
    %585 = math.exp %584 : vector<8x384xf32>
    %cst_182 = arith.constant 1.000000e+00 : f32
    %586 = vector.broadcast %cst_182 : f32 to vector<8x384xf32>
    %587 = arith.addf %586, %585 : vector<8x384xf32>
    %588 = arith.divf %586, %587 : vector<8x384xf32>
    %589 = vector.extract_strided_slice %588 {offsets = [0, 0], sizes = [8, 128], strides = [1, 1]} : vector<8x384xf32> to vector<8x128xf32>
    %590 = vector.extract_strided_slice %588 {offsets = [0, 128], sizes = [8, 128], strides = [1, 1]} : vector<8x384xf32> to vector<8x128xf32>
    %591 = vector.extract_strided_slice %588 {offsets = [0, 256], sizes = [8, 128], strides = [1, 1]} : vector<8x384xf32> to vector<8x128xf32>
    %592 = vector.extract_strided_slice %582 {offsets = [0, 384], sizes = [8, 128], strides = [1, 1]} : vector<8x512xf32> to vector<8x128xf32>
    %593 = math.tanh %592 : vector<8x128xf32>
    %594 = arith.mulf %590, %566 : vector<8x128xf32>
    %595 = arith.mulf %589, %593 : vector<8x128xf32>
    %596 = arith.addf %594, %595 : vector<8x128xf32>
    %597 = math.tanh %596 : vector<8x128xf32>
    %598 = arith.mulf %591, %597 : vector<8x128xf32>
    %c0_183 = arith.constant 0 : index
    %c0_184 = arith.constant 0 : index
    %599 = vector.load %arg10[%c0_183, %c0_184] : memref<128x128xf32, #tpu.memory_space<vmem>>, vector<128x128xf32>
    %cst_185 = arith.constant dense<0.000000e+00> : vector<8x128xf32>
    %600 = tpu.matmul %598, %599, %cst_185 {dimension_numbers = #tpu.dot_dimension_numbers<[1], [0], [0], [1], [0, 0, 1, 1], [], []>} : vector<8x128xf32>, vector<128x128xf32>, vector<8x128xf32> -> vector<8x128xf32>
    %c0_186 = arith.constant 0 : index
    %c0_187 = arith.constant 0 : index
    %601 = vector.load %arg11[%c0_186, %c0_187] : memref<1x128xf32, #tpu.memory_space<vmem>>, vector<1x128xf32>
    %602 = vector.broadcast %601 : vector<1x128xf32> to vector<8x128xf32>
    %603 = arith.addf %600, %602 : vector<8x128xf32>
    %c1_188 = arith.constant 1 : index
    %c0_189 = arith.constant 0 : index
    %c0_190 = arith.constant 0 : index
    %604 = vector.load %arg12[%c1_188, %c0_189, %c0_190] : memref<6x8x128xf32, #tpu.memory_space<vmem>>, vector<1x8x128xf32>
    %605 = vector.shape_cast %604 : vector<1x8x128xf32> to vector<8x128xf32>
    %606 = vector.shape_cast %603 : vector<8x128xf32> to vector<1x8x128xf32>
    tpu.vector_store %arg12[%c1_188, %c0_189, %c0_190], %606 {strides = array<i32>} : memref<6x8x128xf32, #tpu.memory_space<vmem>>, vector<1x8x128xf32>,
    %607 = tpu.concatenate %603, %598 in 1 : vector<8x128xf32>, vector<8x128xf32> -> vector<8x256xf32>
    %c0_191 = arith.constant 0 : index
    %c0_192 = arith.constant 0 : index
    %608 = vector.load %arg8[%c0_191, %c0_192] : memref<256x512xf32, #tpu.memory_space<vmem>>, vector<256x512xf32>
    %cst_193 = arith.constant dense<0.000000e+00> : vector<8x512xf32>
    %609 = tpu.matmul %607, %608, %cst_193 {dimension_numbers = #tpu.dot_dimension_numbers<[1], [0], [0], [1], [0, 0, 1, 1], [], []>} : vector<8x256xf32>, vector<256x512xf32>, vector<8x512xf32> -> vector<8x512xf32>
    %c0_194 = arith.constant 0 : index
    %c0_195 = arith.constant 0 : index
    %610 = vector.load %arg9[%c0_194, %c0_195] : memref<1x512xf32, #tpu.memory_space<vmem>>, vector<1x512xf32>
    %611 = vector.broadcast %610 : vector<1x512xf32> to vector<8x512xf32>
    %612 = arith.addf %609, %611 : vector<8x512xf32>
    %613 = vector.extract_strided_slice %612 {offsets = [0, 0], sizes = [8, 384], strides = [1, 1]} : vector<8x512xf32> to vector<8x384xf32>
    %614 = arith.negf %613 : vector<8x384xf32>
    %615 = math.exp %614 : vector<8x384xf32>
    %cst_196 = arith.constant 1.000000e+00 : f32
    %616 = vector.broadcast %cst_196 : f32 to vector<8x384xf32>
    %617 = arith.addf %616, %615 : vector<8x384xf32>
    %618 = arith.divf %616, %617 : vector<8x384xf32>
    %619 = vector.extract_strided_slice %618 {offsets = [0, 0], sizes = [8, 128], strides = [1, 1]} : vector<8x384xf32> to vector<8x128xf32>
    %620 = vector.extract_strided_slice %618 {offsets = [0, 128], sizes = [8, 128], strides = [1, 1]} : vector<8x384xf32> to vector<8x128xf32>
    %621 = vector.extract_strided_slice %618 {offsets = [0, 256], sizes = [8, 128], strides = [1, 1]} : vector<8x384xf32> to vector<8x128xf32>
    %622 = vector.extract_strided_slice %612 {offsets = [0, 384], sizes = [8, 128], strides = [1, 1]} : vector<8x512xf32> to vector<8x128xf32>
    %623 = math.tanh %622 : vector<8x128xf32>
    %624 = arith.mulf %620, %596 : vector<8x128xf32>
    %625 = arith.mulf %619, %623 : vector<8x128xf32>
    %626 = arith.addf %624, %625 : vector<8x128xf32>
    %627 = math.tanh %626 : vector<8x128xf32>
    %628 = arith.mulf %621, %627 : vector<8x128xf32>
    %c0_197 = arith.constant 0 : index
    %c0_198 = arith.constant 0 : index
    %629 = vector.load %arg10[%c0_197, %c0_198] : memref<128x128xf32, #tpu.memory_space<vmem>>, vector<128x128xf32>
    %cst_199 = arith.constant dense<0.000000e+00> : vector<8x128xf32>
    %630 = tpu.matmul %628, %629, %cst_199 {dimension_numbers = #tpu.dot_dimension_numbers<[1], [0], [0], [1], [0, 0, 1, 1], [], []>} : vector<8x128xf32>, vector<128x128xf32>, vector<8x128xf32> -> vector<8x128xf32>
    %c0_200 = arith.constant 0 : index
    %c0_201 = arith.constant 0 : index
    %631 = vector.load %arg11[%c0_200, %c0_201] : memref<1x128xf32, #tpu.memory_space<vmem>>, vector<1x128xf32>
    %632 = vector.broadcast %631 : vector<1x128xf32> to vector<8x128xf32>
    %633 = arith.addf %630, %632 : vector<8x128xf32>
    %c2_202 = arith.constant 2 : index
    %c0_203 = arith.constant 0 : index
    %c0_204 = arith.constant 0 : index
    %634 = vector.load %arg12[%c2_202, %c0_203, %c0_204] : memref<6x8x128xf32, #tpu.memory_space<vmem>>, vector<1x8x128xf32>
    %635 = vector.shape_cast %634 : vector<1x8x128xf32> to vector<8x128xf32>
    %636 = vector.shape_cast %633 : vector<8x128xf32> to vector<1x8x128xf32>
    tpu.vector_store %arg12[%c2_202, %c0_203, %c0_204], %636 {strides = array<i32>} : memref<6x8x128xf32, #tpu.memory_space<vmem>>, vector<1x8x128xf32>,
    %637 = tpu.concatenate %633, %628 in 1 : vector<8x128xf32>, vector<8x128xf32> -> vector<8x256xf32>
    %c0_205 = arith.constant 0 : index
    %c0_206 = arith.constant 0 : index
    %638 = vector.load %arg8[%c0_205, %c0_206] : memref<256x512xf32, #tpu.memory_space<vmem>>, vector<256x512xf32>
    %cst_207 = arith.constant dense<0.000000e+00> : vector<8x512xf32>
    %639 = tpu.matmul %637, %638, %cst_207 {dimension_numbers = #tpu.dot_dimension_numbers<[1], [0], [0], [1], [0, 0, 1, 1], [], []>} : vector<8x256xf32>, vector<256x512xf32>, vector<8x512xf32> -> vector<8x512xf32>
    %c0_208 = arith.constant 0 : index
    %c0_209 = arith.constant 0 : index
    %640 = vector.load %arg9[%c0_208, %c0_209] : memref<1x512xf32, #tpu.memory_space<vmem>>, vector<1x512xf32>
    %641 = vector.broadcast %640 : vector<1x512xf32> to vector<8x512xf32>
    %642 = arith.addf %639, %641 : vector<8x512xf32>
    %643 = vector.extract_strided_slice %642 {offsets = [0, 0], sizes = [8, 384], strides = [1, 1]} : vector<8x512xf32> to vector<8x384xf32>
    %644 = arith.negf %643 : vector<8x384xf32>
    %645 = math.exp %644 : vector<8x384xf32>
    %cst_210 = arith.constant 1.000000e+00 : f32
    %646 = vector.broadcast %cst_210 : f32 to vector<8x384xf32>
    %647 = arith.addf %646, %645 : vector<8x384xf32>
    %648 = arith.divf %646, %647 : vector<8x384xf32>
    %649 = vector.extract_strided_slice %648 {offsets = [0, 0], sizes = [8, 128], strides = [1, 1]} : vector<8x384xf32> to vector<8x128xf32>
    %650 = vector.extract_strided_slice %648 {offsets = [0, 128], sizes = [8, 128], strides = [1, 1]} : vector<8x384xf32> to vector<8x128xf32>
    %651 = vector.extract_strided_slice %648 {offsets = [0, 256], sizes = [8, 128], strides = [1, 1]} : vector<8x384xf32> to vector<8x128xf32>
    %652 = vector.extract_strided_slice %642 {offsets = [0, 384], sizes = [8, 128], strides = [1, 1]} : vector<8x512xf32> to vector<8x128xf32>
    %653 = math.tanh %652 : vector<8x128xf32>
    %654 = arith.mulf %650, %626 : vector<8x128xf32>
    %655 = arith.mulf %649, %653 : vector<8x128xf32>
    %656 = arith.addf %654, %655 : vector<8x128xf32>
    %657 = math.tanh %656 : vector<8x128xf32>
    %658 = arith.mulf %651, %657 : vector<8x128xf32>
    %c0_211 = arith.constant 0 : index
    %c0_212 = arith.constant 0 : index
    %659 = vector.load %arg10[%c0_211, %c0_212] : memref<128x128xf32, #tpu.memory_space<vmem>>, vector<128x128xf32>
    %cst_213 = arith.constant dense<0.000000e+00> : vector<8x128xf32>
    %660 = tpu.matmul %658, %659, %cst_213 {dimension_numbers = #tpu.dot_dimension_numbers<[1], [0], [0], [1], [0, 0, 1, 1], [], []>} : vector<8x128xf32>, vector<128x128xf32>, vector<8x128xf32> -> vector<8x128xf32>
    %c0_214 = arith.constant 0 : index
    %c0_215 = arith.constant 0 : index
    %661 = vector.load %arg11[%c0_214, %c0_215] : memref<1x128xf32, #tpu.memory_space<vmem>>, vector<1x128xf32>
    %662 = vector.broadcast %661 : vector<1x128xf32> to vector<8x128xf32>
    %663 = arith.addf %660, %662 : vector<8x128xf32>
    %c3_216 = arith.constant 3 : index
    %c0_217 = arith.constant 0 : index
    %c0_218 = arith.constant 0 : index
    %664 = vector.load %arg12[%c3_216, %c0_217, %c0_218] : memref<6x8x128xf32, #tpu.memory_space<vmem>>, vector<1x8x128xf32>
    %665 = vector.shape_cast %664 : vector<1x8x128xf32> to vector<8x128xf32>
    %666 = vector.shape_cast %663 : vector<8x128xf32> to vector<1x8x128xf32>
    tpu.vector_store %arg12[%c3_216, %c0_217, %c0_218], %666 {strides = array<i32>} : memref<6x8x128xf32, #tpu.memory_space<vmem>>, vector<1x8x128xf32>,
    %667 = tpu.concatenate %663, %658 in 1 : vector<8x128xf32>, vector<8x128xf32> -> vector<8x256xf32>
    %c0_219 = arith.constant 0 : index
    %c0_220 = arith.constant 0 : index
    %668 = vector.load %arg8[%c0_219, %c0_220] : memref<256x512xf32, #tpu.memory_space<vmem>>, vector<256x512xf32>
    %cst_221 = arith.constant dense<0.000000e+00> : vector<8x512xf32>
    %669 = tpu.matmul %667, %668, %cst_221 {dimension_numbers = #tpu.dot_dimension_numbers<[1], [0], [0], [1], [0, 0, 1, 1], [], []>} : vector<8x256xf32>, vector<256x512xf32>, vector<8x512xf32> -> vector<8x512xf32>
    %c0_222 = arith.constant 0 : index
    %c0_223 = arith.constant 0 : index
    %670 = vector.load %arg9[%c0_222, %c0_223] : memref<1x512xf32, #tpu.memory_space<vmem>>, vector<1x512xf32>
    %671 = vector.broadcast %670 : vector<1x512xf32> to vector<8x512xf32>
    %672 = arith.addf %669, %671 : vector<8x512xf32>
    %673 = vector.extract_strided_slice %672 {offsets = [0, 0], sizes = [8, 384], strides = [1, 1]} : vector<8x512xf32> to vector<8x384xf32>
    %674 = arith.negf %673 : vector<8x384xf32>
    %675 = math.exp %674 : vector<8x384xf32>
    %cst_224 = arith.constant 1.000000e+00 : f32
    %676 = vector.broadcast %cst_224 : f32 to vector<8x384xf32>
    %677 = arith.addf %676, %675 : vector<8x384xf32>
    %678 = arith.divf %676, %677 : vector<8x384xf32>
    %679 = vector.extract_strided_slice %678 {offsets = [0, 0], sizes = [8, 128], strides = [1, 1]} : vector<8x384xf32> to vector<8x128xf32>
    %680 = vector.extract_strided_slice %678 {offsets = [0, 128], sizes = [8, 128], strides = [1, 1]} : vector<8x384xf32> to vector<8x128xf32>
    %681 = vector.extract_strided_slice %678 {offsets = [0, 256], sizes = [8, 128], strides = [1, 1]} : vector<8x384xf32> to vector<8x128xf32>
    %682 = vector.extract_strided_slice %672 {offsets = [0, 384], sizes = [8, 128], strides = [1, 1]} : vector<8x512xf32> to vector<8x128xf32>
    %683 = math.tanh %682 : vector<8x128xf32>
    %684 = arith.mulf %680, %656 : vector<8x128xf32>
    %685 = arith.mulf %679, %683 : vector<8x128xf32>
    %686 = arith.addf %684, %685 : vector<8x128xf32>
    %687 = math.tanh %686 : vector<8x128xf32>
    %688 = arith.mulf %681, %687 : vector<8x128xf32>
    %c0_225 = arith.constant 0 : index
    %c0_226 = arith.constant 0 : index
    %689 = vector.load %arg10[%c0_225, %c0_226] : memref<128x128xf32, #tpu.memory_space<vmem>>, vector<128x128xf32>
    %cst_227 = arith.constant dense<0.000000e+00> : vector<8x128xf32>
    %690 = tpu.matmul %688, %689, %cst_227 {dimension_numbers = #tpu.dot_dimension_numbers<[1], [0], [0], [1], [0, 0, 1, 1], [], []>} : vector<8x128xf32>, vector<128x128xf32>, vector<8x128xf32> -> vector<8x128xf32>
    %c0_228 = arith.constant 0 : index
    %c0_229 = arith.constant 0 : index
    %691 = vector.load %arg11[%c0_228, %c0_229] : memref<1x128xf32, #tpu.memory_space<vmem>>, vector<1x128xf32>
    %692 = vector.broadcast %691 : vector<1x128xf32> to vector<8x128xf32>
    %693 = arith.addf %690, %692 : vector<8x128xf32>
    %c4_230 = arith.constant 4 : index
    %c0_231 = arith.constant 0 : index
    %c0_232 = arith.constant 0 : index
    %694 = vector.load %arg12[%c4_230, %c0_231, %c0_232] : memref<6x8x128xf32, #tpu.memory_space<vmem>>, vector<1x8x128xf32>
    %695 = vector.shape_cast %694 : vector<1x8x128xf32> to vector<8x128xf32>
    %696 = vector.shape_cast %693 : vector<8x128xf32> to vector<1x8x128xf32>
    tpu.vector_store %arg12[%c4_230, %c0_231, %c0_232], %696 {strides = array<i32>} : memref<6x8x128xf32, #tpu.memory_space<vmem>>, vector<1x8x128xf32>,
    %697 = tpu.concatenate %693, %688 in 1 : vector<8x128xf32>, vector<8x128xf32> -> vector<8x256xf32>
    %c0_233 = arith.constant 0 : index
    %c0_234 = arith.constant 0 : index
    %698 = vector.load %arg8[%c0_233, %c0_234] : memref<256x512xf32, #tpu.memory_space<vmem>>, vector<256x512xf32>
    %cst_235 = arith.constant dense<0.000000e+00> : vector<8x512xf32>
    %699 = tpu.matmul %697, %698, %cst_235 {dimension_numbers = #tpu.dot_dimension_numbers<[1], [0], [0], [1], [0, 0, 1, 1], [], []>} : vector<8x256xf32>, vector<256x512xf32>, vector<8x512xf32> -> vector<8x512xf32>
    %c0_236 = arith.constant 0 : index
    %c0_237 = arith.constant 0 : index
    %700 = vector.load %arg9[%c0_236, %c0_237] : memref<1x512xf32, #tpu.memory_space<vmem>>, vector<1x512xf32>
    %701 = vector.broadcast %700 : vector<1x512xf32> to vector<8x512xf32>
    %702 = arith.addf %699, %701 : vector<8x512xf32>
    %703 = vector.extract_strided_slice %702 {offsets = [0, 0], sizes = [8, 384], strides = [1, 1]} : vector<8x512xf32> to vector<8x384xf32>
    %704 = arith.negf %703 : vector<8x384xf32>
    %705 = math.exp %704 : vector<8x384xf32>
    %cst_238 = arith.constant 1.000000e+00 : f32
    %706 = vector.broadcast %cst_238 : f32 to vector<8x384xf32>
    %707 = arith.addf %706, %705 : vector<8x384xf32>
    %708 = arith.divf %706, %707 : vector<8x384xf32>
    %709 = vector.extract_strided_slice %708 {offsets = [0, 0], sizes = [8, 128], strides = [1, 1]} : vector<8x384xf32> to vector<8x128xf32>
    %710 = vector.extract_strided_slice %708 {offsets = [0, 128], sizes = [8, 128], strides = [1, 1]} : vector<8x384xf32> to vector<8x128xf32>
    %711 = vector.extract_strided_slice %708 {offsets = [0, 256], sizes = [8, 128], strides = [1, 1]} : vector<8x384xf32> to vector<8x128xf32>
    %712 = vector.extract_strided_slice %702 {offsets = [0, 384], sizes = [8, 128], strides = [1, 1]} : vector<8x512xf32> to vector<8x128xf32>
    %713 = math.tanh %712 : vector<8x128xf32>
    %714 = arith.mulf %710, %686 : vector<8x128xf32>
    %715 = arith.mulf %709, %713 : vector<8x128xf32>
    %716 = arith.addf %714, %715 : vector<8x128xf32>
    %717 = math.tanh %716 : vector<8x128xf32>
    %718 = arith.mulf %711, %717 : vector<8x128xf32>
    %c0_239 = arith.constant 0 : index
    %c0_240 = arith.constant 0 : index
    %719 = vector.load %arg10[%c0_239, %c0_240] : memref<128x128xf32, #tpu.memory_space<vmem>>, vector<128x128xf32>
    %cst_241 = arith.constant dense<0.000000e+00> : vector<8x128xf32>
    %720 = tpu.matmul %718, %719, %cst_241 {dimension_numbers = #tpu.dot_dimension_numbers<[1], [0], [0], [1], [0, 0, 1, 1], [], []>} : vector<8x128xf32>, vector<128x128xf32>, vector<8x128xf32> -> vector<8x128xf32>
    %c0_242 = arith.constant 0 : index
    %c0_243 = arith.constant 0 : index
    %721 = vector.load %arg11[%c0_242, %c0_243] : memref<1x128xf32, #tpu.memory_space<vmem>>, vector<1x128xf32>
    %722 = vector.broadcast %721 : vector<1x128xf32> to vector<8x128xf32>
    %723 = arith.addf %720, %722 : vector<8x128xf32>
    %c5_244 = arith.constant 5 : index
    %c0_245 = arith.constant 0 : index
    %c0_246 = arith.constant 0 : index
    %724 = vector.load %arg12[%c5_244, %c0_245, %c0_246] : memref<6x8x128xf32, #tpu.memory_space<vmem>>, vector<1x8x128xf32>
    %725 = vector.shape_cast %724 : vector<1x8x128xf32> to vector<8x128xf32>
    %726 = vector.shape_cast %723 : vector<8x128xf32> to vector<1x8x128xf32>
    tpu.vector_store %arg12[%c5_244, %c0_245, %c0_246], %726 {strides = array<i32>} : memref<6x8x128xf32, #tpu.memory_space<vmem>>, vector<1x8x128xf32>,
    return
  }
  func.func @transform_0(%arg0: i32) -> (i32, i32, i32) {
    %c0_i32 = arith.constant 0 : i32
    %c0_i32_0 = arith.constant 0 : i32
    %c0_i32_1 = arith.constant 0 : i32
    %c0_i32_2 = arith.constant 0 : i32
    return %c0_i32, %c0_i32_0, %c0_i32_1 : i32, i32, i32
  }
  func.func @transform_1(%arg0: i32) -> (i32, i32) {
    %c0_i32 = arith.constant 0 : i32
    %c0_i32_0 = arith.constant 0 : i32
    %c0_i32_1 = arith.constant 0 : i32
    return %c0_i32, %c0_i32_0 : i32, i32
  }
  func.func @transform_2(%arg0: i32) -> (i32, i32) {
    %c0_i32 = arith.constant 0 : i32
    %c0_i32_0 = arith.constant 0 : i32
    %c0_i32_1 = arith.constant 0 : i32
    return %c0_i32, %c0_i32_0 : i32, i32
  }
  func.func @transform_3(%arg0: i32) -> (i32, i32) {
    %c0_i32 = arith.constant 0 : i32
    %c0_i32_0 = arith.constant 0 : i32
    %c0_i32_1 = arith.constant 0 : i32
    return %c0_i32, %c0_i32_0 : i32, i32
  }
  func.func @transform_4(%arg0: i32) -> (i32, i32) {
    %c0_i32 = arith.constant 0 : i32
    %c0_i32_0 = arith.constant 0 : i32
    %c0_i32_1 = arith.constant 0 : i32
    return %c0_i32, %c0_i32_0 : i32, i32
  }
  func.func @transform_5(%arg0: i32) -> (i32, i32) {
    %c0_i32 = arith.constant 0 : i32
    %c0_i32_0 = arith.constant 0 : i32
    %c0_i32_1 = arith.constant 0 : i32
    return %c0_i32, %c0_i32_0 : i32, i32
  }
  func.func @transform_6(%arg0: i32) -> (i32, i32) {
    %c0_i32 = arith.constant 0 : i32
    %c0_i32_0 = arith.constant 0 : i32
    %c0_i32_1 = arith.constant 0 : i32
    return %c0_i32, %c0_i32_0 : i32, i32
  }
  func.func @transform_7(%arg0: i32) -> (i32, i32) {
    %c0_i32 = arith.constant 0 : i32
    %c0_i32_0 = arith.constant 0 : i32
    %c0_i32_1 = arith.constant 0 : i32
    return %c0_i32, %c0_i32_0 : i32, i32
  }
  func.func @transform_8(%arg0: i32) -> (i32, i32) {
    %c0_i32 = arith.constant 0 : i32
    %c0_i32_0 = arith.constant 0 : i32
    %c0_i32_1 = arith.constant 0 : i32
    return %c0_i32, %c0_i32_0 : i32, i32
  }
  func.func @transform_9(%arg0: i32) -> (i32, i32) {
    %c0_i32 = arith.constant 0 : i32
    %c0_i32_0 = arith.constant 0 : i32
    %c0_i32_1 = arith.constant 0 : i32
    return %c0_i32, %c0_i32_0 : i32, i32
  }
  func.func @transform_10(%arg0: i32) -> (i32, i32) {
    %c0_i32 = arith.constant 0 : i32
    %c0_i32_0 = arith.constant 0 : i32
    %c0_i32_1 = arith.constant 0 : i32
    return %c0_i32, %c0_i32_0 : i32, i32
  }
  func.func @transform_11(%arg0: i32) -> (i32, i32, i32) {
    %c0_i32 = arith.constant 0 : i32
    %c0_i32_0 = arith.constant 0 : i32
    %c0_i32_1 = arith.constant 0 : i32
    %c0_i32_2 = arith.constant 0 : i32
    return %c0_i32, %c0_i32_0, %c0_i32_1 : i32, i32, i32
  }
}

</mosaic_0001>

<llo_original>
// kernel: lstm_autoencoder_forward.1
$region0: #{lstm_autoencoder_forward.1}
  #allocation0 [shape = 'u32[]', space=smem, size = 0x4, offset = 0x4, fixed_abs, tag = 'smem constant byte address 0x4 - core index']
  #allocation1 [shape = 'u32[144,128]{1,0:T(1,128)}', space=vmem, size = 0x12000, scoped, tag = 'internal scratch']
  %s0 = inlined_call_operand.hbm [shape: f32[8,8,128], index: 0, kind: input, shape index: {}]
  %s1 = inlined_call_operand.hbm [shape: f32[256,512], index: 1, kind: input, shape index: {}]
  %s2 = inlined_call_operand.hbm [shape: f32[1,512], index: 2, kind: input, shape index: {}]
  %s3 = inlined_call_operand.hbm [shape: f32[256,512], index: 3, kind: input, shape index: {}]
  %s4 = inlined_call_operand.hbm [shape: f32[1,512], index: 4, kind: input, shape index: {}]
  %s5 = inlined_call_operand.hbm [shape: f32[256,512], index: 5, kind: input, shape index: {}]
  %s6 = inlined_call_operand.hbm [shape: f32[1,512], index: 6, kind: input, shape index: {}]
  %s7 = inlined_call_operand.hbm [shape: f32[256,512], index: 7, kind: input, shape index: {}]
  %s8 = inlined_call_operand.hbm [shape: f32[1,512], index: 8, kind: input, shape index: {}]
  %s9 = inlined_call_operand.hbm [shape: f32[128,128], index: 9, kind: input, shape index: {}]
  %s10 = inlined_call_operand.hbm [shape: f32[1,128], index: 10, kind: input, shape index: {}]
  %s11 = inlined_call_operand.hbm [shape: f32[6,8,128], index: 11, kind: output, shape index: {}]
  %s12 = sld [smem:[#allocation0]]
  $region98: #{lstm_autoencoder_forward.1} parent=0
    _
  %s14 = ssub.s32 1, %s12
  %s15 = scalar_select 0, %s14, %s12
  $region1: #{lstm_autoencoder_forward.1} parent=0
    #allocation2 [shape = 'u8[32768]{0}', space=vmem, size = 0x8000, scoped, tag = 'input window, operand 0, single buffered']
    #allocation3 [shape = 's32[1]{0}', space=sflag, size = 0x4, scoped, tag = 'scoped memory for lstm_autoencoder_forward.1']
    #allocation4 [shape = 's32[1]{0}', space=sflag, size = 0x4, scoped, tag = 'scoped memory for lstm_autoencoder_forward.1']
    #allocation5 [shape = 'u8[524288]{0}', space=vmem, size = 0x80000, scoped, tag = 'input window, operand 1, single buffered']
    #allocation6 [shape = 's32[1]{0}', space=sflag, size = 0x4, scoped, tag = 'scoped memory for lstm_autoencoder_forward.1']
    #allocation7 [shape = 'u8[2048]{0}', space=vmem, size = 0x800, scoped, tag = 'input window, operand 2, single buffered']
    #allocation8 [shape = 'u8[524288]{0}', space=vmem, size = 0x80000, scoped, tag = 'input window, operand 3, single buffered']
    #allocation9 [shape = 's32[1]{0}', space=sflag, size = 0x4, scoped, tag = 'scoped memory for lstm_autoencoder_forward.1']
    #allocation10 [shape = 'u8[2048]{0}', space=vmem, size = 0x800, scoped, tag = 'input window, operand 4, single buffered']
    #allocation11 [shape = 'u8[524288]{0}', space=vmem, size = 0x80000, scoped, tag = 'input window, operand 5, single buffered']
    #allocation12 [shape = 's32[1]{0}', space=sflag, size = 0x4, scoped, tag = 'scoped memory for lstm_autoencoder_forward.1']
    #allocation13 [shape = 'u8[2048]{0}', space=vmem, size = 0x800, scoped, tag = 'input window, operand 6, single buffered']
    #allocation14 [shape = 'u8[524288]{0}', space=vmem, size = 0x80000, scoped, tag = 'input window, operand 7, single buffered']
    #allocation15 [shape = 's32[1]{0}', space=sflag, size = 0x4, scoped, tag = 'scoped memory for lstm_autoencoder_forward.1']
    #allocation16 [shape = 'u8[2048]{0}', space=vmem, size = 0x800, scoped, tag = 'input window, operand 8, single buffered']
    #allocation17 [shape = 'u8[65536]{0}', space=vmem, size = 0x10000, scoped, tag = 'input window, operand 9, single buffered']
    #allocation18 [shape = 's32[1]{0}', space=sflag, size = 0x4, scoped, tag = 'scoped memory for lstm_autoencoder_forward.1']
    #allocation19 [shape = 'u8[512]{0}', space=vmem, size = 0x400, scoped, tag = 'input window, operand 10, single buffered']
    #allocation20 [shape = 'u8[24576]{0}', space=vmem, size = 0x6000, scoped, tag = 'output window, operand 0, single buffered']
    %16 = vsyncpa [#allocation3], 0
    %17 = vsyncpa [#allocation6], 0
    %18 = vsyncpa [#allocation9], 0
    %19 = vsyncpa [#allocation12], 0
    %20 = vsyncpa [#allocation15], 0
    %21 = vsyncpa [#allocation18], 0
    %22 = vsyncpa [#allocation4], 0
    // Predicated region
    $region2: #{lstm_autoencoder_forward.1} parent=1 // pred_check
      _
    $region3: #{lstm_autoencoder_forward.1} parent=1 // pred_check_branch
      %24 = sbr.rel (0) target = $region5
    $region4: #{lstm_autoencoder_forward.1} parent=1 // pred_region
      %s26 = ssub.s32 1024, 1024
      %27 = vsyncadd [#allocation3], %s26
      %s28 = sshll.u32 [#allocation2], 4
      %s29 = int_to_ptr.vmem [resolvable:$true] %s28
      %34 = dma.hbm_to_vmem [thread:$0]  %s0, 1024, %s29, [#allocation3], 128, 128, 8
    $region5: #{lstm_autoencoder_forward.1} parent=1 // pred_fallthru
      _
    // Predicated region
    $region6: #{lstm_autoencoder_forward.1} parent=1 // pred_check
      _
    $region7: #{lstm_autoencoder_forward.1} parent=1 // pred_check_branch
      %36 = sbr.rel (0) target = $region9
    $region8: #{lstm_autoencoder_forward.1} parent=1 // pred_region
      %s38 = ssub.s32 16384, 16384
      %39 = vsyncadd [#allocation6], %s38
      %s40 = sshll.u32 [#allocation5], 4
      %s41 = int_to_ptr.vmem [resolvable:$true] %s40
      %46 = dma.hbm_to_vmem [thread:$0]  %s1, 16384, %s41, [#allocation6], 512, 512, 32
    $region9: #{lstm_autoencoder_forward.1} parent=1 // pred_fallthru
      _
    // Predicated region
    $region10: #{lstm_autoencoder_forward.1} parent=1 // pred_check
      _
    $region11: #{lstm_autoencoder_forward.1} parent=1 // pred_check_branch
      %48 = sbr.rel (0) target = $region13
    $region12: #{lstm_autoencoder_forward.1} parent=1 // pred_region
      %s50 = ssub.s32 64, 64
      %51 = vsyncadd [#allocation6], %s50
      %s53 = sshll.u32 [#allocation7], 4
      %s54 = int_to_ptr.vmem [resolvable:$true] %s53
      %56 = dma.hbm_to_vmem [thread:$0]  %s2, 64, %s54, [#allocation6]
    $region13: #{lstm_autoencoder_forward.1} parent=1 // pred_fallthru
      _
    // Predicated region
    $region14: #{lstm_autoencoder_forward.1} parent=1 // pred_check
      _
    $region15: #{lstm_autoencoder_forward.1} parent=1 // pred_check_branch
      %58 = sbr.rel (0) target = $region17
    $region16: #{lstm_autoencoder_forward.1} parent=1 // pred_region
      %s60 = ssub.s32 16384, 16384
      %61 = vsyncadd [#allocation9], %s60
      %s62 = sshll.u32 [#allocation8], 4
      %s63 = int_to_ptr.vmem [resolvable:$true] %s62
      %68 = dma.hbm_to_vmem [thread:$0]  %s3, 16384, %s63, [#allocation9], 512, 512, 32
    $region17: #{lstm_autoencoder_forward.1} parent=1 // pred_fallthru
      _
    // Predicated region
    $region18: #{lstm_autoencoder_forward.1} parent=1 // pred_check
      _
    $region19: #{lstm_autoencoder_forward.1} parent=1 // pred_check_branch
      %70 = sbr.rel (0) target = $region21
    $region20: #{lstm_autoencoder_forward.1} parent=1 // pred_region
      %s72 = ssub.s32 64, 64
      %73 = vsyncadd [#allocation9], %s72
      %s75 = sshll.u32 [#allocation10], 4
      %s76 = int_to_ptr.vmem [resolvable:$true] %s75
      %78 = dma.hbm_to_vmem [thread:$0]  %s4, 64, %s76, [#allocation9]
    $region21: #{lstm_autoencoder_forward.1} parent=1 // pred_fallthru
      _
    // Predicated region
    $region22: #{lstm_autoencoder_forward.1} parent=1 // pred_check
      _
    $region23: #{lstm_autoencoder_forward.1} parent=1 // pred_check_branch
      %80 = sbr.rel (0) target = $region25
    $region24: #{lstm_autoencoder_forward.1} parent=1 // pred_region
      %s82 = ssub.s32 16384, 16384
      %83 = vsyncadd [#allocation12], %s82
      %s84 = sshll.u32 [#allocation11], 4
      %s85 = int_to_ptr.vmem [resolvable:$true] %s84
      %90 = dma.hbm_to_vmem [thread:$0]  %s5, 16384, %s85, [#allocation12], 512, 512, 32
    $region25: #{lstm_autoencoder_forward.1} parent=1 // pred_fallthru
      _
    // Predicated region
    $region26: #{lstm_autoencoder_forward.1} parent=1 // pred_check
      _
    $region27: #{lstm_autoencoder_forward.1} parent=1 // pred_check_branch
      %92 = sbr.rel (0) target = $region29
    $region28: #{lstm_autoencoder_forward.1} parent=1 // pred_region
      %s94 = ssub.s32 64, 64
      %95 = vsyncadd [#allocation12], %s94
      %s97 = sshll.u32 [#allocation13], 4
      %s98 = int_to_ptr.vmem [resolvable:$true] %s97
      %100 = dma.hbm_to_vmem [thread:$0]  %s6, 64, %s98, [#allocation12]
    $region29: #{lstm_autoencoder_forward.1} parent=1 // pred_fallthru
      _
    // Predicated region
    $region30: #{lstm_autoencoder_forward.1} parent=1 // pred_check
      _
    $region31: #{lstm_autoencoder_forward.1} parent=1 // pred_check_branch
      %102 = sbr.rel (0) target = $region33
    $region32: #{lstm_autoencoder_forward.1} parent=1 // pred_region
      %s104 = ssub.s32 16384, 16384
      %105 = vsyncadd [#allocation15], %s104
      %s106 = sshll.u32 [#allocation14], 4
      %s107 = int_to_ptr.vmem [resolvable:$true] %s106
      %112 = dma.hbm_to_vmem [thread:$0]  %s7, 16384, %s107, [#allocation15], 512, 512, 32
    $region33: #{lstm_autoencoder_forward.1} parent=1 // pred_fallthru
      _
    // Predicated region
    $region34: #{lstm_autoencoder_forward.1} parent=1 // pred_check
      _
    $region35: #{lstm_autoencoder_forward.1} parent=1 // pred_check_branch
      %114 = sbr.rel (0) target = $region37
    $region36: #{lstm_autoencoder_forward.1} parent=1 // pred_region
      %s116 = ssub.s32 64, 64
      %117 = vsyncadd [#allocation15], %s116
      %s119 = sshll.u32 [#allocation16], 4
      %s120 = int_to_ptr.vmem [resolvable:$true] %s119
      %122 = dma.hbm_to_vmem [thread:$0]  %s8, 64, %s120, [#allocation15]
    $region37: #{lstm_autoencoder_forward.1} parent=1 // pred_fallthru
      _
    // Predicated region
    $region38: #{lstm_autoencoder_forward.1} parent=1 // pred_check
      _
    $region39: #{lstm_autoencoder_forward.1} parent=1 // pred_check_branch
      %124 = sbr.rel (0) target = $region41
    $region40: #{lstm_autoencoder_forward.1} parent=1 // pred_region
      %s126 = ssub.s32 2048, 2048
      %127 = vsyncadd [#allocation18], %s126
      %s128 = sshll.u32 [#allocation17], 4
      %s129 = int_to_ptr.vmem [resolvable:$true] %s128
      %134 = dma.hbm_to_vmem [thread:$0]  %s9, 2048, %s129, [#allocation18], 128, 128, 8
    $region41: #{lstm_autoencoder_forward.1} parent=1 // pred_fallthru
      _
    // Predicated region
    $region42: #{lstm_autoencoder_forward.1} parent=1 // pred_check
      _
    $region43: #{lstm_autoencoder_forward.1} parent=1 // pred_check_branch
      %136 = sbr.rel (0) target = $region45
    $region44: #{lstm_autoencoder_forward.1} parent=1 // pred_region
      %s138 = ssub.s32 16, 16
      %139 = vsyncadd [#allocation18], %s138
      %s141 = sshll.u32 [#allocation19], 4
      %s142 = int_to_ptr.vmem [resolvable:$true] %s141
      %144 = dma.hbm_to_vmem [thread:$0]  %s10, 16, %s142, [#allocation18]
    $region45: #{lstm_autoencoder_forward.1} parent=1 // pred_fallthru
      _
    // Predicated region
    $region46: #{lstm_autoencoder_forward.1} parent=1 // pred_check
      _
    $region47: #{lstm_autoencoder_forward.1} parent=1 // pred_check_branch
      %146 = sbr.rel (0) target = $region49
    $region48: #{lstm_autoencoder_forward.1} parent=1 // pred_region
      %147 = dma.done [#allocation3], 1024
    $region49: #{lstm_autoencoder_forward.1} parent=1 // pred_fallthru
      _
    // Predicated region
    $region50: #{lstm_autoencoder_forward.1} parent=1 // pred_check
      _
    $region51: #{lstm_autoencoder_forward.1} parent=1 // pred_check_branch
      %149 = sbr.rel (0) target = $region53
    $region52: #{lstm_autoencoder_forward.1} parent=1 // pred_region
      %150 = dma.done [#allocation6], 16384
    $region53: #{lstm_autoencoder_forward.1} parent=1 // pred_fallthru
      _
    // Predicated region
    $region54: #{lstm_autoencoder_forward.1} parent=1 // pred_check
      _
    $region55: #{lstm_autoencoder_forward.1} parent=1 // pred_check_branch
      %152 = sbr.rel (0) target = $region57
    $region56: #{lstm_autoencoder_forward.1} parent=1 // pred_region
      %153 = dma.done [#allocation6], 64
    $region57: #{lstm_autoencoder_forward.1} parent=1 // pred_fallthru
      _
    // Predicated region
    $region58: #{lstm_autoencoder_forward.1} parent=1 // pred_check
      _
    $region59: #{lstm_autoencoder_forward.1} parent=1 // pred_check_branch
      %155 = sbr.rel (0) target = $region61
    $region60: #{lstm_autoencoder_forward.1} parent=1 // pred_region
      %156 = dma.done [#allocation9], 16384
    $region61: #{lstm_autoencoder_forward.1} parent=1 // pred_fallthru
      _
    // Predicated region
    $region62: #{lstm_autoencoder_forward.1} parent=1 // pred_check
      _
    $region63: #{lstm_autoencoder_forward.1} parent=1 // pred_check_branch
      %158 = sbr.rel (0) target = $region65
    $region64: #{lstm_autoencoder_forward.1} parent=1 // pred_region
      %159 = dma.done [#allocation9], 64
    $region65: #{lstm_autoencoder_forward.1} parent=1 // pred_fallthru
      _
    // Predicated region
    $region66: #{lstm_autoencoder_forward.1} parent=1 // pred_check
      _
    $region67: #{lstm_autoencoder_forward.1} parent=1 // pred_check_branch
      %161 = sbr.rel (0) target = $region69
    $region68: #{lstm_autoencoder_forward.1} parent=1 // pred_region
      %162 = dma.done [#allocation12], 16384
    $region69: #{lstm_autoencoder_forward.1} parent=1 // pred_fallthru
      _
    // Predicated region
    $region70: #{lstm_autoencoder_forward.1} parent=1 // pred_check
      _
    $region71: #{lstm_autoencoder_forward.1} parent=1 // pred_check_branch
      %164 = sbr.rel (0) target = $region73
    $region72: #{lstm_autoencoder_forward.1} parent=1 // pred_region
      %165 = dma.done [#allocation12], 64
    $region73: #{lstm_autoencoder_forward.1} parent=1 // pred_fallthru
      _
    // Predicated region
    $region74: #{lstm_autoencoder_forward.1} parent=1 // pred_check
      _
    $region75: #{lstm_autoencoder_forward.1} parent=1 // pred_check_branch
      %167 = sbr.rel (0) target = $region77
    $region76: #{lstm_autoencoder_forward.1} parent=1 // pred_region
      %168 = dma.done [#allocation15], 16384
    $region77: #{lstm_autoencoder_forward.1} parent=1 // pred_fallthru
      _
    // Predicated region
    $region78: #{lstm_autoencoder_forward.1} parent=1 // pred_check
      _
    $region79: #{lstm_autoencoder_forward.1} parent=1 // pred_check_branch
      %170 = sbr.rel (0) target = $region81
    $region80: #{lstm_autoencoder_forward.1} parent=1 // pred_region
      %171 = dma.done [#allocation15], 64
    $region81: #{lstm_autoencoder_forward.1} parent=1 // pred_fallthru
      _
    // Predicated region
    $region82: #{lstm_autoencoder_forward.1} parent=1 // pred_check
      _
    $region83: #{lstm_autoencoder_forward.1} parent=1 // pred_check_branch
      %173 = sbr.rel (0) target = $region85
    $region84: #{lstm_autoencoder_forward.1} parent=1 // pred_region
      %174 = dma.done [#allocation18], 2048
    $region85: #{lstm_autoencoder_forward.1} parent=1 // pred_fallthru
      _
    // Predicated region
    $region86: #{lstm_autoencoder_forward.1} parent=1 // pred_check
      _
    $region87: #{lstm_autoencoder_forward.1} parent=1 // pred_check_branch
      %176 = sbr.rel (0) target = $region89
    $region88: #{lstm_autoencoder_forward.1} parent=1 // pred_region
      %177 = dma.done [#allocation18], 16
    $region89: #{lstm_autoencoder_forward.1} parent=1 // pred_fallthru
      _
    %v178 = vld [vmem:[#allocation2] sm:$0xff]
    %v179 = vld [vmem:[#allocation5] sm:$0xff]
    %v180 = vld [vmem:[#allocation5 + $0x8] sm:$0xff]
    %v181 = vld [vmem:[#allocation5 + $0x10] sm:$0xff]
    %v182 = vld [vmem:[#allocation5 + $0x18] sm:$0xff]
    %v183 = vld [vmem:[#allocation5 + $0x20] sm:$0xff]
    %v184 = vld [vmem:[#allocation5 + $0x28] sm:$0xff]
    %v185 = vld [vmem:[#allocation5 + $0x30] sm:$0xff]
    %v186 = vld [vmem:[#allocation5 + $0x38] sm:$0xff]
    %v187 = vld [vmem:[#allocation5 + $0x40] sm:$0xff]
    %v188 = vld [vmem:[#allocation5 + $0x48] sm:$0xff]
    %v189 = vld [vmem:[#allocation5 + $0x50] sm:$0xff]
    %v190 = vld [vmem:[#allocation5 + $0x58] sm:$0xff]
    %v191 = vld [vmem:[#allocation5 + $0x60] sm:$0xff]
    %v192 = vld [vmem:[#allocation5 + $0x68] sm:$0xff]
    %v193 = vld [vmem:[#allocation5 + $0x70] sm:$0xff]
    %v194 = vld [vmem:[#allocation5 + $0x78] sm:$0xff]
    %v195 = vld [vmem:[#allocation5 + $0x80] sm:$0xff]
    %v196 = vld [vmem:[#allocation5 + $0x88] sm:$0xff]
    %v197 = vld [vmem:[#allocation5 + $0x90] sm:$0xff]
    %v198 = vld [vmem:[#allocation5 + $0x98] sm:$0xff]
    %v199 = vld [vmem:[#allocation5 + $0xa0] sm:$0xff]
    %v200 = vld [vmem:[#allocation5 + $0xa8] sm:$0xff]
    %v201 = vld [vmem:[#allocation5 + $0xb0] sm:$0xff]
    %v202 = vld [vmem:[#allocation5 + $0xb8] sm:$0xff]
    %v203 = vld [vmem:[#allocation5 + $0xc0] sm:$0xff]
    %v204 = vld [vmem:[#allocation5 + $0xc8] sm:$0xff]
    %v205 = vld [vmem:[#allocation5 + $0xd0] sm:$0xff]
    %v206 = vld [vmem:[#allocation5 + $0xd8] sm:$0xff]
    %v207 = vld [vmem:[#allocation5 + $0xe0] sm:$0xff]
    %v208 = vld [vmem:[#allocation5 + $0xe8] sm:$0xff]
    %v209 = vld [vmem:[#allocation5 + $0xf0] sm:$0xff]
    %v210 = vld [vmem:[#allocation5 + $0xf8] sm:$0xff]
    %v211 = vld [vmem:[#allocation5 + $0x100] sm:$0xff]
    %v212 = vld [vmem:[#allocation5 + $0x108] sm:$0xff]
    %v213 = vld [vmem:[#allocation5 + $0x110] sm:$0xff]
    %v214 = vld [vmem:[#allocation5 + $0x118] sm:$0xff]
    %v215 = vld [vmem:[#allocation5 + $0x120] sm:$0xff]
    %v216 = vld [vmem:[#allocation5 + $0x128] sm:$0xff]
    %v217 = vld [vmem:[#allocation5 + $0x130] sm:$0xff]
    %v218 = vld [vmem:[#allocation5 + $0x138] sm:$0xff]
    %v219 = vld [vmem:[#allocation5 + $0x140] sm:$0xff]
    %v220 = vld [vmem:[#allocation5 + $0x148] sm:$0xff]
    %v221 = vld [vmem:[#allocation5 + $0x150] sm:$0xff]
    %v222 = vld [vmem:[#allocation5 + $0x158] sm:$0xff]
    %v223 = vld [vmem:[#allocation5 + $0x160] sm:$0xff]
    %v224 = vld [vmem:[#allocation5 + $0x168] sm:$0xff]
    %v225 = vld [vmem:[#allocation5 + $0x170] sm:$0xff]
    %v226 = vld [vmem:[#allocation5 + $0x178] sm:$0xff]
    %v227 = vld [vmem:[#allocation5 + $0x180] sm:$0xff]
    %v228 = vld [vmem:[#allocation5 + $0x188] sm:$0xff]
    %v229 = vld [vmem:[#allocation5 + $0x190] sm:$0xff]
    %v230 = vld [vmem:[#allocation5 + $0x198] sm:$0xff]
    %v231 = vld [vmem:[#allocation5 + $0x1a0] sm:$0xff]
    %v232 = vld [vmem:[#allocation5 + $0x1a8] sm:$0xff]
    %v233 = vld [vmem:[#allocation5 + $0x1b0] sm:$0xff]
    %v234 = vld [vmem:[#allocation5 + $0x1b8] sm:$0xff]
    %v235 = vld [vmem:[#allocation5 + $0x1c0] sm:$0xff]
    %v236 = vld [vmem:[#allocation5 + $0x1c8] sm:$0xff]
    %v237 = vld [vmem:[#allocation5 + $0x1d0] sm:$0xff]
    %v238 = vld [vmem:[#allocation5 + $0x1d8] sm:$0xff]
    %v239 = vld [vmem:[#allocation5 + $0x1e0] sm:$0xff]
    %v240 = vld [vmem:[#allocation5 + $0x1e8] sm:$0xff]
    %v241 = vld [vmem:[#allocation5 + $0x1f0] sm:$0xff]
    %v242 = vld [vmem:[#allocation5 + $0x1f8] sm:$0xff]
    %v243 = vld [vmem:[#allocation5 + $0x200] sm:$0xff]
    %v244 = vld [vmem:[#allocation5 + $0x208] sm:$0xff]
    %v245 = vld [vmem:[#allocation5 + $0x210] sm:$0xff]
    %v246 = vld [vmem:[#allocation5 + $0x218] sm:$0xff]
    %v247 = vld [vmem:[#allocation5 + $0x220] sm:$0xff]
    %v248 = vld [vmem:[#allocation5 + $0x228] sm:$0xff]
    %v249 = vld [vmem:[#allocation5 + $0x230] sm:$0xff]
    %v250 = vld [vmem:[#allocation5 + $0x238] sm:$0xff]
    %v251 = vld [vmem:[#allocation5 + $0x240] sm:$0xff]
    %v252 = vld [vmem:[#allocation5 + $0x248] sm:$0xff]
    %v253 = vld [vmem:[#allocation5 + $0x250] sm:$0xff]
    %v254 = vld [vmem:[#allocation5 + $0x258] sm:$0xff]
    %v255 = vld [vmem:[#allocation5 + $0x260] sm:$0xff]
    %v256 = vld [vmem:[#allocation5 + $0x268] sm:$0xff]
    %v257 = vld [vmem:[#allocation5 + $0x270] sm:$0xff]
    %v258 = vld [vmem:[#allocation5 + $0x278] sm:$0xff]
    %v259 = vld [vmem:[#allocation5 + $0x280] sm:$0xff]
    %v260 = vld [vmem:[#allocation5 + $0x288] sm:$0xff]
    %v261 = vld [vmem:[#allocation5 + $0x290] sm:$0xff]
    %v262 = vld [vmem:[#allocation5 + $0x298] sm:$0xff]
    %v263 = vld [vmem:[#allocation5 + $0x2a0] sm:$0xff]
    %v264 = vld [vmem:[#allocation5 + $0x2a8] sm:$0xff]
    %v265 = vld [vmem:[#allocation5 + $0x2b0] sm:$0xff]
    %v266 = vld [vmem:[#allocation5 + $0x2b8] sm:$0xff]
    %v267 = vld [vmem:[#allocation5 + $0x2c0] sm:$0xff]
    %v268 = vld [vmem:[#allocation5 + $0x2c8] sm:$0xff]
    %v269 = vld [vmem:[#allocation5 + $0x2d0] sm:$0xff]
    %v270 = vld [vmem:[#allocation5 + $0x2d8] sm:$0xff]
    %v271 = vld [vmem:[#allocation5 + $0x2e0] sm:$0xff]
    %v272 = vld [vmem:[#allocation5 + $0x2e8] sm:$0xff]
    %v273 = vld [vmem:[#allocation5 + $0x2f0] sm:$0xff]
    %v274 = vld [vmem:[#allocation5 + $0x2f8] sm:$0xff]
    %v275 = vld [vmem:[#allocation5 + $0x300] sm:$0xff]
    %v276 = vld [vmem:[#allocation5 + $0x308] sm:$0xff]
    %v277 = vld [vmem:[#allocation5 + $0x310] sm:$0xff]
    %v278 = vld [vmem:[#allocation5 + $0x318] sm:$0xff]
    %v279 = vld [vmem:[#allocation5 + $0x320] sm:$0xff]
    %v280 = vld [vmem:[#allocation5 + $0x328] sm:$0xff]
    %v281 = vld [vmem:[#allocation5 + $0x330] sm:$0xff]
    %v282 = vld [vmem:[#allocation5 + $0x338] sm:$0xff]
    %v283 = vld [vmem:[#allocation5 + $0x340] sm:$0xff]
    %v284 = vld [vmem:[#allocation5 + $0x348] sm:$0xff]
    %v285 = vld [vmem:[#allocation5 + $0x350] sm:$0xff]
    %v286 = vld [vmem:[#allocation5 + $0x358] sm:$0xff]
    %v287 = vld [vmem:[#allocation5 + $0x360] sm:$0xff]
    %v288 = vld [vmem:[#allocation5 + $0x368] sm:$0xff]
    %v289 = vld [vmem:[#allocation5 + $0x370] sm:$0xff]
    %v290 = vld [vmem:[#allocation5 + $0x378] sm:$0xff]
    %v291 = vld [vmem:[#allocation5 + $0x380] sm:$0xff]
    %v292 = vld [vmem:[#allocation5 + $0x388] sm:$0xff]
    %v293 = vld [vmem:[#allocation5 + $0x390] sm:$0xff]
    %v294 = vld [vmem:[#allocation5 + $0x398] sm:$0xff]
    %v295 = vld [vmem:[#allocation5 + $0x3a0] sm:$0xff]
    %v296 = vld [vmem:[#allocation5 + $0x3a8] sm:$0xff]
    %v297 = vld [vmem:[#allocation5 + $0x3b0] sm:$0xff]
    %v298 = vld [vmem:[#allocation5 + $0x3b8] sm:$0xff]
    %v299 = vld [vmem:[#allocation5 + $0x3c0] sm:$0xff]
    %v300 = vld [vmem:[#allocation5 + $0x3c8] sm:$0xff]
    %v301 = vld [vmem:[#allocation5 + $0x3d0] sm:$0xff]
    %v302 = vld [vmem:[#allocation5 + $0x3d8] sm:$0xff]
    %v303 = vld [vmem:[#allocation5 + $0x3e0] sm:$0xff]
    %v304 = vld [vmem:[#allocation5 + $0x3e8] sm:$0xff]
    %v305 = vld [vmem:[#allocation5 + $0x3f0] sm:$0xff]
    %v306 = vld [vmem:[#allocation5 + $0x3f8] sm:$0xff]
    %v307 = vld [vmem:[#allocation7] sm:$0xf]
    %v309 = vlaneseq
    %v310 = vshrl.u32 %v309, 7
    %v311 = vsub.s32 0, %v310
    %v312 = vrot.slane %v307, %v311
    %v313 = vlaneseq
    %v314 = vshrl.u32 %v313, 7
    %v315 = vsub.s32 1, %v314
    %v316 = vrot.slane %v307, %v315
    %v317 = vlaneseq
    %v318 = vshrl.u32 %v317, 7
    %v319 = vsub.s32 2, %v318
    %v320 = vrot.slane %v307, %v319
    %v321 = vlaneseq
    %v322 = vshrl.u32 %v321, 7
    %v323 = vsub.s32 3, %v322
    %v324 = vrot.slane %v307, %v323
    %329 = vmatprep.subr.mxu0 %v180
    %330 = vmatpush1.msra.mxu0 %v179
    %331 = vmatprep.subr.mxu0 %v184
    %332 = vmatpush1.msra.mxu0 %v183
    %333 = vmatprep.subr.mxu0 %v188
    %334 = vmatpush1.msra.mxu0 %v187
    %335 = vmatprep.subr.mxu0 %v192
    %336 = vmatpush1.msra.mxu0 %v191
    %337 = vmatprep.subr.mxu0 %v196
    %338 = vmatpush1.msra.mxu0 %v195
    %339 = vmatprep.subr.mxu0 %v200
    %340 = vmatpush1.msra.mxu0 %v199
    %341 = vmatprep.subr.mxu0 %v204
    %342 = vmatpush1.msra.mxu0 %v203
    %343 = vmatprep.subr.mxu0 %v208
    %344 = vmatpush1.msra.mxu0 %v207
    %345 = vmatprep.subr.mxu0 %v212
    %346 = vmatpush1.msra.mxu0 %v211
    %347 = vmatprep.subr.mxu0 %v216
    %348 = vmatpush1.msra.mxu0 %v215
    %349 = vmatprep.subr.mxu0 %v220
    %350 = vmatpush1.msra.mxu0 %v219
    %351 = vmatprep.subr.mxu0 %v224
    %352 = vmatpush1.msra.mxu0 %v223
    %353 = vmatprep.subr.mxu0 %v228
    %354 = vmatpush1.msra.mxu0 %v227
    %355 = vmatprep.subr.mxu0 %v232
    %356 = vmatpush1.msra.mxu0 %v231
    %357 = vmatprep.subr.mxu0 %v236
    %358 = vmatpush1.msra.mxu0 %v235
    %359 = vmatprep.subr.mxu0 %v240
    %360 = vmatpush1.msra.mxu0 %v239
    %361 = vmatprep.subr.mxu0 %v244
    %362 = vmatpush1.msra.mxu0 %v243
    %363 = vmatprep.subr.mxu0 %v248
    %364 = vmatpush1.msra.mxu0 %v247
    %365 = vmatprep.subr.mxu0 %v252
    %366 = vmatpush1.msra.mxu0 %v251
    %367 = vmatprep.subr.mxu0 %v256
    %368 = vmatpush1.msra.mxu0 %v255
    %369 = vmatprep.subr.mxu0 %v260
    %370 = vmatpush1.msra.mxu0 %v259
    %371 = vmatprep.subr.mxu0 %v264
    %372 = vmatpush1.msra.mxu0 %v263
    %373 = vmatprep.subr.mxu0 %v268
    %374 = vmatpush1.msra.mxu0 %v267
    %375 = vmatprep.subr.mxu0 %v272
    %376 = vmatpush1.msra.mxu0 %v271
    %377 = vmatprep.subr.mxu0 %v276
    %378 = vmatpush1.msra.mxu0 %v275
    %379 = vmatprep.subr.mxu0 %v280
    %380 = vmatpush1.msra.mxu0 %v279
    %381 = vmatprep.subr.mxu0 %v284
    %382 = vmatpush1.msra.mxu0 %v283
    %383 = vmatprep.subr.mxu0 %v288
    %384 = vmatpush1.msra.mxu0 %v287
    %385 = vmatprep.subr.mxu0 %v292
    %386 = vmatpush1.msra.mxu0 %v291
    %387 = vmatprep.subr.mxu0 %v296
    %388 = vmatpush1.msra.mxu0 %v295
    %389 = vmatprep.subr.mxu0 %v300
    %390 = vmatpush1.msra.mxu0 %v299
    %391 = vmatprep.subr.mxu0 %v304
    %392 = vmatpush1.msra.mxu0 %v303
    %393 = vmatprep.mubr.f32.mxu0 0.0
    %394 = vmatmul.mubr.f32.gmra.mrb[0].mxu0 %v178
    %v395 = vpop.f32.mrb[0].mxu0
    %v396 = vadd.f32 %v312, %v395
    %v397 = vpop.f32.mrb[0].mxu0
    %v398 = vadd.f32 %v316, %v397
    %399 = vdwg.mxu0
    %400 = vmatprep.subr.mxu0 %v182
    %401 = vmatpush1.msra.mxu0 %v181
    %402 = vmatprep.subr.mxu0 %v186
    %403 = vmatpush1.msra.mxu0 %v185
    %404 = vmatprep.subr.mxu0 %v190
    %405 = vmatpush1.msra.mxu0 %v189
    %406 = vmatprep.subr.mxu0 %v194
    %407 = vmatpush1.msra.mxu0 %v193
    %408 = vmatprep.subr.mxu0 %v198
    %409 = vmatpush1.msra.mxu0 %v197
    %410 = vmatprep.subr.mxu0 %v202
    %411 = vmatpush1.msra.mxu0 %v201
    %412 = vmatprep.subr.mxu0 %v206
    %413 = vmatpush1.msra.mxu0 %v205
    %414 = vmatprep.subr.mxu0 %v210
    %415 = vmatpush1.msra.mxu0 %v209
    %416 = vmatprep.subr.mxu0 %v214
    %417 = vmatpush1.msra.mxu0 %v213
    %418 = vmatprep.subr.mxu0 %v218
    %419 = vmatpush1.msra.mxu0 %v217
    %420 = vmatprep.subr.mxu0 %v222
    %421 = vmatpush1.msra.mxu0 %v221
    %422 = vmatprep.subr.mxu0 %v226
    %423 = vmatpush1.msra.mxu0 %v225
    %424 = vmatprep.subr.mxu0 %v230
    %425 = vmatpush1.msra.mxu0 %v229
    %426 = vmatprep.subr.mxu0 %v234
    %427 = vmatpush1.msra.mxu0 %v233
    %428 = vmatprep.subr.mxu0 %v238
    %429 = vmatpush1.msra.mxu0 %v237
    %430 = vmatprep.subr.mxu0 %v242
    %431 = vmatpush1.msra.mxu0 %v241
    %432 = vmatprep.subr.mxu0 %v246
    %433 = vmatpush1.msra.mxu0 %v245
    %434 = vmatprep.subr.mxu0 %v250
    %435 = vmatpush1.msra.mxu0 %v249
    %436 = vmatprep.subr.mxu0 %v254
    %437 = vmatpush1.msra.mxu0 %v253
    %438 = vmatprep.subr.mxu0 %v258
    %439 = vmatpush1.msra.mxu0 %v257
    %440 = vmatprep.subr.mxu0 %v262
    %441 = vmatpush1.msra.mxu0 %v261
    %442 = vmatprep.subr.mxu0 %v266
    %443 = vmatpush1.msra.mxu0 %v265
    %444 = vmatprep.subr.mxu0 %v270
    %445 = vmatpush1.msra.mxu0 %v269
    %446 = vmatprep.subr.mxu0 %v274
    %447 = vmatpush1.msra.mxu0 %v273
    %448 = vmatprep.subr.mxu0 %v278
    %449 = vmatpush1.msra.mxu0 %v277
    %450 = vmatprep.subr.mxu0 %v282
    %451 = vmatpush1.msra.mxu0 %v281
    %452 = vmatprep.subr.mxu0 %v286
    %453 = vmatpush1.msra.mxu0 %v285
    %454 = vmatprep.subr.mxu0 %v290
    %455 = vmatpush1.msra.mxu0 %v289
    %456 = vmatprep.subr.mxu0 %v294
    %457 = vmatpush1.msra.mxu0 %v293
    %458 = vmatprep.subr.mxu0 %v298
    %459 = vmatpush1.msra.mxu0 %v297
    %460 = vmatprep.subr.mxu0 %v302
    %461 = vmatpush1.msra.mxu0 %v301
    %462 = vmatprep.subr.mxu0 %v306
    %463 = vmatpush1.msra.mxu0 %v305
    %464 = vmatprep.mubr.f32.mxu0 0.0
    %465 = vmatmul.mubr.f32.gmra.mrb[0].mxu0 %v178
    %v466 = vpop.f32.mrb[0].mxu0
    %v467 = vadd.f32 %v320, %v466
    %v468 = vpop.f32.mrb[0].mxu0
    %v469 = vadd.f32 %v324, %v468
    %470 = vdwg.mxu0
    %v471 = vxor.u32 %v396, 2147483648
    %v472 = vxor.u32 %v398, 2147483648
    %v473 = vxor.u32 %v467, 2147483648
    %v474 = vmul.f32 %v471, 1.442695
    %v475 = vpow.pop %v474
    %v476 = vmul.f32 %v472, 1.442695
    %v477 = vpow.pop %v476
    %v478 = vmul.f32 %v473, 1.442695
    %v479 = vpow.pop %v478
    %v480 = vadd.f32 %v475, 1.0
    %v481 = vadd.f32 %v477, 1.0
    %v482 = vadd.f32 %v479, 1.0
    %v483 = vrcp.pop %v480
    %v484 = vmul.f32 1.0, %v483
    %v485 = vrcp.pop %v481
    %v486 = vmul.f32 1.0, %v485
    %v487 = vrcp.pop %v482
    %v488 = vmul.f32 1.0, %v487
    %v489 = vtanh.pop %v469
    %v490 = vmul.f32 %v486, 0.0
    %v491 = vmul.f32 %v484, %v489
    %v492 = vadd.f32 %v490, %v491
    %v493 = vtanh.pop %v492
    %v494 = vmul.f32 %v488, %v493
    %v495 = vld [vmem:[#allocation8] sm:$0xff]
    %v496 = vld [vmem:[#allocation8 + $0x8] sm:$0xff]
    %v497 = vld [vmem:[#allocation8 + $0x10] sm:$0xff]
    %v498 = vld [vmem:[#allocation8 + $0x18] sm:$0xff]
    %v499 = vld [vmem:[#allocation8 + $0x20] sm:$0xff]
    %v500 = vld [vmem:[#allocation8 + $0x28] sm:$0xff]
    %v501 = vld [vmem:[#allocation8 + $0x30] sm:$0xff]
    %v502 = vld [vmem:[#allocation8 + $0x38] sm:$0xff]
    %v503 = vld [vmem:[#allocation8 + $0x40] sm:$0xff]
    %v504 = vld [vmem:[#allocation8 + $0x48] sm:$0xff]
    %v505 = vld [vmem:[#allocation8 + $0x50] sm:$0xff]
    %v506 = vld [vmem:[#allocation8 + $0x58] sm:$0xff]
    %v507 = vld [vmem:[#allocation8 + $0x60] sm:$0xff]
    %v508 = vld [vmem:[#allocation8 + $0x68] sm:$0xff]
    %v509 = vld [vmem:[#allocation8 + $0x70] sm:$0xff]
    %v510 = vld [vmem:[#allocation8 + $0x78] sm:$0xff]
    %v511 = vld [vmem:[#allocation8 + $0x80] sm:$0xff]
    %v512 = vld [vmem:[#allocation8 + $0x88] sm:$0xff]
    %v513 = vld [vmem:[#allocation8 + $0x90] sm:$0xff]
    %v514 = vld [vmem:[#allocation8 + $0x98] sm:$0xff]
    %v515 = vld [vmem:[#allocation8 + $0xa0] sm:$0xff]
    %v516 = vld [vmem:[#allocation8 + $0xa8] sm:$0xff]
    %v517 = vld [vmem:[#allocation8 + $0xb0] sm:$0xff]
    %v518 = vld [vmem:[#allocation8 + $0xb8] sm:$0xff]
    %v519 = vld [vmem:[#allocation8 + $0xc0] sm:$0xff]
    %v520 = vld [vmem:[#allocation8 + $0xc8] sm:$0xff]
    %v521 = vld [vmem:[#allocation8 + $0xd0] sm:$0xff]
    %v522 = vld [vmem:[#allocation8 + $0xd8] sm:$0xff]
    %v523 = vld [vmem:[#allocation8 + $0xe0] sm:$0xff]
    %v524 = vld [vmem:[#allocation8 + $0xe8] sm:$0xff]
    %v525 = vld [vmem:[#allocation8 + $0xf0] sm:$0xff]
    %v526 = vld [vmem:[#allocation8 + $0xf8] sm:$0xff]
    %v527 = vld [vmem:[#allocation8 + $0x100] sm:$0xff]
    %v528 = vld [vmem:[#allocation8 + $0x108] sm:$0xff]
    %v529 = vld [vmem:[#allocation8 + $0x110] sm:$0xff]
    %v530 = vld [vmem:[#allocation8 + $0x118] sm:$0xff]
    %v531 = vld [vmem:[#allocation8 + $0x120] sm:$0xff]
    %v532 = vld [vmem:[#allocation8 + $0x128] sm:$0xff]
    %v533 = vld [vmem:[#allocation8 + $0x130] sm:$0xff]
    %v534 = vld [vmem:[#allocation8 + $0x138] sm:$0xff]
    %v535 = vld [vmem:[#allocation8 + $0x140] sm:$0xff]
    %v536 = vld [vmem:[#allocation8 + $0x148] sm:$0xff]
    %v537 = vld [vmem:[#allocation8 + $0x150] sm:$0xff]
    %v538 = vld [vmem:[#allocation8 + $0x158] sm:$0xff]
    %v539 = vld [vmem:[#allocation8 + $0x160] sm:$0xff]
    %v540 = vld [vmem:[#allocation8 + $0x168] sm:$0xff]
    %v541 = vld [vmem:[#allocation8 + $0x170] sm:$0xff]
    %v542 = vld [vmem:[#allocation8 + $0x178] sm:$0xff]
    %v543 = vld [vmem:[#allocation8 + $0x180] sm:$0xff]
    %v544 = vld [vmem:[#allocation8 + $0x188] sm:$0xff]
    %v545 = vld [vmem:[#allocation8 + $0x190] sm:$0xff]
    %v546 = vld [vmem:[#allocation8 + $0x198] sm:$0xff]
    %v547 = vld [vmem:[#allocation8 + $0x1a0] sm:$0xff]
    %v548 = vld [vmem:[#allocation8 + $0x1a8] sm:$0xff]
    %v549 = vld [vmem:[#allocation8 + $0x1b0] sm:$0xff]
    %v550 = vld [vmem:[#allocation8 + $0x1b8] sm:$0xff]
    %v551 = vld [vmem:[#allocation8 + $0x1c0] sm:$0xff]
    %v552 = vld [vmem:[#allocation8 + $0x1c8] sm:$0xff]
    %v553 = vld [vmem:[#allocation8 + $0x1d0] sm:$0xff]
    %v554 = vld [vmem:[#allocation8 + $0x1d8] sm:$0xff]
    %v555 = vld [vmem:[#allocation8 + $0x1e0] sm:$0xff]
    %v556 = vld [vmem:[#allocation8 + $0x1e8] sm:$0xff]
    %v557 = vld [vmem:[#allocation8 + $0x1f0] sm:$0xff]
    %v558 = vld [vmem:[#allocation8 + $0x1f8] sm:$0xff]
    %v559 = vld [vmem:[#allocation8 + $0x200] sm:$0xff]
    %v560 = vld [vmem:[#allocation8 + $0x208] sm:$0xff]
    %v561 = vld [vmem:[#allocation8 + $0x210] sm:$0xff]
    %v562 = vld [vmem:[#allocation8 + $0x218] sm:$0xff]
    %v563 = vld [vmem:[#allocation8 + $0x220] sm:$0xff]
    %v564 = vld [vmem:[#allocation8 + $0x228] sm:$0xff]
    %v565 = vld [vmem:[#allocation8 + $0x230] sm:$0xff]
    %v566 = vld [vmem:[#allocation8 + $0x238] sm:$0xff]
    %v567 = vld [vmem:[#allocation8 + $0x240] sm:$0xff]
    %v568 = vld [vmem:[#allocation8 + $0x248] sm:$0xff]
    %v569 = vld [vmem:[#allocation8 + $0x250] sm:$0xff]
    %v570 = vld [vmem:[#allocation8 + $0x258] sm:$0xff]
    %v571 = vld [vmem:[#allocation8 + $0x260] sm:$0xff]
    %v572 = vld [vmem:[#allocation8 + $0x268] sm:$0xff]
    %v573 = vld [vmem:[#allocation8 + $0x270] sm:$0xff]
    %v574 = vld [vmem:[#allocation8 + $0x278] sm:$0xff]
    %v575 = vld [vmem:[#allocation8 + $0x280] sm:$0xff]
    %v576 = vld [vmem:[#allocation8 + $0x288] sm:$0xff]
    %v577 = vld [vmem:[#allocation8 + $0x290] sm:$0xff]
    %v578 = vld [vmem:[#allocation8 + $0x298] sm:$0xff]
    %v579 = vld [vmem:[#allocation8 + $0x2a0] sm:$0xff]
    %v580 = vld [vmem:[#allocation8 + $0x2a8] sm:$0xff]
    %v581 = vld [vmem:[#allocation8 + $0x2b0] sm:$0xff]
    %v582 = vld [vmem:[#allocation8 + $0x2b8] sm:$0xff]
    %v583 = vld [vmem:[#allocation8 + $0x2c0] sm:$0xff]
    %v584 = vld [vmem:[#allocation8 + $0x2c8] sm:$0xff]
    %v585 = vld [vmem:[#allocation8 + $0x2d0] sm:$0xff]
    %v586 = vld [vmem:[#allocation8 + $0x2d8] sm:$0xff]
    %v587 = vld [vmem:[#allocation8 + $0x2e0] sm:$0xff]
    %v588 = vld [vmem:[#allocation8 + $0x2e8] sm:$0xff]
    %v589 = vld [vmem:[#allocation8 + $0x2f0] sm:$0xff]
    %v590 = vld [vmem:[#allocation8 + $0x2f8] sm:$0xff]
    %v591 = vld [vmem:[#allocation8 + $0x300] sm:$0xff]
    %v592 = vld [vmem:[#allocation8 + $0x308] sm:$0xff]
    %v593 = vld [vmem:[#allocation8 + $0x310] sm:$0xff]
    %v594 = vld [vmem:[#allocation8 + $0x318] sm:$0xff]
    %v595 = vld [vmem:[#allocation8 + $0x320] sm:$0xff]
    %v596 = vld [vmem:[#allocation8 + $0x328] sm:$0xff]
    %v597 = vld [vmem:[#allocation8 + $0x330] sm:$0xff]
    %v598 = vld [vmem:[#allocation8 + $0x338] sm:$0xff]
    %v599 = vld [vmem:[#allocation8 + $0x340] sm:$0xff]
    %v600 = vld [vmem:[#allocation8 + $0x348] sm:$0xff]
    %v601 = vld [vmem:[#allocation8 + $0x350] sm:$0xff]
    %v602 = vld [vmem:[#allocation8 + $0x358] sm:$0xff]
    %v603 = vld [vmem:[#allocation8 + $0x360] sm:$0xff]
    %v604 = vld [vmem:[#allocation8 + $0x368] sm:$0xff]
    %v605 = vld [vmem:[#allocation8 + $0x370] sm:$0xff]
    %v606 = vld [vmem:[#allocation8 + $0x378] sm:$0xff]
    %v607 = vld [vmem:[#allocation8 + $0x380] sm:$0xff]
    %v608 = vld [vmem:[#allocation8 + $0x388] sm:$0xff]
    %v609 = vld [vmem:[#allocation8 + $0x390] sm:$0xff]
    %v610 = vld [vmem:[#allocation8 + $0x398] sm:$0xff]
    %v611 = vld [vmem:[#allocation8 + $0x3a0] sm:$0xff]
    %v612 = vld [vmem:[#allocation8 + $0x3a8] sm:$0xff]
    %v613 = vld [vmem:[#allocation8 + $0x3b0] sm:$0xff]
    %v614 = vld [vmem:[#allocation8 + $0x3b8] sm:$0xff]
    %v615 = vld [vmem:[#allocation8 + $0x3c0] sm:$0xff]
    %v616 = vld [vmem:[#allocation8 + $0x3c8] sm:$0xff]
    %v617 = vld [vmem:[#allocation8 + $0x3d0] sm:$0xff]
    %v618 = vld [vmem:[#allocation8 + $0x3d8] sm:$0xff]
    %v619 = vld [vmem:[#allocation8 + $0x3e0] sm:$0xff]
    %v620 = vld [vmem:[#allocation8 + $0x3e8] sm:$0xff]
    %v621 = vld [vmem:[#allocation8 + $0x3f0] sm:$0xff]
    %v622 = vld [vmem:[#allocation8 + $0x3f8] sm:$0xff]
    %v623 = vld [vmem:[#allocation10] sm:$0xf]
    %v625 = vlaneseq
    %v626 = vshrl.u32 %v625, 7
    %v627 = vsub.s32 0, %v626
    %v628 = vrot.slane %v623, %v627
    %v629 = vlaneseq
    %v630 = vshrl.u32 %v629, 7
    %v631 = vsub.s32 1, %v630
    %v632 = vrot.slane %v623, %v631
    %v633 = vlaneseq
    %v634 = vshrl.u32 %v633, 7
    %v635 = vsub.s32 2, %v634
    %v636 = vrot.slane %v623, %v635
    %v637 = vlaneseq
    %v638 = vshrl.u32 %v637, 7
    %v639 = vsub.s32 3, %v638
    %v640 = vrot.slane %v623, %v639
    %645 = vmatprep.subr.mxu0 %v496
    %646 = vmatpush1.msra.mxu0 %v495
    %647 = vmatprep.subr.mxu0 %v500
    %648 = vmatpush1.msra.mxu0 %v499
    %649 = vmatprep.subr.mxu0 %v504
    %650 = vmatpush1.msra.mxu0 %v503
    %651 = vmatprep.subr.mxu0 %v508
    %652 = vmatpush1.msra.mxu0 %v507
    %653 = vmatprep.subr.mxu0 %v512
    %654 = vmatpush1.msra.mxu0 %v511
    %655 = vmatprep.subr.mxu0 %v516
    %656 = vmatpush1.msra.mxu0 %v515
    %657 = vmatprep.subr.mxu0 %v520
    %658 = vmatpush1.msra.mxu0 %v519
    %659 = vmatprep.subr.mxu0 %v524
    %660 = vmatpush1.msra.mxu0 %v523
    %661 = vmatprep.subr.mxu0 %v528
    %662 = vmatpush1.msra.mxu0 %v527
    %663 = vmatprep.subr.mxu0 %v532
    %664 = vmatpush1.msra.mxu0 %v531
    %665 = vmatprep.subr.mxu0 %v536
    %666 = vmatpush1.msra.mxu0 %v535
    %667 = vmatprep.subr.mxu0 %v540
    %668 = vmatpush1.msra.mxu0 %v539
    %669 = vmatprep.subr.mxu0 %v544
    %670 = vmatpush1.msra.mxu0 %v543
    %671 = vmatprep.subr.mxu0 %v548
    %672 = vmatpush1.msra.mxu0 %v547
    %673 = vmatprep.subr.mxu0 %v552
    %674 = vmatpush1.msra.mxu0 %v551
    %675 = vmatprep.subr.mxu0 %v556
    %676 = vmatpush1.msra.mxu0 %v555
    %677 = vmatprep.subr.mxu0 %v560
    %678 = vmatpush1.msra.mxu0 %v559
    %679 = vmatprep.subr.mxu0 %v564
    %680 = vmatpush1.msra.mxu0 %v563
    %681 = vmatprep.subr.mxu0 %v568
    %682 = vmatpush1.msra.mxu0 %v567
    %683 = vmatprep.subr.mxu0 %v572
    %684 = vmatpush1.msra.mxu0 %v571
    %685 = vmatprep.subr.mxu0 %v576
    %686 = vmatpush1.msra.mxu0 %v575
    %687 = vmatprep.subr.mxu0 %v580
    %688 = vmatpush1.msra.mxu0 %v579
    %689 = vmatprep.subr.mxu0 %v584
    %690 = vmatpush1.msra.mxu0 %v583
    %691 = vmatprep.subr.mxu0 %v588
    %692 = vmatpush1.msra.mxu0 %v587
    %693 = vmatprep.subr.mxu0 %v592
    %694 = vmatpush1.msra.mxu0 %v591
    %695 = vmatprep.subr.mxu0 %v596
    %696 = vmatpush1.msra.mxu0 %v595
    %697 = vmatprep.subr.mxu0 %v600
    %698 = vmatpush1.msra.mxu0 %v599
    %699 = vmatprep.subr.mxu0 %v604
    %700 = vmatpush1.msra.mxu0 %v603
    %701 = vmatprep.subr.mxu0 %v608
    %702 = vmatpush1.msra.mxu0 %v607
    %703 = vmatprep.subr.mxu0 %v612
    %704 = vmatpush1.msra.mxu0 %v611
    %705 = vmatprep.subr.mxu0 %v616
    %706 = vmatpush1.msra.mxu0 %v615
    %707 = vmatprep.subr.mxu0 %v620
    %708 = vmatpush1.msra.mxu0 %v619
    %709 = vmatprep.mubr.f32.mxu0 0.0
    %710 = vmatmul.mubr.f32.gmra.mrb[0].mxu0 %v494
    %v711 = vpop.f32.mrb[0].mxu0
    %v712 = vadd.f32 %v628, %v711
    %v713 = vpop.f32.mrb[0].mxu0
    %v714 = vadd.f32 %v632, %v713
    %715 = vdwg.mxu0
    %716 = vmatprep.subr.mxu0 %v498
    %717 = vmatpush1.msra.mxu0 %v497
    %718 = vmatprep.subr.mxu0 %v502
    %719 = vmatpush1.msra.mxu0 %v501
    %720 = vmatprep.subr.mxu0 %v506
    %721 = vmatpush1.msra.mxu0 %v505
    %722 = vmatprep.subr.mxu0 %v510
    %723 = vmatpush1.msra.mxu0 %v509
    %724 = vmatprep.subr.mxu0 %v514
    %725 = vmatpush1.msra.mxu0 %v513
    %726 = vmatprep.subr.mxu0 %v518
    %727 = vmatpush1.msra.mxu0 %v517
    %728 = vmatprep.subr.mxu0 %v522
    %729 = vmatpush1.msra.mxu0 %v521
    %730 = vmatprep.subr.mxu0 %v526
    %731 = vmatpush1.msra.mxu0 %v525
    %732 = vmatprep.subr.mxu0 %v530
    %733 = vmatpush1.msra.mxu0 %v529
    %734 = vmatprep.subr.mxu0 %v534
    %735 = vmatpush1.msra.mxu0 %v533
    %736 = vmatprep.subr.mxu0 %v538
    %737 = vmatpush1.msra.mxu0 %v537
    %738 = vmatprep.subr.mxu0 %v542
    %739 = vmatpush1.msra.mxu0 %v541
    %740 = vmatprep.subr.mxu0 %v546
    %741 = vmatpush1.msra.mxu0 %v545
    %742 = vmatprep.subr.mxu0 %v550
    %743 = vmatpush1.msra.mxu0 %v549
    %744 = vmatprep.subr.mxu0 %v554
    %745 = vmatpush1.msra.mxu0 %v553
    %746 = vmatprep.subr.mxu0 %v558
    %747 = vmatpush1.msra.mxu0 %v557
    %748 = vmatprep.subr.mxu0 %v562
    %749 = vmatpush1.msra.mxu0 %v561
    %750 = vmatprep.subr.mxu0 %v566
    %751 = vmatpush1.msra.mxu0 %v565
    %752 = vmatprep.subr.mxu0 %v570
    %753 = vmatpush1.msra.mxu0 %v569
    %754 = vmatprep.subr.mxu0 %v574
    %755 = vmatpush1.msra.mxu0 %v573
    %756 = vmatprep.subr.mxu0 %v578
    %757 = vmatpush1.msra.mxu0 %v577
    %758 = vmatprep.subr.mxu0 %v582
    %759 = vmatpush1.msra.mxu0 %v581
    %760 = vmatprep.subr.mxu0 %v586
    %761 = vmatpush1.msra.mxu0 %v585
    %762 = vmatprep.subr.mxu0 %v590
    %763 = vmatpush1.msra.mxu0 %v589
    %764 = vmatprep.subr.mxu0 %v594
    %765 = vmatpush1.msra.mxu0 %v593
    %766 = vmatprep.subr.mxu0 %v598
    %767 = vmatpush1.msra.mxu0 %v597
    %768 = vmatprep.subr.mxu0 %v602
    %769 = vmatpush1.msra.mxu0 %v601
    %770 = vmatprep.subr.mxu0 %v606
    %771 = vmatpush1.msra.mxu0 %v605
    %772 = vmatprep.subr.mxu0 %v610
    %773 = vmatpush1.msra.mxu0 %v609
    %774 = vmatprep.subr.mxu0 %v614
    %775 = vmatpush1.msra.mxu0 %v613
    %776 = vmatprep.subr.mxu0 %v618
    %777 = vmatpush1.msra.mxu0 %v617
    %778 = vmatprep.subr.mxu0 %v622
    %779 = vmatpush1.msra.mxu0 %v621
    %780 = vmatprep.mubr.f32.mxu0 0.0
    %781 = vmatmul.mubr.f32.gmra.mrb[0].mxu0 %v494
    %v782 = vpop.f32.mrb[0].mxu0
    %v783 = vadd.f32 %v636, %v782
    %v784 = vpop.f32.mrb[0].mxu0
    %v785 = vadd.f32 %v640, %v784
    %786 = vdwg.mxu0
    %v787 = vxor.u32 %v712, 2147483648
    %v788 = vxor.u32 %v714, 2147483648
    %v789 = vxor.u32 %v783, 2147483648
    %v790 = vmul.f32 %v787, 1.442695
    %v791 = vpow.pop %v790
    %v792 = vmul.f32 %v788, 1.442695
    %v793 = vpow.pop %v792
    %v794 = vmul.f32 %v789, 1.442695
    %v795 = vpow.pop %v794
    %v796 = vadd.f32 %v791, 1.0
    %v797 = vadd.f32 %v793, 1.0
    %v798 = vadd.f32 %v795, 1.0
    %v799 = vrcp.pop %v796
    %v800 = vmul.f32 1.0, %v799
    %v801 = vrcp.pop %v797
    %v802 = vmul.f32 1.0, %v801
    %v803 = vrcp.pop %v798
    %v804 = vmul.f32 1.0, %v803
    %v805 = vtanh.pop %v785
    %v806 = vmul.f32 %v802, 0.0
    %v807 = vmul.f32 %v800, %v805
    %v808 = vadd.f32 %v806, %v807
    %v809 = vtanh.pop %v808
    %v810 = vmul.f32 %v804, %v809
    %v811 = vld [vmem:[#allocation11] sm:$0xff]
    %v812 = vld [vmem:[#allocation11 + $0x8] sm:$0xff]
    %v813 = vld [vmem:[#allocation11 + $0x10] sm:$0xff]
    %v814 = vld [vmem:[#allocation11 + $0x18] sm:$0xff]
    %v815 = vld [vmem:[#allocation11 + $0x20] sm:$0xff]
    %v816 = vld [vmem:[#allocation11 + $0x28] sm:$0xff]
    %v817 = vld [vmem:[#allocation11 + $0x30] sm:$0xff]
    %v818 = vld [vmem:[#allocation11 + $0x38] sm:$0xff]
    %v819 = vld [vmem:[#allocation11 + $0x40] sm:$0xff]
    %v820 = vld [vmem:[#allocation11 + $0x48] sm:$0xff]
    %v821 = vld [vmem:[#allocation11 + $0x50] sm:$0xff]
    %v822 = vld [vmem:[#allocation11 + $0x58] sm:$0xff]
    %v823 = vld [vmem:[#allocation11 + $0x60] sm:$0xff]
    %v824 = vld [vmem:[#allocation11 + $0x68] sm:$0xff]
    %v825 = vld [vmem:[#allocation11 + $0x70] sm:$0xff]
    %v826 = vld [vmem:[#allocation11 + $0x78] sm:$0xff]
    %v827 = vld [vmem:[#allocation11 + $0x80] sm:$0xff]
    %v828 = vld [vmem:[#allocation11 + $0x88] sm:$0xff]
    %v829 = vld [vmem:[#allocation11 + $0x90] sm:$0xff]
    %v830 = vld [vmem:[#allocation11 + $0x98] sm:$0xff]
    %v831 = vld [vmem:[#allocation11 + $0xa0] sm:$0xff]
    %v832 = vld [vmem:[#allocation11 + $0xa8] sm:$0xff]
    %v833 = vld [vmem:[#allocation11 + $0xb0] sm:$0xff]
    %v834 = vld [vmem:[#allocation11 + $0xb8] sm:$0xff]
    %v835 = vld [vmem:[#allocation11 + $0xc0] sm:$0xff]
    %v836 = vld [vmem:[#allocation11 + $0xc8] sm:$0xff]
    %v837 = vld [vmem:[#allocation11 + $0xd0] sm:$0xff]
    %v838 = vld [vmem:[#allocation11 + $0xd8] sm:$0xff]
    %v839 = vld [vmem:[#allocation11 + $0xe0] sm:$0xff]
    %v840 = vld [vmem:[#allocation11 + $0xe8] sm:$0xff]
    %v841 = vld [vmem:[#allocation11 + $0xf0] sm:$0xff]
    %v842 = vld [vmem:[#allocation11 + $0xf8] sm:$0xff]
    %v843 = vld [vmem:[#allocation11 + $0x100] sm:$0xff]
    %v844 = vld [vmem:[#allocation11 + $0x108] sm:$0xff]
    %v845 = vld [vmem:[#allocation11 + $0x110] sm:$0xff]
    %v846 = vld [vmem:[#allocation11 + $0x118] sm:$0xff]
    %v847 = vld [vmem:[#allocation11 + $0x120] sm:$0xff]
    %v848 = vld [vmem:[#allocation11 + $0x128] sm:$0xff]
    %v849 = vld [vmem:[#allocation11 + $0x130] sm:$0xff]
    %v850 = vld [vmem:[#allocation11 + $0x138] sm:$0xff]
    %v851 = vld [vmem:[#allocation11 + $0x140] sm:$0xff]
    %v852 = vld [vmem:[#allocation11 + $0x148] sm:$0xff]
    %v853 = vld [vmem:[#allocation11 + $0x150] sm:$0xff]
    %v854 = vld [vmem:[#allocation11 + $0x158] sm:$0xff]
    %v855 = vld [vmem:[#allocation11 + $0x160] sm:$0xff]
    %v856 = vld [vmem:[#allocation11 + $0x168] sm:$0xff]
    %v857 = vld [vmem:[#allocation11 + $0x170] sm:$0xff]
    %v858 = vld [vmem:[#allocation11 + $0x178] sm:$0xff]
    %v859 = vld [vmem:[#allocation11 + $0x180] sm:$0xff]
    %v860 = vld [vmem:[#allocation11 + $0x188] sm:$0xff]
    %v861 = vld [vmem:[#allocation11 + $0x190] sm:$0xff]
    %v862 = vld [vmem:[#allocation11 + $0x198] sm:$0xff]
    %v863 = vld [vmem:[#allocation11 + $0x1a0] sm:$0xff]
    %v864 = vld [vmem:[#allocation11 + $0x1a8] sm:$0xff]
    %v865 = vld [vmem:[#allocation11 + $0x1b0] sm:$0xff]
    %v866 = vld [vmem:[#allocation11 + $0x1b8] sm:$0xff]
    %v867 = vld [vmem:[#allocation11 + $0x1c0] sm:$0xff]
    %v868 = vld [vmem:[#allocation11 + $0x1c8] sm:$0xff]
    %v869 = vld [vmem:[#allocation11 + $0x1d0] sm:$0xff]
    %v870 = vld [vmem:[#allocation11 + $0x1d8] sm:$0xff]
    %v871 = vld [vmem:[#allocation11 + $0x1e0] sm:$0xff]
    %v872 = vld [vmem:[#allocation11 + $0x1e8] sm:$0xff]
    %v873 = vld [vmem:[#allocation11 + $0x1f0] sm:$0xff]
    %v874 = vld [vmem:[#allocation11 + $0x1f8] sm:$0xff]
    %v875 = vld [vmem:[#allocation11 + $0x200] sm:$0xff]
    %v876 = vld [vmem:[#allocation11 + $0x208] sm:$0xff]
    %v877 = vld [vmem:[#allocation11 + $0x210] sm:$0xff]
    %v878 = vld [vmem:[#allocation11 + $0x218] sm:$0xff]
    %v879 = vld [vmem:[#allocation11 + $0x220] sm:$0xff]
    %v880 = vld [vmem:[#allocation11 + $0x228] sm:$0xff]
    %v881 = vld [vmem:[#allocation11 + $0x230] sm:$0xff]
    %v882 = vld [vmem:[#allocation11 + $0x238] sm:$0xff]
    %v883 = vld [vmem:[#allocation11 + $0x240] sm:$0xff]
    %v884 = vld [vmem:[#allocation11 + $0x248] sm:$0xff]
    %v885 = vld [vmem:[#allocation11 + $0x250] sm:$0xff]
    %v886 = vld [vmem:[#allocation11 + $0x258] sm:$0xff]
    %v887 = vld [vmem:[#allocation11 + $0x260] sm:$0xff]
    %v888 = vld [vmem:[#allocation11 + $0x268] sm:$0xff]
    %v889 = vld [vmem:[#allocation11 + $0x270] sm:$0xff]
    %v890 = vld [vmem:[#allocation11 + $0x278] sm:$0xff]
    %v891 = vld [vmem:[#allocation11 + $0x280] sm:$0xff]
    %v892 = vld [vmem:[#allocation11 + $0x288] sm:$0xff]
    %v893 = vld [vmem:[#allocation11 + $0x290] sm:$0xff]
    %v894 = vld [vmem:[#allocation11 + $0x298] sm:$0xff]
    %v895 = vld [vmem:[#allocation11 + $0x2a0] sm:$0xff]
    %v896 = vld [vmem:[#allocation11 + $0x2a8] sm:$0xff]
    %v897 = vld [vmem:[#allocation11 + $0x2b0] sm:$0xff]
    %v898 = vld [vmem:[#allocation11 + $0x2b8] sm:$0xff]
    %v899 = vld [vmem:[#allocation11 + $0x2c0] sm:$0xff]
    %v900 = vld [vmem:[#allocation11 + $0x2c8] sm:$0xff]
    %v901 = vld [vmem:[#allocation11 + $0x2d0] sm:$0xff]
    %v902 = vld [vmem:[#allocation11 + $0x2d8] sm:$0xff]
    %v903 = vld [vmem:[#allocation11 + $0x2e0] sm:$0xff]
    %v904 = vld [vmem:[#allocation11 + $0x2e8] sm:$0xff]
    %v905 = vld [vmem:[#allocation11 + $0x2f0] sm:$0xff]
    %v906 = vld [vmem:[#allocation11 + $0x2f8] sm:$0xff]
    %v907 = vld [vmem:[#allocation11 + $0x300] sm:$0xff]
    %v908 = vld [vmem:[#allocation11 + $0x308] sm:$0xff]
    %v909 = vld [vmem:[#allocation11 + $0x310] sm:$0xff]
    %v910 = vld [vmem:[#allocation11 + $0x318] sm:$0xff]
    %v911 = vld [vmem:[#allocation11 + $0x320] sm:$0xff]
    %v912 = vld [vmem:[#allocation11 + $0x328] sm:$0xff]
    %v913 = vld [vmem:[#allocation11 + $0x330] sm:$0xff]
    %v914 = vld [vmem:[#allocation11 + $0x338] sm:$0xff]
    %v915 = vld [vmem:[#allocation11 + $0x340] sm:$0xff]
    %v916 = vld [vmem:[#allocation11 + $0x348] sm:$0xff]
    %v917 = vld [vmem:[#allocation11 + $0x350] sm:$0xff]
    %v918 = vld [vmem:[#allocation11 + $0x358] sm:$0xff]
    %v919 = vld [vmem:[#allocation11 + $0x360] sm:$0xff]
    %v920 = vld [vmem:[#allocation11 + $0x368] sm:$0xff]
    %v921 = vld [vmem:[#allocation11 + $0x370] sm:$0xff]
    %v922 = vld [vmem:[#allocation11 + $0x378] sm:$0xff]
    %v923 = vld [vmem:[#allocation11 + $0x380] sm:$0xff]
    %v924 = vld [vmem:[#allocation11 + $0x388] sm:$0xff]
    %v925 = vld [vmem:[#allocation11 + $0x390] sm:$0xff]
    %v926 = vld [vmem:[#allocation11 + $0x398] sm:$0xff]
    %v927 = vld [vmem:[#allocation11 + $0x3a0] sm:$0xff]
    %v928 = vld [vmem:[#allocation11 + $0x3a8] sm:$0xff]
    %v929 = vld [vmem:[#allocation11 + $0x3b0] sm:$0xff]
    %v930 = vld [vmem:[#allocation11 + $0x3b8] sm:$0xff]
    %v931 = vld [vmem:[#allocation11 + $0x3c0] sm:$0xff]
    %v932 = vld [vmem:[#allocation11 + $0x3c8] sm:$0xff]
    %v933 = vld [vmem:[#allocation11 + $0x3d0] sm:$0xff]
    %v934 = vld [vmem:[#allocation11 + $0x3d8] sm:$0xff]
    %v935 = vld [vmem:[#allocation11 + $0x3e0] sm:$0xff]
    %v936 = vld [vmem:[#allocation11 + $0x3e8] sm:$0xff]
    %v937 = vld [vmem:[#allocation11 + $0x3f0] sm:$0xff]
    %v938 = vld [vmem:[#allocation11 + $0x3f8] sm:$0xff]
    %v939 = vld [vmem:[#allocation13] sm:$0xf]
    %v941 = vlaneseq
    %v942 = vshrl.u32 %v941, 7
    %v943 = vsub.s32 0, %v942
    %v944 = vrot.slane %v939, %v943
    %v945 = vlaneseq
    %v946 = vshrl.u32 %v945, 7
    %v947 = vsub.s32 1, %v946
    %v948 = vrot.slane %v939, %v947
    %v949 = vlaneseq
    %v950 = vshrl.u32 %v949, 7
    %v951 = vsub.s32 2, %v950
    %v952 = vrot.slane %v939, %v951
    %v953 = vlaneseq
    %v954 = vshrl.u32 %v953, 7
    %v955 = vsub.s32 3, %v954
    %v956 = vrot.slane %v939, %v955
    %961 = vmatprep.subr.mxu0 %v812
    %962 = vmatpush1.msra.mxu0 %v811
    %963 = vmatprep.subr.mxu0 %v816
    %964 = vmatpush1.msra.mxu0 %v815
    %965 = vmatprep.subr.mxu0 %v820
    %966 = vmatpush1.msra.mxu0 %v819
    %967 = vmatprep.subr.mxu0 %v824
    %968 = vmatpush1.msra.mxu0 %v823
    %969 = vmatprep.subr.mxu0 %v828
    %970 = vmatpush1.msra.mxu0 %v827
    %971 = vmatprep.subr.mxu0 %v832
    %972 = vmatpush1.msra.mxu0 %v831
    %973 = vmatprep.subr.mxu0 %v836
    %974 = vmatpush1.msra.mxu0 %v835
    %975 = vmatprep.subr.mxu0 %v840
    %976 = vmatpush1.msra.mxu0 %v839
    %977 = vmatprep.subr.mxu0 %v844
    %978 = vmatpush1.msra.mxu0 %v843
    %979 = vmatprep.subr.mxu0 %v848
    %980 = vmatpush1.msra.mxu0 %v847
    %981 = vmatprep.subr.mxu0 %v852
    %982 = vmatpush1.msra.mxu0 %v851
    %983 = vmatprep.subr.mxu0 %v856
    %984 = vmatpush1.msra.mxu0 %v855
    %985 = vmatprep.subr.mxu0 %v860
    %986 = vmatpush1.msra.mxu0 %v859
    %987 = vmatprep.subr.mxu0 %v864
    %988 = vmatpush1.msra.mxu0 %v863
    %989 = vmatprep.subr.mxu0 %v868
    %990 = vmatpush1.msra.mxu0 %v867
    %991 = vmatprep.subr.mxu0 %v872
    %992 = vmatpush1.msra.mxu0 %v871
    %993 = vmatprep.subr.mxu0 %v876
    %994 = vmatpush1.msra.mxu0 %v875
    %995 = vmatprep.subr.mxu0 %v880
    %996 = vmatpush1.msra.mxu0 %v879
    %997 = vmatprep.subr.mxu0 %v884
    %998 = vmatpush1.msra.mxu0 %v883
    %999 = vmatprep.subr.mxu0 %v888
    %1000 = vmatpush1.msra.mxu0 %v887
    %1001 = vmatprep.subr.mxu0 %v892
    %1002 = vmatpush1.msra.mxu0 %v891
    %1003 = vmatprep.subr.mxu0 %v896
    %1004 = vmatpush1.msra.mxu0 %v895
    %1005 = vmatprep.subr.mxu0 %v900
    %1006 = vmatpush1.msra.mxu0 %v899
    %1007 = vmatprep.subr.mxu0 %v904
    %1008 = vmatpush1.msra.mxu0 %v903
    %1009 = vmatprep.subr.mxu0 %v908
    %1010 = vmatpush1.msra.mxu0 %v907
    %1011 = vmatprep.subr.mxu0 %v912
    %1012 = vmatpush1.msra.mxu0 %v911
    %1013 = vmatprep.subr.mxu0 %v916
    %1014 = vmatpush1.msra.mxu0 %v915
    %1015 = vmatprep.subr.mxu0 %v920
    %1016 = vmatpush1.msra.mxu0 %v919
    %1017 = vmatprep.subr.mxu0 %v924
    %1018 = vmatpush1.msra.mxu0 %v923
    %1019 = vmatprep.subr.mxu0 %v928
    %1020 = vmatpush1.msra.mxu0 %v927
    %1021 = vmatprep.subr.mxu0 %v932
    %1022 = vmatpush1.msra.mxu0 %v931
    %1023 = vmatprep.subr.mxu0 %v936
    %1024 = vmatpush1.msra.mxu0 %v935
    %1025 = vmatprep.mubr.f32.mxu0 0.0
    %1026 = vmatmul.mubr.f32.gmra.mrb[0].mxu0 %v810
    %v1027 = vpop.f32.mrb[0].mxu0
    %v1028 = vadd.f32 %v944, %v1027
    %v1029 = vpop.f32.mrb[0].mxu0
    %v1030 = vadd.f32 %v948, %v1029
    %1031 = vdwg.mxu0
    %1032 = vmatprep.subr.mxu0 %v814
    %1033 = vmatpush1.msra.mxu0 %v813
    %1034 = vmatprep.subr.mxu0 %v818
    %1035 = vmatpush1.msra.mxu0 %v817
    %1036 = vmatprep.subr.mxu0 %v822
    %1037 = vmatpush1.msra.mxu0 %v821
    %1038 = vmatprep.subr.mxu0 %v826
    %1039 = vmatpush1.msra.mxu0 %v825
    %1040 = vmatprep.subr.mxu0 %v830
    %1041 = vmatpush1.msra.mxu0 %v829
    %1042 = vmatprep.subr.mxu0 %v834
    %1043 = vmatpush1.msra.mxu0 %v833
    %1044 = vmatprep.subr.mxu0 %v838
    %1045 = vmatpush1.msra.mxu0 %v837
    %1046 = vmatprep.subr.mxu0 %v842
    %1047 = vmatpush1.msra.mxu0 %v841
    %1048 = vmatprep.subr.mxu0 %v846
    %1049 = vmatpush1.msra.mxu0 %v845
    %1050 = vmatprep.subr.mxu0 %v850
    %1051 = vmatpush1.msra.mxu0 %v849
    %1052 = vmatprep.subr.mxu0 %v854
    %1053 = vmatpush1.msra.mxu0 %v853
    %1054 = vmatprep.subr.mxu0 %v858
    %1055 = vmatpush1.msra.mxu0 %v857
    %1056 = vmatprep.subr.mxu0 %v862
    %1057 = vmatpush1.msra.mxu0 %v861
    %1058 = vmatprep.subr.mxu0 %v866
    %1059 = vmatpush1.msra.mxu0 %v865
    %1060 = vmatprep.subr.mxu0 %v870
    %1061 = vmatpush1.msra.mxu0 %v869
    %1062 = vmatprep.subr.mxu0 %v874
    %1063 = vmatpush1.msra.mxu0 %v873
    %1064 = vmatprep.subr.mxu0 %v878
    %1065 = vmatpush1.msra.mxu0 %v877
    %1066 = vmatprep.subr.mxu0 %v882
    %1067 = vmatpush1.msra.mxu0 %v881
    %1068 = vmatprep.subr.mxu0 %v886
    %1069 = vmatpush1.msra.mxu0 %v885
    %1070 = vmatprep.subr.mxu0 %v890
    %1071 = vmatpush1.msra.mxu0 %v889
    %1072 = vmatprep.subr.mxu0 %v894
    %1073 = vmatpush1.msra.mxu0 %v893
    %1074 = vmatprep.subr.mxu0 %v898
    %1075 = vmatpush1.msra.mxu0 %v897
    %1076 = vmatprep.subr.mxu0 %v902
    %1077 = vmatpush1.msra.mxu0 %v901
    %1078 = vmatprep.subr.mxu0 %v906
    %1079 = vmatpush1.msra.mxu0 %v905
    %1080 = vmatprep.subr.mxu0 %v910
    %1081 = vmatpush1.msra.mxu0 %v909
    %1082 = vmatprep.subr.mxu0 %v914
    %1083 = vmatpush1.msra.mxu0 %v913
    %1084 = vmatprep.subr.mxu0 %v918
    %1085 = vmatpush1.msra.mxu0 %v917
    %1086 = vmatprep.subr.mxu0 %v922
    %1087 = vmatpush1.msra.mxu0 %v921
    %1088 = vmatprep.subr.mxu0 %v926
    %1089 = vmatpush1.msra.mxu0 %v925
    %1090 = vmatprep.subr.mxu0 %v930
    %1091 = vmatpush1.msra.mxu0 %v929
    %1092 = vmatprep.subr.mxu0 %v934
    %1093 = vmatpush1.msra.mxu0 %v933
    %1094 = vmatprep.subr.mxu0 %v938
    %1095 = vmatpush1.msra.mxu0 %v937
    %1096 = vmatprep.mubr.f32.mxu0 0.0
    %1097 = vmatmul.mubr.f32.gmra.mrb[0].mxu0 %v810
    %v1098 = vpop.f32.mrb[0].mxu0
    %v1099 = vadd.f32 %v952, %v1098
    %v1100 = vpop.f32.mrb[0].mxu0
    %v1101 = vadd.f32 %v956, %v1100
    %1102 = vdwg.mxu0
    %v1103 = vxor.u32 %v1028, 2147483648
    %v1104 = vxor.u32 %v1030, 2147483648
    %v1105 = vxor.u32 %v1099, 2147483648
    %v1106 = vmul.f32 %v1103, 1.442695
    %v1107 = vpow.pop %v1106
    %v1108 = vmul.f32 %v1104, 1.442695
    %v1109 = vpow.pop %v1108
    %v1110 = vmul.f32 %v1105, 1.442695
    %v1111 = vpow.pop %v1110
    %v1112 = vadd.f32 %v1107, 1.0
    %v1113 = vadd.f32 %v1109, 1.0
    %v1114 = vadd.f32 %v1111, 1.0
    %v1115 = vrcp.pop %v1112
    %v1116 = vmul.f32 1.0, %v1115
    %v1117 = vrcp.pop %v1113
    %v1118 = vmul.f32 1.0, %v1117
    %v1119 = vrcp.pop %v1114
    %v1120 = vmul.f32 1.0, %v1119
    %v1121 = vtanh.pop %v1101
    %v1122 = vmul.f32 %v1118, 0.0
    %v1123 = vmul.f32 %v1116, %v1121
    %v1124 = vadd.f32 %v1122, %v1123
    %v1125 = vtanh.pop %v1124
    %v1126 = vmul.f32 %v1120, %v1125
    %s1127 = scalar_lea.vmem [#allocation2], 8
    %v1128 = vld [vmem:[%s1127] sm:$0xff]
    %1129 = vmatprep.subr.mxu0 %v180
    %1130 = vmatpush1.msra.mxu0 %v179
    %1131 = vmatprep.subr.mxu0 %v184
    %1132 = vmatpush1.msra.mxu0 %v183
    %1133 = vmatprep.subr.mxu0 %v188
    %1134 = vmatpush1.msra.mxu0 %v187
    %1135 = vmatprep.subr.mxu0 %v192
    %1136 = vmatpush1.msra.mxu0 %v191
    %1137 = vmatprep.subr.mxu0 %v196
    %1138 = vmatpush1.msra.mxu0 %v195
    %1139 = vmatprep.subr.mxu0 %v200
    %1140 = vmatpush1.msra.mxu0 %v199
    %1141 = vmatprep.subr.mxu0 %v204
    %1142 = vmatpush1.msra.mxu0 %v203
    %1143 = vmatprep.subr.mxu0 %v208
    %1144 = vmatpush1.msra.mxu0 %v207
    %1145 = vmatprep.subr.mxu0 %v212
    %1146 = vmatpush1.msra.mxu0 %v211
    %1147 = vmatprep.subr.mxu0 %v216
    %1148 = vmatpush1.msra.mxu0 %v215
    %1149 = vmatprep.subr.mxu0 %v220
    %1150 = vmatpush1.msra.mxu0 %v219
    %1151 = vmatprep.subr.mxu0 %v224
    %1152 = vmatpush1.msra.mxu0 %v223
    %1153 = vmatprep.subr.mxu0 %v228
    %1154 = vmatpush1.msra.mxu0 %v227
    %1155 = vmatprep.subr.mxu0 %v232
    %1156 = vmatpush1.msra.mxu0 %v231
    %1157 = vmatprep.subr.mxu0 %v236
    %1158 = vmatpush1.msra.mxu0 %v235
    %1159 = vmatprep.subr.mxu0 %v240
    %1160 = vmatpush1.msra.mxu0 %v239
    %1161 = vmatprep.subr.mxu0 %v244
    %1162 = vmatpush1.msra.mxu0 %v243
    %1163 = vmatprep.subr.mxu0 %v248
    %1164 = vmatpush1.msra.mxu0 %v247
    %1165 = vmatprep.subr.mxu0 %v252
    %1166 = vmatpush1.msra.mxu0 %v251
    %1167 = vmatprep.subr.mxu0 %v256
    %1168 = vmatpush1.msra.mxu0 %v255
    %1169 = vmatprep.subr.mxu0 %v260
    %1170 = vmatpush1.msra.mxu0 %v259
    %1171 = vmatprep.subr.mxu0 %v264
    %1172 = vmatpush1.msra.mxu0 %v263
    %1173 = vmatprep.subr.mxu0 %v268
    %1174 = vmatpush1.msra.mxu0 %v267
    %1175 = vmatprep.subr.mxu0 %v272
    %1176 = vmatpush1.msra.mxu0 %v271
    %1177 = vmatprep.subr.mxu0 %v276
    %1178 = vmatpush1.msra.mxu0 %v275
    %1179 = vmatprep.subr.mxu0 %v280
    %1180 = vmatpush1.msra.mxu0 %v279
    %1181 = vmatprep.subr.mxu0 %v284
    %1182 = vmatpush1.msra.mxu0 %v283
    %1183 = vmatprep.subr.mxu0 %v288
    %1184 = vmatpush1.msra.mxu0 %v287
    %1185 = vmatprep.subr.mxu0 %v292
    %1186 = vmatpush1.msra.mxu0 %v291
    %1187 = vmatprep.subr.mxu0 %v296
    %1188 = vmatpush1.msra.mxu0 %v295
    %1189 = vmatprep.subr.mxu0 %v300
    %1190 = vmatpush1.msra.mxu0 %v299
    %1191 = vmatprep.subr.mxu0 %v304
    %1192 = vmatpush1.msra.mxu0 %v303
    %1193 = vmatprep.mubr.f32.mxu0 %v494
    %1194 = vmatmul.mubr.f32.gmra.mrb[0].mxu0 %v1128
    %v1195 = vpop.f32.mrb[0].mxu0
    %v1196 = vadd.f32 %v312, %v1195
    %v1197 = vpop.f32.mrb[0].mxu0
    %v1198 = vadd.f32 %v316, %v1197
    %1199 = vdwg.mxu0
    %1200 = vmatprep.subr.mxu0 %v182
    %1201 = vmatpush1.msra.mxu0 %v181
    %1202 = vmatprep.subr.mxu0 %v186
    %1203 = vmatpush1.msra.mxu0 %v185
    %1204 = vmatprep.subr.mxu0 %v190
    %1205 = vmatpush1.msra.mxu0 %v189
    %1206 = vmatprep.subr.mxu0 %v194
    %1207 = vmatpush1.msra.mxu0 %v193
    %1208 = vmatprep.subr.mxu0 %v198
    %1209 = vmatpush1.msra.mxu0 %v197
    %1210 = vmatprep.subr.mxu0 %v202
    %1211 = vmatpush1.msra.mxu0 %v201
    %1212 = vmatprep.subr.mxu0 %v206
    %1213 = vmatpush1.msra.mxu0 %v205
    %1214 = vmatprep.subr.mxu0 %v210
    %1215 = vmatpush1.msra.mxu0 %v209
    %1216 = vmatprep.subr.mxu0 %v214
    %1217 = vmatpush1.msra.mxu0 %v213
    %1218 = vmatprep.subr.mxu0 %v218
    %1219 = vmatpush1.msra.mxu0 %v217
    %1220 = vmatprep.subr.mxu0 %v222
    %1221 = vmatpush1.msra.mxu0 %v221
    %1222 = vmatprep.subr.mxu0 %v226
    %1223 = vmatpush1.msra.mxu0 %v225
    %1224 = vmatprep.subr.mxu0 %v230
    %1225 = vmatpush1.msra.mxu0 %v229
    %1226 = vmatprep.subr.mxu0 %v234
    %1227 = vmatpush1.msra.mxu0 %v233
    %1228 = vmatprep.subr.mxu0 %v238
    %1229 = vmatpush1.msra.mxu0 %v237
    %1230 = vmatprep.subr.mxu0 %v242
    %1231 = vmatpush1.msra.mxu0 %v241
    %1232 = vmatprep.subr.mxu0 %v246
    %1233 = vmatpush1.msra.mxu0 %v245
    %1234 = vmatprep.subr.mxu0 %v250
    %1235 = vmatpush1.msra.mxu0 %v249
    %1236 = vmatprep.subr.mxu0 %v254
    %1237 = vmatpush1.msra.mxu0 %v253
    %1238 = vmatprep.subr.mxu0 %v258
    %1239 = vmatpush1.msra.mxu0 %v257
    %1240 = vmatprep.subr.mxu0 %v262
    %1241 = vmatpush1.msra.mxu0 %v261
    %1242 = vmatprep.subr.mxu0 %v266
    %1243 = vmatpush1.msra.mxu0 %v265
    %1244 = vmatprep.subr.mxu0 %v270
    %1245 = vmatpush1.msra.mxu0 %v269
    %1246 = vmatprep.subr.mxu0 %v274
    %1247 = vmatpush1.msra.mxu0 %v273
    %1248 = vmatprep.subr.mxu0 %v278
    %1249 = vmatpush1.msra.mxu0 %v277
    %1250 = vmatprep.subr.mxu0 %v282
    %1251 = vmatpush1.msra.mxu0 %v281
    %1252 = vmatprep.subr.mxu0 %v286
    %1253 = vmatpush1.msra.mxu0 %v285
    %1254 = vmatprep.subr.mxu0 %v290
    %1255 = vmatpush1.msra.mxu0 %v289
    %1256 = vmatprep.subr.mxu0 %v294
    %1257 = vmatpush1.msra.mxu0 %v293
    %1258 = vmatprep.subr.mxu0 %v298
    %1259 = vmatpush1.msra.mxu0 %v297
    %1260 = vmatprep.subr.mxu0 %v302
    %1261 = vmatpush1.msra.mxu0 %v301
    %1262 = vmatprep.subr.mxu0 %v306
    %1263 = vmatpush1.msra.mxu0 %v305
    %1264 = vmatprep.mubr.f32.mxu0 %v494
    %1265 = vmatmul.mubr.f32.gmra.mrb[0].mxu0 %v1128
    %v1266 = vpop.f32.mrb[0].mxu0
    %v1267 = vadd.f32 %v320, %v1266
    %v1268 = vpop.f32.mrb[0].mxu0
    %v1269 = vadd.f32 %v324, %v1268
    %1270 = vdwg.mxu0
    %v1271 = vxor.u32 %v1196, 2147483648
    %v1272 = vxor.u32 %v1198, 2147483648
    %v1273 = vxor.u32 %v1267, 2147483648
    %v1274 = vmul.f32 %v1271, 1.442695
    %v1275 = vpow.pop %v1274
    %v1276 = vmul.f32 %v1272, 1.442695
    %v1277 = vpow.pop %v1276
    %v1278 = vmul.f32 %v1273, 1.442695
    %v1279 = vpow.pop %v1278
    %v1280 = vadd.f32 %v1275, 1.0
    %v1281 = vadd.f32 %v1277, 1.0
    %v1282 = vadd.f32 %v1279, 1.0
    %v1283 = vrcp.pop %v1280
    %v1284 = vmul.f32 1.0, %v1283
    %v1285 = vrcp.pop %v1281
    %v1286 = vmul.f32 1.0, %v1285
    %v1287 = vrcp.pop %v1282
    %v1288 = vmul.f32 1.0, %v1287
    %v1289 = vtanh.pop %v1269
    %v1290 = vmul.f32 %v1286, %v492
    %v1291 = vmul.f32 %v1284, %v1289
    %v1292 = vadd.f32 %v1290, %v1291
    %v1293 = vtanh.pop %v1292
    %v1294 = vmul.f32 %v1288, %v1293
    %1295 = vmatprep.subr.mxu0 %v496
    %1296 = vmatpush1.msra.mxu0 %v495
    %1297 = vmatprep.subr.mxu0 %v500
    %1298 = vmatpush1.msra.mxu0 %v499
    %1299 = vmatprep.subr.mxu0 %v504
    %1300 = vmatpush1.msra.mxu0 %v503
    %1301 = vmatprep.subr.mxu0 %v508
    %1302 = vmatpush1.msra.mxu0 %v507
    %1303 = vmatprep.subr.mxu0 %v512
    %1304 = vmatpush1.msra.mxu0 %v511
    %1305 = vmatprep.subr.mxu0 %v516
    %1306 = vmatpush1.msra.mxu0 %v515
    %1307 = vmatprep.subr.mxu0 %v520
    %1308 = vmatpush1.msra.mxu0 %v519
    %1309 = vmatprep.subr.mxu0 %v524
    %1310 = vmatpush1.msra.mxu0 %v523
    %1311 = vmatprep.subr.mxu0 %v528
    %1312 = vmatpush1.msra.mxu0 %v527
    %1313 = vmatprep.subr.mxu0 %v532
    %1314 = vmatpush1.msra.mxu0 %v531
    %1315 = vmatprep.subr.mxu0 %v536
    %1316 = vmatpush1.msra.mxu0 %v535
    %1317 = vmatprep.subr.mxu0 %v540
    %1318 = vmatpush1.msra.mxu0 %v539
    %1319 = vmatprep.subr.mxu0 %v544
    %1320 = vmatpush1.msra.mxu0 %v543
    %1321 = vmatprep.subr.mxu0 %v548
    %1322 = vmatpush1.msra.mxu0 %v547
    %1323 = vmatprep.subr.mxu0 %v552
    %1324 = vmatpush1.msra.mxu0 %v551
    %1325 = vmatprep.subr.mxu0 %v556
    %1326 = vmatpush1.msra.mxu0 %v555
    %1327 = vmatprep.subr.mxu0 %v560
    %1328 = vmatpush1.msra.mxu0 %v559
    %1329 = vmatprep.subr.mxu0 %v564
    %1330 = vmatpush1.msra.mxu0 %v563
    %1331 = vmatprep.subr.mxu0 %v568
    %1332 = vmatpush1.msra.mxu0 %v567
    %1333 = vmatprep.subr.mxu0 %v572
    %1334 = vmatpush1.msra.mxu0 %v571
    %1335 = vmatprep.subr.mxu0 %v576
    %1336 = vmatpush1.msra.mxu0 %v575
    %1337 = vmatprep.subr.mxu0 %v580
    %1338 = vmatpush1.msra.mxu0 %v579
    %1339 = vmatprep.subr.mxu0 %v584
    %1340 = vmatpush1.msra.mxu0 %v583
    %1341 = vmatprep.subr.mxu0 %v588
    %1342 = vmatpush1.msra.mxu0 %v587
    %1343 = vmatprep.subr.mxu0 %v592
    %1344 = vmatpush1.msra.mxu0 %v591
    %1345 = vmatprep.subr.mxu0 %v596
    %1346 = vmatpush1.msra.mxu0 %v595
    %1347 = vmatprep.subr.mxu0 %v600
    %1348 = vmatpush1.msra.mxu0 %v599
    %1349 = vmatprep.subr.mxu0 %v604
    %1350 = vmatpush1.msra.mxu0 %v603
    %1351 = vmatprep.subr.mxu0 %v608
    %1352 = vmatpush1.msra.mxu0 %v607
    %1353 = vmatprep.subr.mxu0 %v612
    %1354 = vmatpush1.msra.mxu0 %v611
    %1355 = vmatprep.subr.mxu0 %v616
    %1356 = vmatpush1.msra.mxu0 %v615
    %1357 = vmatprep.subr.mxu0 %v620
    %1358 = vmatpush1.msra.mxu0 %v619
    %1359 = vmatprep.mubr.f32.mxu0 %v810
    %1360 = vmatmul.mubr.f32.gmra.mrb[0].mxu0 %v1294
    %v1361 = vpop.f32.mrb[0].mxu0
    %v1362 = vadd.f32 %v628, %v1361
    %v1363 = vpop.f32.mrb[0].mxu0
    %v1364 = vadd.f32 %v632, %v1363
    %1365 = vdwg.mxu0
    %1366 = vmatprep.subr.mxu0 %v498
    %1367 = vmatpush1.msra.mxu0 %v497
    %1368 = vmatprep.subr.mxu0 %v502
    %1369 = vmatpush1.msra.mxu0 %v501
    %1370 = vmatprep.subr.mxu0 %v506
    %1371 = vmatpush1.msra.mxu0 %v505
    %1372 = vmatprep.subr.mxu0 %v510
    %1373 = vmatpush1.msra.mxu0 %v509
    %1374 = vmatprep.subr.mxu0 %v514
    %1375 = vmatpush1.msra.mxu0 %v513
    %1376 = vmatprep.subr.mxu0 %v518
    %1377 = vmatpush1.msra.mxu0 %v517
    %1378 = vmatprep.subr.mxu0 %v522
    %1379 = vmatpush1.msra.mxu0 %v521
    %1380 = vmatprep.subr.mxu0 %v526
    %1381 = vmatpush1.msra.mxu0 %v525
    %1382 = vmatprep.subr.mxu0 %v530
    %1383 = vmatpush1.msra.mxu0 %v529
    %1384 = vmatprep.subr.mxu0 %v534
    %1385 = vmatpush1.msra.mxu0 %v533
    %1386 = vmatprep.subr.mxu0 %v538
    %1387 = vmatpush1.msra.mxu0 %v537
    %1388 = vmatprep.subr.mxu0 %v542
    %1389 = vmatpush1.msra.mxu0 %v541
    %1390 = vmatprep.subr.mxu0 %v546
    %1391 = vmatpush1.msra.mxu0 %v545
    %1392 = vmatprep.subr.mxu0 %v550
    %1393 = vmatpush1.msra.mxu0 %v549
    %1394 = vmatprep.subr.mxu0 %v554
    %1395 = vmatpush1.msra.mxu0 %v553
    %1396 = vmatprep.subr.mxu0 %v558
    %1397 = vmatpush1.msra.mxu0 %v557
    %1398 = vmatprep.subr.mxu0 %v562
    %1399 = vmatpush1.msra.mxu0 %v561
    %1400 = vmatprep.subr.mxu0 %v566
    %1401 = vmatpush1.msra.mxu0 %v565
    %1402 = vmatprep.subr.mxu0 %v570
    %1403 = vmatpush1.msra.mxu0 %v569
    %1404 = vmatprep.subr.mxu0 %v574
    %1405 = vmatpush1.msra.mxu0 %v573
    %1406 = vmatprep.subr.mxu0 %v578
    %1407 = vmatpush1.msra.mxu0 %v577
    %1408 = vmatprep.subr.mxu0 %v582
    %1409 = vmatpush1.msra.mxu0 %v581
    %1410 = vmatprep.subr.mxu0 %v586
    %1411 = vmatpush1.msra.mxu0 %v585
    %1412 = vmatprep.subr.mxu0 %v590
    %1413 = vmatpush1.msra.mxu0 %v589
    %1414 = vmatprep.subr.mxu0 %v594
    %1415 = vmatpush1.msra.mxu0 %v593
    %1416 = vmatprep.subr.mxu0 %v598
    %1417 = vmatpush1.msra.mxu0 %v597
    %1418 = vmatprep.subr.mxu0 %v602
    %1419 = vmatpush1.msra.mxu0 %v601
    %1420 = vmatprep.subr.mxu0 %v606
    %1421 = vmatpush1.msra.mxu0 %v605
    %1422 = vmatprep.subr.mxu0 %v610
    %1423 = vmatpush1.msra.mxu0 %v609
    %1424 = vmatprep.subr.mxu0 %v614
    %1425 = vmatpush1.msra.mxu0 %v613
    %1426 = vmatprep.subr.mxu0 %v618
    %1427 = vmatpush1.msra.mxu0 %v617
    %1428 = vmatprep.subr.mxu0 %v622
    %1429 = vmatpush1.msra.mxu0 %v621
    %1430 = vmatprep.mubr.f32.mxu0 %v810
    %1431 = vmatmul.mubr.f32.gmra.mrb[0].mxu0 %v1294
    %v1432 = vpop.f32.mrb[0].mxu0
    %v1433 = vadd.f32 %v636, %v1432
    %v1434 = vpop.f32.mrb[0].mxu0
    %v1435 = vadd.f32 %v640, %v1434
    %1436 = vdwg.mxu0
    %v1437 = vxor.u32 %v1362, 2147483648
    %v1438 = vxor.u32 %v1364, 2147483648
    %v1439 = vxor.u32 %v1433, 2147483648
    %v1440 = vmul.f32 %v1437, 1.442695
    %v1441 = vpow.pop %v1440
    %v1442 = vmul.f32 %v1438, 1.442695
    %v1443 = vpow.pop %v1442
    %v1444 = vmul.f32 %v1439, 1.442695
    %v1445 = vpow.pop %v1444
    %v1446 = vadd.f32 %v1441, 1.0
    %v1447 = vadd.f32 %v1443, 1.0
    %v1448 = vadd.f32 %v1445, 1.0
    %v1449 = vrcp.pop %v1446
    %v1450 = vmul.f32 1.0, %v1449
    %v1451 = vrcp.pop %v1447
    %v1452 = vmul.f32 1.0, %v1451
    %v1453 = vrcp.pop %v1448
    %v1454 = vmul.f32 1.0, %v1453
    %v1455 = vtanh.pop %v1435
    %v1456 = vmul.f32 %v1452, %v808
    %v1457 = vmul.f32 %v1450, %v1455
    %v1458 = vadd.f32 %v1456, %v1457
    %v1459 = vtanh.pop %v1458
    %v1460 = vmul.f32 %v1454, %v1459
    %1461 = vmatprep.subr.mxu0 %v812
    %1462 = vmatpush1.msra.mxu0 %v811
    %1463 = vmatprep.subr.mxu0 %v816
    %1464 = vmatpush1.msra.mxu0 %v815
    %1465 = vmatprep.subr.mxu0 %v820
    %1466 = vmatpush1.msra.mxu0 %v819
    %1467 = vmatprep.subr.mxu0 %v824
    %1468 = vmatpush1.msra.mxu0 %v823
    %1469 = vmatprep.subr.mxu0 %v828
    %1470 = vmatpush1.msra.mxu0 %v827
    %1471 = vmatprep.subr.mxu0 %v832
    %1472 = vmatpush1.msra.mxu0 %v831
    %1473 = vmatprep.subr.mxu0 %v836
    %1474 = vmatpush1.msra.mxu0 %v835
    %1475 = vmatprep.subr.mxu0 %v840
    %1476 = vmatpush1.msra.mxu0 %v839
    %1477 = vmatprep.subr.mxu0 %v844
    %1478 = vmatpush1.msra.mxu0 %v843
    %1479 = vmatprep.subr.mxu0 %v848
    %1480 = vmatpush1.msra.mxu0 %v847
    %1481 = vmatprep.subr.mxu0 %v852
    %1482 = vmatpush1.msra.mxu0 %v851
    %1483 = vmatprep.subr.mxu0 %v856
    %1484 = vmatpush1.msra.mxu0 %v855
    %1485 = vmatprep.subr.mxu0 %v860
    %1486 = vmatpush1.msra.mxu0 %v859
    %1487 = vmatprep.subr.mxu0 %v864
    %1488 = vmatpush1.msra.mxu0 %v863
    %1489 = vmatprep.subr.mxu0 %v868
    %1490 = vmatpush1.msra.mxu0 %v867
    %1491 = vmatprep.subr.mxu0 %v872
    %1492 = vmatpush1.msra.mxu0 %v871
    %1493 = vmatprep.subr.mxu0 %v876
    %1494 = vmatpush1.msra.mxu0 %v875
    %1495 = vmatprep.subr.mxu0 %v880
    %1496 = vmatpush1.msra.mxu0 %v879
    %1497 = vmatprep.subr.mxu0 %v884
    %1498 = vmatpush1.msra.mxu0 %v883
    %1499 = vmatprep.subr.mxu0 %v888
    %1500 = vmatpush1.msra.mxu0 %v887
    %1501 = vmatprep.subr.mxu0 %v892
    %1502 = vmatpush1.msra.mxu0 %v891
    %1503 = vmatprep.subr.mxu0 %v896
    %1504 = vmatpush1.msra.mxu0 %v895
    %1505 = vmatprep.subr.mxu0 %v900
    %1506 = vmatpush1.msra.mxu0 %v899
    %1507 = vmatprep.subr.mxu0 %v904
    %1508 = vmatpush1.msra.mxu0 %v903
    %1509 = vmatprep.subr.mxu0 %v908
    %1510 = vmatpush1.msra.mxu0 %v907
    %1511 = vmatprep.subr.mxu0 %v912
    %1512 = vmatpush1.msra.mxu0 %v911
    %1513 = vmatprep.subr.mxu0 %v916
    %1514 = vmatpush1.msra.mxu0 %v915
    %1515 = vmatprep.subr.mxu0 %v920
    %1516 = vmatpush1.msra.mxu0 %v919
    %1517 = vmatprep.subr.mxu0 %v924
    %1518 = vmatpush1.msra.mxu0 %v923
    %1519 = vmatprep.subr.mxu0 %v928
    %1520 = vmatpush1.msra.mxu0 %v927
    %1521 = vmatprep.subr.mxu0 %v932
    %1522 = vmatpush1.msra.mxu0 %v931
    %1523 = vmatprep.subr.mxu0 %v936
    %1524 = vmatpush1.msra.mxu0 %v935
    %1525 = vmatprep.mubr.f32.mxu0 %v1126
    %1526 = vmatmul.mubr.f32.gmra.mrb[0].mxu0 %v1460
    %v1527 = vpop.f32.mrb[0].mxu0
    %v1528 = vadd.f32 %v944, %v1527
    %v1529 = vpop.f32.mrb[0].mxu0
    %v1530 = vadd.f32 %v948, %v1529
    %1531 = vdwg.mxu0
    %1532 = vmatprep.subr.mxu0 %v814
    %1533 = vmatpush1.msra.mxu0 %v813
    %1534 = vmatprep.subr.mxu0 %v818
    %1535 = vmatpush1.msra.mxu0 %v817
    %1536 = vmatprep.subr.mxu0 %v822
    %1537 = vmatpush1.msra.mxu0 %v821
    %1538 = vmatprep.subr.mxu0 %v826
    %1539 = vmatpush1.msra.mxu0 %v825
    %1540 = vmatprep.subr.mxu0 %v830
    %1541 = vmatpush1.msra.mxu0 %v829
    %1542 = vmatprep.subr.mxu0 %v834
    %1543 = vmatpush1.msra.mxu0 %v833
    %1544 = vmatprep.subr.mxu0 %v838
    %1545 = vmatpush1.msra.mxu0 %v837
    %1546 = vmatprep.subr.mxu0 %v842
    %1547 = vmatpush1.msra.mxu0 %v841
    %1548 = vmatprep.subr.mxu0 %v846
    %1549 = vmatpush1.msra.mxu0 %v845
    %1550 = vmatprep.subr.mxu0 %v850
    %1551 = vmatpush1.msra.mxu0 %v849
    %1552 = vmatprep.subr.mxu0 %v854
    %1553 = vmatpush1.msra.mxu0 %v853
    %1554 = vmatprep.subr.mxu0 %v858
    %1555 = vmatpush1.msra.mxu0 %v857
    %1556 = vmatprep.subr.mxu0 %v862
    %1557 = vmatpush1.msra.mxu0 %v861
    %1558 = vmatprep.subr.mxu0 %v866
    %1559 = vmatpush1.msra.mxu0 %v865
    %1560 = vmatprep.subr.mxu0 %v870
    %1561 = vmatpush1.msra.mxu0 %v869
    %1562 = vmatprep.subr.mxu0 %v874
    %1563 = vmatpush1.msra.mxu0 %v873
    %1564 = vmatprep.subr.mxu0 %v878
    %1565 = vmatpush1.msra.mxu0 %v877
    %1566 = vmatprep.subr.mxu0 %v882
    %1567 = vmatpush1.msra.mxu0 %v881
    %1568 = vmatprep.subr.mxu0 %v886
    %1569 = vmatpush1.msra.mxu0 %v885
    %1570 = vmatprep.subr.mxu0 %v890
    %1571 = vmatpush1.msra.mxu0 %v889
    %1572 = vmatprep.subr.mxu0 %v894
    %1573 = vmatpush1.msra.mxu0 %v893
    %1574 = vmatprep.subr.mxu0 %v898
    %1575 = vmatpush1.msra.mxu0 %v897
    %1576 = vmatprep.subr.mxu0 %v902
    %1577 = vmatpush1.msra.mxu0 %v901
    %1578 = vmatprep.subr.mxu0 %v906
    %1579 = vmatpush1.msra.mxu0 %v905
    %1580 = vmatprep.subr.mxu0 %v910
    %1581 = vmatpush1.msra.mxu0 %v909
    %1582 = vmatprep.subr.mxu0 %v914
    %1583 = vmatpush1.msra.mxu0 %v913
    %1584 = vmatprep.subr.mxu0 %v918
    %1585 = vmatpush1.msra.mxu0 %v917
    %1586 = vmatprep.subr.mxu0 %v922
    %1587 = vmatpush1.msra.mxu0 %v921
    %1588 = vmatprep.subr.mxu0 %v926
    %1589 = vmatpush1.msra.mxu0 %v925
    %1590 = vmatprep.subr.mxu0 %v930
    %1591 = vmatpush1.msra.mxu0 %v929
    %1592 = vmatprep.subr.mxu0 %v934
    %1593 = vmatpush1.msra.mxu0 %v933
    %1594 = vmatprep.subr.mxu0 %v938
    %1595 = vmatpush1.msra.mxu0 %v937
    %1596 = vmatprep.mubr.f32.mxu0 %v1126
    %1597 = vmatmul.mubr.f32.gmra.mrb[0].mxu0 %v1460
    %v1598 = vpop.f32.mrb[0].mxu0
    %v1599 = vadd.f32 %v952, %v1598
    %v1600 = vpop.f32.mrb[0].mxu0
    %v1601 = vadd.f32 %v956, %v1600
    %1602 = vdwg.mxu0
    %v1603 = vxor.u32 %v1528, 2147483648
    %v1604 = vxor.u32 %v1530, 2147483648
    %v1605 = vxor.u32 %v1599, 2147483648
    %v1606 = vmul.f32 %v1603, 1.442695
    %v1607 = vpow.pop %v1606
    %v1608 = vmul.f32 %v1604, 1.442695
    %v1609 = vpow.pop %v1608
    %v1610 = vmul.f32 %v1605, 1.442695
    %v1611 = vpow.pop %v1610
    %v1612 = vadd.f32 %v1607, 1.0
    %v1613 = vadd.f32 %v1609, 1.0
    %v1614 = vadd.f32 %v1611, 1.0
    %v1615 = vrcp.pop %v1612
    %v1616 = vmul.f32 1.0, %v1615
    %v1617 = vrcp.pop %v1613
    %v1618 = vmul.f32 1.0, %v1617
    %v1619 = vrcp.pop %v1614
    %v1620 = vmul.f32 1.0, %v1619
    %v1621 = vtanh.pop %v1601
    %v1622 = vmul.f32 %v1618, %v1124
    %v1623 = vmul.f32 %v1616, %v1621
    %v1624 = vadd.f32 %v1622, %v1623
    %v1625 = vtanh.pop %v1624
    %v1626 = vmul.f32 %v1620, %v1625
    %s1627 = scalar_lea.vmem [#allocation2], 16
    %v1628 = vld [vmem:[%s1627] sm:$0xff]
    %1629 = vmatprep.subr.mxu0 %v180
    %1630 = vmatpush1.msra.mxu0 %v179
    %1631 = vmatprep.subr.mxu0 %v184
    %1632 = vmatpush1.msra.mxu0 %v183
    %1633 = vmatprep.subr.mxu0 %v188
    %1634 = vmatpush1.msra.mxu0 %v187
    %1635 = vmatprep.subr.mxu0 %v192
    %1636 = vmatpush1.msra.mxu0 %v191
    %1637 = vmatprep.subr.mxu0 %v196
    %1638 = vmatpush1.msra.mxu0 %v195
    %1639 = vmatprep.subr.mxu0 %v200
    %1640 = vmatpush1.msra.mxu0 %v199
    %1641 = vmatprep.subr.mxu0 %v204
    %1642 = vmatpush1.msra.mxu0 %v203
    %1643 = vmatprep.subr.mxu0 %v208
    %1644 = vmatpush1.msra.mxu0 %v207
    %1645 = vmatprep.subr.mxu0 %v212
    %1646 = vmatpush1.msra.mxu0 %v211
    %1647 = vmatprep.subr.mxu0 %v216
    %1648 = vmatpush1.msra.mxu0 %v215
    %1649 = vmatprep.subr.mxu0 %v220
    %1650 = vmatpush1.msra.mxu0 %v219
    %1651 = vmatprep.subr.mxu0 %v224
    %1652 = vmatpush1.msra.mxu0 %v223
    %1653 = vmatprep.subr.mxu0 %v228
    %1654 = vmatpush1.msra.mxu0 %v227
    %1655 = vmatprep.subr.mxu0 %v232
    %1656 = vmatpush1.msra.mxu0 %v231
    %1657 = vmatprep.subr.mxu0 %v236
    %1658 = vmatpush1.msra.mxu0 %v235
    %1659 = vmatprep.subr.mxu0 %v240
    %1660 = vmatpush1.msra.mxu0 %v239
    %1661 = vmatprep.subr.mxu0 %v244
    %1662 = vmatpush1.msra.mxu0 %v243
    %1663 = vmatprep.subr.mxu0 %v248
    %1664 = vmatpush1.msra.mxu0 %v247
    %1665 = vmatprep.subr.mxu0 %v252
    %1666 = vmatpush1.msra.mxu0 %v251
    %1667 = vmatprep.subr.mxu0 %v256
    %1668 = vmatpush1.msra.mxu0 %v255
    %1669 = vmatprep.subr.mxu0 %v260
    %1670 = vmatpush1.msra.mxu0 %v259
    %1671 = vmatprep.subr.mxu0 %v264
    %1672 = vmatpush1.msra.mxu0 %v263
    %1673 = vmatprep.subr.mxu0 %v268
    %1674 = vmatpush1.msra.mxu0 %v267
    %1675 = vmatprep.subr.mxu0 %v272
    %1676 = vmatpush1.msra.mxu0 %v271
    %1677 = vmatprep.subr.mxu0 %v276
    %1678 = vmatpush1.msra.mxu0 %v275
    %1679 = vmatprep.subr.mxu0 %v280
    %1680 = vmatpush1.msra.mxu0 %v279
    %1681 = vmatprep.subr.mxu0 %v284
    %1682 = vmatpush1.msra.mxu0 %v283
    %1683 = vmatprep.subr.mxu0 %v288
    %1684 = vmatpush1.msra.mxu0 %v287
    %1685 = vmatprep.subr.mxu0 %v292
    %1686 = vmatpush1.msra.mxu0 %v291
    %1687 = vmatprep.subr.mxu0 %v296
    %1688 = vmatpush1.msra.mxu0 %v295
    %1689 = vmatprep.subr.mxu0 %v300
    %1690 = vmatpush1.msra.mxu0 %v299
    %1691 = vmatprep.subr.mxu0 %v304
    %1692 = vmatpush1.msra.mxu0 %v303
    %1693 = vmatprep.mubr.f32.mxu0 %v1294
    %1694 = vmatmul.mubr.f32.gmra.mrb[0].mxu0 %v1628
    %v1695 = vpop.f32.mrb[0].mxu0
    %v1696 = vadd.f32 %v312, %v1695
    %v1697 = vpop.f32.mrb[0].mxu0
    %v1698 = vadd.f32 %v316, %v1697
    %1699 = vdwg.mxu0
    %1700 = vmatprep.subr.mxu0 %v182
    %1701 = vmatpush1.msra.mxu0 %v181
    %1702 = vmatprep.subr.mxu0 %v186
    %1703 = vmatpush1.msra.mxu0 %v185
    %1704 = vmatprep.subr.mxu0 %v190
    %1705 = vmatpush1.msra.mxu0 %v189
    %1706 = vmatprep.subr.mxu0 %v194
    %1707 = vmatpush1.msra.mxu0 %v193
    %1708 = vmatprep.subr.mxu0 %v198
    %1709 = vmatpush1.msra.mxu0 %v197
    %1710 = vmatprep.subr.mxu0 %v202
    %1711 = vmatpush1.msra.mxu0 %v201
    %1712 = vmatprep.subr.mxu0 %v206
    %1713 = vmatpush1.msra.mxu0 %v205
    %1714 = vmatprep.subr.mxu0 %v210
    %1715 = vmatpush1.msra.mxu0 %v209
    %1716 = vmatprep.subr.mxu0 %v214
    %1717 = vmatpush1.msra.mxu0 %v213
    %1718 = vmatprep.subr.mxu0 %v218
    %1719 = vmatpush1.msra.mxu0 %v217
    %1720 = vmatprep.subr.mxu0 %v222
    %1721 = vmatpush1.msra.mxu0 %v221
    %1722 = vmatprep.subr.mxu0 %v226
    %1723 = vmatpush1.msra.mxu0 %v225
    %1724 = vmatprep.subr.mxu0 %v230
    %1725 = vmatpush1.msra.mxu0 %v229
    %1726 = vmatprep.subr.mxu0 %v234
    %1727 = vmatpush1.msra.mxu0 %v233
    %1728 = vmatprep.subr.mxu0 %v238
    %1729 = vmatpush1.msra.mxu0 %v237
    %1730 = vmatprep.subr.mxu0 %v242
    %1731 = vmatpush1.msra.mxu0 %v241
    %1732 = vmatprep.subr.mxu0 %v246
    %1733 = vmatpush1.msra.mxu0 %v245
    %1734 = vmatprep.subr.mxu0 %v250
    %1735 = vmatpush1.msra.mxu0 %v249
    %1736 = vmatprep.subr.mxu0 %v254
    %1737 = vmatpush1.msra.mxu0 %v253
    %1738 = vmatprep.subr.mxu0 %v258
    %1739 = vmatpush1.msra.mxu0 %v257
    %1740 = vmatprep.subr.mxu0 %v262
    %1741 = vmatpush1.msra.mxu0 %v261
    %1742 = vmatprep.subr.mxu0 %v266
    %1743 = vmatpush1.msra.mxu0 %v265
    %1744 = vmatprep.subr.mxu0 %v270
    %1745 = vmatpush1.msra.mxu0 %v269
    %1746 = vmatprep.subr.mxu0 %v274
    %1747 = vmatpush1.msra.mxu0 %v273
    %1748 = vmatprep.subr.mxu0 %v278
    %1749 = vmatpush1.msra.mxu0 %v277
    %1750 = vmatprep.subr.mxu0 %v282
    %1751 = vmatpush1.msra.mxu0 %v281
    %1752 = vmatprep.subr.mxu0 %v286
    %1753 = vmatpush1.msra.mxu0 %v285
    %1754 = vmatprep.subr.mxu0 %v290
    %1755 = vmatpush1.msra.mxu0 %v289
    %1756 = vmatprep.subr.mxu0 %v294
    %1757 = vmatpush1.msra.mxu0 %v293
    %1758 = vmatprep.subr.mxu0 %v298
    %1759 = vmatpush1.msra.mxu0 %v297
    %1760 = vmatprep.subr.mxu0 %v302
    %1761 = vmatpush1.msra.mxu0 %v301
    %1762 = vmatprep.subr.mxu0 %v306
    %1763 = vmatpush1.msra.mxu0 %v305
    %1764 = vmatprep.mubr.f32.mxu0 %v1294
    %1765 = vmatmul.mubr.f32.gmra.mrb[0].mxu0 %v1628
    %v1766 = vpop.f32.mrb[0].mxu0
    %v1767 = vadd.f32 %v320, %v1766
    %v1768 = vpop.f32.mrb[0].mxu0
    %v1769 = vadd.f32 %v324, %v1768
    %1770 = vdwg.mxu0
    %v1771 = vxor.u32 %v1696, 2147483648
    %v1772 = vxor.u32 %v1698, 2147483648
    %v1773 = vxor.u32 %v1767, 2147483648
    %v1774 = vmul.f32 %v1771, 1.442695
    %v1775 = vpow.pop %v1774
    %v1776 = vmul.f32 %v1772, 1.442695
    %v1777 = vpow.pop %v1776
    %v1778 = vmul.f32 %v1773, 1.442695
    %v1779 = vpow.pop %v1778
    %v1780 = vadd.f32 %v1775, 1.0
    %v1781 = vadd.f32 %v1777, 1.0
    %v1782 = vadd.f32 %v1779, 1.0
    %v1783 = vrcp.pop %v1780
    %v1784 = vmul.f32 1.0, %v1783
    %v1785 = vrcp.pop %v1781
    %v1786 = vmul.f32 1.0, %v1785
    %v1787 = vrcp.pop %v1782
    %v1788 = vmul.f32 1.0, %v1787
    %v1789 = vtanh.pop %v1769
    %v1790 = vmul.f32 %v1786, %v1292
    %v1791 = vmul.f32 %v1784, %v1789
    %v1792 = vadd.f32 %v1790, %v1791
    %v1793 = vtanh.pop %v1792
    %v1794 = vmul.f32 %v1788, %v1793
    %1795 = vmatprep.subr.mxu0 %v496
    %1796 = vmatpush1.msra.mxu0 %v495
    %1797 = vmatprep.subr.mxu0 %v500
    %1798 = vmatpush1.msra.mxu0 %v499
    %1799 = vmatprep.subr.mxu0 %v504
    %1800 = vmatpush1.msra.mxu0 %v503
    %1801 = vmatprep.subr.mxu0 %v508
    %1802 = vmatpush1.msra.mxu0 %v507
    %1803 = vmatprep.subr.mxu0 %v512
    %1804 = vmatpush1.msra.mxu0 %v511
    %1805 = vmatprep.subr.mxu0 %v516
    %1806 = vmatpush1.msra.mxu0 %v515
    %1807 = vmatprep.subr.mxu0 %v520
    %1808 = vmatpush1.msra.mxu0 %v519
    %1809 = vmatprep.subr.mxu0 %v524
    %1810 = vmatpush1.msra.mxu0 %v523
    %1811 = vmatprep.subr.mxu0 %v528
    %1812 = vmatpush1.msra.mxu0 %v527
    %1813 = vmatprep.subr.mxu0 %v532
    %1814 = vmatpush1.msra.mxu0 %v531
    %1815 = vmatprep.subr.mxu0 %v536
    %1816 = vmatpush1.msra.mxu0 %v535
    %1817 = vmatprep.subr.mxu0 %v540
    %1818 = vmatpush1.msra.mxu0 %v539
    %1819 = vmatprep.subr.mxu0 %v544
    %1820 = vmatpush1.msra.mxu0 %v543
    %1821 = vmatprep.subr.mxu0 %v548
    %1822 = vmatpush1.msra.mxu0 %v547
    %1823 = vmatprep.subr.mxu0 %v552
    %1824 = vmatpush1.msra.mxu0 %v551
    %1825 = vmatprep.subr.mxu0 %v556
    %1826 = vmatpush1.msra.mxu0 %v555
    %1827 = vmatprep.subr.mxu0 %v560
    %1828 = vmatpush1.msra.mxu0 %v559
    %1829 = vmatprep.subr.mxu0 %v564
    %1830 = vmatpush1.msra.mxu0 %v563
    %1831 = vmatprep.subr.mxu0 %v568
    %1832 = vmatpush1.msra.mxu0 %v567
    %1833 = vmatprep.subr.mxu0 %v572
    %1834 = vmatpush1.msra.mxu0 %v571
    %1835 = vmatprep.subr.mxu0 %v576
    %1836 = vmatpush1.msra.mxu0 %v575
    %1837 = vmatprep.subr.mxu0 %v580
    %1838 = vmatpush1.msra.mxu0 %v579
    %1839 = vmatprep.subr.mxu0 %v584
    %1840 = vmatpush1.msra.mxu0 %v583
    %1841 = vmatprep.subr.mxu0 %v588
    %1842 = vmatpush1.msra.mxu0 %v587
    %1843 = vmatprep.subr.mxu0 %v592
    %1844 = vmatpush1.msra.mxu0 %v591
    %1845 = vmatprep.subr.mxu0 %v596
    %1846 = vmatpush1.msra.mxu0 %v595
    %1847 = vmatprep.subr.mxu0 %v600
    %1848 = vmatpush1.msra.mxu0 %v599
    %1849 = vmatprep.subr.mxu0 %v604
    %1850 = vmatpush1.msra.mxu0 %v603
    %1851 = vmatprep.subr.mxu0 %v608
    %1852 = vmatpush1.msra.mxu0 %v607
    %1853 = vmatprep.subr.mxu0 %v612
    %1854 = vmatpush1.msra.mxu0 %v611
    %1855 = vmatprep.subr.mxu0 %v616
    %1856 = vmatpush1.msra.mxu0 %v615
    %1857 = vmatprep.subr.mxu0 %v620
    %1858 = vmatpush1.msra.mxu0 %v619
    %1859 = vmatprep.mubr.f32.mxu0 %v1460
    %1860 = vmatmul.mubr.f32.gmra.mrb[0].mxu0 %v1794
    %v1861 = vpop.f32.mrb[0].mxu0
    %v1862 = vadd.f32 %v628, %v1861
    %v1863 = vpop.f32.mrb[0].mxu0
    %v1864 = vadd.f32 %v632, %v1863
    %1865 = vdwg.mxu0
    %1866 = vmatprep.subr.mxu0 %v498
    %1867 = vmatpush1.msra.mxu0 %v497
    %1868 = vmatprep.subr.mxu0 %v502
    %1869 = vmatpush1.msra.mxu0 %v501
    %1870 = vmatprep.subr.mxu0 %v506
    %1871 = vmatpush1.msra.mxu0 %v505
    %1872 = vmatprep.subr.mxu0 %v510
    %1873 = vmatpush1.msra.mxu0 %v509
    %1874 = vmatprep.subr.mxu0 %v514
    %1875 = vmatpush1.msra.mxu0 %v513
    %1876 = vmatprep.subr.mxu0 %v518
    %1877 = vmatpush1.msra.mxu0 %v517
    %1878 = vmatprep.subr.mxu0 %v522
    %1879 = vmatpush1.msra.mxu0 %v521
    %1880 = vmatprep.subr.mxu0 %v526
    %1881 = vmatpush1.msra.mxu0 %v525
    %1882 = vmatprep.subr.mxu0 %v530
    %1883 = vmatpush1.msra.mxu0 %v529
    %1884 = vmatprep.subr.mxu0 %v534
    %1885 = vmatpush1.msra.mxu0 %v533
    %1886 = vmatprep.subr.mxu0 %v538
    %1887 = vmatpush1.msra.mxu0 %v537
    %1888 = vmatprep.subr.mxu0 %v542
    %1889 = vmatpush1.msra.mxu0 %v541
    %1890 = vmatprep.subr.mxu0 %v546
    %1891 = vmatpush1.msra.mxu0 %v545
    %1892 = vmatprep.subr.mxu0 %v550
    %1893 = vmatpush1.msra.mxu0 %v549
    %1894 = vmatprep.subr.mxu0 %v554
    %1895 = vmatpush1.msra.mxu0 %v553
    %1896 = vmatprep.subr.mxu0 %v558
    %1897 = vmatpush1.msra.mxu0 %v557
    %1898 = vmatprep.subr.mxu0 %v562
    %1899 = vmatpush1.msra.mxu0 %v561
    %1900 = vmatprep.subr.mxu0 %v566
    %1901 = vmatpush1.msra.mxu0 %v565
    %1902 = vmatprep.subr.mxu0 %v570
    %1903 = vmatpush1.msra.mxu0 %v569
    %1904 = vmatprep.subr.mxu0 %v574
    %1905 = vmatpush1.msra.mxu0 %v573
    %1906 = vmatprep.subr.mxu0 %v578
    %1907 = vmatpush1.msra.mxu0 %v577
    %1908 = vmatprep.subr.mxu0 %v582
    %1909 = vmatpush1.msra.mxu0 %v581
    %1910 = vmatprep.subr.mxu0 %v586
    %1911 = vmatpush1.msra.mxu0 %v585
    %1912 = vmatprep.subr.mxu0 %v590
    %1913 = vmatpush1.msra.mxu0 %v589
    %1914 = vmatprep.subr.mxu0 %v594
    %1915 = vmatpush1.msra.mxu0 %v593
    %1916 = vmatprep.subr.mxu0 %v598
    %1917 = vmatpush1.msra.mxu0 %v597
    %1918 = vmatprep.subr.mxu0 %v602
    %1919 = vmatpush1.msra.mxu0 %v601
    %1920 = vmatprep.subr.mxu0 %v606
    %1921 = vmatpush1.msra.mxu0 %v605
    %1922 = vmatprep.subr.mxu0 %v610
    %1923 = vmatpush1.msra.mxu0 %v609
    %1924 = vmatprep.subr.mxu0 %v614
    %1925 = vmatpush1.msra.mxu0 %v613
    %1926 = vmatprep.subr.mxu0 %v618
    %1927 = vmatpush1.msra.mxu0 %v617
    %1928 = vmatprep.subr.mxu0 %v622
    %1929 = vmatpush1.msra.mxu0 %v621
    %1930 = vmatprep.mubr.f32.mxu0 %v1460
    %1931 = vmatmul.mubr.f32.gmra.mrb[0].mxu0 %v1794
    %v1932 = vpop.f32.mrb[0].mxu0
    %v1933 = vadd.f32 %v636, %v1932
    %v1934 = vpop.f32.mrb[0].mxu0
    %v1935 = vadd.f32 %v640, %v1934
    %1936 = vdwg.mxu0
    %v1937 = vxor.u32 %v1862, 2147483648
    %v1938 = vxor.u32 %v1864, 2147483648
    %v1939 = vxor.u32 %v1933, 2147483648
    %v1940 = vmul.f32 %v1937, 1.442695
    %v1941 = vpow.pop %v1940
    %v1942 = vmul.f32 %v1938, 1.442695
    %v1943 = vpow.pop %v1942
    %v1944 = vmul.f32 %v1939, 1.442695
    %v1945 = vpow.pop %v1944
    %v1946 = vadd.f32 %v1941, 1.0
    %v1947 = vadd.f32 %v1943, 1.0
    %v1948 = vadd.f32 %v1945, 1.0
    %v1949 = vrcp.pop %v1946
    %v1950 = vmul.f32 1.0, %v1949
    %v1951 = vrcp.pop %v1947
    %v1952 = vmul.f32 1.0, %v1951
    %v1953 = vrcp.pop %v1948
    %v1954 = vmul.f32 1.0, %v1953
    %v1955 = vtanh.pop %v1935
    %v1956 = vmul.f32 %v1952, %v1458
    %v1957 = vmul.f32 %v1950, %v1955
    %v1958 = vadd.f32 %v1956, %v1957
    %v1959 = vtanh.pop %v1958
    %v1960 = vmul.f32 %v1954, %v1959
    %1961 = vmatprep.subr.mxu0 %v812
    %1962 = vmatpush1.msra.mxu0 %v811
    %1963 = vmatprep.subr.mxu0 %v816
    %1964 = vmatpush1.msra.mxu0 %v815
    %1965 = vmatprep.subr.mxu0 %v820
    %1966 = vmatpush1.msra.mxu0 %v819
    %1967 = vmatprep.subr.mxu0 %v824
    %1968 = vmatpush1.msra.mxu0 %v823
    %1969 = vmatprep.subr.mxu0 %v828
    %1970 = vmatpush1.msra.mxu0 %v827
    %1971 = vmatprep.subr.mxu0 %v832
    %1972 = vmatpush1.msra.mxu0 %v831
    %1973 = vmatprep.subr.mxu0 %v836
    %1974 = vmatpush1.msra.mxu0 %v835
    %1975 = vmatprep.subr.mxu0 %v840
    %1976 = vmatpush1.msra.mxu0 %v839
    %1977 = vmatprep.subr.mxu0 %v844
    %1978 = vmatpush1.msra.mxu0 %v843
    %1979 = vmatprep.subr.mxu0 %v848
    %1980 = vmatpush1.msra.mxu0 %v847
    %1981 = vmatprep.subr.mxu0 %v852
    %1982 = vmatpush1.msra.mxu0 %v851
    %1983 = vmatprep.subr.mxu0 %v856
    %1984 = vmatpush1.msra.mxu0 %v855
    %1985 = vmatprep.subr.mxu0 %v860
    %1986 = vmatpush1.msra.mxu0 %v859
    %1987 = vmatprep.subr.mxu0 %v864
    %1988 = vmatpush1.msra.mxu0 %v863
    %1989 = vmatprep.subr.mxu0 %v868
    %1990 = vmatpush1.msra.mxu0 %v867
    %1991 = vmatprep.subr.mxu0 %v872
    %1992 = vmatpush1.msra.mxu0 %v871
    %1993 = vmatprep.subr.mxu0 %v876
    %1994 = vmatpush1.msra.mxu0 %v875
    %1995 = vmatprep.subr.mxu0 %v880
    %1996 = vmatpush1.msra.mxu0 %v879
    %1997 = vmatprep.subr.mxu0 %v884
    %1998 = vmatpush1.msra.mxu0 %v883
    %1999 = vmatprep.subr.mxu0 %v888
    %2000 = vmatpush1.msra.mxu0 %v887
    %2001 = vmatprep.subr.mxu0 %v892
    %2002 = vmatpush1.msra.mxu0 %v891
    %2003 = vmatprep.subr.mxu0 %v896
    %2004 = vmatpush1.msra.mxu0 %v895
    %2005 = vmatprep.subr.mxu0 %v900
    %2006 = vmatpush1.msra.mxu0 %v899
    %2007 = vmatprep.subr.mxu0 %v904
    %2008 = vmatpush1.msra.mxu0 %v903
    %2009 = vmatprep.subr.mxu0 %v908
    %2010 = vmatpush1.msra.mxu0 %v907
    %2011 = vmatprep.subr.mxu0 %v912
    %2012 = vmatpush1.msra.mxu0 %v911
    %2013 = vmatprep.subr.mxu0 %v916
    %2014 = vmatpush1.msra.mxu0 %v915
    %2015 = vmatprep.subr.mxu0 %v920
    %2016 = vmatpush1.msra.mxu0 %v919
    %2017 = vmatprep.subr.mxu0 %v924
    %2018 = vmatpush1.msra.mxu0 %v923
    %2019 = vmatprep.subr.mxu0 %v928
    %2020 = vmatpush1.msra.mxu0 %v927
    %2021 = vmatprep.subr.mxu0 %v932
    %2022 = vmatpush1.msra.mxu0 %v931
    %2023 = vmatprep.subr.mxu0 %v936
    %2024 = vmatpush1.msra.mxu0 %v935
    %2025 = vmatprep.mubr.f32.mxu0 %v1626
    %2026 = vmatmul.mubr.f32.gmra.mrb[0].mxu0 %v1960
    %v2027 = vpop.f32.mrb[0].mxu0
    %v2028 = vadd.f32 %v944, %v2027
    %v2029 = vpop.f32.mrb[0].mxu0
    %v2030 = vadd.f32 %v948, %v2029
    %2031 = vdwg.mxu0
    %2032 = vmatprep.subr.mxu0 %v814
    %2033 = vmatpush1.msra.mxu0 %v813
    %2034 = vmatprep.subr.mxu0 %v818
    %2035 = vmatpush1.msra.mxu0 %v817
    %2036 = vmatprep.subr.mxu0 %v822
    %2037 = vmatpush1.msra.mxu0 %v821
    %2038 = vmatprep.subr.mxu0 %v826
    %2039 = vmatpush1.msra.mxu0 %v825
    %2040 = vmatprep.subr.mxu0 %v830
    %2041 = vmatpush1.msra.mxu0 %v829
    %2042 = vmatprep.subr.mxu0 %v834
    %2043 = vmatpush1.msra.mxu0 %v833
    %2044 = vmatprep.subr.mxu0 %v838
    %2045 = vmatpush1.msra.mxu0 %v837
    %2046 = vmatprep.subr.mxu0 %v842
    %2047 = vmatpush1.msra.mxu0 %v841
    %2048 = vmatprep.subr.mxu0 %v846
    %2049 = vmatpush1.msra.mxu0 %v845
    %2050 = vmatprep.subr.mxu0 %v850
    %2051 = vmatpush1.msra.mxu0 %v849
    %2052 = vmatprep.subr.mxu0 %v854
    %2053 = vmatpush1.msra.mxu0 %v853
    %2054 = vmatprep.subr.mxu0 %v858
    %2055 = vmatpush1.msra.mxu0 %v857
    %2056 = vmatprep.subr.mxu0 %v862
    %2057 = vmatpush1.msra.mxu0 %v861
    %2058 = vmatprep.subr.mxu0 %v866
    %2059 = vmatpush1.msra.mxu0 %v865
    %2060 = vmatprep.subr.mxu0 %v870
    %2061 = vmatpush1.msra.mxu0 %v869
    %2062 = vmatprep.subr.mxu0 %v874
    %2063 = vmatpush1.msra.mxu0 %v873
    %2064 = vmatprep.subr.mxu0 %v878
    %2065 = vmatpush1.msra.mxu0 %v877
    %2066 = vmatprep.subr.mxu0 %v882
    %2067 = vmatpush1.msra.mxu0 %v881
    %2068 = vmatprep.subr.mxu0 %v886
    %2069 = vmatpush1.msra.mxu0 %v885
    %2070 = vmatprep.subr.mxu0 %v890
    %2071 = vmatpush1.msra.mxu0 %v889
    %2072 = vmatprep.subr.mxu0 %v894
    %2073 = vmatpush1.msra.mxu0 %v893
    %2074 = vmatprep.subr.mxu0 %v898
    %2075 = vmatpush1.msra.mxu0 %v897
    %2076 = vmatprep.subr.mxu0 %v902
    %2077 = vmatpush1.msra.mxu0 %v901
    %2078 = vmatprep.subr.mxu0 %v906
    %2079 = vmatpush1.msra.mxu0 %v905
    %2080 = vmatprep.subr.mxu0 %v910
    %2081 = vmatpush1.msra.mxu0 %v909
    %2082 = vmatprep.subr.mxu0 %v914
    %2083 = vmatpush1.msra.mxu0 %v913
    %2084 = vmatprep.subr.mxu0 %v918
    %2085 = vmatpush1.msra.mxu0 %v917
    %2086 = vmatprep.subr.mxu0 %v922
    %2087 = vmatpush1.msra.mxu0 %v921
    %2088 = vmatprep.subr.mxu0 %v926
    %2089 = vmatpush1.msra.mxu0 %v925
    %2090 = vmatprep.subr.mxu0 %v930
    %2091 = vmatpush1.msra.mxu0 %v929
    %2092 = vmatprep.subr.mxu0 %v934
    %2093 = vmatpush1.msra.mxu0 %v933
    %2094 = vmatprep.subr.mxu0 %v938
    %2095 = vmatpush1.msra.mxu0 %v937
    %2096 = vmatprep.mubr.f32.mxu0 %v1626
    %2097 = vmatmul.mubr.f32.gmra.mrb[0].mxu0 %v1960
    %v2098 = vpop.f32.mrb[0].mxu0
    %v2099 = vadd.f32 %v952, %v2098
    %v2100 = vpop.f32.mrb[0].mxu0
    %v2101 = vadd.f32 %v956, %v2100
    %2102 = vdwg.mxu0
    %v2103 = vxor.u32 %v2028, 2147483648
    %v2104 = vxor.u32 %v2030, 2147483648
    %v2105 = vxor.u32 %v2099, 2147483648
    %v2106 = vmul.f32 %v2103, 1.442695
    %v2107 = vpow.pop %v2106
    %v2108 = vmul.f32 %v2104, 1.442695
    %v2109 = vpow.pop %v2108
    %v2110 = vmul.f32 %v2105, 1.442695
    %v2111 = vpow.pop %v2110
    %v2112 = vadd.f32 %v2107, 1.0
    %v2113 = vadd.f32 %v2109, 1.0
    %v2114 = vadd.f32 %v2111, 1.0
    %v2115 = vrcp.pop %v2112
    %v2116 = vmul.f32 1.0, %v2115
    %v2117 = vrcp.pop %v2113
    %v2118 = vmul.f32 1.0, %v2117
    %v2119 = vrcp.pop %v2114
    %v2120 = vmul.f32 1.0, %v2119
    %v2121 = vtanh.pop %v2101
    %v2122 = vmul.f32 %v2118, %v1624
    %v2123 = vmul.f32 %v2116, %v2121
    %v2124 = vadd.f32 %v2122, %v2123
    %v2125 = vtanh.pop %v2124
    %v2126 = vmul.f32 %v2120, %v2125
    %s2127 = scalar_lea.vmem [#allocation2], 24
    %v2128 = vld [vmem:[%s2127] sm:$0xff]
    %2129 = vmatprep.subr.mxu0 %v180
    %2130 = vmatpush1.msra.mxu0 %v179
    %2131 = vmatprep.subr.mxu0 %v184
    %2132 = vmatpush1.msra.mxu0 %v183
    %2133 = vmatprep.subr.mxu0 %v188
    %2134 = vmatpush1.msra.mxu0 %v187
    %2135 = vmatprep.subr.mxu0 %v192
    %2136 = vmatpush1.msra.mxu0 %v191
    %2137 = vmatprep.subr.mxu0 %v196
    %2138 = vmatpush1.msra.mxu0 %v195
    %2139 = vmatprep.subr.mxu0 %v200
    %2140 = vmatpush1.msra.mxu0 %v199
    %2141 = vmatprep.subr.mxu0 %v204
    %2142 = vmatpush1.msra.mxu0 %v203
    %2143 = vmatprep.subr.mxu0 %v208
    %2144 = vmatpush1.msra.mxu0 %v207
    %2145 = vmatprep.subr.mxu0 %v212
    %2146 = vmatpush1.msra.mxu0 %v211
    %2147 = vmatprep.subr.mxu0 %v216
    %2148 = vmatpush1.msra.mxu0 %v215
    %2149 = vmatprep.subr.mxu0 %v220
    %2150 = vmatpush1.msra.mxu0 %v219
    %2151 = vmatprep.subr.mxu0 %v224
    %2152 = vmatpush1.msra.mxu0 %v223
    %2153 = vmatprep.subr.mxu0 %v228
    %2154 = vmatpush1.msra.mxu0 %v227
    %2155 = vmatprep.subr.mxu0 %v232
    %2156 = vmatpush1.msra.mxu0 %v231
    %2157 = vmatprep.subr.mxu0 %v236
    %2158 = vmatpush1.msra.mxu0 %v235
    %2159 = vmatprep.subr.mxu0 %v240
    %2160 = vmatpush1.msra.mxu0 %v239
    %2161 = vmatprep.subr.mxu0 %v244
    %2162 = vmatpush1.msra.mxu0 %v243
    %2163 = vmatprep.subr.mxu0 %v248
    %2164 = vmatpush1.msra.mxu0 %v247
    %2165 = vmatprep.subr.mxu0 %v252
    %2166 = vmatpush1.msra.mxu0 %v251
    %2167 = vmatprep.subr.mxu0 %v256
    %2168 = vmatpush1.msra.mxu0 %v255
    %2169 = vmatprep.subr.mxu0 %v260
    %2170 = vmatpush1.msra.mxu0 %v259
    %2171 = vmatprep.subr.mxu0 %v264
    %2172 = vmatpush1.msra.mxu0 %v263
    %2173 = vmatprep.subr.mxu0 %v268
    %2174 = vmatpush1.msra.mxu0 %v267
    %2175 = vmatprep.subr.mxu0 %v272
    %2176 = vmatpush1.msra.mxu0 %v271
    %2177 = vmatprep.subr.mxu0 %v276
    %2178 = vmatpush1.msra.mxu0 %v275
    %2179 = vmatprep.subr.mxu0 %v280
    %2180 = vmatpush1.msra.mxu0 %v279
    %2181 = vmatprep.subr.mxu0 %v284
    %2182 = vmatpush1.msra.mxu0 %v283
    %2183 = vmatprep.subr.mxu0 %v288
    %2184 = vmatpush1.msra.mxu0 %v287
    %2185 = vmatprep.subr.mxu0 %v292
    %2186 = vmatpush1.msra.mxu0 %v291
    %2187 = vmatprep.subr.mxu0 %v296
    %2188 = vmatpush1.msra.mxu0 %v295
    %2189 = vmatprep.subr.mxu0 %v300
    %2190 = vmatpush1.msra.mxu0 %v299
    %2191 = vmatprep.subr.mxu0 %v304
    %2192 = vmatpush1.msra.mxu0 %v303
    %2193 = vmatprep.mubr.f32.mxu0 %v1794
    %2194 = vmatmul.mubr.f32.gmra.mrb[0].mxu0 %v2128
    %v2195 = vpop.f32.mrb[0].mxu0
    %v2196 = vadd.f32 %v312, %v2195
    %v2197 = vpop.f32.mrb[0].mxu0
    %v2198 = vadd.f32 %v316, %v2197
    %2199 = vdwg.mxu0
    %2200 = vmatprep.subr.mxu0 %v182
    %2201 = vmatpush1.msra.mxu0 %v181
    %2202 = vmatprep.subr.mxu0 %v186
    %2203 = vmatpush1.msra.mxu0 %v185
    %2204 = vmatprep.subr.mxu0 %v190
    %2205 = vmatpush1.msra.mxu0 %v189
    %2206 = vmatprep.subr.mxu0 %v194
    %2207 = vmatpush1.msra.mxu0 %v193
    %2208 = vmatprep.subr.mxu0 %v198
    %2209 = vmatpush1.msra.mxu0 %v197
    %2210 = vmatprep.subr.mxu0 %v202
    %2211 = vmatpush1.msra.mxu0 %v201
    %2212 = vmatprep.subr.mxu0 %v206
    %2213 = vmatpush1.msra.mxu0 %v205
    %2214 = vmatprep.subr.mxu0 %v210
    %2215 = vmatpush1.msra.mxu0 %v209
    %2216 = vmatprep.subr.mxu0 %v214
    %2217 = vmatpush1.msra.mxu0 %v213
    %2218 = vmatprep.subr.mxu0 %v218
    %2219 = vmatpush1.msra.mxu0 %v217
    %2220 = vmatprep.subr.mxu0 %v222
    %2221 = vmatpush1.msra.mxu0 %v221
    %2222 = vmatprep.subr.mxu0 %v226
    %2223 = vmatpush1.msra.mxu0 %v225
    %2224 = vmatprep.subr.mxu0 %v230
    %2225 = vmatpush1.msra.mxu0 %v229
    %2226 = vmatprep.subr.mxu0 %v234
    %2227 = vmatpush1.msra.mxu0 %v233
    %2228 = vmatprep.subr.mxu0 %v238
    %2229 = vmatpush1.msra.mxu0 %v237
    %2230 = vmatprep.subr.mxu0 %v242
    %2231 = vmatpush1.msra.mxu0 %v241
    %2232 = vmatprep.subr.mxu0 %v246
    %2233 = vmatpush1.msra.mxu0 %v245
    %2234 = vmatprep.subr.mxu0 %v250
    %2235 = vmatpush1.msra.mxu0 %v249
    %2236 = vmatprep.subr.mxu0 %v254
    %2237 = vmatpush1.msra.mxu0 %v253
    %2238 = vmatprep.subr.mxu0 %v258
    %2239 = vmatpush1.msra.mxu0 %v257
    %2240 = vmatprep.subr.mxu0 %v262
    %2241 = vmatpush1.msra.mxu0 %v261
    %2242 = vmatprep.subr.mxu0 %v266
    %2243 = vmatpush1.msra.mxu0 %v265
    %2244 = vmatprep.subr.mxu0 %v270
    %2245 = vmatpush1.msra.mxu0 %v269
    %2246 = vmatprep.subr.mxu0 %v274
    %2247 = vmatpush1.msra.mxu0 %v273
    %2248 = vmatprep.subr.mxu0 %v278
    %2249 = vmatpush1.msra.mxu0 %v277
    %2250 = vmatprep.subr.mxu0 %v282
    %2251 = vmatpush1.msra.mxu0 %v281
    %2252 = vmatprep.subr.mxu0 %v286
    %2253 = vmatpush1.msra.mxu0 %v285
    %2254 = vmatprep.subr.mxu0 %v290
    %2255 = vmatpush1.msra.mxu0 %v289
    %2256 = vmatprep.subr.mxu0 %v294
    %2257 = vmatpush1.msra.mxu0 %v293
    %2258 = vmatprep.subr.mxu0 %v298
    %2259 = vmatpush1.msra.mxu0 %v297
    %2260 = vmatprep.subr.mxu0 %v302
    %2261 = vmatpush1.msra.mxu0 %v301
    %2262 = vmatprep.subr.mxu0 %v306
    %2263 = vmatpush1.msra.mxu0 %v305
    %2264 = vmatprep.mubr.f32.mxu0 %v1794
    %2265 = vmatmul.mubr.f32.gmra.mrb[0].mxu0 %v2128
    %v2266 = vpop.f32.mrb[0].mxu0
    %v2267 = vadd.f32 %v320, %v2266
    %v2268 = vpop.f32.mrb[0].mxu0
    %v2269 = vadd.f32 %v324, %v2268
    %2270 = vdwg.mxu0
    %v2271 = vxor.u32 %v2196, 2147483648
    %v2272 = vxor.u32 %v2198, 2147483648
    %v2273 = vxor.u32 %v2267, 2147483648
    %v2274 = vmul.f32 %v2271, 1.442695
    %v2275 = vpow.pop %v2274
    %v2276 = vmul.f32 %v2272, 1.442695
    %v2277 = vpow.pop %v2276
    %v2278 = vmul.f32 %v2273, 1.442695
    %v2279 = vpow.pop %v2278
    %v2280 = vadd.f32 %v2275, 1.0
    %v2281 = vadd.f32 %v2277, 1.0
    %v2282 = vadd.f32 %v2279, 1.0
    %v2283 = vrcp.pop %v2280
    %v2284 = vmul.f32 1.0, %v2283
    %v2285 = vrcp.pop %v2281
    %v2286 = vmul.f32 1.0, %v2285
    %v2287 = vrcp.pop %v2282
    %v2288 = vmul.f32 1.0, %v2287
    %v2289 = vtanh.pop %v2269
    %v2290 = vmul.f32 %v2286, %v1792
    %v2291 = vmul.f32 %v2284, %v2289
    %v2292 = vadd.f32 %v2290, %v2291
    %v2293 = vtanh.pop %v2292
    %v2294 = vmul.f32 %v2288, %v2293
    %2295 = vmatprep.subr.mxu0 %v496
    %2296 = vmatpush1.msra.mxu0 %v495
    %2297 = vmatprep.subr.mxu0 %v500
    %2298 = vmatpush1.msra.mxu0 %v499
    %2299 = vmatprep.subr.mxu0 %v504
    %2300 = vmatpush1.msra.mxu0 %v503
    %2301 = vmatprep.subr.mxu0 %v508
    %2302 = vmatpush1.msra.mxu0 %v507
    %2303 = vmatprep.subr.mxu0 %v512
    %2304 = vmatpush1.msra.mxu0 %v511
    %2305 = vmatprep.subr.mxu0 %v516
    %2306 = vmatpush1.msra.mxu0 %v515
    %2307 = vmatprep.subr.mxu0 %v520
    %2308 = vmatpush1.msra.mxu0 %v519
    %2309 = vmatprep.subr.mxu0 %v524
    %2310 = vmatpush1.msra.mxu0 %v523
    %2311 = vmatprep.subr.mxu0 %v528
    %2312 = vmatpush1.msra.mxu0 %v527
    %2313 = vmatprep.subr.mxu0 %v532
    %2314 = vmatpush1.msra.mxu0 %v531
    %2315 = vmatprep.subr.mxu0 %v536
    %2316 = vmatpush1.msra.mxu0 %v535
    %2317 = vmatprep.subr.mxu0 %v540
    %2318 = vmatpush1.msra.mxu0 %v539
    %2319 = vmatprep.subr.mxu0 %v544
    %2320 = vmatpush1.msra.mxu0 %v543
    %2321 = vmatprep.subr.mxu0 %v548
    %2322 = vmatpush1.msra.mxu0 %v547
    %2323 = vmatprep.subr.mxu0 %v552
    %2324 = vmatpush1.msra.mxu0 %v551
    %2325 = vmatprep.subr.mxu0 %v556
    %2326 = vmatpush1.msra.mxu0 %v555
    %2327 = vmatprep.subr.mxu0 %v560
    %2328 = vmatpush1.msra.mxu0 %v559
    %2329 = vmatprep.subr.mxu0 %v564
    %2330 = vmatpush1.msra.mxu0 %v563
    %2331 = vmatprep.subr.mxu0 %v568
    %2332 = vmatpush1.msra.mxu0 %v567
    %2333 = vmatprep.subr.mxu0 %v572
    %2334 = vmatpush1.msra.mxu0 %v571
    %2335 = vmatprep.subr.mxu0 %v576
    %2336 = vmatpush1.msra.mxu0 %v575
    %2337 = vmatprep.subr.mxu0 %v580
    %2338 = vmatpush1.msra.mxu0 %v579
    %2339 = vmatprep.subr.mxu0 %v584
    %2340 = vmatpush1.msra.mxu0 %v583
    %2341 = vmatprep.subr.mxu0 %v588
    %2342 = vmatpush1.msra.mxu0 %v587
    %2343 = vmatprep.subr.mxu0 %v592
    %2344 = vmatpush1.msra.mxu0 %v591
    %2345 = vmatprep.subr.mxu0 %v596
    %2346 = vmatpush1.msra.mxu0 %v595
    %2347 = vmatprep.subr.mxu0 %v600
    %2348 = vmatpush1.msra.mxu0 %v599
    %2349 = vmatprep.subr.mxu0 %v604
    %2350 = vmatpush1.msra.mxu0 %v603
    %2351 = vmatprep.subr.mxu0 %v608
    %2352 = vmatpush1.msra.mxu0 %v607
    %2353 = vmatprep.subr.mxu0 %v612
    %2354 = vmatpush1.msra.mxu0 %v611
    %2355 = vmatprep.subr.mxu0 %v616
    %2356 = vmatpush1.msra.mxu0 %v615
    %2357 = vmatprep.subr.mxu0 %v620
    %2358 = vmatpush1.msra.mxu0 %v619
    %2359 = vmatprep.mubr.f32.mxu0 %v1960
    %2360 = vmatmul.mubr.f32.gmra.mrb[0].mxu0 %v2294
    %v2361 = vpop.f32.mrb[0].mxu0
    %v2362 = vadd.f32 %v628, %v2361
    %v2363 = vpop.f32.mrb[0].mxu0
    %v2364 = vadd.f32 %v632, %v2363
    %2365 = vdwg.mxu0
    %2366 = vmatprep.subr.mxu0 %v498
    %2367 = vmatpush1.msra.mxu0 %v497
    %2368 = vmatprep.subr.mxu0 %v502
    %2369 = vmatpush1.msra.mxu0 %v501
    %2370 = vmatprep.subr.mxu0 %v506
    %2371 = vmatpush1.msra.mxu0 %v505
    %2372 = vmatprep.subr.mxu0 %v510
    %2373 = vmatpush1.msra.mxu0 %v509
    %2374 = vmatprep.subr.mxu0 %v514
    %2375 = vmatpush1.msra.mxu0 %v513
    %2376 = vmatprep.subr.mxu0 %v518
    %2377 = vmatpush1.msra.mxu0 %v517
    %2378 = vmatprep.subr.mxu0 %v522
    %2379 = vmatpush1.msra.mxu0 %v521
    %2380 = vmatprep.subr.mxu0 %v526
    %2381 = vmatpush1.msra.mxu0 %v525
    %2382 = vmatprep.subr.mxu0 %v530
    %2383 = vmatpush1.msra.mxu0 %v529
    %2384 = vmatprep.subr.mxu0 %v534
    %2385 = vmatpush1.msra.mxu0 %v533
    %2386 = vmatprep.subr.mxu0 %v538
    %2387 = vmatpush1.msra.mxu0 %v537
    %2388 = vmatprep.subr.mxu0 %v542
    %2389 = vmatpush1.msra.mxu0 %v541
    %2390 = vmatprep.subr.mxu0 %v546
    %2391 = vmatpush1.msra.mxu0 %v545
    %2392 = vmatprep.subr.mxu0 %v550
    %2393 = vmatpush1.msra.mxu0 %v549
    %2394 = vmatprep.subr.mxu0 %v554
    %2395 = vmatpush1.msra.mxu0 %v553
    %2396 = vmatprep.subr.mxu0 %v558
    %2397 = vmatpush1.msra.mxu0 %v557
    %2398 = vmatprep.subr.mxu0 %v562
    %2399 = vmatpush1.msra.mxu0 %v561
    %2400 = vmatprep.subr.mxu0 %v566
    %2401 = vmatpush1.msra.mxu0 %v565
    %2402 = vmatprep.subr.mxu0 %v570
    %2403 = vmatpush1.msra.mxu0 %v569
    %2404 = vmatprep.subr.mxu0 %v574
    %2405 = vmatpush1.msra.mxu0 %v573
    %2406 = vmatprep.subr.mxu0 %v578
    %2407 = vmatpush1.msra.mxu0 %v577
    %2408 = vmatprep.subr.mxu0 %v582
    %2409 = vmatpush1.msra.mxu0 %v581
    %2410 = vmatprep.subr.mxu0 %v586
    %2411 = vmatpush1.msra.mxu0 %v585
    %2412 = vmatprep.subr.mxu0 %v590
    %2413 = vmatpush1.msra.mxu0 %v589
    %2414 = vmatprep.subr.mxu0 %v594
    %2415 = vmatpush1.msra.mxu0 %v593
    %2416 = vmatprep.subr.mxu0 %v598
    %2417 = vmatpush1.msra.mxu0 %v597
    %2418 = vmatprep.subr.mxu0 %v602
    %2419 = vmatpush1.msra.mxu0 %v601
    %2420 = vmatprep.subr.mxu0 %v606
    %2421 = vmatpush1.msra.mxu0 %v605
    %2422 = vmatprep.subr.mxu0 %v610
    %2423 = vmatpush1.msra.mxu0 %v609
    %2424 = vmatprep.subr.mxu0 %v614
    %2425 = vmatpush1.msra.mxu0 %v613
    %2426 = vmatprep.subr.mxu0 %v618
    %2427 = vmatpush1.msra.mxu0 %v617
    %2428 = vmatprep.subr.mxu0 %v622
    %2429 = vmatpush1.msra.mxu0 %v621
    %2430 = vmatprep.mubr.f32.mxu0 %v1960
    %2431 = vmatmul.mubr.f32.gmra.mrb[0].mxu0 %v2294
    %v2432 = vpop.f32.mrb[0].mxu0
    %v2433 = vadd.f32 %v636, %v2432
    %v2434 = vpop.f32.mrb[0].mxu0
    %v2435 = vadd.f32 %v640, %v2434
    %2436 = vdwg.mxu0
    %v2437 = vxor.u32 %v2362, 2147483648
    %v2438 = vxor.u32 %v2364, 2147483648
    %v2439 = vxor.u32 %v2433, 2147483648
    %v2440 = vmul.f32 %v2437, 1.442695
    %v2441 = vpow.pop %v2440
    %v2442 = vmul.f32 %v2438, 1.442695
    %v2443 = vpow.pop %v2442
    %v2444 = vmul.f32 %v2439, 1.442695
    %v2445 = vpow.pop %v2444
    %v2446 = vadd.f32 %v2441, 1.0
    %v2447 = vadd.f32 %v2443, 1.0
    %v2448 = vadd.f32 %v2445, 1.0
    %v2449 = vrcp.pop %v2446
    %v2450 = vmul.f32 1.0, %v2449
    %v2451 = vrcp.pop %v2447
    %v2452 = vmul.f32 1.0, %v2451
    %v2453 = vrcp.pop %v2448
    %v2454 = vmul.f32 1.0, %v2453
    %v2455 = vtanh.pop %v2435
    %v2456 = vmul.f32 %v2452, %v1958
    %v2457 = vmul.f32 %v2450, %v2455
    %v2458 = vadd.f32 %v2456, %v2457
    %v2459 = vtanh.pop %v2458
    %v2460 = vmul.f32 %v2454, %v2459
    %2461 = vmatprep.subr.mxu0 %v812
    %2462 = vmatpush1.msra.mxu0 %v811
    %2463 = vmatprep.subr.mxu0 %v816
    %2464 = vmatpush1.msra.mxu0 %v815
    %2465 = vmatprep.subr.mxu0 %v820
    %2466 = vmatpush1.msra.mxu0 %v819
    %2467 = vmatprep.subr.mxu0 %v824
    %2468 = vmatpush1.msra.mxu0 %v823
    %2469 = vmatprep.subr.mxu0 %v828
    %2470 = vmatpush1.msra.mxu0 %v827
    %2471 = vmatprep.subr.mxu0 %v832
    %2472 = vmatpush1.msra.mxu0 %v831
    %2473 = vmatprep.subr.mxu0 %v836
    %2474 = vmatpush1.msra.mxu0 %v835
    %2475 = vmatprep.subr.mxu0 %v840
    %2476 = vmatpush1.msra.mxu0 %v839
    %2477 = vmatprep.subr.mxu0 %v844
    %2478 = vmatpush1.msra.mxu0 %v843
    %2479 = vmatprep.subr.mxu0 %v848
    %2480 = vmatpush1.msra.mxu0 %v847
    %2481 = vmatprep.subr.mxu0 %v852
    %2482 = vmatpush1.msra.mxu0 %v851
    %2483 = vmatprep.subr.mxu0 %v856
    %2484 = vmatpush1.msra.mxu0 %v855
    %2485 = vmatprep.subr.mxu0 %v860
    %2486 = vmatpush1.msra.mxu0 %v859
    %2487 = vmatprep.subr.mxu0 %v864
    %2488 = vmatpush1.msra.mxu0 %v863
    %2489 = vmatprep.subr.mxu0 %v868
    %2490 = vmatpush1.msra.mxu0 %v867
    %2491 = vmatprep.subr.mxu0 %v872
    %2492 = vmatpush1.msra.mxu0 %v871
    %2493 = vmatprep.subr.mxu0 %v876
    %2494 = vmatpush1.msra.mxu0 %v875
    %2495 = vmatprep.subr.mxu0 %v880
    %2496 = vmatpush1.msra.mxu0 %v879
    %2497 = vmatprep.subr.mxu0 %v884
    %2498 = vmatpush1.msra.mxu0 %v883
    %2499 = vmatprep.subr.mxu0 %v888
    %2500 = vmatpush1.msra.mxu0 %v887
    %2501 = vmatprep.subr.mxu0 %v892
    %2502 = vmatpush1.msra.mxu0 %v891
    %2503 = vmatprep.subr.mxu0 %v896
    %2504 = vmatpush1.msra.mxu0 %v895
    %2505 = vmatprep.subr.mxu0 %v900
    %2506 = vmatpush1.msra.mxu0 %v899
    %2507 = vmatprep.subr.mxu0 %v904
    %2508 = vmatpush1.msra.mxu0 %v903
    %2509 = vmatprep.subr.mxu0 %v908
    %2510 = vmatpush1.msra.mxu0 %v907
    %2511 = vmatprep.subr.mxu0 %v912
    %2512 = vmatpush1.msra.mxu0 %v911
    %2513 = vmatprep.subr.mxu0 %v916
    %2514 = vmatpush1.msra.mxu0 %v915
    %2515 = vmatprep.subr.mxu0 %v920
    %2516 = vmatpush1.msra.mxu0 %v919
    %2517 = vmatprep.subr.mxu0 %v924
    %2518 = vmatpush1.msra.mxu0 %v923
    %2519 = vmatprep.subr.mxu0 %v928
    %2520 = vmatpush1.msra.mxu0 %v927
    %2521 = vmatprep.subr.mxu0 %v932
    %2522 = vmatpush1.msra.mxu0 %v931
    %2523 = vmatprep.subr.mxu0 %v936
    %2524 = vmatpush1.msra.mxu0 %v935
    %2525 = vmatprep.mubr.f32.mxu0 %v2126
    %2526 = vmatmul.mubr.f32.gmra.mrb[0].mxu0 %v2460
    %v2527 = vpop.f32.mrb[0].mxu0
    %v2528 = vadd.f32 %v944, %v2527
    %v2529 = vpop.f32.mrb[0].mxu0
    %v2530 = vadd.f32 %v948, %v2529
    %2531 = vdwg.mxu0
    %2532 = vmatprep.subr.mxu0 %v814
    %2533 = vmatpush1.msra.mxu0 %v813
    %2534 = vmatprep.subr.mxu0 %v818
    %2535 = vmatpush1.msra.mxu0 %v817
    %2536 = vmatprep.subr.mxu0 %v822
    %2537 = vmatpush1.msra.mxu0 %v821
    %2538 = vmatprep.subr.mxu0 %v826
    %2539 = vmatpush1.msra.mxu0 %v825
    %2540 = vmatprep.subr.mxu0 %v830
    %2541 = vmatpush1.msra.mxu0 %v829
    %2542 = vmatprep.subr.mxu0 %v834
    %2543 = vmatpush1.msra.mxu0 %v833
    %2544 = vmatprep.subr.mxu0 %v838
    %2545 = vmatpush1.msra.mxu0 %v837
    %2546 = vmatprep.subr.mxu0 %v842
    %2547 = vmatpush1.msra.mxu0 %v841
    %2548 = vmatprep.subr.mxu0 %v846
    %2549 = vmatpush1.msra.mxu0 %v845
    %2550 = vmatprep.subr.mxu0 %v850
    %2551 = vmatpush1.msra.mxu0 %v849
    %2552 = vmatprep.subr.mxu0 %v854
    %2553 = vmatpush1.msra.mxu0 %v853
    %2554 = vmatprep.subr.mxu0 %v858
    %2555 = vmatpush1.msra.mxu0 %v857
    %2556 = vmatprep.subr.mxu0 %v862
    %2557 = vmatpush1.msra.mxu0 %v861
    %2558 = vmatprep.subr.mxu0 %v866
    %2559 = vmatpush1.msra.mxu0 %v865
    %2560 = vmatprep.subr.mxu0 %v870
    %2561 = vmatpush1.msra.mxu0 %v869
    %2562 = vmatprep.subr.mxu0 %v874
    %2563 = vmatpush1.msra.mxu0 %v873
    %2564 = vmatprep.subr.mxu0 %v878
    %2565 = vmatpush1.msra.mxu0 %v877
    %2566 = vmatprep.subr.mxu0 %v882
    %2567 = vmatpush1.msra.mxu0 %v881
    %2568 = vmatprep.subr.mxu0 %v886
    %2569 = vmatpush1.msra.mxu0 %v885
    %2570 = vmatprep.subr.mxu0 %v890
    %2571 = vmatpush1.msra.mxu0 %v889
    %2572 = vmatprep.subr.mxu0 %v894
    %2573 = vmatpush1.msra.mxu0 %v893
    %2574 = vmatprep.subr.mxu0 %v898
    %2575 = vmatpush1.msra.mxu0 %v897
    %2576 = vmatprep.subr.mxu0 %v902
    %2577 = vmatpush1.msra.mxu0 %v901
    %2578 = vmatprep.subr.mxu0 %v906
    %2579 = vmatpush1.msra.mxu0 %v905
    %2580 = vmatprep.subr.mxu0 %v910
    %2581 = vmatpush1.msra.mxu0 %v909
    %2582 = vmatprep.subr.mxu0 %v914
    %2583 = vmatpush1.msra.mxu0 %v913
    %2584 = vmatprep.subr.mxu0 %v918
    %2585 = vmatpush1.msra.mxu0 %v917
    %2586 = vmatprep.subr.mxu0 %v922
    %2587 = vmatpush1.msra.mxu0 %v921
    %2588 = vmatprep.subr.mxu0 %v926
    %2589 = vmatpush1.msra.mxu0 %v925
    %2590 = vmatprep.subr.mxu0 %v930
    %2591 = vmatpush1.msra.mxu0 %v929
    %2592 = vmatprep.subr.mxu0 %v934
    %2593 = vmatpush1.msra.mxu0 %v933
    %2594 = vmatprep.subr.mxu0 %v938
    %2595 = vmatpush1.msra.mxu0 %v937
    %2596 = vmatprep.mubr.f32.mxu0 %v2126
    %2597 = vmatmul.mubr.f32.gmra.mrb[0].mxu0 %v2460
    %v2598 = vpop.f32.mrb[0].mxu0
    %v2599 = vadd.f32 %v952, %v2598
    %v2600 = vpop.f32.mrb[0].mxu0
    %v2601 = vadd.f32 %v956, %v2600
    %2602 = vdwg.mxu0
    %v2603 = vxor.u32 %v2528, 2147483648
    %v2604 = vxor.u32 %v2530, 2147483648
    %v2605 = vxor.u32 %v2599, 2147483648
    %v2606 = vmul.f32 %v2603, 1.442695
    %v2607 = vpow.pop %v2606
    %v2608 = vmul.f32 %v2604, 1.442695
    %v2609 = vpow.pop %v2608
    %v2610 = vmul.f32 %v2605, 1.442695
    %v2611 = vpow.pop %v2610
    %v2612 = vadd.f32 %v2607, 1.0
    %v2613 = vadd.f32 %v2609, 1.0
    %v2614 = vadd.f32 %v2611, 1.0
    %v2615 = vrcp.pop %v2612
    %v2616 = vmul.f32 1.0, %v2615
    %v2617 = vrcp.pop %v2613
    %v2618 = vmul.f32 1.0, %v2617
    %v2619 = vrcp.pop %v2614
    %v2620 = vmul.f32 1.0, %v2619
    %v2621 = vtanh.pop %v2601
    %v2622 = vmul.f32 %v2618, %v2124
    %v2623 = vmul.f32 %v2616, %v2621
    %v2624 = vadd.f32 %v2622, %v2623
    %v2625 = vtanh.pop %v2624
    %v2626 = vmul.f32 %v2620, %v2625
    %s2627 = scalar_lea.vmem [#allocation2], 32
    %v2628 = vld [vmem:[%s2627] sm:$0xff]
    %2629 = vmatprep.subr.mxu0 %v180
    %2630 = vmatpush1.msra.mxu0 %v179
    %2631 = vmatprep.subr.mxu0 %v184
    %2632 = vmatpush1.msra.mxu0 %v183
    %2633 = vmatprep.subr.mxu0 %v188
    %2634 = vmatpush1.msra.mxu0 %v187
    %2635 = vmatprep.subr.mxu0 %v192
    %2636 = vmatpush1.msra.mxu0 %v191
    %2637 = vmatprep.subr.mxu0 %v196
    %2638 = vmatpush1.msra.mxu0 %v195
    %2639 = vmatprep.subr.mxu0 %v200
    %2640 = vmatpush1.msra.mxu0 %v199
    %2641 = vmatprep.subr.mxu0 %v204
    %2642 = vmatpush1.msra.mxu0 %v203
    %2643 = vmatprep.subr.mxu0 %v208
    %2644 = vmatpush1.msra.mxu0 %v207
    %2645 = vmatprep.subr.mxu0 %v212
    %2646 = vmatpush1.msra.mxu0 %v211
    %2647 = vmatprep.subr.mxu0 %v216
    %2648 = vmatpush1.msra.mxu0 %v215
    %2649 = vmatprep.subr.mxu0 %v220
    %2650 = vmatpush1.msra.mxu0 %v219
    %2651 = vmatprep.subr.mxu0 %v224
    %2652 = vmatpush1.msra.mxu0 %v223
    %2653 = vmatprep.subr.mxu0 %v228
    %2654 = vmatpush1.msra.mxu0 %v227
    %2655 = vmatprep.subr.mxu0 %v232
    %2656 = vmatpush1.msra.mxu0 %v231
    %2657 = vmatprep.subr.mxu0 %v236
    %2658 = vmatpush1.msra.mxu0 %v235
    %2659 = vmatprep.subr.mxu0 %v240
    %2660 = vmatpush1.msra.mxu0 %v239
    %2661 = vmatprep.subr.mxu0 %v244
    %2662 = vmatpush1.msra.mxu0 %v243
    %2663 = vmatprep.subr.mxu0 %v248
    %2664 = vmatpush1.msra.mxu0 %v247
    %2665 = vmatprep.subr.mxu0 %v252
    %2666 = vmatpush1.msra.mxu0 %v251
    %2667 = vmatprep.subr.mxu0 %v256
    %2668 = vmatpush1.msra.mxu0 %v255
    %2669 = vmatprep.subr.mxu0 %v260
    %2670 = vmatpush1.msra.mxu0 %v259
    %2671 = vmatprep.subr.mxu0 %v264
    %2672 = vmatpush1.msra.mxu0 %v263
    %2673 = vmatprep.subr.mxu0 %v268
    %2674 = vmatpush1.msra.mxu0 %v267
    %2675 = vmatprep.subr.mxu0 %v272
    %2676 = vmatpush1.msra.mxu0 %v271
    %2677 = vmatprep.subr.mxu0 %v276
    %2678 = vmatpush1.msra.mxu0 %v275
    %2679 = vmatprep.subr.mxu0 %v280
    %2680 = vmatpush1.msra.mxu0 %v279
    %2681 = vmatprep.subr.mxu0 %v284
    %2682 = vmatpush1.msra.mxu0 %v283
    %2683 = vmatprep.subr.mxu0 %v288
    %2684 = vmatpush1.msra.mxu0 %v287
    %2685 = vmatprep.subr.mxu0 %v292
    %2686 = vmatpush1.msra.mxu0 %v291
    %2687 = vmatprep.subr.mxu0 %v296
    %2688 = vmatpush1.msra.mxu0 %v295
    %2689 = vmatprep.subr.mxu0 %v300
    %2690 = vmatpush1.msra.mxu0 %v299
    %2691 = vmatprep.subr.mxu0 %v304
    %2692 = vmatpush1.msra.mxu0 %v303
    %2693 = vmatprep.mubr.f32.mxu0 %v2294
    %2694 = vmatmul.mubr.f32.gmra.mrb[0].mxu0 %v2628
    %v2695 = vpop.f32.mrb[0].mxu0
    %v2696 = vadd.f32 %v312, %v2695
    %v2697 = vpop.f32.mrb[0].mxu0
    %v2698 = vadd.f32 %v316, %v2697
    %2699 = vdwg.mxu0
    %2700 = vmatprep.subr.mxu0 %v182
    %2701 = vmatpush1.msra.mxu0 %v181
    %2702 = vmatprep.subr.mxu0 %v186
    %2703 = vmatpush1.msra.mxu0 %v185
    %2704 = vmatprep.subr.mxu0 %v190
    %2705 = vmatpush1.msra.mxu0 %v189
    %2706 = vmatprep.subr.mxu0 %v194
    %2707 = vmatpush1.msra.mxu0 %v193
    %2708 = vmatprep.subr.mxu0 %v198
    %2709 = vmatpush1.msra.mxu0 %v197
    %2710 = vmatprep.subr.mxu0 %v202
    %2711 = vmatpush1.msra.mxu0 %v201
    %2712 = vmatprep.subr.mxu0 %v206
    %2713 = vmatpush1.msra.mxu0 %v205
    %2714 = vmatprep.subr.mxu0 %v210
    %2715 = vmatpush1.msra.mxu0 %v209
    %2716 = vmatprep.subr.mxu0 %v214
    %2717 = vmatpush1.msra.mxu0 %v213
    %2718 = vmatprep.subr.mxu0 %v218
    %2719 = vmatpush1.msra.mxu0 %v217
    %2720 = vmatprep.subr.mxu0 %v222
    %2721 = vmatpush1.msra.mxu0 %v221
    %2722 = vmatprep.subr.mxu0 %v226
    %2723 = vmatpush1.msra.mxu0 %v225
    %2724 = vmatprep.subr.mxu0 %v230
    %2725 = vmatpush1.msra.mxu0 %v229
    %2726 = vmatprep.subr.mxu0 %v234
    %2727 = vmatpush1.msra.mxu0 %v233
    %2728 = vmatprep.subr.mxu0 %v238
    %2729 = vmatpush1.msra.mxu0 %v237
    %2730 = vmatprep.subr.mxu0 %v242
    %2731 = vmatpush1.msra.mxu0 %v241
    %2732 = vmatprep.subr.mxu0 %v246
    %2733 = vmatpush1.msra.mxu0 %v245
    %2734 = vmatprep.subr.mxu0 %v250
    %2735 = vmatpush1.msra.mxu0 %v249
    %2736 = vmatprep.subr.mxu0 %v254
    %2737 = vmatpush1.msra.mxu0 %v253
    %2738 = vmatprep.subr.mxu0 %v258
    %2739 = vmatpush1.msra.mxu0 %v257
    %2740 = vmatprep.subr.mxu0 %v262
    %2741 = vmatpush1.msra.mxu0 %v261
    %2742 = vmatprep.subr.mxu0 %v266
    %2743 = vmatpush1.msra.mxu0 %v265
    %2744 = vmatprep.subr.mxu0 %v270
    %2745 = vmatpush1.msra.mxu0 %v269
    %2746 = vmatprep.subr.mxu0 %v274
    %2747 = vmatpush1.msra.mxu0 %v273
    %2748 = vmatprep.subr.mxu0 %v278
    %2749 = vmatpush1.msra.mxu0 %v277
    %2750 = vmatprep.subr.mxu0 %v282
    %2751 = vmatpush1.msra.mxu0 %v281
    %2752 = vmatprep.subr.mxu0 %v286
    %2753 = vmatpush1.msra.mxu0 %v285
    %2754 = vmatprep.subr.mxu0 %v290
    %2755 = vmatpush1.msra.mxu0 %v289
    %2756 = vmatprep.subr.mxu0 %v294
    %2757 = vmatpush1.msra.mxu0 %v293
    %2758 = vmatprep.subr.mxu0 %v298
    %2759 = vmatpush1.msra.mxu0 %v297
    %2760 = vmatprep.subr.mxu0 %v302
    %2761 = vmatpush1.msra.mxu0 %v301
    %2762 = vmatprep.subr.mxu0 %v306
    %2763 = vmatpush1.msra.mxu0 %v305
    %2764 = vmatprep.mubr.f32.mxu0 %v2294
    %2765 = vmatmul.mubr.f32.gmra.mrb[0].mxu0 %v2628
    %v2766 = vpop.f32.mrb[0].mxu0
    %v2767 = vadd.f32 %v320, %v2766
    %v2768 = vpop.f32.mrb[0].mxu0
    %v2769 = vadd.f32 %v324, %v2768
    %2770 = vdwg.mxu0
    %v2771 = vxor.u32 %v2696, 2147483648
    %v2772 = vxor.u32 %v2698, 2147483648
    %v2773 = vxor.u32 %v2767, 2147483648
    %v2774 = vmul.f32 %v2771, 1.442695
    %v2775 = vpow.pop %v2774
    %v2776 = vmul.f32 %v2772, 1.442695
    %v2777 = vpow.pop %v2776
    %v2778 = vmul.f32 %v2773, 1.442695
    %v2779 = vpow.pop %v2778
    %v2780 = vadd.f32 %v2775, 1.0
    %v2781 = vadd.f32 %v2777, 1.0
    %v2782 = vadd.f32 %v2779, 1.0
    %v2783 = vrcp.pop %v2780
    %v2784 = vmul.f32 1.0, %v2783
    %v2785 = vrcp.pop %v2781
    %v2786 = vmul.f32 1.0, %v2785
    %v2787 = vrcp.pop %v2782
    %v2788 = vmul.f32 1.0, %v2787
    %v2789 = vtanh.pop %v2769
    %v2790 = vmul.f32 %v2786, %v2292
    %v2791 = vmul.f32 %v2784, %v2789
    %v2792 = vadd.f32 %v2790, %v2791
    %v2793 = vtanh.pop %v2792
    %v2794 = vmul.f32 %v2788, %v2793
    %2795 = vmatprep.subr.mxu0 %v496
    %2796 = vmatpush1.msra.mxu0 %v495
    %2797 = vmatprep.subr.mxu0 %v500
    %2798 = vmatpush1.msra.mxu0 %v499
    %2799 = vmatprep.subr.mxu0 %v504
    %2800 = vmatpush1.msra.mxu0 %v503
    %2801 = vmatprep.subr.mxu0 %v508
    %2802 = vmatpush1.msra.mxu0 %v507
    %2803 = vmatprep.subr.mxu0 %v512
    %2804 = vmatpush1.msra.mxu0 %v511
    %2805 = vmatprep.subr.mxu0 %v516
    %2806 = vmatpush1.msra.mxu0 %v515
    %2807 = vmatprep.subr.mxu0 %v520
    %2808 = vmatpush1.msra.mxu0 %v519
    %2809 = vmatprep.subr.mxu0 %v524
    %2810 = vmatpush1.msra.mxu0 %v523
    %2811 = vmatprep.subr.mxu0 %v528
    %2812 = vmatpush1.msra.mxu0 %v527
    %2813 = vmatprep.subr.mxu0 %v532
    %2814 = vmatpush1.msra.mxu0 %v531
    %2815 = vmatprep.subr.mxu0 %v536
    %2816 = vmatpush1.msra.mxu0 %v535
    %2817 = vmatprep.subr.mxu0 %v540
    %2818 = vmatpush1.msra.mxu0 %v539
    %2819 = vmatprep.subr.mxu0 %v544
    %2820 = vmatpush1.msra.mxu0 %v543
    %2821 = vmatprep.subr.mxu0 %v548
    %2822 = vmatpush1.msra.mxu0 %v547
    %2823 = vmatprep.subr.mxu0 %v552
    %2824 = vmatpush1.msra.mxu0 %v551
    %2825 = vmatprep.subr.mxu0 %v556
    %2826 = vmatpush1.msra.mxu0 %v555
    %2827 = vmatprep.subr.mxu0 %v560
    %2828 = vmatpush1.msra.mxu0 %v559
    %2829 = vmatprep.subr.mxu0 %v564
    %2830 = vmatpush1.msra.mxu0 %v563
    %2831 = vmatprep.subr.mxu0 %v568
    %2832 = vmatpush1.msra.mxu0 %v567
    %2833 = vmatprep.subr.mxu0 %v572
    %2834 = vmatpush1.msra.mxu0 %v571
    %2835 = vmatprep.subr.mxu0 %v576
    %2836 = vmatpush1.msra.mxu0 %v575
    %2837 = vmatprep.subr.mxu0 %v580
    %2838 = vmatpush1.msra.mxu0 %v579
    %2839 = vmatprep.subr.mxu0 %v584
    %2840 = vmatpush1.msra.mxu0 %v583
    %2841 = vmatprep.subr.mxu0 %v588
    %2842 = vmatpush1.msra.mxu0 %v587
    %2843 = vmatprep.subr.mxu0 %v592
    %2844 = vmatpush1.msra.mxu0 %v591
    %2845 = vmatprep.subr.mxu0 %v596
    %2846 = vmatpush1.msra.mxu0 %v595
    %2847 = vmatprep.subr.mxu0 %v600
    %2848 = vmatpush1.msra.mxu0 %v599
    %2849 = vmatprep.subr.mxu0 %v604
    %2850 = vmatpush1.msra.mxu0 %v603
    %2851 = vmatprep.subr.mxu0 %v608
    %2852 = vmatpush1.msra.mxu0 %v607
    %2853 = vmatprep.subr.mxu0 %v612
    %2854 = vmatpush1.msra.mxu0 %v611
    %2855 = vmatprep.subr.mxu0 %v616
    %2856 = vmatpush1.msra.mxu0 %v615
    %2857 = vmatprep.subr.mxu0 %v620
    %2858 = vmatpush1.msra.mxu0 %v619
    %2859 = vmatprep.mubr.f32.mxu0 %v2460
    %2860 = vmatmul.mubr.f32.gmra.mrb[0].mxu0 %v2794
    %v2861 = vpop.f32.mrb[0].mxu0
    %v2862 = vadd.f32 %v628, %v2861
    %v2863 = vpop.f32.mrb[0].mxu0
    %v2864 = vadd.f32 %v632, %v2863
    %2865 = vdwg.mxu0
    %2866 = vmatprep.subr.mxu0 %v498
    %2867 = vmatpush1.msra.mxu0 %v497
    %2868 = vmatprep.subr.mxu0 %v502
    %2869 = vmatpush1.msra.mxu0 %v501
    %2870 = vmatprep.subr.mxu0 %v506
    %2871 = vmatpush1.msra.mxu0 %v505
    %2872 = vmatprep.subr.mxu0 %v510
    %2873 = vmatpush1.msra.mxu0 %v509
    %2874 = vmatprep.subr.mxu0 %v514
    %2875 = vmatpush1.msra.mxu0 %v513
    %2876 = vmatprep.subr.mxu0 %v518
    %2877 = vmatpush1.msra.mxu0 %v517
    %2878 = vmatprep.subr.mxu0 %v522
    %2879 = vmatpush1.msra.mxu0 %v521
    %2880 = vmatprep.subr.mxu0 %v526
    %2881 = vmatpush1.msra.mxu0 %v525
    %2882 = vmatprep.subr.mxu0 %v530
    %2883 = vmatpush1.msra.mxu0 %v529
    %2884 = vmatprep.subr.mxu0 %v534
    %2885 = vmatpush1.msra.mxu0 %v533
    %2886 = vmatprep.subr.mxu0 %v538
    %2887 = vmatpush1.msra.mxu0 %v537
    %2888 = vmatprep.subr.mxu0 %v542
    %2889 = vmatpush1.msra.mxu0 %v541
    %2890 = vmatprep.subr.mxu0 %v546
    %2891 = vmatpush1.msra.mxu0 %v545
    %2892 = vmatprep.subr.mxu0 %v550
    %2893 = vmatpush1.msra.mxu0 %v549
    %2894 = vmatprep.subr.mxu0 %v554
    %2895 = vmatpush1.msra.mxu0 %v553
    %2896 = vmatprep.subr.mxu0 %v558
    %2897 = vmatpush1.msra.mxu0 %v557
    %2898 = vmatprep.subr.mxu0 %v562
    %2899 = vmatpush1.msra.mxu0 %v561
    %2900 = vmatprep.subr.mxu0 %v566
    %2901 = vmatpush1.msra.mxu0 %v565
    %2902 = vmatprep.subr.mxu0 %v570
    %2903 = vmatpush1.msra.mxu0 %v569
    %2904 = vmatprep.subr.mxu0 %v574
    %2905 = vmatpush1.msra.mxu0 %v573
    %2906 = vmatprep.subr.mxu0 %v578
    %2907 = vmatpush1.msra.mxu0 %v577
    %2908 = vmatprep.subr.mxu0 %v582
    %2909 = vmatpush1.msra.mxu0 %v581
    %2910 = vmatprep.subr.mxu0 %v586
    %2911 = vmatpush1.msra.mxu0 %v585
    %2912 = vmatprep.subr.mxu0 %v590
    %2913 = vmatpush1.msra.mxu0 %v589
    %2914 = vmatprep.subr.mxu0 %v594
    %2915 = vmatpush1.msra.mxu0 %v593
    %2916 = vmatprep.subr.mxu0 %v598
    %2917 = vmatpush1.msra.mxu0 %v597
    %2918 = vmatprep.subr.mxu0 %v602
    %2919 = vmatpush1.msra.mxu0 %v601
    %2920 = vmatprep.subr.mxu0 %v606
    %2921 = vmatpush1.msra.mxu0 %v605
    %2922 = vmatprep.subr.mxu0 %v610
    %2923 = vmatpush1.msra.mxu0 %v609
    %2924 = vmatprep.subr.mxu0 %v614
    %2925 = vmatpush1.msra.mxu0 %v613
    %2926 = vmatprep.subr.mxu0 %v618
    %2927 = vmatpush1.msra.mxu0 %v617
    %2928 = vmatprep.subr.mxu0 %v622
    %2929 = vmatpush1.msra.mxu0 %v621
    %2930 = vmatprep.mubr.f32.mxu0 %v2460
    %2931 = vmatmul.mubr.f32.gmra.mrb[0].mxu0 %v2794
    %v2932 = vpop.f32.mrb[0].mxu0
    %v2933 = vadd.f32 %v636, %v2932
    %v2934 = vpop.f32.mrb[0].mxu0
    %v2935 = vadd.f32 %v640, %v2934
    %2936 = vdwg.mxu0
    %v2937 = vxor.u32 %v2862, 2147483648
    %v2938 = vxor.u32 %v2864, 2147483648
    %v2939 = vxor.u32 %v2933, 2147483648
    %v2940 = vmul.f32 %v2937, 1.442695
    %v2941 = vpow.pop %v2940
    %v2942 = vmul.f32 %v2938, 1.442695
    %v2943 = vpow.pop %v2942
    %v2944 = vmul.f32 %v2939, 1.442695
    %v2945 = vpow.pop %v2944
    %v2946 = vadd.f32 %v2941, 1.0
    %v2947 = vadd.f32 %v2943, 1.0
    %v2948 = vadd.f32 %v2945, 1.0
    %v2949 = vrcp.pop %v2946
    %v2950 = vmul.f32 1.0, %v2949
    %v2951 = vrcp.pop %v2947
    %v2952 = vmul.f32 1.0, %v2951
    %v2953 = vrcp.pop %v2948
    %v2954 = vmul.f32 1.0, %v2953
    %v2955 = vtanh.pop %v2935
    %v2956 = vmul.f32 %v2952, %v2458
    %v2957 = vmul.f32 %v2950, %v2955
    %v2958 = vadd.f32 %v2956, %v2957
    %v2959 = vtanh.pop %v2958
    %v2960 = vmul.f32 %v2954, %v2959
    %2961 = vmatprep.subr.mxu0 %v812
    %2962 = vmatpush1.msra.mxu0 %v811
    %2963 = vmatprep.subr.mxu0 %v816
    %2964 = vmatpush1.msra.mxu0 %v815
    %2965 = vmatprep.subr.mxu0 %v820
    %2966 = vmatpush1.msra.mxu0 %v819
    %2967 = vmatprep.subr.mxu0 %v824
    %2968 = vmatpush1.msra.mxu0 %v823
    %2969 = vmatprep.subr.mxu0 %v828
    %2970 = vmatpush1.msra.mxu0 %v827
    %2971 = vmatprep.subr.mxu0 %v832
    %2972 = vmatpush1.msra.mxu0 %v831
    %2973 = vmatprep.subr.mxu0 %v836
    %2974 = vmatpush1.msra.mxu0 %v835
    %2975 = vmatprep.subr.mxu0 %v840
    %2976 = vmatpush1.msra.mxu0 %v839
    %2977 = vmatprep.subr.mxu0 %v844
    %2978 = vmatpush1.msra.mxu0 %v843
    %2979 = vmatprep.subr.mxu0 %v848
    %2980 = vmatpush1.msra.mxu0 %v847
    %2981 = vmatprep.subr.mxu0 %v852
    %2982 = vmatpush1.msra.mxu0 %v851
    %2983 = vmatprep.subr.mxu0 %v856
    %2984 = vmatpush1.msra.mxu0 %v855
    %2985 = vmatprep.subr.mxu0 %v860
    %2986 = vmatpush1.msra.mxu0 %v859
    %2987 = vmatprep.subr.mxu0 %v864
    %2988 = vmatpush1.msra.mxu0 %v863
    %2989 = vmatprep.subr.mxu0 %v868
    %2990 = vmatpush1.msra.mxu0 %v867
    %2991 = vmatprep.subr.mxu0 %v872
    %2992 = vmatpush1.msra.mxu0 %v871
    %2993 = vmatprep.subr.mxu0 %v876
    %2994 = vmatpush1.msra.mxu0 %v875
    %2995 = vmatprep.subr.mxu0 %v880
    %2996 = vmatpush1.msra.mxu0 %v879
    %2997 = vmatprep.subr.mxu0 %v884
    %2998 = vmatpush1.msra.mxu0 %v883
    %2999 = vmatprep.subr.mxu0 %v888
    %3000 = vmatpush1.msra.mxu0 %v887
    %3001 = vmatprep.subr.mxu0 %v892
    %3002 = vmatpush1.msra.mxu0 %v891
    %3003 = vmatprep.subr.mxu0 %v896
    %3004 = vmatpush1.msra.mxu0 %v895
    %3005 = vmatprep.subr.mxu0 %v900
    %3006 = vmatpush1.msra.mxu0 %v899
    %3007 = vmatprep.subr.mxu0 %v904
    %3008 = vmatpush1.msra.mxu0 %v903
    %3009 = vmatprep.subr.mxu0 %v908
    %3010 = vmatpush1.msra.mxu0 %v907
    %3011 = vmatprep.subr.mxu0 %v912
    %3012 = vmatpush1.msra.mxu0 %v911
    %3013 = vmatprep.subr.mxu0 %v916
    %3014 = vmatpush1.msra.mxu0 %v915
    %3015 = vmatprep.subr.mxu0 %v920
    %3016 = vmatpush1.msra.mxu0 %v919
    %3017 = vmatprep.subr.mxu0 %v924
    %3018 = vmatpush1.msra.mxu0 %v923
    %3019 = vmatprep.subr.mxu0 %v928
    %3020 = vmatpush1.msra.mxu0 %v927
    %3021 = vmatprep.subr.mxu0 %v932
    %3022 = vmatpush1.msra.mxu0 %v931
    %3023 = vmatprep.subr.mxu0 %v936
    %3024 = vmatpush1.msra.mxu0 %v935
    %3025 = vmatprep.mubr.f32.mxu0 %v2626
    %3026 = vmatmul.mubr.f32.gmra.mrb[0].mxu0 %v2960
    %v3027 = vpop.f32.mrb[0].mxu0
    %v3028 = vadd.f32 %v944, %v3027
    %v3029 = vpop.f32.mrb[0].mxu0
    %v3030 = vadd.f32 %v948, %v3029
    %3031 = vdwg.mxu0
    %3032 = vmatprep.subr.mxu0 %v814
    %3033 = vmatpush1.msra.mxu0 %v813
    %3034 = vmatprep.subr.mxu0 %v818
    %3035 = vmatpush1.msra.mxu0 %v817
    %3036 = vmatprep.subr.mxu0 %v822
    %3037 = vmatpush1.msra.mxu0 %v821
    %3038 = vmatprep.subr.mxu0 %v826
    %3039 = vmatpush1.msra.mxu0 %v825
    %3040 = vmatprep.subr.mxu0 %v830
    %3041 = vmatpush1.msra.mxu0 %v829
    %3042 = vmatprep.subr.mxu0 %v834
    %3043 = vmatpush1.msra.mxu0 %v833
    %3044 = vmatprep.subr.mxu0 %v838
    %3045 = vmatpush1.msra.mxu0 %v837
    %3046 = vmatprep.subr.mxu0 %v842
    %3047 = vmatpush1.msra.mxu0 %v841
    %3048 = vmatprep.subr.mxu0 %v846
    %3049 = vmatpush1.msra.mxu0 %v845
    %3050 = vmatprep.subr.mxu0 %v850
    %3051 = vmatpush1.msra.mxu0 %v849
    %3052 = vmatprep.subr.mxu0 %v854
    %3053 = vmatpush1.msra.mxu0 %v853
    %3054 = vmatprep.subr.mxu0 %v858
    %3055 = vmatpush1.msra.mxu0 %v857
    %3056 = vmatprep.subr.mxu0 %v862
    %3057 = vmatpush1.msra.mxu0 %v861
    %3058 = vmatprep.subr.mxu0 %v866
    %3059 = vmatpush1.msra.mxu0 %v865
    %3060 = vmatprep.subr.mxu0 %v870
    %3061 = vmatpush1.msra.mxu0 %v869
    %3062 = vmatprep.subr.mxu0 %v874
    %3063 = vmatpush1.msra.mxu0 %v873
    %3064 = vmatprep.subr.mxu0 %v878
    %3065 = vmatpush1.msra.mxu0 %v877
    %3066 = vmatprep.subr.mxu0 %v882
    %3067 = vmatpush1.msra.mxu0 %v881
    %3068 = vmatprep.subr.mxu0 %v886
    %3069 = vmatpush1.msra.mxu0 %v885
    %3070 = vmatprep.subr.mxu0 %v890
    %3071 = vmatpush1.msra.mxu0 %v889
    %3072 = vmatprep.subr.mxu0 %v894
    %3073 = vmatpush1.msra.mxu0 %v893
    %3074 = vmatprep.subr.mxu0 %v898
    %3075 = vmatpush1.msra.mxu0 %v897
    %3076 = vmatprep.subr.mxu0 %v902
    %3077 = vmatpush1.msra.mxu0 %v901
    %3078 = vmatprep.subr.mxu0 %v906
    %3079 = vmatpush1.msra.mxu0 %v905
    %3080 = vmatprep.subr.mxu0 %v910
    %3081 = vmatpush1.msra.mxu0 %v909
    %3082 = vmatprep.subr.mxu0 %v914
    %3083 = vmatpush1.msra.mxu0 %v913
    %3084 = vmatprep.subr.mxu0 %v918
    %3085 = vmatpush1.msra.mxu0 %v917
    %3086 = vmatprep.subr.mxu0 %v922
    %3087 = vmatpush1.msra.mxu0 %v921
    %3088 = vmatprep.subr.mxu0 %v926
    %3089 = vmatpush1.msra.mxu0 %v925
    %3090 = vmatprep.subr.mxu0 %v930
    %3091 = vmatpush1.msra.mxu0 %v929
    %3092 = vmatprep.subr.mxu0 %v934
    %3093 = vmatpush1.msra.mxu0 %v933
    %3094 = vmatprep.subr.mxu0 %v938
    %3095 = vmatpush1.msra.mxu0 %v937
    %3096 = vmatprep.mubr.f32.mxu0 %v2626
    %3097 = vmatmul.mubr.f32.gmra.mrb[0].mxu0 %v2960
    %v3098 = vpop.f32.mrb[0].mxu0
    %v3099 = vadd.f32 %v952, %v3098
    %v3100 = vpop.f32.mrb[0].mxu0
    %v3101 = vadd.f32 %v956, %v3100
    %3102 = vdwg.mxu0
    %v3103 = vxor.u32 %v3028, 2147483648
    %v3104 = vxor.u32 %v3030, 2147483648
    %v3105 = vxor.u32 %v3099, 2147483648
    %v3106 = vmul.f32 %v3103, 1.442695
    %v3107 = vpow.pop %v3106
    %v3108 = vmul.f32 %v3104, 1.442695
    %v3109 = vpow.pop %v3108
    %v3110 = vmul.f32 %v3105, 1.442695
    %v3111 = vpow.pop %v3110
    %v3112 = vadd.f32 %v3107, 1.0
    %v3113 = vadd.f32 %v3109, 1.0
    %v3114 = vadd.f32 %v3111, 1.0
    %v3115 = vrcp.pop %v3112
    %v3116 = vmul.f32 1.0, %v3115
    %v3117 = vrcp.pop %v3113
    %v3118 = vmul.f32 1.0, %v3117
    %v3119 = vrcp.pop %v3114
    %v3120 = vmul.f32 1.0, %v3119
    %v3121 = vtanh.pop %v3101
    %v3122 = vmul.f32 %v3118, %v2624
    %v3123 = vmul.f32 %v3116, %v3121
    %v3124 = vadd.f32 %v3122, %v3123
    %v3125 = vtanh.pop %v3124
    %v3126 = vmul.f32 %v3120, %v3125
    %s3127 = scalar_lea.vmem [#allocation2], 40
    %v3128 = vld [vmem:[%s3127] sm:$0xff]
    %3129 = vmatprep.subr.mxu0 %v180
    %3130 = vmatpush1.msra.mxu0 %v179
    %3131 = vmatprep.subr.mxu0 %v184
    %3132 = vmatpush1.msra.mxu0 %v183
    %3133 = vmatprep.subr.mxu0 %v188
    %3134 = vmatpush1.msra.mxu0 %v187
    %3135 = vmatprep.subr.mxu0 %v192
    %3136 = vmatpush1.msra.mxu0 %v191
    %3137 = vmatprep.subr.mxu0 %v196
    %3138 = vmatpush1.msra.mxu0 %v195
    %3139 = vmatprep.subr.mxu0 %v200
    %3140 = vmatpush1.msra.mxu0 %v199
    %3141 = vmatprep.subr.mxu0 %v204
    %3142 = vmatpush1.msra.mxu0 %v203
    %3143 = vmatprep.subr.mxu0 %v208
    %3144 = vmatpush1.msra.mxu0 %v207
    %3145 = vmatprep.subr.mxu0 %v212
    %3146 = vmatpush1.msra.mxu0 %v211
    %3147 = vmatprep.subr.mxu0 %v216
    %3148 = vmatpush1.msra.mxu0 %v215
    %3149 = vmatprep.subr.mxu0 %v220
    %3150 = vmatpush1.msra.mxu0 %v219
    %3151 = vmatprep.subr.mxu0 %v224
    %3152 = vmatpush1.msra.mxu0 %v223
    %3153 = vmatprep.subr.mxu0 %v228
    %3154 = vmatpush1.msra.mxu0 %v227
    %3155 = vmatprep.subr.mxu0 %v232
    %3156 = vmatpush1.msra.mxu0 %v231
    %3157 = vmatprep.subr.mxu0 %v236
    %3158 = vmatpush1.msra.mxu0 %v235
    %3159 = vmatprep.subr.mxu0 %v240
    %3160 = vmatpush1.msra.mxu0 %v239
    %3161 = vmatprep.subr.mxu0 %v244
    %3162 = vmatpush1.msra.mxu0 %v243
    %3163 = vmatprep.subr.mxu0 %v248
    %3164 = vmatpush1.msra.mxu0 %v247
    %3165 = vmatprep.subr.mxu0 %v252
    %3166 = vmatpush1.msra.mxu0 %v251
    %3167 = vmatprep.subr.mxu0 %v256
    %3168 = vmatpush1.msra.mxu0 %v255
    %3169 = vmatprep.subr.mxu0 %v260
    %3170 = vmatpush1.msra.mxu0 %v259
    %3171 = vmatprep.subr.mxu0 %v264
    %3172 = vmatpush1.msra.mxu0 %v263
    %3173 = vmatprep.subr.mxu0 %v268
    %3174 = vmatpush1.msra.mxu0 %v267
    %3175 = vmatprep.subr.mxu0 %v272
    %3176 = vmatpush1.msra.mxu0 %v271
    %3177 = vmatprep.subr.mxu0 %v276
    %3178 = vmatpush1.msra.mxu0 %v275
    %3179 = vmatprep.subr.mxu0 %v280
    %3180 = vmatpush1.msra.mxu0 %v279
    %3181 = vmatprep.subr.mxu0 %v284
    %3182 = vmatpush1.msra.mxu0 %v283
    %3183 = vmatprep.subr.mxu0 %v288
    %3184 = vmatpush1.msra.mxu0 %v287
    %3185 = vmatprep.subr.mxu0 %v292
    %3186 = vmatpush1.msra.mxu0 %v291
    %3187 = vmatprep.subr.mxu0 %v296
    %3188 = vmatpush1.msra.mxu0 %v295
    %3189 = vmatprep.subr.mxu0 %v300
    %3190 = vmatpush1.msra.mxu0 %v299
    %3191 = vmatprep.subr.mxu0 %v304
    %3192 = vmatpush1.msra.mxu0 %v303
    %3193 = vmatprep.mubr.f32.mxu0 %v2794
    %3194 = vmatmul.mubr.f32.gmra.mrb[0].mxu0 %v3128
    %v3195 = vpop.f32.mrb[0].mxu0
    %v3196 = vadd.f32 %v312, %v3195
    %v3197 = vpop.f32.mrb[0].mxu0
    %v3198 = vadd.f32 %v316, %v3197
    %3199 = vdwg.mxu0
    %3200 = vmatprep.subr.mxu0 %v182
    %3201 = vmatpush1.msra.mxu0 %v181
    %3202 = vmatprep.subr.mxu0 %v186
    %3203 = vmatpush1.msra.mxu0 %v185
    %3204 = vmatprep.subr.mxu0 %v190
    %3205 = vmatpush1.msra.mxu0 %v189
    %3206 = vmatprep.subr.mxu0 %v194
    %3207 = vmatpush1.msra.mxu0 %v193
    %3208 = vmatprep.subr.mxu0 %v198
    %3209 = vmatpush1.msra.mxu0 %v197
    %3210 = vmatprep.subr.mxu0 %v202
    %3211 = vmatpush1.msra.mxu0 %v201
    %3212 = vmatprep.subr.mxu0 %v206
    %3213 = vmatpush1.msra.mxu0 %v205
    %3214 = vmatprep.subr.mxu0 %v210
    %3215 = vmatpush1.msra.mxu0 %v209
    %3216 = vmatprep.subr.mxu0 %v214
    %3217 = vmatpush1.msra.mxu0 %v213
    %3218 = vmatprep.subr.mxu0 %v218
    %3219 = vmatpush1.msra.mxu0 %v217
    %3220 = vmatprep.subr.mxu0 %v222
    %3221 = vmatpush1.msra.mxu0 %v221
    %3222 = vmatprep.subr.mxu0 %v226
    %3223 = vmatpush1.msra.mxu0 %v225
    %3224 = vmatprep.subr.mxu0 %v230
    %3225 = vmatpush1.msra.mxu0 %v229
    %3226 = vmatprep.subr.mxu0 %v234
    %3227 = vmatpush1.msra.mxu0 %v233
    %3228 = vmatprep.subr.mxu0 %v238
    %3229 = vmatpush1.msra.mxu0 %v237
    %3230 = vmatprep.subr.mxu0 %v242
    %3231 = vmatpush1.msra.mxu0 %v241
    %3232 = vmatprep.subr.mxu0 %v246
    %3233 = vmatpush1.msra.mxu0 %v245
    %3234 = vmatprep.subr.mxu0 %v250
    %3235 = vmatpush1.msra.mxu0 %v249
    %3236 = vmatprep.subr.mxu0 %v254
    %3237 = vmatpush1.msra.mxu0 %v253
    %3238 = vmatprep.subr.mxu0 %v258
    %3239 = vmatpush1.msra.mxu0 %v257
    %3240 = vmatprep.subr.mxu0 %v262
    %3241 = vmatpush1.msra.mxu0 %v261
    %3242 = vmatprep.subr.mxu0 %v266
    %3243 = vmatpush1.msra.mxu0 %v265
    %3244 = vmatprep.subr.mxu0 %v270
    %3245 = vmatpush1.msra.mxu0 %v269
    %3246 = vmatprep.subr.mxu0 %v274
    %3247 = vmatpush1.msra.mxu0 %v273
    %3248 = vmatprep.subr.mxu0 %v278
    %3249 = vmatpush1.msra.mxu0 %v277
    %3250 = vmatprep.subr.mxu0 %v282
    %3251 = vmatpush1.msra.mxu0 %v281
    %3252 = vmatprep.subr.mxu0 %v286
    %3253 = vmatpush1.msra.mxu0 %v285
    %3254 = vmatprep.subr.mxu0 %v290
    %3255 = vmatpush1.msra.mxu0 %v289
    %3256 = vmatprep.subr.mxu0 %v294
    %3257 = vmatpush1.msra.mxu0 %v293
    %3258 = vmatprep.subr.mxu0 %v298
    %3259 = vmatpush1.msra.mxu0 %v297
    %3260 = vmatprep.subr.mxu0 %v302
    %3261 = vmatpush1.msra.mxu0 %v301
    %3262 = vmatprep.subr.mxu0 %v306
    %3263 = vmatpush1.msra.mxu0 %v305
    %3264 = vmatprep.mubr.f32.mxu0 %v2794
    %3265 = vmatmul.mubr.f32.gmra.mrb[0].mxu0 %v3128
    %v3266 = vpop.f32.mrb[0].mxu0
    %v3267 = vadd.f32 %v320, %v3266
    %v3268 = vpop.f32.mrb[0].mxu0
    %v3269 = vadd.f32 %v324, %v3268
    %3270 = vdwg.mxu0
    %v3271 = vxor.u32 %v3196, 2147483648
    %v3272 = vxor.u32 %v3198, 2147483648
    %v3273 = vxor.u32 %v3267, 2147483648
    %v3274 = vmul.f32 %v3271, 1.442695
    %v3275 = vpow.pop %v3274
    %v3276 = vmul.f32 %v3272, 1.442695
    %v3277 = vpow.pop %v3276
    %v3278 = vmul.f32 %v3273, 1.442695
    %v3279 = vpow.pop %v3278
    %v3280 = vadd.f32 %v3275, 1.0
    %v3281 = vadd.f32 %v3277, 1.0
    %v3282 = vadd.f32 %v3279, 1.0
    %v3283 = vrcp.pop %v3280
    %v3284 = vmul.f32 1.0, %v3283
    %v3285 = vrcp.pop %v3281
    %v3286 = vmul.f32 1.0, %v3285
    %v3287 = vrcp.pop %v3282
    %v3288 = vmul.f32 1.0, %v3287
    %v3289 = vtanh.pop %v3269
    %v3290 = vmul.f32 %v3286, %v2792
    %v3291 = vmul.f32 %v3284, %v3289
    %v3292 = vadd.f32 %v3290, %v3291
    %v3293 = vtanh.pop %v3292
    %v3294 = vmul.f32 %v3288, %v3293
    %3295 = vmatprep.subr.mxu0 %v496
    %3296 = vmatpush1.msra.mxu0 %v495
    %3297 = vmatprep.subr.mxu0 %v500
    %3298 = vmatpush1.msra.mxu0 %v499
    %3299 = vmatprep.subr.mxu0 %v504
    %3300 = vmatpush1.msra.mxu0 %v503
    %3301 = vmatprep.subr.mxu0 %v508
    %3302 = vmatpush1.msra.mxu0 %v507
    %3303 = vmatprep.subr.mxu0 %v512
    %3304 = vmatpush1.msra.mxu0 %v511
    %3305 = vmatprep.subr.mxu0 %v516
    %3306 = vmatpush1.msra.mxu0 %v515
    %3307 = vmatprep.subr.mxu0 %v520
    %3308 = vmatpush1.msra.mxu0 %v519
    %3309 = vmatprep.subr.mxu0 %v524
    %3310 = vmatpush1.msra.mxu0 %v523
    %3311 = vmatprep.subr.mxu0 %v528
    %3312 = vmatpush1.msra.mxu0 %v527
    %3313 = vmatprep.subr.mxu0 %v532
    %3314 = vmatpush1.msra.mxu0 %v531
    %3315 = vmatprep.subr.mxu0 %v536
    %3316 = vmatpush1.msra.mxu0 %v535
    %3317 = vmatprep.subr.mxu0 %v540
    %3318 = vmatpush1.msra.mxu0 %v539
    %3319 = vmatprep.subr.mxu0 %v544
    %3320 = vmatpush1.msra.mxu0 %v543
    %3321 = vmatprep.subr.mxu0 %v548
    %3322 = vmatpush1.msra.mxu0 %v547
    %3323 = vmatprep.subr.mxu0 %v552
    %3324 = vmatpush1.msra.mxu0 %v551
    %3325 = vmatprep.subr.mxu0 %v556
    %3326 = vmatpush1.msra.mxu0 %v555
    %3327 = vmatprep.subr.mxu0 %v560
    %3328 = vmatpush1.msra.mxu0 %v559
    %3329 = vmatprep.subr.mxu0 %v564
    %3330 = vmatpush1.msra.mxu0 %v563
    %3331 = vmatprep.subr.mxu0 %v568
    %3332 = vmatpush1.msra.mxu0 %v567
    %3333 = vmatprep.subr.mxu0 %v572
    %3334 = vmatpush1.msra.mxu0 %v571
    %3335 = vmatprep.subr.mxu0 %v576
    %3336 = vmatpush1.msra.mxu0 %v575
    %3337 = vmatprep.subr.mxu0 %v580
    %3338 = vmatpush1.msra.mxu0 %v579
    %3339 = vmatprep.subr.mxu0 %v584
    %3340 = vmatpush1.msra.mxu0 %v583
    %3341 = vmatprep.subr.mxu0 %v588
    %3342 = vmatpush1.msra.mxu0 %v587
    %3343 = vmatprep.subr.mxu0 %v592
    %3344 = vmatpush1.msra.mxu0 %v591
    %3345 = vmatprep.subr.mxu0 %v596
    %3346 = vmatpush1.msra.mxu0 %v595
    %3347 = vmatprep.subr.mxu0 %v600
    %3348 = vmatpush1.msra.mxu0 %v599
    %3349 = vmatprep.subr.mxu0 %v604
    %3350 = vmatpush1.msra.mxu0 %v603
    %3351 = vmatprep.subr.mxu0 %v608
    %3352 = vmatpush1.msra.mxu0 %v607
    %3353 = vmatprep.subr.mxu0 %v612
    %3354 = vmatpush1.msra.mxu0 %v611
    %3355 = vmatprep.subr.mxu0 %v616
    %3356 = vmatpush1.msra.mxu0 %v615
    %3357 = vmatprep.subr.mxu0 %v620
    %3358 = vmatpush1.msra.mxu0 %v619
    %3359 = vmatprep.mubr.f32.mxu0 %v2960
    %3360 = vmatmul.mubr.f32.gmra.mrb[0].mxu0 %v3294
    %v3361 = vpop.f32.mrb[0].mxu0
    %v3362 = vadd.f32 %v628, %v3361
    %v3363 = vpop.f32.mrb[0].mxu0
    %v3364 = vadd.f32 %v632, %v3363
    %3365 = vdwg.mxu0
    %3366 = vmatprep.subr.mxu0 %v498
    %3367 = vmatpush1.msra.mxu0 %v497
    %3368 = vmatprep.subr.mxu0 %v502
    %3369 = vmatpush1.msra.mxu0 %v501
    %3370 = vmatprep.subr.mxu0 %v506
    %3371 = vmatpush1.msra.mxu0 %v505
    %3372 = vmatprep.subr.mxu0 %v510
    %3373 = vmatpush1.msra.mxu0 %v509
    %3374 = vmatprep.subr.mxu0 %v514
    %3375 = vmatpush1.msra.mxu0 %v513
    %3376 = vmatprep.subr.mxu0 %v518
    %3377 = vmatpush1.msra.mxu0 %v517
    %3378 = vmatprep.subr.mxu0 %v522
    %3379 = vmatpush1.msra.mxu0 %v521
    %3380 = vmatprep.subr.mxu0 %v526
    %3381 = vmatpush1.msra.mxu0 %v525
    %3382 = vmatprep.subr.mxu0 %v530
    %3383 = vmatpush1.msra.mxu0 %v529
    %3384 = vmatprep.subr.mxu0 %v534
    %3385 = vmatpush1.msra.mxu0 %v533
    %3386 = vmatprep.subr.mxu0 %v538
    %3387 = vmatpush1.msra.mxu0 %v537
    %3388 = vmatprep.subr.mxu0 %v542
    %3389 = vmatpush1.msra.mxu0 %v541
    %3390 = vmatprep.subr.mxu0 %v546
    %3391 = vmatpush1.msra.mxu0 %v545
    %3392 = vmatprep.subr.mxu0 %v550
    %3393 = vmatpush1.msra.mxu0 %v549
    %3394 = vmatprep.subr.mxu0 %v554
    %3395 = vmatpush1.msra.mxu0 %v553
    %3396 = vmatprep.subr.mxu0 %v558
    %3397 = vmatpush1.msra.mxu0 %v557
    %3398 = vmatprep.subr.mxu0 %v562
    %3399 = vmatpush1.msra.mxu0 %v561
    %3400 = vmatprep.subr.mxu0 %v566
    %3401 = vmatpush1.msra.mxu0 %v565
    %3402 = vmatprep.subr.mxu0 %v570
    %3403 = vmatpush1.msra.mxu0 %v569
    %3404 = vmatprep.subr.mxu0 %v574
    %3405 = vmatpush1.msra.mxu0 %v573
    %3406 = vmatprep.subr.mxu0 %v578
    %3407 = vmatpush1.msra.mxu0 %v577
    %3408 = vmatprep.subr.mxu0 %v582
    %3409 = vmatpush1.msra.mxu0 %v581
    %3410 = vmatprep.subr.mxu0 %v586
    %3411 = vmatpush1.msra.mxu0 %v585
    %3412 = vmatprep.subr.mxu0 %v590
    %3413 = vmatpush1.msra.mxu0 %v589
    %3414 = vmatprep.subr.mxu0 %v594
    %3415 = vmatpush1.msra.mxu0 %v593
    %3416 = vmatprep.subr.mxu0 %v598
    %3417 = vmatpush1.msra.mxu0 %v597
    %3418 = vmatprep.subr.mxu0 %v602
    %3419 = vmatpush1.msra.mxu0 %v601
    %3420 = vmatprep.subr.mxu0 %v606
    %3421 = vmatpush1.msra.mxu0 %v605
    %3422 = vmatprep.subr.mxu0 %v610
    %3423 = vmatpush1.msra.mxu0 %v609
    %3424 = vmatprep.subr.mxu0 %v614
    %3425 = vmatpush1.msra.mxu0 %v613
    %3426 = vmatprep.subr.mxu0 %v618
    %3427 = vmatpush1.msra.mxu0 %v617
    %3428 = vmatprep.subr.mxu0 %v622
    %3429 = vmatpush1.msra.mxu0 %v621
    %3430 = vmatprep.mubr.f32.mxu0 %v2960
    %3431 = vmatmul.mubr.f32.gmra.mrb[0].mxu0 %v3294
    %v3432 = vpop.f32.mrb[0].mxu0
    %v3433 = vadd.f32 %v636, %v3432
    %v3434 = vpop.f32.mrb[0].mxu0
    %v3435 = vadd.f32 %v640, %v3434
    %3436 = vdwg.mxu0
    %v3437 = vxor.u32 %v3362, 2147483648
    %v3438 = vxor.u32 %v3364, 2147483648
    %v3439 = vxor.u32 %v3433, 2147483648
    %v3440 = vmul.f32 %v3437, 1.442695
    %v3441 = vpow.pop %v3440
    %v3442 = vmul.f32 %v3438, 1.442695
    %v3443 = vpow.pop %v3442
    %v3444 = vmul.f32 %v3439, 1.442695
    %v3445 = vpow.pop %v3444
    %v3446 = vadd.f32 %v3441, 1.0
    %v3447 = vadd.f32 %v3443, 1.0
    %v3448 = vadd.f32 %v3445, 1.0
    %v3449 = vrcp.pop %v3446
    %v3450 = vmul.f32 1.0, %v3449
    %v3451 = vrcp.pop %v3447
    %v3452 = vmul.f32 1.0, %v3451
    %v3453 = vrcp.pop %v3448
    %v3454 = vmul.f32 1.0, %v3453
    %v3455 = vtanh.pop %v3435
    %v3456 = vmul.f32 %v3452, %v2958
    %v3457 = vmul.f32 %v3450, %v3455
    %v3458 = vadd.f32 %v3456, %v3457
    %v3459 = vtanh.pop %v3458
    %v3460 = vmul.f32 %v3454, %v3459
    %3461 = vmatprep.subr.mxu0 %v812
    %3462 = vmatpush1.msra.mxu0 %v811
    %3463 = vmatprep.subr.mxu0 %v816
    %3464 = vmatpush1.msra.mxu0 %v815
    %3465 = vmatprep.subr.mxu0 %v820
    %3466 = vmatpush1.msra.mxu0 %v819
    %3467 = vmatprep.subr.mxu0 %v824
    %3468 = vmatpush1.msra.mxu0 %v823
    %3469 = vmatprep.subr.mxu0 %v828
    %3470 = vmatpush1.msra.mxu0 %v827
    %3471 = vmatprep.subr.mxu0 %v832
    %3472 = vmatpush1.msra.mxu0 %v831
    %3473 = vmatprep.subr.mxu0 %v836
    %3474 = vmatpush1.msra.mxu0 %v835
    %3475 = vmatprep.subr.mxu0 %v840
    %3476 = vmatpush1.msra.mxu0 %v839
    %3477 = vmatprep.subr.mxu0 %v844
    %3478 = vmatpush1.msra.mxu0 %v843
    %3479 = vmatprep.subr.mxu0 %v848
    %3480 = vmatpush1.msra.mxu0 %v847
    %3481 = vmatprep.subr.mxu0 %v852
    %3482 = vmatpush1.msra.mxu0 %v851
    %3483 = vmatprep.subr.mxu0 %v856
    %3484 = vmatpush1.msra.mxu0 %v855
    %3485 = vmatprep.subr.mxu0 %v860
    %3486 = vmatpush1.msra.mxu0 %v859
    %3487 = vmatprep.subr.mxu0 %v864
    %3488 = vmatpush1.msra.mxu0 %v863
    %3489 = vmatprep.subr.mxu0 %v868
    %3490 = vmatpush1.msra.mxu0 %v867
    %3491 = vmatprep.subr.mxu0 %v872
    %3492 = vmatpush1.msra.mxu0 %v871
    %3493 = vmatprep.subr.mxu0 %v876
    %3494 = vmatpush1.msra.mxu0 %v875
    %3495 = vmatprep.subr.mxu0 %v880
    %3496 = vmatpush1.msra.mxu0 %v879
    %3497 = vmatprep.subr.mxu0 %v884
    %3498 = vmatpush1.msra.mxu0 %v883
    %3499 = vmatprep.subr.mxu0 %v888
    %3500 = vmatpush1.msra.mxu0 %v887
    %3501 = vmatprep.subr.mxu0 %v892
    %3502 = vmatpush1.msra.mxu0 %v891
    %3503 = vmatprep.subr.mxu0 %v896
    %3504 = vmatpush1.msra.mxu0 %v895
    %3505 = vmatprep.subr.mxu0 %v900
    %3506 = vmatpush1.msra.mxu0 %v899
    %3507 = vmatprep.subr.mxu0 %v904
    %3508 = vmatpush1.msra.mxu0 %v903
    %3509 = vmatprep.subr.mxu0 %v908
    %3510 = vmatpush1.msra.mxu0 %v907
    %3511 = vmatprep.subr.mxu0 %v912
    %3512 = vmatpush1.msra.mxu0 %v911
    %3513 = vmatprep.subr.mxu0 %v916
    %3514 = vmatpush1.msra.mxu0 %v915
    %3515 = vmatprep.subr.mxu0 %v920
    %3516 = vmatpush1.msra.mxu0 %v919
    %3517 = vmatprep.subr.mxu0 %v924
    %3518 = vmatpush1.msra.mxu0 %v923
    %3519 = vmatprep.subr.mxu0 %v928
    %3520 = vmatpush1.msra.mxu0 %v927
    %3521 = vmatprep.subr.mxu0 %v932
    %3522 = vmatpush1.msra.mxu0 %v931
    %3523 = vmatprep.subr.mxu0 %v936
    %3524 = vmatpush1.msra.mxu0 %v935
    %3525 = vmatprep.mubr.f32.mxu0 %v3126
    %3526 = vmatmul.mubr.f32.gmra.mrb[0].mxu0 %v3460
    %v3527 = vpop.f32.mrb[0].mxu0
    %v3528 = vadd.f32 %v944, %v3527
    %v3529 = vpop.f32.mrb[0].mxu0
    %v3530 = vadd.f32 %v948, %v3529
    %3531 = vdwg.mxu0
    %3532 = vmatprep.subr.mxu0 %v814
    %3533 = vmatpush1.msra.mxu0 %v813
    %3534 = vmatprep.subr.mxu0 %v818
    %3535 = vmatpush1.msra.mxu0 %v817
    %3536 = vmatprep.subr.mxu0 %v822
    %3537 = vmatpush1.msra.mxu0 %v821
    %3538 = vmatprep.subr.mxu0 %v826
    %3539 = vmatpush1.msra.mxu0 %v825
    %3540 = vmatprep.subr.mxu0 %v830
    %3541 = vmatpush1.msra.mxu0 %v829
    %3542 = vmatprep.subr.mxu0 %v834
    %3543 = vmatpush1.msra.mxu0 %v833
    %3544 = vmatprep.subr.mxu0 %v838
    %3545 = vmatpush1.msra.mxu0 %v837
    %3546 = vmatprep.subr.mxu0 %v842
    %3547 = vmatpush1.msra.mxu0 %v841
    %3548 = vmatprep.subr.mxu0 %v846
    %3549 = vmatpush1.msra.mxu0 %v845
    %3550 = vmatprep.subr.mxu0 %v850
    %3551 = vmatpush1.msra.mxu0 %v849
    %3552 = vmatprep.subr.mxu0 %v854
    %3553 = vmatpush1.msra.mxu0 %v853
    %3554 = vmatprep.subr.mxu0 %v858
    %3555 = vmatpush1.msra.mxu0 %v857
    %3556 = vmatprep.subr.mxu0 %v862
    %3557 = vmatpush1.msra.mxu0 %v861
    %3558 = vmatprep.subr.mxu0 %v866
    %3559 = vmatpush1.msra.mxu0 %v865
    %3560 = vmatprep.subr.mxu0 %v870
    %3561 = vmatpush1.msra.mxu0 %v869
    %3562 = vmatprep.subr.mxu0 %v874
    %3563 = vmatpush1.msra.mxu0 %v873
    %3564 = vmatprep.subr.mxu0 %v878
    %3565 = vmatpush1.msra.mxu0 %v877
    %3566 = vmatprep.subr.mxu0 %v882
    %3567 = vmatpush1.msra.mxu0 %v881
    %3568 = vmatprep.subr.mxu0 %v886
    %3569 = vmatpush1.msra.mxu0 %v885
    %3570 = vmatprep.subr.mxu0 %v890
    %3571 = vmatpush1.msra.mxu0 %v889
    %3572 = vmatprep.subr.mxu0 %v894
    %3573 = vmatpush1.msra.mxu0 %v893
    %3574 = vmatprep.subr.mxu0 %v898
    %3575 = vmatpush1.msra.mxu0 %v897
    %3576 = vmatprep.subr.mxu0 %v902
    %3577 = vmatpush1.msra.mxu0 %v901
    %3578 = vmatprep.subr.mxu0 %v906
    %3579 = vmatpush1.msra.mxu0 %v905
    %3580 = vmatprep.subr.mxu0 %v910
    %3581 = vmatpush1.msra.mxu0 %v909
    %3582 = vmatprep.subr.mxu0 %v914
    %3583 = vmatpush1.msra.mxu0 %v913
    %3584 = vmatprep.subr.mxu0 %v918
    %3585 = vmatpush1.msra.mxu0 %v917
    %3586 = vmatprep.subr.mxu0 %v922
    %3587 = vmatpush1.msra.mxu0 %v921
    %3588 = vmatprep.subr.mxu0 %v926
    %3589 = vmatpush1.msra.mxu0 %v925
    %3590 = vmatprep.subr.mxu0 %v930
    %3591 = vmatpush1.msra.mxu0 %v929
    %3592 = vmatprep.subr.mxu0 %v934
    %3593 = vmatpush1.msra.mxu0 %v933
    %3594 = vmatprep.subr.mxu0 %v938
    %3595 = vmatpush1.msra.mxu0 %v937
    %3596 = vmatprep.mubr.f32.mxu0 %v3126
    %3597 = vmatmul.mubr.f32.gmra.mrb[0].mxu0 %v3460
    %v3598 = vpop.f32.mrb[0].mxu0
    %v3599 = vadd.f32 %v952, %v3598
    %v3600 = vpop.f32.mrb[0].mxu0
    %v3601 = vadd.f32 %v956, %v3600
    %3602 = vdwg.mxu0
    %v3603 = vxor.u32 %v3528, 2147483648
    %v3604 = vxor.u32 %v3530, 2147483648
    %v3605 = vxor.u32 %v3599, 2147483648
    %v3606 = vmul.f32 %v3603, 1.442695
    %v3607 = vpow.pop %v3606
    %v3608 = vmul.f32 %v3604, 1.442695
    %v3609 = vpow.pop %v3608
    %v3610 = vmul.f32 %v3605, 1.442695
    %v3611 = vpow.pop %v3610
    %v3612 = vadd.f32 %v3607, 1.0
    %v3613 = vadd.f32 %v3609, 1.0
    %v3614 = vadd.f32 %v3611, 1.0
    %v3615 = vrcp.pop %v3612
    %v3616 = vmul.f32 1.0, %v3615
    %v3617 = vrcp.pop %v3613
    %v3618 = vmul.f32 1.0, %v3617
    %v3619 = vrcp.pop %v3614
    %v3620 = vmul.f32 1.0, %v3619
    %v3621 = vtanh.pop %v3601
    %v3622 = vmul.f32 %v3618, %v3124
    %v3623 = vmul.f32 %v3616, %v3621
    %v3624 = vadd.f32 %v3622, %v3623
    %v3625 = vtanh.pop %v3624
    %v3626 = vmul.f32 %v3620, %v3625
    %s3627 = scalar_lea.vmem [#allocation2], 48
    %v3628 = vld [vmem:[%s3627] sm:$0xff]
    %3629 = vmatprep.subr.mxu0 %v180
    %3630 = vmatpush1.msra.mxu0 %v179
    %3631 = vmatprep.subr.mxu0 %v184
    %3632 = vmatpush1.msra.mxu0 %v183
    %3633 = vmatprep.subr.mxu0 %v188
    %3634 = vmatpush1.msra.mxu0 %v187
    %3635 = vmatprep.subr.mxu0 %v192
    %3636 = vmatpush1.msra.mxu0 %v191
    %3637 = vmatprep.subr.mxu0 %v196
    %3638 = vmatpush1.msra.mxu0 %v195
    %3639 = vmatprep.subr.mxu0 %v200
    %3640 = vmatpush1.msra.mxu0 %v199
    %3641 = vmatprep.subr.mxu0 %v204
    %3642 = vmatpush1.msra.mxu0 %v203
    %3643 = vmatprep.subr.mxu0 %v208
    %3644 = vmatpush1.msra.mxu0 %v207
    %3645 = vmatprep.subr.mxu0 %v212
    %3646 = vmatpush1.msra.mxu0 %v211
    %3647 = vmatprep.subr.mxu0 %v216
    %3648 = vmatpush1.msra.mxu0 %v215
    %3649 = vmatprep.subr.mxu0 %v220
    %3650 = vmatpush1.msra.mxu0 %v219
    %3651 = vmatprep.subr.mxu0 %v224
    %3652 = vmatpush1.msra.mxu0 %v223
    %3653 = vmatprep.subr.mxu0 %v228
    %3654 = vmatpush1.msra.mxu0 %v227
    %3655 = vmatprep.subr.mxu0 %v232
    %3656 = vmatpush1.msra.mxu0 %v231
    %3657 = vmatprep.subr.mxu0 %v236
    %3658 = vmatpush1.msra.mxu0 %v235
    %3659 = vmatprep.subr.mxu0 %v240
    %3660 = vmatpush1.msra.mxu0 %v239
    %3661 = vmatprep.subr.mxu0 %v244
    %3662 = vmatpush1.msra.mxu0 %v243
    %3663 = vmatprep.subr.mxu0 %v248
    %3664 = vmatpush1.msra.mxu0 %v247
    %3665 = vmatprep.subr.mxu0 %v252
    %3666 = vmatpush1.msra.mxu0 %v251
    %3667 = vmatprep.subr.mxu0 %v256
    %3668 = vmatpush1.msra.mxu0 %v255
    %3669 = vmatprep.subr.mxu0 %v260
    %3670 = vmatpush1.msra.mxu0 %v259
    %3671 = vmatprep.subr.mxu0 %v264
    %3672 = vmatpush1.msra.mxu0 %v263
    %3673 = vmatprep.subr.mxu0 %v268
    %3674 = vmatpush1.msra.mxu0 %v267
    %3675 = vmatprep.subr.mxu0 %v272
    %3676 = vmatpush1.msra.mxu0 %v271
    %3677 = vmatprep.subr.mxu0 %v276
    %3678 = vmatpush1.msra.mxu0 %v275
    %3679 = vmatprep.subr.mxu0 %v280
    %3680 = vmatpush1.msra.mxu0 %v279
    %3681 = vmatprep.subr.mxu0 %v284
    %3682 = vmatpush1.msra.mxu0 %v283
    %3683 = vmatprep.subr.mxu0 %v288
    %3684 = vmatpush1.msra.mxu0 %v287
    %3685 = vmatprep.subr.mxu0 %v292
    %3686 = vmatpush1.msra.mxu0 %v291
    %3687 = vmatprep.subr.mxu0 %v296
    %3688 = vmatpush1.msra.mxu0 %v295
    %3689 = vmatprep.subr.mxu0 %v300
    %3690 = vmatpush1.msra.mxu0 %v299
    %3691 = vmatprep.subr.mxu0 %v304
    %3692 = vmatpush1.msra.mxu0 %v303
    %3693 = vmatprep.mubr.f32.mxu0 %v3294
    %3694 = vmatmul.mubr.f32.gmra.mrb[0].mxu0 %v3628
    %v3695 = vpop.f32.mrb[0].mxu0
    %v3696 = vadd.f32 %v312, %v3695
    %v3697 = vpop.f32.mrb[0].mxu0
    %v3698 = vadd.f32 %v316, %v3697
    %3699 = vdwg.mxu0
    %3700 = vmatprep.subr.mxu0 %v182
    %3701 = vmatpush1.msra.mxu0 %v181
    %3702 = vmatprep.subr.mxu0 %v186
    %3703 = vmatpush1.msra.mxu0 %v185
    %3704 = vmatprep.subr.mxu0 %v190
    %3705 = vmatpush1.msra.mxu0 %v189
    %3706 = vmatprep.subr.mxu0 %v194
    %3707 = vmatpush1.msra.mxu0 %v193
    %3708 = vmatprep.subr.mxu0 %v198
    %3709 = vmatpush1.msra.mxu0 %v197
    %3710 = vmatprep.subr.mxu0 %v202
    %3711 = vmatpush1.msra.mxu0 %v201
    %3712 = vmatprep.subr.mxu0 %v206
    %3713 = vmatpush1.msra.mxu0 %v205
    %3714 = vmatprep.subr.mxu0 %v210
    %3715 = vmatpush1.msra.mxu0 %v209
    %3716 = vmatprep.subr.mxu0 %v214
    %3717 = vmatpush1.msra.mxu0 %v213
    %3718 = vmatprep.subr.mxu0 %v218
    %3719 = vmatpush1.msra.mxu0 %v217
    %3720 = vmatprep.subr.mxu0 %v222
    %3721 = vmatpush1.msra.mxu0 %v221
    %3722 = vmatprep.subr.mxu0 %v226
    %3723 = vmatpush1.msra.mxu0 %v225
    %3724 = vmatprep.subr.mxu0 %v230
    %3725 = vmatpush1.msra.mxu0 %v229
    %3726 = vmatprep.subr.mxu0 %v234
    %3727 = vmatpush1.msra.mxu0 %v233
    %3728 = vmatprep.subr.mxu0 %v238
    %3729 = vmatpush1.msra.mxu0 %v237
    %3730 = vmatprep.subr.mxu0 %v242
    %3731 = vmatpush1.msra.mxu0 %v241
    %3732 = vmatprep.subr.mxu0 %v246
    %3733 = vmatpush1.msra.mxu0 %v245
    %3734 = vmatprep.subr.mxu0 %v250
    %3735 = vmatpush1.msra.mxu0 %v249
    %3736 = vmatprep.subr.mxu0 %v254
    %3737 = vmatpush1.msra.mxu0 %v253
    %3738 = vmatprep.subr.mxu0 %v258
    %3739 = vmatpush1.msra.mxu0 %v257
    %3740 = vmatprep.subr.mxu0 %v262
    %3741 = vmatpush1.msra.mxu0 %v261
    %3742 = vmatprep.subr.mxu0 %v266
    %3743 = vmatpush1.msra.mxu0 %v265
    %3744 = vmatprep.subr.mxu0 %v270
    %3745 = vmatpush1.msra.mxu0 %v269
    %3746 = vmatprep.subr.mxu0 %v274
    %3747 = vmatpush1.msra.mxu0 %v273
    %3748 = vmatprep.subr.mxu0 %v278
    %3749 = vmatpush1.msra.mxu0 %v277
    %3750 = vmatprep.subr.mxu0 %v282
    %3751 = vmatpush1.msra.mxu0 %v281
    %3752 = vmatprep.subr.mxu0 %v286
    %3753 = vmatpush1.msra.mxu0 %v285
    %3754 = vmatprep.subr.mxu0 %v290
    %3755 = vmatpush1.msra.mxu0 %v289
    %3756 = vmatprep.subr.mxu0 %v294
    %3757 = vmatpush1.msra.mxu0 %v293
    %3758 = vmatprep.subr.mxu0 %v298
    %3759 = vmatpush1.msra.mxu0 %v297
    %3760 = vmatprep.subr.mxu0 %v302
    %3761 = vmatpush1.msra.mxu0 %v301
    %3762 = vmatprep.subr.mxu0 %v306
    %3763 = vmatpush1.msra.mxu0 %v305
    %3764 = vmatprep.mubr.f32.mxu0 %v3294
    %3765 = vmatmul.mubr.f32.gmra.mrb[0].mxu0 %v3628
    %v3766 = vpop.f32.mrb[0].mxu0
    %v3767 = vadd.f32 %v320, %v3766
    %v3768 = vpop.f32.mrb[0].mxu0
    %v3769 = vadd.f32 %v324, %v3768
    %3770 = vdwg.mxu0
    %v3771 = vxor.u32 %v3696, 2147483648
    %v3772 = vxor.u32 %v3698, 2147483648
    %v3773 = vxor.u32 %v3767, 2147483648
    %v3774 = vmul.f32 %v3771, 1.442695
    %v3775 = vpow.pop %v3774
    %v3776 = vmul.f32 %v3772, 1.442695
    %v3777 = vpow.pop %v3776
    %v3778 = vmul.f32 %v3773, 1.442695
    %v3779 = vpow.pop %v3778
    %v3780 = vadd.f32 %v3775, 1.0
    %v3781 = vadd.f32 %v3777, 1.0
    %v3782 = vadd.f32 %v3779, 1.0
    %v3783 = vrcp.pop %v3780
    %v3784 = vmul.f32 1.0, %v3783
    %v3785 = vrcp.pop %v3781
    %v3786 = vmul.f32 1.0, %v3785
    %v3787 = vrcp.pop %v3782
    %v3788 = vmul.f32 1.0, %v3787
    %v3789 = vtanh.pop %v3769
    %v3790 = vmul.f32 %v3786, %v3292
    %v3791 = vmul.f32 %v3784, %v3789
    %v3792 = vadd.f32 %v3790, %v3791
    %v3793 = vtanh.pop %v3792
    %v3794 = vmul.f32 %v3788, %v3793
    %3795 = vmatprep.subr.mxu0 %v496
    %3796 = vmatpush1.msra.mxu0 %v495
    %3797 = vmatprep.subr.mxu0 %v500
    %3798 = vmatpush1.msra.mxu0 %v499
    %3799 = vmatprep.subr.mxu0 %v504
    %3800 = vmatpush1.msra.mxu0 %v503
    %3801 = vmatprep.subr.mxu0 %v508
    %3802 = vmatpush1.msra.mxu0 %v507
    %3803 = vmatprep.subr.mxu0 %v512
    %3804 = vmatpush1.msra.mxu0 %v511
    %3805 = vmatprep.subr.mxu0 %v516
    %3806 = vmatpush1.msra.mxu0 %v515
    %3807 = vmatprep.subr.mxu0 %v520
    %3808 = vmatpush1.msra.mxu0 %v519
    %3809 = vmatprep.subr.mxu0 %v524
    %3810 = vmatpush1.msra.mxu0 %v523
    %3811 = vmatprep.subr.mxu0 %v528
    %3812 = vmatpush1.msra.mxu0 %v527
    %3813 = vmatprep.subr.mxu0 %v532
    %3814 = vmatpush1.msra.mxu0 %v531
    %3815 = vmatprep.subr.mxu0 %v536
    %3816 = vmatpush1.msra.mxu0 %v535
    %3817 = vmatprep.subr.mxu0 %v540
    %3818 = vmatpush1.msra.mxu0 %v539
    %3819 = vmatprep.subr.mxu0 %v544
    %3820 = vmatpush1.msra.mxu0 %v543
    %3821 = vmatprep.subr.mxu0 %v548
    %3822 = vmatpush1.msra.mxu0 %v547
    %3823 = vmatprep.subr.mxu0 %v552
    %3824 = vmatpush1.msra.mxu0 %v551
    %3825 = vmatprep.subr.mxu0 %v556
    %3826 = vmatpush1.msra.mxu0 %v555
    %3827 = vmatprep.subr.mxu0 %v560
    %3828 = vmatpush1.msra.mxu0 %v559
    %3829 = vmatprep.subr.mxu0 %v564
    %3830 = vmatpush1.msra.mxu0 %v563
    %3831 = vmatprep.subr.mxu0 %v568
    %3832 = vmatpush1.msra.mxu0 %v567
    %3833 = vmatprep.subr.mxu0 %v572
    %3834 = vmatpush1.msra.mxu0 %v571
    %3835 = vmatprep.subr.mxu0 %v576
    %3836 = vmatpush1.msra.mxu0 %v575
    %3837 = vmatprep.subr.mxu0 %v580
    %3838 = vmatpush1.msra.mxu0 %v579
    %3839 = vmatprep.subr.mxu0 %v584
    %3840 = vmatpush1.msra.mxu0 %v583
    %3841 = vmatprep.subr.mxu0 %v588
    %3842 = vmatpush1.msra.mxu0 %v587
    %3843 = vmatprep.subr.mxu0 %v592
    %3844 = vmatpush1.msra.mxu0 %v591
    %3845 = vmatprep.subr.mxu0 %v596
    %3846 = vmatpush1.msra.mxu0 %v595
    %3847 = vmatprep.subr.mxu0 %v600
    %3848 = vmatpush1.msra.mxu0 %v599
    %3849 = vmatprep.subr.mxu0 %v604
    %3850 = vmatpush1.msra.mxu0 %v603
    %3851 = vmatprep.subr.mxu0 %v608
    %3852 = vmatpush1.msra.mxu0 %v607
    %3853 = vmatprep.subr.mxu0 %v612
    %3854 = vmatpush1.msra.mxu0 %v611
    %3855 = vmatprep.subr.mxu0 %v616
    %3856 = vmatpush1.msra.mxu0 %v615
    %3857 = vmatprep.subr.mxu0 %v620
    %3858 = vmatpush1.msra.mxu0 %v619
    %3859 = vmatprep.mubr.f32.mxu0 %v3460
    %3860 = vmatmul.mubr.f32.gmra.mrb[0].mxu0 %v3794
    %v3861 = vpop.f32.mrb[0].mxu0
    %v3862 = vadd.f32 %v628, %v3861
    %v3863 = vpop.f32.mrb[0].mxu0
    %v3864 = vadd.f32 %v632, %v3863
    %3865 = vdwg.mxu0
    %3866 = vmatprep.subr.mxu0 %v498
    %3867 = vmatpush1.msra.mxu0 %v497
    %3868 = vmatprep.subr.mxu0 %v502
    %3869 = vmatpush1.msra.mxu0 %v501
    %3870 = vmatprep.subr.mxu0 %v506
    %3871 = vmatpush1.msra.mxu0 %v505
    %3872 = vmatprep.subr.mxu0 %v510
    %3873 = vmatpush1.msra.mxu0 %v509
    %3874 = vmatprep.subr.mxu0 %v514
    %3875 = vmatpush1.msra.mxu0 %v513
    %3876 = vmatprep.subr.mxu0 %v518
    %3877 = vmatpush1.msra.mxu0 %v517
    %3878 = vmatprep.subr.mxu0 %v522
    %3879 = vmatpush1.msra.mxu0 %v521
    %3880 = vmatprep.subr.mxu0 %v526
    %3881 = vmatpush1.msra.mxu0 %v525
    %3882 = vmatprep.subr.mxu0 %v530
    %3883 = vmatpush1.msra.mxu0 %v529
    %3884 = vmatprep.subr.mxu0 %v534
    %3885 = vmatpush1.msra.mxu0 %v533
    %3886 = vmatprep.subr.mxu0 %v538
    %3887 = vmatpush1.msra.mxu0 %v537
    %3888 = vmatprep.subr.mxu0 %v542
    %3889 = vmatpush1.msra.mxu0 %v541
    %3890 = vmatprep.subr.mxu0 %v546
    %3891 = vmatpush1.msra.mxu0 %v545
    %3892 = vmatprep.subr.mxu0 %v550
    %3893 = vmatpush1.msra.mxu0 %v549
    %3894 = vmatprep.subr.mxu0 %v554
    %3895 = vmatpush1.msra.mxu0 %v553
    %3896 = vmatprep.subr.mxu0 %v558
    %3897 = vmatpush1.msra.mxu0 %v557
    %3898 = vmatprep.subr.mxu0 %v562
    %3899 = vmatpush1.msra.mxu0 %v561
    %3900 = vmatprep.subr.mxu0 %v566
    %3901 = vmatpush1.msra.mxu0 %v565
    %3902 = vmatprep.subr.mxu0 %v570
    %3903 = vmatpush1.msra.mxu0 %v569
    %3904 = vmatprep.subr.mxu0 %v574
    %3905 = vmatpush1.msra.mxu0 %v573
    %3906 = vmatprep.subr.mxu0 %v578
    %3907 = vmatpush1.msra.mxu0 %v577
    %3908 = vmatprep.subr.mxu0 %v582
    %3909 = vmatpush1.msra.mxu0 %v581
    %3910 = vmatprep.subr.mxu0 %v586
    %3911 = vmatpush1.msra.mxu0 %v585
    %3912 = vmatprep.subr.mxu0 %v590
    %3913 = vmatpush1.msra.mxu0 %v589
    %3914 = vmatprep.subr.mxu0 %v594
    %3915 = vmatpush1.msra.mxu0 %v593
    %3916 = vmatprep.subr.mxu0 %v598
    %3917 = vmatpush1.msra.mxu0 %v597
    %3918 = vmatprep.subr.mxu0 %v602
    %3919 = vmatpush1.msra.mxu0 %v601
    %3920 = vmatprep.subr.mxu0 %v606
    %3921 = vmatpush1.msra.mxu0 %v605
    %3922 = vmatprep.subr.mxu0 %v610
    %3923 = vmatpush1.msra.mxu0 %v609
    %3924 = vmatprep.subr.mxu0 %v614
    %3925 = vmatpush1.msra.mxu0 %v613
    %3926 = vmatprep.subr.mxu0 %v618
    %3927 = vmatpush1.msra.mxu0 %v617
    %3928 = vmatprep.subr.mxu0 %v622
    %3929 = vmatpush1.msra.mxu0 %v621
    %3930 = vmatprep.mubr.f32.mxu0 %v3460
    %3931 = vmatmul.mubr.f32.gmra.mrb[0].mxu0 %v3794
    %v3932 = vpop.f32.mrb[0].mxu0
    %v3933 = vadd.f32 %v636, %v3932
    %v3934 = vpop.f32.mrb[0].mxu0
    %v3935 = vadd.f32 %v640, %v3934
    %3936 = vdwg.mxu0
    %v3937 = vxor.u32 %v3862, 2147483648
    %v3938 = vxor.u32 %v3864, 2147483648
    %v3939 = vxor.u32 %v3933, 2147483648
    %v3940 = vmul.f32 %v3937, 1.442695
    %v3941 = vpow.pop %v3940
    %v3942 = vmul.f32 %v3938, 1.442695
    %v3943 = vpow.pop %v3942
    %v3944 = vmul.f32 %v3939, 1.442695
    %v3945 = vpow.pop %v3944
    %v3946 = vadd.f32 %v3941, 1.0
    %v3947 = vadd.f32 %v3943, 1.0
    %v3948 = vadd.f32 %v3945, 1.0
    %v3949 = vrcp.pop %v3946
    %v3950 = vmul.f32 1.0, %v3949
    %v3951 = vrcp.pop %v3947
    %v3952 = vmul.f32 1.0, %v3951
    %v3953 = vrcp.pop %v3948
    %v3954 = vmul.f32 1.0, %v3953
    %v3955 = vtanh.pop %v3935
    %v3956 = vmul.f32 %v3952, %v3458
    %v3957 = vmul.f32 %v3950, %v3955
    %v3958 = vadd.f32 %v3956, %v3957
    %v3959 = vtanh.pop %v3958
    %v3960 = vmul.f32 %v3954, %v3959
    %3961 = vmatprep.subr.mxu0 %v812
    %3962 = vmatpush1.msra.mxu0 %v811
    %3963 = vmatprep.subr.mxu0 %v816
    %3964 = vmatpush1.msra.mxu0 %v815
    %3965 = vmatprep.subr.mxu0 %v820
    %3966 = vmatpush1.msra.mxu0 %v819
    %3967 = vmatprep.subr.mxu0 %v824
    %3968 = vmatpush1.msra.mxu0 %v823
    %3969 = vmatprep.subr.mxu0 %v828
    %3970 = vmatpush1.msra.mxu0 %v827
    %3971 = vmatprep.subr.mxu0 %v832
    %3972 = vmatpush1.msra.mxu0 %v831
    %3973 = vmatprep.subr.mxu0 %v836
    %3974 = vmatpush1.msra.mxu0 %v835
    %3975 = vmatprep.subr.mxu0 %v840
    %3976 = vmatpush1.msra.mxu0 %v839
    %3977 = vmatprep.subr.mxu0 %v844
    %3978 = vmatpush1.msra.mxu0 %v843
    %3979 = vmatprep.subr.mxu0 %v848
    %3980 = vmatpush1.msra.mxu0 %v847
    %3981 = vmatprep.subr.mxu0 %v852
    %3982 = vmatpush1.msra.mxu0 %v851
    %3983 = vmatprep.subr.mxu0 %v856
    %3984 = vmatpush1.msra.mxu0 %v855
    %3985 = vmatprep.subr.mxu0 %v860
    %3986 = vmatpush1.msra.mxu0 %v859
    %3987 = vmatprep.subr.mxu0 %v864
    %3988 = vmatpush1.msra.mxu0 %v863
    %3989 = vmatprep.subr.mxu0 %v868
    %3990 = vmatpush1.msra.mxu0 %v867
    %3991 = vmatprep.subr.mxu0 %v872
    %3992 = vmatpush1.msra.mxu0 %v871
    %3993 = vmatprep.subr.mxu0 %v876
    %3994 = vmatpush1.msra.mxu0 %v875
    %3995 = vmatprep.subr.mxu0 %v880
    %3996 = vmatpush1.msra.mxu0 %v879
    %3997 = vmatprep.subr.mxu0 %v884
    %3998 = vmatpush1.msra.mxu0 %v883
    %3999 = vmatprep.subr.mxu0 %v888
    %4000 = vmatpush1.msra.mxu0 %v887
    %4001 = vmatprep.subr.mxu0 %v892
    %4002 = vmatpush1.msra.mxu0 %v891
    %4003 = vmatprep.subr.mxu0 %v896
    %4004 = vmatpush1.msra.mxu0 %v895
    %4005 = vmatprep.subr.mxu0 %v900
    %4006 = vmatpush1.msra.mxu0 %v899
    %4007 = vmatprep.subr.mxu0 %v904
    %4008 = vmatpush1.msra.mxu0 %v903
    %4009 = vmatprep.subr.mxu0 %v908
    %4010 = vmatpush1.msra.mxu0 %v907
    %4011 = vmatprep.subr.mxu0 %v912
    %4012 = vmatpush1.msra.mxu0 %v911
    %4013 = vmatprep.subr.mxu0 %v916
    %4014 = vmatpush1.msra.mxu0 %v915
    %4015 = vmatprep.subr.mxu0 %v920
    %4016 = vmatpush1.msra.mxu0 %v919
    %4017 = vmatprep.subr.mxu0 %v924
    %4018 = vmatpush1.msra.mxu0 %v923
    %4019 = vmatprep.subr.mxu0 %v928
    %4020 = vmatpush1.msra.mxu0 %v927
    %4021 = vmatprep.subr.mxu0 %v932
    %4022 = vmatpush1.msra.mxu0 %v931
    %4023 = vmatprep.subr.mxu0 %v936
    %4024 = vmatpush1.msra.mxu0 %v935
    %4025 = vmatprep.mubr.f32.mxu0 %v3626
    %4026 = vmatmul.mubr.f32.gmra.mrb[0].mxu0 %v3960
    %v4027 = vpop.f32.mrb[0].mxu0
    %v4028 = vadd.f32 %v944, %v4027
    %v4029 = vpop.f32.mrb[0].mxu0
    %v4030 = vadd.f32 %v948, %v4029
    %4031 = vdwg.mxu0
    %4032 = vmatprep.subr.mxu0 %v814
    %4033 = vmatpush1.msra.mxu0 %v813
    %4034 = vmatprep.subr.mxu0 %v818
    %4035 = vmatpush1.msra.mxu0 %v817
    %4036 = vmatprep.subr.mxu0 %v822
    %4037 = vmatpush1.msra.mxu0 %v821
    %4038 = vmatprep.subr.mxu0 %v826
    %4039 = vmatpush1.msra.mxu0 %v825
    %4040 = vmatprep.subr.mxu0 %v830
    %4041 = vmatpush1.msra.mxu0 %v829
    %4042 = vmatprep.subr.mxu0 %v834
    %4043 = vmatpush1.msra.mxu0 %v833
    %4044 = vmatprep.subr.mxu0 %v838
    %4045 = vmatpush1.msra.mxu0 %v837
    %4046 = vmatprep.subr.mxu0 %v842
    %4047 = vmatpush1.msra.mxu0 %v841
    %4048 = vmatprep.subr.mxu0 %v846
    %4049 = vmatpush1.msra.mxu0 %v845
    %4050 = vmatprep.subr.mxu0 %v850
    %4051 = vmatpush1.msra.mxu0 %v849
    %4052 = vmatprep.subr.mxu0 %v854
    %4053 = vmatpush1.msra.mxu0 %v853
    %4054 = vmatprep.subr.mxu0 %v858
    %4055 = vmatpush1.msra.mxu0 %v857
    %4056 = vmatprep.subr.mxu0 %v862
    %4057 = vmatpush1.msra.mxu0 %v861
    %4058 = vmatprep.subr.mxu0 %v866
    %4059 = vmatpush1.msra.mxu0 %v865
    %4060 = vmatprep.subr.mxu0 %v870
    %4061 = vmatpush1.msra.mxu0 %v869
    %4062 = vmatprep.subr.mxu0 %v874
    %4063 = vmatpush1.msra.mxu0 %v873
    %4064 = vmatprep.subr.mxu0 %v878
    %4065 = vmatpush1.msra.mxu0 %v877
    %4066 = vmatprep.subr.mxu0 %v882
    %4067 = vmatpush1.msra.mxu0 %v881
    %4068 = vmatprep.subr.mxu0 %v886
    %4069 = vmatpush1.msra.mxu0 %v885
    %4070 = vmatprep.subr.mxu0 %v890
    %4071 = vmatpush1.msra.mxu0 %v889
    %4072 = vmatprep.subr.mxu0 %v894
    %4073 = vmatpush1.msra.mxu0 %v893
    %4074 = vmatprep.subr.mxu0 %v898
    %4075 = vmatpush1.msra.mxu0 %v897
    %4076 = vmatprep.subr.mxu0 %v902
    %4077 = vmatpush1.msra.mxu0 %v901
    %4078 = vmatprep.subr.mxu0 %v906
    %4079 = vmatpush1.msra.mxu0 %v905
    %4080 = vmatprep.subr.mxu0 %v910
    %4081 = vmatpush1.msra.mxu0 %v909
    %4082 = vmatprep.subr.mxu0 %v914
    %4083 = vmatpush1.msra.mxu0 %v913
    %4084 = vmatprep.subr.mxu0 %v918
    %4085 = vmatpush1.msra.mxu0 %v917
    %4086 = vmatprep.subr.mxu0 %v922
    %4087 = vmatpush1.msra.mxu0 %v921
    %4088 = vmatprep.subr.mxu0 %v926
    %4089 = vmatpush1.msra.mxu0 %v925
    %4090 = vmatprep.subr.mxu0 %v930
    %4091 = vmatpush1.msra.mxu0 %v929
    %4092 = vmatprep.subr.mxu0 %v934
    %4093 = vmatpush1.msra.mxu0 %v933
    %4094 = vmatprep.subr.mxu0 %v938
    %4095 = vmatpush1.msra.mxu0 %v937
    %4096 = vmatprep.mubr.f32.mxu0 %v3626
    %4097 = vmatmul.mubr.f32.gmra.mrb[0].mxu0 %v3960
    %v4098 = vpop.f32.mrb[0].mxu0
    %v4099 = vadd.f32 %v952, %v4098
    %v4100 = vpop.f32.mrb[0].mxu0
    %v4101 = vadd.f32 %v956, %v4100
    %4102 = vdwg.mxu0
    %v4103 = vxor.u32 %v4028, 2147483648
    %v4104 = vxor.u32 %v4030, 2147483648
    %v4105 = vxor.u32 %v4099, 2147483648
    %v4106 = vmul.f32 %v4103, 1.442695
    %v4107 = vpow.pop %v4106
    %v4108 = vmul.f32 %v4104, 1.442695
    %v4109 = vpow.pop %v4108
    %v4110 = vmul.f32 %v4105, 1.442695
    %v4111 = vpow.pop %v4110
    %v4112 = vadd.f32 %v4107, 1.0
    %v4113 = vadd.f32 %v4109, 1.0
    %v4114 = vadd.f32 %v4111, 1.0
    %v4115 = vrcp.pop %v4112
    %v4116 = vmul.f32 1.0, %v4115
    %v4117 = vrcp.pop %v4113
    %v4118 = vmul.f32 1.0, %v4117
    %v4119 = vrcp.pop %v4114
    %v4120 = vmul.f32 1.0, %v4119
    %v4121 = vtanh.pop %v4101
    %v4122 = vmul.f32 %v4118, %v3624
    %v4123 = vmul.f32 %v4116, %v4121
    %v4124 = vadd.f32 %v4122, %v4123
    %v4125 = vtanh.pop %v4124
    %v4126 = vmul.f32 %v4120, %v4125
    %s4127 = scalar_lea.vmem [#allocation2], 56
    %v4128 = vld [vmem:[%s4127] sm:$0xff]
    %4129 = vmatprep.subr.mxu0 %v180
    %4130 = vmatpush1.msra.mxu0 %v179
    %4131 = vmatprep.subr.mxu0 %v184
    %4132 = vmatpush1.msra.mxu0 %v183
    %4133 = vmatprep.subr.mxu0 %v188
    %4134 = vmatpush1.msra.mxu0 %v187
    %4135 = vmatprep.subr.mxu0 %v192
    %4136 = vmatpush1.msra.mxu0 %v191
    %4137 = vmatprep.subr.mxu0 %v196
    %4138 = vmatpush1.msra.mxu0 %v195
    %4139 = vmatprep.subr.mxu0 %v200
    %4140 = vmatpush1.msra.mxu0 %v199
    %4141 = vmatprep.subr.mxu0 %v204
    %4142 = vmatpush1.msra.mxu0 %v203
    %4143 = vmatprep.subr.mxu0 %v208
    %4144 = vmatpush1.msra.mxu0 %v207
    %4145 = vmatprep.subr.mxu0 %v212
    %4146 = vmatpush1.msra.mxu0 %v211
    %4147 = vmatprep.subr.mxu0 %v216
    %4148 = vmatpush1.msra.mxu0 %v215
    %4149 = vmatprep.subr.mxu0 %v220
    %4150 = vmatpush1.msra.mxu0 %v219
    %4151 = vmatprep.subr.mxu0 %v224
    %4152 = vmatpush1.msra.mxu0 %v223
    %4153 = vmatprep.subr.mxu0 %v228
    %4154 = vmatpush1.msra.mxu0 %v227
    %4155 = vmatprep.subr.mxu0 %v232
    %4156 = vmatpush1.msra.mxu0 %v231
    %4157 = vmatprep.subr.mxu0 %v236
    %4158 = vmatpush1.msra.mxu0 %v235
    %4159 = vmatprep.subr.mxu0 %v240
    %4160 = vmatpush1.msra.mxu0 %v239
    %4161 = vmatprep.subr.mxu0 %v244
    %4162 = vmatpush1.msra.mxu0 %v243
    %4163 = vmatprep.subr.mxu0 %v248
    %4164 = vmatpush1.msra.mxu0 %v247
    %4165 = vmatprep.subr.mxu0 %v252
    %4166 = vmatpush1.msra.mxu0 %v251
    %4167 = vmatprep.subr.mxu0 %v256
    %4168 = vmatpush1.msra.mxu0 %v255
    %4169 = vmatprep.subr.mxu0 %v260
    %4170 = vmatpush1.msra.mxu0 %v259
    %4171 = vmatprep.subr.mxu0 %v264
    %4172 = vmatpush1.msra.mxu0 %v263
    %4173 = vmatprep.subr.mxu0 %v268
    %4174 = vmatpush1.msra.mxu0 %v267
    %4175 = vmatprep.subr.mxu0 %v272
    %4176 = vmatpush1.msra.mxu0 %v271
    %4177 = vmatprep.subr.mxu0 %v276
    %4178 = vmatpush1.msra.mxu0 %v275
    %4179 = vmatprep.subr.mxu0 %v280
    %4180 = vmatpush1.msra.mxu0 %v279
    %4181 = vmatprep.subr.mxu0 %v284
    %4182 = vmatpush1.msra.mxu0 %v283
    %4183 = vmatprep.subr.mxu0 %v288
    %4184 = vmatpush1.msra.mxu0 %v287
    %4185 = vmatprep.subr.mxu0 %v292
    %4186 = vmatpush1.msra.mxu0 %v291
    %4187 = vmatprep.subr.mxu0 %v296
    %4188 = vmatpush1.msra.mxu0 %v295
    %4189 = vmatprep.subr.mxu0 %v300
    %4190 = vmatpush1.msra.mxu0 %v299
    %4191 = vmatprep.subr.mxu0 %v304
    %4192 = vmatpush1.msra.mxu0 %v303
    %4193 = vmatprep.mubr.f32.mxu0 %v3794
    %4194 = vmatmul.mubr.f32.gmra.mrb[0].mxu0 %v4128
    %v4195 = vpop.f32.mrb[0].mxu0
    %v4196 = vadd.f32 %v312, %v4195
    %v4197 = vpop.f32.mrb[0].mxu0
    %v4198 = vadd.f32 %v316, %v4197
    %4199 = vdwg.mxu0
    %4200 = vmatprep.subr.mxu0 %v182
    %4201 = vmatpush1.msra.mxu0 %v181
    %4202 = vmatprep.subr.mxu0 %v186
    %4203 = vmatpush1.msra.mxu0 %v185
    %4204 = vmatprep.subr.mxu0 %v190
    %4205 = vmatpush1.msra.mxu0 %v189
    %4206 = vmatprep.subr.mxu0 %v194
    %4207 = vmatpush1.msra.mxu0 %v193
    %4208 = vmatprep.subr.mxu0 %v198
    %4209 = vmatpush1.msra.mxu0 %v197
    %4210 = vmatprep.subr.mxu0 %v202
    %4211 = vmatpush1.msra.mxu0 %v201
    %4212 = vmatprep.subr.mxu0 %v206
    %4213 = vmatpush1.msra.mxu0 %v205
    %4214 = vmatprep.subr.mxu0 %v210
    %4215 = vmatpush1.msra.mxu0 %v209
    %4216 = vmatprep.subr.mxu0 %v214
    %4217 = vmatpush1.msra.mxu0 %v213
    %4218 = vmatprep.subr.mxu0 %v218
    %4219 = vmatpush1.msra.mxu0 %v217
    %4220 = vmatprep.subr.mxu0 %v222
    %4221 = vmatpush1.msra.mxu0 %v221
    %4222 = vmatprep.subr.mxu0 %v226
    %4223 = vmatpush1.msra.mxu0 %v225
    %4224 = vmatprep.subr.mxu0 %v230
    %4225 = vmatpush1.msra.mxu0 %v229
    %4226 = vmatprep.subr.mxu0 %v234
    %4227 = vmatpush1.msra.mxu0 %v233
    %4228 = vmatprep.subr.mxu0 %v238
    %4229 = vmatpush1.msra.mxu0 %v237
    %4230 = vmatprep.subr.mxu0 %v242
    %4231 = vmatpush1.msra.mxu0 %v241
    %4232 = vmatprep.subr.mxu0 %v246
    %4233 = vmatpush1.msra.mxu0 %v245
    %4234 = vmatprep.subr.mxu0 %v250
    %4235 = vmatpush1.msra.mxu0 %v249
    %4236 = vmatprep.subr.mxu0 %v254
    %4237 = vmatpush1.msra.mxu0 %v253
    %4238 = vmatprep.subr.mxu0 %v258
    %4239 = vmatpush1.msra.mxu0 %v257
    %4240 = vmatprep.subr.mxu0 %v262
    %4241 = vmatpush1.msra.mxu0 %v261
    %4242 = vmatprep.subr.mxu0 %v266
    %4243 = vmatpush1.msra.mxu0 %v265
    %4244 = vmatprep.subr.mxu0 %v270
    %4245 = vmatpush1.msra.mxu0 %v269
    %4246 = vmatprep.subr.mxu0 %v274
    %4247 = vmatpush1.msra.mxu0 %v273
    %4248 = vmatprep.subr.mxu0 %v278
    %4249 = vmatpush1.msra.mxu0 %v277
    %4250 = vmatprep.subr.mxu0 %v282
    %4251 = vmatpush1.msra.mxu0 %v281
    %4252 = vmatprep.subr.mxu0 %v286
    %4253 = vmatpush1.msra.mxu0 %v285
    %4254 = vmatprep.subr.mxu0 %v290
    %4255 = vmatpush1.msra.mxu0 %v289
    %4256 = vmatprep.subr.mxu0 %v294
    %4257 = vmatpush1.msra.mxu0 %v293
    %4258 = vmatprep.subr.mxu0 %v298
    %4259 = vmatpush1.msra.mxu0 %v297
    %4260 = vmatprep.subr.mxu0 %v302
    %4261 = vmatpush1.msra.mxu0 %v301
    %4262 = vmatprep.subr.mxu0 %v306
    %4263 = vmatpush1.msra.mxu0 %v305
    %4264 = vmatprep.mubr.f32.mxu0 %v3794
    %4265 = vmatmul.mubr.f32.gmra.mrb[0].mxu0 %v4128
    %v4266 = vpop.f32.mrb[0].mxu0
    %v4267 = vadd.f32 %v320, %v4266
    %v4268 = vpop.f32.mrb[0].mxu0
    %v4269 = vadd.f32 %v324, %v4268
    %4270 = vdwg.mxu0
    %v4271 = vxor.u32 %v4196, 2147483648
    %v4272 = vxor.u32 %v4198, 2147483648
    %v4273 = vxor.u32 %v4267, 2147483648
    %v4274 = vmul.f32 %v4271, 1.442695
    %v4275 = vpow.pop %v4274
    %v4276 = vmul.f32 %v4272, 1.442695
    %v4277 = vpow.pop %v4276
    %v4278 = vmul.f32 %v4273, 1.442695
    %v4279 = vpow.pop %v4278
    %v4280 = vadd.f32 %v4275, 1.0
    %v4281 = vadd.f32 %v4277, 1.0
    %v4282 = vadd.f32 %v4279, 1.0
    %v4283 = vrcp.pop %v4280
    %v4284 = vmul.f32 1.0, %v4283
    %v4285 = vrcp.pop %v4281
    %v4286 = vmul.f32 1.0, %v4285
    %v4287 = vrcp.pop %v4282
    %v4288 = vmul.f32 1.0, %v4287
    %v4289 = vtanh.pop %v4269
    %v4290 = vmul.f32 %v4286, %v3792
    %v4291 = vmul.f32 %v4284, %v4289
    %v4292 = vadd.f32 %v4290, %v4291
    %v4293 = vtanh.pop %v4292
    %v4294 = vmul.f32 %v4288, %v4293
    %4295 = vmatprep.subr.mxu0 %v496
    %4296 = vmatpush1.msra.mxu0 %v495
    %4297 = vmatprep.subr.mxu0 %v500
    %4298 = vmatpush1.msra.mxu0 %v499
    %4299 = vmatprep.subr.mxu0 %v504
    %4300 = vmatpush1.msra.mxu0 %v503
    %4301 = vmatprep.subr.mxu0 %v508
    %4302 = vmatpush1.msra.mxu0 %v507
    %4303 = vmatprep.subr.mxu0 %v512
    %4304 = vmatpush1.msra.mxu0 %v511
    %4305 = vmatprep.subr.mxu0 %v516
    %4306 = vmatpush1.msra.mxu0 %v515
    %4307 = vmatprep.subr.mxu0 %v520
    %4308 = vmatpush1.msra.mxu0 %v519
    %4309 = vmatprep.subr.mxu0 %v524
    %4310 = vmatpush1.msra.mxu0 %v523
    %4311 = vmatprep.subr.mxu0 %v528
    %4312 = vmatpush1.msra.mxu0 %v527
    %4313 = vmatprep.subr.mxu0 %v532
    %4314 = vmatpush1.msra.mxu0 %v531
    %4315 = vmatprep.subr.mxu0 %v536
    %4316 = vmatpush1.msra.mxu0 %v535
    %4317 = vmatprep.subr.mxu0 %v540
    %4318 = vmatpush1.msra.mxu0 %v539
    %4319 = vmatprep.subr.mxu0 %v544
    %4320 = vmatpush1.msra.mxu0 %v543
    %4321 = vmatprep.subr.mxu0 %v548
    %4322 = vmatpush1.msra.mxu0 %v547
    %4323 = vmatprep.subr.mxu0 %v552
    %4324 = vmatpush1.msra.mxu0 %v551
    %4325 = vmatprep.subr.mxu0 %v556
    %4326 = vmatpush1.msra.mxu0 %v555
    %4327 = vmatprep.subr.mxu0 %v560
    %4328 = vmatpush1.msra.mxu0 %v559
    %4329 = vmatprep.subr.mxu0 %v564
    %4330 = vmatpush1.msra.mxu0 %v563
    %4331 = vmatprep.subr.mxu0 %v568
    %4332 = vmatpush1.msra.mxu0 %v567
    %4333 = vmatprep.subr.mxu0 %v572
    %4334 = vmatpush1.msra.mxu0 %v571
    %4335 = vmatprep.subr.mxu0 %v576
    %4336 = vmatpush1.msra.mxu0 %v575
    %4337 = vmatprep.subr.mxu0 %v580
    %4338 = vmatpush1.msra.mxu0 %v579
    %4339 = vmatprep.subr.mxu0 %v584
    %4340 = vmatpush1.msra.mxu0 %v583
    %4341 = vmatprep.subr.mxu0 %v588
    %4342 = vmatpush1.msra.mxu0 %v587
    %4343 = vmatprep.subr.mxu0 %v592
    %4344 = vmatpush1.msra.mxu0 %v591
    %4345 = vmatprep.subr.mxu0 %v596
    %4346 = vmatpush1.msra.mxu0 %v595
    %4347 = vmatprep.subr.mxu0 %v600
    %4348 = vmatpush1.msra.mxu0 %v599
    %4349 = vmatprep.subr.mxu0 %v604
    %4350 = vmatpush1.msra.mxu0 %v603
    %4351 = vmatprep.subr.mxu0 %v608
    %4352 = vmatpush1.msra.mxu0 %v607
    %4353 = vmatprep.subr.mxu0 %v612
    %4354 = vmatpush1.msra.mxu0 %v611
    %4355 = vmatprep.subr.mxu0 %v616
    %4356 = vmatpush1.msra.mxu0 %v615
    %4357 = vmatprep.subr.mxu0 %v620
    %4358 = vmatpush1.msra.mxu0 %v619
    %4359 = vmatprep.mubr.f32.mxu0 %v3960
    %4360 = vmatmul.mubr.f32.gmra.mrb[0].mxu0 %v4294
    %v4361 = vpop.f32.mrb[0].mxu0
    %v4362 = vadd.f32 %v628, %v4361
    %v4363 = vpop.f32.mrb[0].mxu0
    %v4364 = vadd.f32 %v632, %v4363
    %4365 = vdwg.mxu0
    %4366 = vmatprep.subr.mxu0 %v498
    %4367 = vmatpush1.msra.mxu0 %v497
    %4368 = vmatprep.subr.mxu0 %v502
    %4369 = vmatpush1.msra.mxu0 %v501
    %4370 = vmatprep.subr.mxu0 %v506
    %4371 = vmatpush1.msra.mxu0 %v505
    %4372 = vmatprep.subr.mxu0 %v510
    %4373 = vmatpush1.msra.mxu0 %v509
    %4374 = vmatprep.subr.mxu0 %v514
    %4375 = vmatpush1.msra.mxu0 %v513
    %4376 = vmatprep.subr.mxu0 %v518
    %4377 = vmatpush1.msra.mxu0 %v517
    %4378 = vmatprep.subr.mxu0 %v522
    %4379 = vmatpush1.msra.mxu0 %v521
    %4380 = vmatprep.subr.mxu0 %v526
    %4381 = vmatpush1.msra.mxu0 %v525
    %4382 = vmatprep.subr.mxu0 %v530
    %4383 = vmatpush1.msra.mxu0 %v529
    %4384 = vmatprep.subr.mxu0 %v534
    %4385 = vmatpush1.msra.mxu0 %v533
    %4386 = vmatprep.subr.mxu0 %v538
    %4387 = vmatpush1.msra.mxu0 %v537
    %4388 = vmatprep.subr.mxu0 %v542
    %4389 = vmatpush1.msra.mxu0 %v541
    %4390 = vmatprep.subr.mxu0 %v546
    %4391 = vmatpush1.msra.mxu0 %v545
    %4392 = vmatprep.subr.mxu0 %v550
    %4393 = vmatpush1.msra.mxu0 %v549
    %4394 = vmatprep.subr.mxu0 %v554
    %4395 = vmatpush1.msra.mxu0 %v553
    %4396 = vmatprep.subr.mxu0 %v558
    %4397 = vmatpush1.msra.mxu0 %v557
    %4398 = vmatprep.subr.mxu0 %v562
    %4399 = vmatpush1.msra.mxu0 %v561
    %4400 = vmatprep.subr.mxu0 %v566
    %4401 = vmatpush1.msra.mxu0 %v565
    %4402 = vmatprep.subr.mxu0 %v570
    %4403 = vmatpush1.msra.mxu0 %v569
    %4404 = vmatprep.subr.mxu0 %v574
    %4405 = vmatpush1.msra.mxu0 %v573
    %4406 = vmatprep.subr.mxu0 %v578
    %4407 = vmatpush1.msra.mxu0 %v577
    %4408 = vmatprep.subr.mxu0 %v582
    %4409 = vmatpush1.msra.mxu0 %v581
    %4410 = vmatprep.subr.mxu0 %v586
    %4411 = vmatpush1.msra.mxu0 %v585
    %4412 = vmatprep.subr.mxu0 %v590
    %4413 = vmatpush1.msra.mxu0 %v589
    %4414 = vmatprep.subr.mxu0 %v594
    %4415 = vmatpush1.msra.mxu0 %v593
    %4416 = vmatprep.subr.mxu0 %v598
    %4417 = vmatpush1.msra.mxu0 %v597
    %4418 = vmatprep.subr.mxu0 %v602
    %4419 = vmatpush1.msra.mxu0 %v601
    %4420 = vmatprep.subr.mxu0 %v606
    %4421 = vmatpush1.msra.mxu0 %v605
    %4422 = vmatprep.subr.mxu0 %v610
    %4423 = vmatpush1.msra.mxu0 %v609
    %4424 = vmatprep.subr.mxu0 %v614
    %4425 = vmatpush1.msra.mxu0 %v613
    %4426 = vmatprep.subr.mxu0 %v618
    %4427 = vmatpush1.msra.mxu0 %v617
    %4428 = vmatprep.subr.mxu0 %v622
    %4429 = vmatpush1.msra.mxu0 %v621
    %4430 = vmatprep.mubr.f32.mxu0 %v3960
    %4431 = vmatmul.mubr.f32.gmra.mrb[0].mxu0 %v4294
    %v4432 = vpop.f32.mrb[0].mxu0
    %v4433 = vadd.f32 %v636, %v4432
    %v4434 = vpop.f32.mrb[0].mxu0
    %v4435 = vadd.f32 %v640, %v4434
    %4436 = vdwg.mxu0
    %v4437 = vxor.u32 %v4362, 2147483648
    %v4438 = vxor.u32 %v4364, 2147483648
    %v4439 = vxor.u32 %v4433, 2147483648
    %v4440 = vmul.f32 %v4437, 1.442695
    %v4441 = vpow.pop %v4440
    %v4442 = vmul.f32 %v4438, 1.442695
    %v4443 = vpow.pop %v4442
    %v4444 = vmul.f32 %v4439, 1.442695
    %v4445 = vpow.pop %v4444
    %v4446 = vadd.f32 %v4441, 1.0
    %v4447 = vadd.f32 %v4443, 1.0
    %v4448 = vadd.f32 %v4445, 1.0
    %v4449 = vrcp.pop %v4446
    %v4450 = vmul.f32 1.0, %v4449
    %v4451 = vrcp.pop %v4447
    %v4452 = vmul.f32 1.0, %v4451
    %v4453 = vrcp.pop %v4448
    %v4454 = vmul.f32 1.0, %v4453
    %v4455 = vtanh.pop %v4435
    %v4456 = vmul.f32 %v4452, %v3958
    %v4457 = vmul.f32 %v4450, %v4455
    %v4458 = vadd.f32 %v4456, %v4457
    %v4459 = vtanh.pop %v4458
    %v4460 = vmul.f32 %v4454, %v4459
    %4461 = vmatprep.subr.mxu0 %v812
    %4462 = vmatpush1.msra.mxu0 %v811
    %4463 = vmatprep.subr.mxu0 %v816
    %4464 = vmatpush1.msra.mxu0 %v815
    %4465 = vmatprep.subr.mxu0 %v820
    %4466 = vmatpush1.msra.mxu0 %v819
    %4467 = vmatprep.subr.mxu0 %v824
    %4468 = vmatpush1.msra.mxu0 %v823
    %4469 = vmatprep.subr.mxu0 %v828
    %4470 = vmatpush1.msra.mxu0 %v827
    %4471 = vmatprep.subr.mxu0 %v832
    %4472 = vmatpush1.msra.mxu0 %v831
    %4473 = vmatprep.subr.mxu0 %v836
    %4474 = vmatpush1.msra.mxu0 %v835
    %4475 = vmatprep.subr.mxu0 %v840
    %4476 = vmatpush1.msra.mxu0 %v839
    %4477 = vmatprep.subr.mxu0 %v844
    %4478 = vmatpush1.msra.mxu0 %v843
    %4479 = vmatprep.subr.mxu0 %v848
    %4480 = vmatpush1.msra.mxu0 %v847
    %4481 = vmatprep.subr.mxu0 %v852
    %4482 = vmatpush1.msra.mxu0 %v851
    %4483 = vmatprep.subr.mxu0 %v856
    %4484 = vmatpush1.msra.mxu0 %v855
    %4485 = vmatprep.subr.mxu0 %v860
    %4486 = vmatpush1.msra.mxu0 %v859
    %4487 = vmatprep.subr.mxu0 %v864
    %4488 = vmatpush1.msra.mxu0 %v863
    %4489 = vmatprep.subr.mxu0 %v868
    %4490 = vmatpush1.msra.mxu0 %v867
    %4491 = vmatprep.subr.mxu0 %v872
    %4492 = vmatpush1.msra.mxu0 %v871
    %4493 = vmatprep.subr.mxu0 %v876
    %4494 = vmatpush1.msra.mxu0 %v875
    %4495 = vmatprep.subr.mxu0 %v880
    %4496 = vmatpush1.msra.mxu0 %v879
    %4497 = vmatprep.subr.mxu0 %v884
    %4498 = vmatpush1.msra.mxu0 %v883
    %4499 = vmatprep.subr.mxu0 %v888
    %4500 = vmatpush1.msra.mxu0 %v887
    %4501 = vmatprep.subr.mxu0 %v892
    %4502 = vmatpush1.msra.mxu0 %v891
    %4503 = vmatprep.subr.mxu0 %v896
    %4504 = vmatpush1.msra.mxu0 %v895
    %4505 = vmatprep.subr.mxu0 %v900
    %4506 = vmatpush1.msra.mxu0 %v899
    %4507 = vmatprep.subr.mxu0 %v904
    %4508 = vmatpush1.msra.mxu0 %v903
    %4509 = vmatprep.subr.mxu0 %v908
    %4510 = vmatpush1.msra.mxu0 %v907
    %4511 = vmatprep.subr.mxu0 %v912
    %4512 = vmatpush1.msra.mxu0 %v911
    %4513 = vmatprep.subr.mxu0 %v916
    %4514 = vmatpush1.msra.mxu0 %v915
    %4515 = vmatprep.subr.mxu0 %v920
    %4516 = vmatpush1.msra.mxu0 %v919
    %4517 = vmatprep.subr.mxu0 %v924
    %4518 = vmatpush1.msra.mxu0 %v923
    %4519 = vmatprep.subr.mxu0 %v928
    %4520 = vmatpush1.msra.mxu0 %v927
    %4521 = vmatprep.subr.mxu0 %v932
    %4522 = vmatpush1.msra.mxu0 %v931
    %4523 = vmatprep.subr.mxu0 %v936
    %4524 = vmatpush1.msra.mxu0 %v935
    %4525 = vmatprep.mubr.f32.mxu0 %v4126
    %4526 = vmatmul.mubr.f32.gmra.mrb[0].mxu0 %v4460
    %v4527 = vpop.f32.mrb[0].mxu0
    %v4528 = vadd.f32 %v944, %v4527
    %v4529 = vpop.f32.mrb[0].mxu0
    %v4530 = vadd.f32 %v948, %v4529
    %4531 = vdwg.mxu0
    %4532 = vmatprep.subr.mxu0 %v814
    %4533 = vmatpush1.msra.mxu0 %v813
    %4534 = vmatprep.subr.mxu0 %v818
    %4535 = vmatpush1.msra.mxu0 %v817
    %4536 = vmatprep.subr.mxu0 %v822
    %4537 = vmatpush1.msra.mxu0 %v821
    %4538 = vmatprep.subr.mxu0 %v826
    %4539 = vmatpush1.msra.mxu0 %v825
    %4540 = vmatprep.subr.mxu0 %v830
    %4541 = vmatpush1.msra.mxu0 %v829
    %4542 = vmatprep.subr.mxu0 %v834
    %4543 = vmatpush1.msra.mxu0 %v833
    %4544 = vmatprep.subr.mxu0 %v838
    %4545 = vmatpush1.msra.mxu0 %v837
    %4546 = vmatprep.subr.mxu0 %v842
    %4547 = vmatpush1.msra.mxu0 %v841
    %4548 = vmatprep.subr.mxu0 %v846
    %4549 = vmatpush1.msra.mxu0 %v845
    %4550 = vmatprep.subr.mxu0 %v850
    %4551 = vmatpush1.msra.mxu0 %v849
    %4552 = vmatprep.subr.mxu0 %v854
    %4553 = vmatpush1.msra.mxu0 %v853
    %4554 = vmatprep.subr.mxu0 %v858
    %4555 = vmatpush1.msra.mxu0 %v857
    %4556 = vmatprep.subr.mxu0 %v862
    %4557 = vmatpush1.msra.mxu0 %v861
    %4558 = vmatprep.subr.mxu0 %v866
    %4559 = vmatpush1.msra.mxu0 %v865
    %4560 = vmatprep.subr.mxu0 %v870
    %4561 = vmatpush1.msra.mxu0 %v869
    %4562 = vmatprep.subr.mxu0 %v874
    %4563 = vmatpush1.msra.mxu0 %v873
    %4564 = vmatprep.subr.mxu0 %v878
    %4565 = vmatpush1.msra.mxu0 %v877
    %4566 = vmatprep.subr.mxu0 %v882
    %4567 = vmatpush1.msra.mxu0 %v881
    %4568 = vmatprep.subr.mxu0 %v886
    %4569 = vmatpush1.msra.mxu0 %v885
    %4570 = vmatprep.subr.mxu0 %v890
    %4571 = vmatpush1.msra.mxu0 %v889
    %4572 = vmatprep.subr.mxu0 %v894
    %4573 = vmatpush1.msra.mxu0 %v893
    %4574 = vmatprep.subr.mxu0 %v898
    %4575 = vmatpush1.msra.mxu0 %v897
    %4576 = vmatprep.subr.mxu0 %v902
    %4577 = vmatpush1.msra.mxu0 %v901
    %4578 = vmatprep.subr.mxu0 %v906
    %4579 = vmatpush1.msra.mxu0 %v905
    %4580 = vmatprep.subr.mxu0 %v910
    %4581 = vmatpush1.msra.mxu0 %v909
    %4582 = vmatprep.subr.mxu0 %v914
    %4583 = vmatpush1.msra.mxu0 %v913
    %4584 = vmatprep.subr.mxu0 %v918
    %4585 = vmatpush1.msra.mxu0 %v917
    %4586 = vmatprep.subr.mxu0 %v922
    %4587 = vmatpush1.msra.mxu0 %v921
    %4588 = vmatprep.subr.mxu0 %v926
    %4589 = vmatpush1.msra.mxu0 %v925
    %4590 = vmatprep.subr.mxu0 %v930
    %4591 = vmatpush1.msra.mxu0 %v929
    %4592 = vmatprep.subr.mxu0 %v934
    %4593 = vmatpush1.msra.mxu0 %v933
    %4594 = vmatprep.subr.mxu0 %v938
    %4595 = vmatpush1.msra.mxu0 %v937
    %4596 = vmatprep.mubr.f32.mxu0 %v4126
    %4597 = vmatmul.mubr.f32.gmra.mrb[0].mxu0 %v4460
    %v4598 = vpop.f32.mrb[0].mxu0
    %v4599 = vadd.f32 %v952, %v4598
    %v4600 = vpop.f32.mrb[0].mxu0
    %v4601 = vadd.f32 %v956, %v4600
    %4602 = vdwg.mxu0
    %v4603 = vxor.u32 %v4528, 2147483648
    %v4604 = vxor.u32 %v4530, 2147483648
    %v4605 = vxor.u32 %v4599, 2147483648
    %v4606 = vmul.f32 %v4603, 1.442695
    %v4607 = vpow.pop %v4606
    %v4608 = vmul.f32 %v4604, 1.442695
    %v4609 = vpow.pop %v4608
    %v4610 = vmul.f32 %v4605, 1.442695
    %v4611 = vpow.pop %v4610
    %v4612 = vadd.f32 %v4607, 1.0
    %v4613 = vadd.f32 %v4609, 1.0
    %v4614 = vadd.f32 %v4611, 1.0
    %v4615 = vrcp.pop %v4612
    %v4616 = vmul.f32 1.0, %v4615
    %v4617 = vrcp.pop %v4613
    %v4618 = vmul.f32 1.0, %v4617
    %v4619 = vrcp.pop %v4614
    %v4620 = vmul.f32 1.0, %v4619
    %v4621 = vtanh.pop %v4601
    %v4622 = vmul.f32 %v4618, %v4124
    %v4623 = vmul.f32 %v4616, %v4621
    %v4624 = vadd.f32 %v4622, %v4623
    %v4625 = vtanh.pop %v4624
    %v4626 = vmul.f32 %v4620, %v4625
    %v4627 = vld [vmem:[#allocation14] sm:$0xff]
    %v4628 = vld [vmem:[#allocation14 + $0x8] sm:$0xff]
    %v4629 = vld [vmem:[#allocation14 + $0x10] sm:$0xff]
    %v4630 = vld [vmem:[#allocation14 + $0x18] sm:$0xff]
    %v4631 = vld [vmem:[#allocation14 + $0x20] sm:$0xff]
    %v4632 = vld [vmem:[#allocation14 + $0x28] sm:$0xff]
    %v4633 = vld [vmem:[#allocation14 + $0x30] sm:$0xff]
    %v4634 = vld [vmem:[#allocation14 + $0x38] sm:$0xff]
    %v4635 = vld [vmem:[#allocation14 + $0x40] sm:$0xff]
    %v4636 = vld [vmem:[#allocation14 + $0x48] sm:$0xff]
    %v4637 = vld [vmem:[#allocation14 + $0x50] sm:$0xff]
    %v4638 = vld [vmem:[#allocation14 + $0x58] sm:$0xff]
    %v4639 = vld [vmem:[#allocation14 + $0x60] sm:$0xff]
    %v4640 = vld [vmem:[#allocation14 + $0x68] sm:$0xff]
    %v4641 = vld [vmem:[#allocation14 + $0x70] sm:$0xff]
    %v4642 = vld [vmem:[#allocation14 + $0x78] sm:$0xff]
    %v4643 = vld [vmem:[#allocation14 + $0x80] sm:$0xff]
    %v4644 = vld [vmem:[#allocation14 + $0x88] sm:$0xff]
    %v4645 = vld [vmem:[#allocation14 + $0x90] sm:$0xff]
    %v4646 = vld [vmem:[#allocation14 + $0x98] sm:$0xff]
    %v4647 = vld [vmem:[#allocation14 + $0xa0] sm:$0xff]
    %v4648 = vld [vmem:[#allocation14 + $0xa8] sm:$0xff]
    %v4649 = vld [vmem:[#allocation14 + $0xb0] sm:$0xff]
    %v4650 = vld [vmem:[#allocation14 + $0xb8] sm:$0xff]
    %v4651 = vld [vmem:[#allocation14 + $0xc0] sm:$0xff]
    %v4652 = vld [vmem:[#allocation14 + $0xc8] sm:$0xff]
    %v4653 = vld [vmem:[#allocation14 + $0xd0] sm:$0xff]
    %v4654 = vld [vmem:[#allocation14 + $0xd8] sm:$0xff]
    %v4655 = vld [vmem:[#allocation14 + $0xe0] sm:$0xff]
    %v4656 = vld [vmem:[#allocation14 + $0xe8] sm:$0xff]
    %v4657 = vld [vmem:[#allocation14 + $0xf0] sm:$0xff]
    %v4658 = vld [vmem:[#allocation14 + $0xf8] sm:$0xff]
    %v4659 = vld [vmem:[#allocation14 + $0x100] sm:$0xff]
    %v4660 = vld [vmem:[#allocation14 + $0x108] sm:$0xff]
    %v4661 = vld [vmem:[#allocation14 + $0x110] sm:$0xff]
    %v4662 = vld [vmem:[#allocation14 + $0x118] sm:$0xff]
    %v4663 = vld [vmem:[#allocation14 + $0x120] sm:$0xff]
    %v4664 = vld [vmem:[#allocation14 + $0x128] sm:$0xff]
    %v4665 = vld [vmem:[#allocation14 + $0x130] sm:$0xff]
    %v4666 = vld [vmem:[#allocation14 + $0x138] sm:$0xff]
    %v4667 = vld [vmem:[#allocation14 + $0x140] sm:$0xff]
    %v4668 = vld [vmem:[#allocation14 + $0x148] sm:$0xff]
    %v4669 = vld [vmem:[#allocation14 + $0x150] sm:$0xff]
    %v4670 = vld [vmem:[#allocation14 + $0x158] sm:$0xff]
    %v4671 = vld [vmem:[#allocation14 + $0x160] sm:$0xff]
    %v4672 = vld [vmem:[#allocation14 + $0x168] sm:$0xff]
    %v4673 = vld [vmem:[#allocation14 + $0x170] sm:$0xff]
    %v4674 = vld [vmem:[#allocation14 + $0x178] sm:$0xff]
    %v4675 = vld [vmem:[#allocation14 + $0x180] sm:$0xff]
    %v4676 = vld [vmem:[#allocation14 + $0x188] sm:$0xff]
    %v4677 = vld [vmem:[#allocation14 + $0x190] sm:$0xff]
    %v4678 = vld [vmem:[#allocation14 + $0x198] sm:$0xff]
    %v4679 = vld [vmem:[#allocation14 + $0x1a0] sm:$0xff]
    %v4680 = vld [vmem:[#allocation14 + $0x1a8] sm:$0xff]
    %v4681 = vld [vmem:[#allocation14 + $0x1b0] sm:$0xff]
    %v4682 = vld [vmem:[#allocation14 + $0x1b8] sm:$0xff]
    %v4683 = vld [vmem:[#allocation14 + $0x1c0] sm:$0xff]
    %v4684 = vld [vmem:[#allocation14 + $0x1c8] sm:$0xff]
    %v4685 = vld [vmem:[#allocation14 + $0x1d0] sm:$0xff]
    %v4686 = vld [vmem:[#allocation14 + $0x1d8] sm:$0xff]
    %v4687 = vld [vmem:[#allocation14 + $0x1e0] sm:$0xff]
    %v4688 = vld [vmem:[#allocation14 + $0x1e8] sm:$0xff]
    %v4689 = vld [vmem:[#allocation14 + $0x1f0] sm:$0xff]
    %v4690 = vld [vmem:[#allocation14 + $0x1f8] sm:$0xff]
    %v4691 = vld [vmem:[#allocation14 + $0x200] sm:$0xff]
    %v4692 = vld [vmem:[#allocation14 + $0x208] sm:$0xff]
    %v4693 = vld [vmem:[#allocation14 + $0x210] sm:$0xff]
    %v4694 = vld [vmem:[#allocation14 + $0x218] sm:$0xff]
    %v4695 = vld [vmem:[#allocation14 + $0x220] sm:$0xff]
    %v4696 = vld [vmem:[#allocation14 + $0x228] sm:$0xff]
    %v4697 = vld [vmem:[#allocation14 + $0x230] sm:$0xff]
    %v4698 = vld [vmem:[#allocation14 + $0x238] sm:$0xff]
    %v4699 = vld [vmem:[#allocation14 + $0x240] sm:$0xff]
    %v4700 = vld [vmem:[#allocation14 + $0x248] sm:$0xff]
    %v4701 = vld [vmem:[#allocation14 + $0x250] sm:$0xff]
    %v4702 = vld [vmem:[#allocation14 + $0x258] sm:$0xff]
    %v4703 = vld [vmem:[#allocation14 + $0x260] sm:$0xff]
    %v4704 = vld [vmem:[#allocation14 + $0x268] sm:$0xff]
    %v4705 = vld [vmem:[#allocation14 + $0x270] sm:$0xff]
    %v4706 = vld [vmem:[#allocation14 + $0x278] sm:$0xff]
    %v4707 = vld [vmem:[#allocation14 + $0x280] sm:$0xff]
    %v4708 = vld [vmem:[#allocation14 + $0x288] sm:$0xff]
    %v4709 = vld [vmem:[#allocation14 + $0x290] sm:$0xff]
    %v4710 = vld [vmem:[#allocation14 + $0x298] sm:$0xff]
    %v4711 = vld [vmem:[#allocation14 + $0x2a0] sm:$0xff]
    %v4712 = vld [vmem:[#allocation14 + $0x2a8] sm:$0xff]
    %v4713 = vld [vmem:[#allocation14 + $0x2b0] sm:$0xff]
    %v4714 = vld [vmem:[#allocation14 + $0x2b8] sm:$0xff]
    %v4715 = vld [vmem:[#allocation14 + $0x2c0] sm:$0xff]
    %v4716 = vld [vmem:[#allocation14 + $0x2c8] sm:$0xff]
    %v4717 = vld [vmem:[#allocation14 + $0x2d0] sm:$0xff]
    %v4718 = vld [vmem:[#allocation14 + $0x2d8] sm:$0xff]
    %v4719 = vld [vmem:[#allocation14 + $0x2e0] sm:$0xff]
    %v4720 = vld [vmem:[#allocation14 + $0x2e8] sm:$0xff]
    %v4721 = vld [vmem:[#allocation14 + $0x2f0] sm:$0xff]
    %v4722 = vld [vmem:[#allocation14 + $0x2f8] sm:$0xff]
    %v4723 = vld [vmem:[#allocation14 + $0x300] sm:$0xff]
    %v4724 = vld [vmem:[#allocation14 + $0x308] sm:$0xff]
    %v4725 = vld [vmem:[#allocation14 + $0x310] sm:$0xff]
    %v4726 = vld [vmem:[#allocation14 + $0x318] sm:$0xff]
    %v4727 = vld [vmem:[#allocation14 + $0x320] sm:$0xff]
    %v4728 = vld [vmem:[#allocation14 + $0x328] sm:$0xff]
    %v4729 = vld [vmem:[#allocation14 + $0x330] sm:$0xff]
    %v4730 = vld [vmem:[#allocation14 + $0x338] sm:$0xff]
    %v4731 = vld [vmem:[#allocation14 + $0x340] sm:$0xff]
    %v4732 = vld [vmem:[#allocation14 + $0x348] sm:$0xff]
    %v4733 = vld [vmem:[#allocation14 + $0x350] sm:$0xff]
    %v4734 = vld [vmem:[#allocation14 + $0x358] sm:$0xff]
    %v4735 = vld [vmem:[#allocation14 + $0x360] sm:$0xff]
    %v4736 = vld [vmem:[#allocation14 + $0x368] sm:$0xff]
    %v4737 = vld [vmem:[#allocation14 + $0x370] sm:$0xff]
    %v4738 = vld [vmem:[#allocation14 + $0x378] sm:$0xff]
    %v4739 = vld [vmem:[#allocation14 + $0x380] sm:$0xff]
    %v4740 = vld [vmem:[#allocation14 + $0x388] sm:$0xff]
    %v4741 = vld [vmem:[#allocation14 + $0x390] sm:$0xff]
    %v4742 = vld [vmem:[#allocation14 + $0x398] sm:$0xff]
    %v4743 = vld [vmem:[#allocation14 + $0x3a0] sm:$0xff]
    %v4744 = vld [vmem:[#allocation14 + $0x3a8] sm:$0xff]
    %v4745 = vld [vmem:[#allocation14 + $0x3b0] sm:$0xff]
    %v4746 = vld [vmem:[#allocation14 + $0x3b8] sm:$0xff]
    %v4747 = vld [vmem:[#allocation14 + $0x3c0] sm:$0xff]
    %v4748 = vld [vmem:[#allocation14 + $0x3c8] sm:$0xff]
    %v4749 = vld [vmem:[#allocation14 + $0x3d0] sm:$0xff]
    %v4750 = vld [vmem:[#allocation14 + $0x3d8] sm:$0xff]
    %v4751 = vld [vmem:[#allocation14 + $0x3e0] sm:$0xff]
    %v4752 = vld [vmem:[#allocation14 + $0x3e8] sm:$0xff]
    %v4753 = vld [vmem:[#allocation14 + $0x3f0] sm:$0xff]
    %v4754 = vld [vmem:[#allocation14 + $0x3f8] sm:$0xff]
    %v4755 = vld [vmem:[#allocation16] sm:$0xf]
    %v4757 = vlaneseq
    %v4758 = vshrl.u32 %v4757, 7
    %v4759 = vsub.s32 0, %v4758
    %v4760 = vrot.slane %v4755, %v4759
    %v4761 = vlaneseq
    %v4762 = vshrl.u32 %v4761, 7
    %v4763 = vsub.s32 1, %v4762
    %v4764 = vrot.slane %v4755, %v4763
    %v4765 = vlaneseq
    %v4766 = vshrl.u32 %v4765, 7
    %v4767 = vsub.s32 2, %v4766
    %v4768 = vrot.slane %v4755, %v4767
    %v4769 = vlaneseq
    %v4770 = vshrl.u32 %v4769, 7
    %v4771 = vsub.s32 3, %v4770
    %v4772 = vrot.slane %v4755, %v4771
    %4777 = vmatprep.subr.mxu0 %v4628
    %4778 = vmatpush1.msra.mxu0 %v4627
    %4779 = vmatprep.subr.mxu0 %v4632
    %4780 = vmatpush1.msra.mxu0 %v4631
    %4781 = vmatprep.subr.mxu0 %v4636
    %4782 = vmatpush1.msra.mxu0 %v4635
    %4783 = vmatprep.subr.mxu0 %v4640
    %4784 = vmatpush1.msra.mxu0 %v4639
    %4785 = vmatprep.subr.mxu0 %v4644
    %4786 = vmatpush1.msra.mxu0 %v4643
    %4787 = vmatprep.subr.mxu0 %v4648
    %4788 = vmatpush1.msra.mxu0 %v4647
    %4789 = vmatprep.subr.mxu0 %v4652
    %4790 = vmatpush1.msra.mxu0 %v4651
    %4791 = vmatprep.subr.mxu0 %v4656
    %4792 = vmatpush1.msra.mxu0 %v4655
    %4793 = vmatprep.subr.mxu0 %v4660
    %4794 = vmatpush1.msra.mxu0 %v4659
    %4795 = vmatprep.subr.mxu0 %v4664
    %4796 = vmatpush1.msra.mxu0 %v4663
    %4797 = vmatprep.subr.mxu0 %v4668
    %4798 = vmatpush1.msra.mxu0 %v4667
    %4799 = vmatprep.subr.mxu0 %v4672
    %4800 = vmatpush1.msra.mxu0 %v4671
    %4801 = vmatprep.subr.mxu0 %v4676
    %4802 = vmatpush1.msra.mxu0 %v4675
    %4803 = vmatprep.subr.mxu0 %v4680
    %4804 = vmatpush1.msra.mxu0 %v4679
    %4805 = vmatprep.subr.mxu0 %v4684
    %4806 = vmatpush1.msra.mxu0 %v4683
    %4807 = vmatprep.subr.mxu0 %v4688
    %4808 = vmatpush1.msra.mxu0 %v4687
    %4809 = vmatprep.subr.mxu0 %v4692
    %4810 = vmatpush1.msra.mxu0 %v4691
    %4811 = vmatprep.subr.mxu0 %v4696
    %4812 = vmatpush1.msra.mxu0 %v4695
    %4813 = vmatprep.subr.mxu0 %v4700
    %4814 = vmatpush1.msra.mxu0 %v4699
    %4815 = vmatprep.subr.mxu0 %v4704
    %4816 = vmatpush1.msra.mxu0 %v4703
    %4817 = vmatprep.subr.mxu0 %v4708
    %4818 = vmatpush1.msra.mxu0 %v4707
    %4819 = vmatprep.subr.mxu0 %v4712
    %4820 = vmatpush1.msra.mxu0 %v4711
    %4821 = vmatprep.subr.mxu0 %v4716
    %4822 = vmatpush1.msra.mxu0 %v4715
    %4823 = vmatprep.subr.mxu0 %v4720
    %4824 = vmatpush1.msra.mxu0 %v4719
    %4825 = vmatprep.subr.mxu0 %v4724
    %4826 = vmatpush1.msra.mxu0 %v4723
    %4827 = vmatprep.subr.mxu0 %v4728
    %4828 = vmatpush1.msra.mxu0 %v4727
    %4829 = vmatprep.subr.mxu0 %v4732
    %4830 = vmatpush1.msra.mxu0 %v4731
    %4831 = vmatprep.subr.mxu0 %v4736
    %4832 = vmatpush1.msra.mxu0 %v4735
    %4833 = vmatprep.subr.mxu0 %v4740
    %4834 = vmatpush1.msra.mxu0 %v4739
    %4835 = vmatprep.subr.mxu0 %v4744
    %4836 = vmatpush1.msra.mxu0 %v4743
    %4837 = vmatprep.subr.mxu0 %v4748
    %4838 = vmatpush1.msra.mxu0 %v4747
    %4839 = vmatprep.subr.mxu0 %v4752
    %4840 = vmatpush1.msra.mxu0 %v4751
    %4841 = vmatprep.mubr.f32.mxu0 %v4626
    %4842 = vmatmul.mubr.f32.gmra.mrb[0].mxu0 %v4128
    %v4843 = vpop.f32.mrb[0].mxu0
    %v4844 = vadd.f32 %v4760, %v4843
    %v4845 = vpop.f32.mrb[0].mxu0
    %v4846 = vadd.f32 %v4764, %v4845
    %4847 = vdwg.mxu0
    %4848 = vmatprep.subr.mxu0 %v4630
    %4849 = vmatpush1.msra.mxu0 %v4629
    %4850 = vmatprep.subr.mxu0 %v4634
    %4851 = vmatpush1.msra.mxu0 %v4633
    %4852 = vmatprep.subr.mxu0 %v4638
    %4853 = vmatpush1.msra.mxu0 %v4637
    %4854 = vmatprep.subr.mxu0 %v4642
    %4855 = vmatpush1.msra.mxu0 %v4641
    %4856 = vmatprep.subr.mxu0 %v4646
    %4857 = vmatpush1.msra.mxu0 %v4645
    %4858 = vmatprep.subr.mxu0 %v4650
    %4859 = vmatpush1.msra.mxu0 %v4649
    %4860 = vmatprep.subr.mxu0 %v4654
    %4861 = vmatpush1.msra.mxu0 %v4653
    %4862 = vmatprep.subr.mxu0 %v4658
    %4863 = vmatpush1.msra.mxu0 %v4657
    %4864 = vmatprep.subr.mxu0 %v4662
    %4865 = vmatpush1.msra.mxu0 %v4661
    %4866 = vmatprep.subr.mxu0 %v4666
    %4867 = vmatpush1.msra.mxu0 %v4665
    %4868 = vmatprep.subr.mxu0 %v4670
    %4869 = vmatpush1.msra.mxu0 %v4669
    %4870 = vmatprep.subr.mxu0 %v4674
    %4871 = vmatpush1.msra.mxu0 %v4673
    %4872 = vmatprep.subr.mxu0 %v4678
    %4873 = vmatpush1.msra.mxu0 %v4677
    %4874 = vmatprep.subr.mxu0 %v4682
    %4875 = vmatpush1.msra.mxu0 %v4681
    %4876 = vmatprep.subr.mxu0 %v4686
    %4877 = vmatpush1.msra.mxu0 %v4685
    %4878 = vmatprep.subr.mxu0 %v4690
    %4879 = vmatpush1.msra.mxu0 %v4689
    %4880 = vmatprep.subr.mxu0 %v4694
    %4881 = vmatpush1.msra.mxu0 %v4693
    %4882 = vmatprep.subr.mxu0 %v4698
    %4883 = vmatpush1.msra.mxu0 %v4697
    %4884 = vmatprep.subr.mxu0 %v4702
    %4885 = vmatpush1.msra.mxu0 %v4701
    %4886 = vmatprep.subr.mxu0 %v4706
    %4887 = vmatpush1.msra.mxu0 %v4705
    %4888 = vmatprep.subr.mxu0 %v4710
    %4889 = vmatpush1.msra.mxu0 %v4709
    %4890 = vmatprep.subr.mxu0 %v4714
    %4891 = vmatpush1.msra.mxu0 %v4713
    %4892 = vmatprep.subr.mxu0 %v4718
    %4893 = vmatpush1.msra.mxu0 %v4717
    %4894 = vmatprep.subr.mxu0 %v4722
    %4895 = vmatpush1.msra.mxu0 %v4721
    %4896 = vmatprep.subr.mxu0 %v4726
    %4897 = vmatpush1.msra.mxu0 %v4725
    %4898 = vmatprep.subr.mxu0 %v4730
    %4899 = vmatpush1.msra.mxu0 %v4729
    %4900 = vmatprep.subr.mxu0 %v4734
    %4901 = vmatpush1.msra.mxu0 %v4733
    %4902 = vmatprep.subr.mxu0 %v4738
    %4903 = vmatpush1.msra.mxu0 %v4737
    %4904 = vmatprep.subr.mxu0 %v4742
    %4905 = vmatpush1.msra.mxu0 %v4741
    %4906 = vmatprep.subr.mxu0 %v4746
    %4907 = vmatpush1.msra.mxu0 %v4745
    %4908 = vmatprep.subr.mxu0 %v4750
    %4909 = vmatpush1.msra.mxu0 %v4749
    %4910 = vmatprep.subr.mxu0 %v4754
    %4911 = vmatpush1.msra.mxu0 %v4753
    %4912 = vmatprep.mubr.f32.mxu0 %v4626
    %4913 = vmatmul.mubr.f32.gmra.mrb[0].mxu0 %v4128
    %v4914 = vpop.f32.mrb[0].mxu0
    %v4915 = vadd.f32 %v4768, %v4914
    %v4916 = vpop.f32.mrb[0].mxu0
    %v4917 = vadd.f32 %v4772, %v4916
    %4918 = vdwg.mxu0
    %v4919 = vxor.u32 %v4844, 2147483648
    %v4920 = vxor.u32 %v4846, 2147483648
    %v4921 = vxor.u32 %v4915, 2147483648
    %v4922 = vmul.f32 %v4919, 1.442695
    %v4923 = vpow.pop %v4922
    %v4924 = vmul.f32 %v4920, 1.442695
    %v4925 = vpow.pop %v4924
    %v4926 = vmul.f32 %v4921, 1.442695
    %v4927 = vpow.pop %v4926
    %v4928 = vadd.f32 %v4923, 1.0
    %v4929 = vadd.f32 %v4925, 1.0
    %v4930 = vadd.f32 %v4927, 1.0
    %v4931 = vrcp.pop %v4928
    %v4932 = vmul.f32 1.0, %v4931
    %v4933 = vrcp.pop %v4929
    %v4934 = vmul.f32 1.0, %v4933
    %v4935 = vrcp.pop %v4930
    %v4936 = vmul.f32 1.0, %v4935
    %v4937 = vtanh.pop %v4917
    %v4938 = vmul.f32 %v4934, %v4624
    %v4939 = vmul.f32 %v4932, %v4937
    %v4940 = vadd.f32 %v4938, %v4939
    %v4941 = vtanh.pop %v4940
    %v4942 = vmul.f32 %v4936, %v4941
    %v4943 = vld [vmem:[#allocation17] sm:$0xff]
    %v4944 = vld [vmem:[#allocation17 + $0x8] sm:$0xff]
    %v4945 = vld [vmem:[#allocation17 + $0x10] sm:$0xff]
    %v4946 = vld [vmem:[#allocation17 + $0x18] sm:$0xff]
    %v4947 = vld [vmem:[#allocation17 + $0x20] sm:$0xff]
    %v4948 = vld [vmem:[#allocation17 + $0x28] sm:$0xff]
    %v4949 = vld [vmem:[#allocation17 + $0x30] sm:$0xff]
    %v4950 = vld [vmem:[#allocation17 + $0x38] sm:$0xff]
    %v4951 = vld [vmem:[#allocation17 + $0x40] sm:$0xff]
    %v4952 = vld [vmem:[#allocation17 + $0x48] sm:$0xff]
    %v4953 = vld [vmem:[#allocation17 + $0x50] sm:$0xff]
    %v4954 = vld [vmem:[#allocation17 + $0x58] sm:$0xff]
    %v4955 = vld [vmem:[#allocation17 + $0x60] sm:$0xff]
    %v4956 = vld [vmem:[#allocation17 + $0x68] sm:$0xff]
    %v4957 = vld [vmem:[#allocation17 + $0x70] sm:$0xff]
    %v4958 = vld [vmem:[#allocation17 + $0x78] sm:$0xff]
    %v4959 = vld [vmem:[#allocation19] sm:$0x1]
    %v4961 = vlaneseq
    %v4962 = vshrl.u32 %v4961, 7
    %v4963 = vsub.s32 0, %v4962
    %v4964 = vrot.slane %v4959, %v4963
    %4966 = vmatprep.subr.mxu0 0.0
    %4967 = vmatpush1.msra.mxu0 %v4943
    %4968 = vmatprep.subr.mxu0 0.0
    %4969 = vmatpush1.msra.mxu0 %v4944
    %4970 = vmatprep.subr.mxu0 0.0
    %4971 = vmatpush1.msra.mxu0 %v4945
    %4972 = vmatprep.subr.mxu0 0.0
    %4973 = vmatpush1.msra.mxu0 %v4946
    %4974 = vmatprep.subr.mxu0 0.0
    %4975 = vmatpush1.msra.mxu0 %v4947
    %4976 = vmatprep.subr.mxu0 0.0
    %4977 = vmatpush1.msra.mxu0 %v4948
    %4978 = vmatprep.subr.mxu0 0.0
    %4979 = vmatpush1.msra.mxu0 %v4949
    %4980 = vmatprep.subr.mxu0 0.0
    %4981 = vmatpush1.msra.mxu0 %v4950
    %4982 = vmatprep.subr.mxu0 0.0
    %4983 = vmatpush1.msra.mxu0 %v4951
    %4984 = vmatprep.subr.mxu0 0.0
    %4985 = vmatpush1.msra.mxu0 %v4952
    %4986 = vmatprep.subr.mxu0 0.0
    %4987 = vmatpush1.msra.mxu0 %v4953
    %4988 = vmatprep.subr.mxu0 0.0
    %4989 = vmatpush1.msra.mxu0 %v4954
    %4990 = vmatprep.subr.mxu0 0.0
    %4991 = vmatpush1.msra.mxu0 %v4955
    %4992 = vmatprep.subr.mxu0 0.0
    %4993 = vmatpush1.msra.mxu0 %v4956
    %4994 = vmatprep.subr.mxu0 0.0
    %4995 = vmatpush1.msra.mxu0 %v4957
    %4996 = vmatprep.subr.mxu0 0.0
    %4997 = vmatpush1.msra.mxu0 %v4958
    %4998 = vmatprep.subr.mxu0 0.0
    %4999 = vmatpush1.msra.mxu0 0.0
    %5000 = vmatprep.subr.mxu0 0.0
    %5001 = vmatpush1.msra.mxu0 0.0
    %5002 = vmatprep.subr.mxu0 0.0
    %5003 = vmatpush1.msra.mxu0 0.0
    %5004 = vmatprep.subr.mxu0 0.0
    %5005 = vmatpush1.msra.mxu0 0.0
    %5006 = vmatprep.subr.mxu0 0.0
    %5007 = vmatpush1.msra.mxu0 0.0
    %5008 = vmatprep.subr.mxu0 0.0
    %5009 = vmatpush1.msra.mxu0 0.0
    %5010 = vmatprep.subr.mxu0 0.0
    %5011 = vmatpush1.msra.mxu0 0.0
    %5012 = vmatprep.subr.mxu0 0.0
    %5013 = vmatpush1.msra.mxu0 0.0
    %5014 = vmatprep.subr.mxu0 0.0
    %5015 = vmatpush1.msra.mxu0 0.0
    %5016 = vmatprep.subr.mxu0 0.0
    %5017 = vmatpush1.msra.mxu0 0.0
    %5018 = vmatprep.subr.mxu0 0.0
    %5019 = vmatpush1.msra.mxu0 0.0
    %5020 = vmatprep.subr.mxu0 0.0
    %5021 = vmatpush1.msra.mxu0 0.0
    %5022 = vmatprep.subr.mxu0 0.0
    %5023 = vmatpush1.msra.mxu0 0.0
    %5024 = vmatprep.subr.mxu0 0.0
    %5025 = vmatpush1.msra.mxu0 0.0
    %5026 = vmatprep.subr.mxu0 0.0
    %5027 = vmatpush1.msra.mxu0 0.0
    %5028 = vmatprep.subr.mxu0 0.0
    %5029 = vmatpush1.msra.mxu0 0.0
    %5030 = vmatprep.mubr.f32.mxu0 0.0
    %5031 = vmatmul.mubr.f32.gmra.mrb[0].mxu0 %v4942
    %v5032 = vpop.f32.mrb[0].mxu0
    %v5033 = vadd.f32 %v4964, %v5032
    %v5034 = vpop.f32.mrb[0].mxu0
    %5035 = vdwg.mxu0
    %5036 = vst [vmem:[#allocation20] sm:$0xff] %v5033
    %v5037 = vld [vmem:[#allocation14] sm:$0xff]
    %v5038 = vld [vmem:[#allocation14 + $0x8] sm:$0xff]
    %v5039 = vld [vmem:[#allocation14 + $0x10] sm:$0xff]
    %v5040 = vld [vmem:[#allocation14 + $0x18] sm:$0xff]
    %v5041 = vld [vmem:[#allocation14 + $0x20] sm:$0xff]
    %v5042 = vld [vmem:[#allocation14 + $0x28] sm:$0xff]
    %v5043 = vld [vmem:[#allocation14 + $0x30] sm:$0xff]
    %v5044 = vld [vmem:[#allocation14 + $0x38] sm:$0xff]
    %v5045 = vld [vmem:[#allocation14 + $0x40] sm:$0xff]
    %v5046 = vld [vmem:[#allocation14 + $0x48] sm:$0xff]
    %v5047 = vld [vmem:[#allocation14 + $0x50] sm:$0xff]
    %v5048 = vld [vmem:[#allocation14 + $0x58] sm:$0xff]
    %v5049 = vld [vmem:[#allocation14 + $0x60] sm:$0xff]
    %v5050 = vld [vmem:[#allocation14 + $0x68] sm:$0xff]
    %v5051 = vld [vmem:[#allocation14 + $0x70] sm:$0xff]
    %v5052 = vld [vmem:[#allocation14 + $0x78] sm:$0xff]
    %v5053 = vld [vmem:[#allocation14 + $0x80] sm:$0xff]
    %v5054 = vld [vmem:[#allocation14 + $0x88] sm:$0xff]
    %v5055 = vld [vmem:[#allocation14 + $0x90] sm:$0xff]
    %v5056 = vld [vmem:[#allocation14 + $0x98] sm:$0xff]
    %v5057 = vld [vmem:[#allocation14 + $0xa0] sm:$0xff]
    %v5058 = vld [vmem:[#allocation14 + $0xa8] sm:$0xff]
    %v5059 = vld [vmem:[#allocation14 + $0xb0] sm:$0xff]
    %v5060 = vld [vmem:[#allocation14 + $0xb8] sm:$0xff]
    %v5061 = vld [vmem:[#allocation14 + $0xc0] sm:$0xff]
    %v5062 = vld [vmem:[#allocation14 + $0xc8] sm:$0xff]
    %v5063 = vld [vmem:[#allocation14 + $0xd0] sm:$0xff]
    %v5064 = vld [vmem:[#allocation14 + $0xd8] sm:$0xff]
    %v5065 = vld [vmem:[#allocation14 + $0xe0] sm:$0xff]
    %v5066 = vld [vmem:[#allocation14 + $0xe8] sm:$0xff]
    %v5067 = vld [vmem:[#allocation14 + $0xf0] sm:$0xff]
    %v5068 = vld [vmem:[#allocation14 + $0xf8] sm:$0xff]
    %v5069 = vld [vmem:[#allocation14 + $0x100] sm:$0xff]
    %v5070 = vld [vmem:[#allocation14 + $0x108] sm:$0xff]
    %v5071 = vld [vmem:[#allocation14 + $0x110] sm:$0xff]
    %v5072 = vld [vmem:[#allocation14 + $0x118] sm:$0xff]
    %v5073 = vld [vmem:[#allocation14 + $0x120] sm:$0xff]
    %v5074 = vld [vmem:[#allocation14 + $0x128] sm:$0xff]
    %v5075 = vld [vmem:[#allocation14 + $0x130] sm:$0xff]
    %v5076 = vld [vmem:[#allocation14 + $0x138] sm:$0xff]
    %v5077 = vld [vmem:[#allocation14 + $0x140] sm:$0xff]
    %v5078 = vld [vmem:[#allocation14 + $0x148] sm:$0xff]
    %v5079 = vld [vmem:[#allocation14 + $0x150] sm:$0xff]
    %v5080 = vld [vmem:[#allocation14 + $0x158] sm:$0xff]
    %v5081 = vld [vmem:[#allocation14 + $0x160] sm:$0xff]
    %v5082 = vld [vmem:[#allocation14 + $0x168] sm:$0xff]
    %v5083 = vld [vmem:[#allocation14 + $0x170] sm:$0xff]
    %v5084 = vld [vmem:[#allocation14 + $0x178] sm:$0xff]
    %v5085 = vld [vmem:[#allocation14 + $0x180] sm:$0xff]
    %v5086 = vld [vmem:[#allocation14 + $0x188] sm:$0xff]
    %v5087 = vld [vmem:[#allocation14 + $0x190] sm:$0xff]
    %v5088 = vld [vmem:[#allocation14 + $0x198] sm:$0xff]
    %v5089 = vld [vmem:[#allocation14 + $0x1a0] sm:$0xff]
    %v5090 = vld [vmem:[#allocation14 + $0x1a8] sm:$0xff]
    %v5091 = vld [vmem:[#allocation14 + $0x1b0] sm:$0xff]
    %v5092 = vld [vmem:[#allocation14 + $0x1b8] sm:$0xff]
    %v5093 = vld [vmem:[#allocation14 + $0x1c0] sm:$0xff]
    %v5094 = vld [vmem:[#allocation14 + $0x1c8] sm:$0xff]
    %v5095 = vld [vmem:[#allocation14 + $0x1d0] sm:$0xff]
    %v5096 = vld [vmem:[#allocation14 + $0x1d8] sm:$0xff]
    %v5097 = vld [vmem:[#allocation14 + $0x1e0] sm:$0xff]
    %v5098 = vld [vmem:[#allocation14 + $0x1e8] sm:$0xff]
    %v5099 = vld [vmem:[#allocation14 + $0x1f0] sm:$0xff]
    %v5100 = vld [vmem:[#allocation14 + $0x1f8] sm:$0xff]
    %v5101 = vld [vmem:[#allocation14 + $0x200] sm:$0xff]
    %v5102 = vld [vmem:[#allocation14 + $0x208] sm:$0xff]
    %v5103 = vld [vmem:[#allocation14 + $0x210] sm:$0xff]
    %v5104 = vld [vmem:[#allocation14 + $0x218] sm:$0xff]
    %v5105 = vld [vmem:[#allocation14 + $0x220] sm:$0xff]
    %v5106 = vld [vmem:[#allocation14 + $0x228] sm:$0xff]
    %v5107 = vld [vmem:[#allocation14 + $0x230] sm:$0xff]
    %v5108 = vld [vmem:[#allocation14 + $0x238] sm:$0xff]
    %v5109 = vld [vmem:[#allocation14 + $0x240] sm:$0xff]
    %v5110 = vld [vmem:[#allocation14 + $0x248] sm:$0xff]
    %v5111 = vld [vmem:[#allocation14 + $0x250] sm:$0xff]
    %v5112 = vld [vmem:[#allocation14 + $0x258] sm:$0xff]
    %v5113 = vld [vmem:[#allocation14 + $0x260] sm:$0xff]
    %v5114 = vld [vmem:[#allocation14 + $0x268] sm:$0xff]
    %v5115 = vld [vmem:[#allocation14 + $0x270] sm:$0xff]
    %v5116 = vld [vmem:[#allocation14 + $0x278] sm:$0xff]
    %v5117 = vld [vmem:[#allocation14 + $0x280] sm:$0xff]
    %v5118 = vld [vmem:[#allocation14 + $0x288] sm:$0xff]
    %v5119 = vld [vmem:[#allocation14 + $0x290] sm:$0xff]
    %v5120 = vld [vmem:[#allocation14 + $0x298] sm:$0xff]
    %v5121 = vld [vmem:[#allocation14 + $0x2a0] sm:$0xff]
    %v5122 = vld [vmem:[#allocation14 + $0x2a8] sm:$0xff]
    %v5123 = vld [vmem:[#allocation14 + $0x2b0] sm:$0xff]
    %v5124 = vld [vmem:[#allocation14 + $0x2b8] sm:$0xff]
    %v5125 = vld [vmem:[#allocation14 + $0x2c0] sm:$0xff]
    %v5126 = vld [vmem:[#allocation14 + $0x2c8] sm:$0xff]
    %v5127 = vld [vmem:[#allocation14 + $0x2d0] sm:$0xff]
    %v5128 = vld [vmem:[#allocation14 + $0x2d8] sm:$0xff]
    %v5129 = vld [vmem:[#allocation14 + $0x2e0] sm:$0xff]
    %v5130 = vld [vmem:[#allocation14 + $0x2e8] sm:$0xff]
    %v5131 = vld [vmem:[#allocation14 + $0x2f0] sm:$0xff]
    %v5132 = vld [vmem:[#allocation14 + $0x2f8] sm:$0xff]
    %v5133 = vld [vmem:[#allocation14 + $0x300] sm:$0xff]
    %v5134 = vld [vmem:[#allocation14 + $0x308] sm:$0xff]
    %v5135 = vld [vmem:[#allocation14 + $0x310] sm:$0xff]
    %v5136 = vld [vmem:[#allocation14 + $0x318] sm:$0xff]
    %v5137 = vld [vmem:[#allocation14 + $0x320] sm:$0xff]
    %v5138 = vld [vmem:[#allocation14 + $0x328] sm:$0xff]
    %v5139 = vld [vmem:[#allocation14 + $0x330] sm:$0xff]
    %v5140 = vld [vmem:[#allocation14 + $0x338] sm:$0xff]
    %v5141 = vld [vmem:[#allocation14 + $0x340] sm:$0xff]
    %v5142 = vld [vmem:[#allocation14 + $0x348] sm:$0xff]
    %v5143 = vld [vmem:[#allocation14 + $0x350] sm:$0xff]
    %v5144 = vld [vmem:[#allocation14 + $0x358] sm:$0xff]
    %v5145 = vld [vmem:[#allocation14 + $0x360] sm:$0xff]
    %v5146 = vld [vmem:[#allocation14 + $0x368] sm:$0xff]
    %v5147 = vld [vmem:[#allocation14 + $0x370] sm:$0xff]
    %v5148 = vld [vmem:[#allocation14 + $0x378] sm:$0xff]
    %v5149 = vld [vmem:[#allocation14 + $0x380] sm:$0xff]
    %v5150 = vld [vmem:[#allocation14 + $0x388] sm:$0xff]
    %v5151 = vld [vmem:[#allocation14 + $0x390] sm:$0xff]
    %v5152 = vld [vmem:[#allocation14 + $0x398] sm:$0xff]
    %v5153 = vld [vmem:[#allocation14 + $0x3a0] sm:$0xff]
    %v5154 = vld [vmem:[#allocation14 + $0x3a8] sm:$0xff]
    %v5155 = vld [vmem:[#allocation14 + $0x3b0] sm:$0xff]
    %v5156 = vld [vmem:[#allocation14 + $0x3b8] sm:$0xff]
    %v5157 = vld [vmem:[#allocation14 + $0x3c0] sm:$0xff]
    %v5158 = vld [vmem:[#allocation14 + $0x3c8] sm:$0xff]
    %v5159 = vld [vmem:[#allocation14 + $0x3d0] sm:$0xff]
    %v5160 = vld [vmem:[#allocation14 + $0x3d8] sm:$0xff]
    %v5161 = vld [vmem:[#allocation14 + $0x3e0] sm:$0xff]
    %v5162 = vld [vmem:[#allocation14 + $0x3e8] sm:$0xff]
    %v5163 = vld [vmem:[#allocation14 + $0x3f0] sm:$0xff]
    %v5164 = vld [vmem:[#allocation14 + $0x3f8] sm:$0xff]
    %v5165 = vld [vmem:[#allocation16] sm:$0xf]
    %v5167 = vlaneseq
    %v5168 = vshrl.u32 %v5167, 7
    %v5169 = vsub.s32 0, %v5168
    %v5170 = vrot.slane %v5165, %v5169
    %v5171 = vlaneseq
    %v5172 = vshrl.u32 %v5171, 7
    %v5173 = vsub.s32 1, %v5172
    %v5174 = vrot.slane %v5165, %v5173
    %v5175 = vlaneseq
    %v5176 = vshrl.u32 %v5175, 7
    %v5177 = vsub.s32 2, %v5176
    %v5178 = vrot.slane %v5165, %v5177
    %v5179 = vlaneseq
    %v5180 = vshrl.u32 %v5179, 7
    %v5181 = vsub.s32 3, %v5180
    %v5182 = vrot.slane %v5165, %v5181
    %5187 = vmatprep.subr.mxu0 %v5038
    %5188 = vmatpush1.msra.mxu0 %v5037
    %5189 = vmatprep.subr.mxu0 %v5042
    %5190 = vmatpush1.msra.mxu0 %v5041
    %5191 = vmatprep.subr.mxu0 %v5046
    %5192 = vmatpush1.msra.mxu0 %v5045
    %5193 = vmatprep.subr.mxu0 %v5050
    %5194 = vmatpush1.msra.mxu0 %v5049
    %5195 = vmatprep.subr.mxu0 %v5054
    %5196 = vmatpush1.msra.mxu0 %v5053
    %5197 = vmatprep.subr.mxu0 %v5058
    %5198 = vmatpush1.msra.mxu0 %v5057
    %5199 = vmatprep.subr.mxu0 %v5062
    %5200 = vmatpush1.msra.mxu0 %v5061
    %5201 = vmatprep.subr.mxu0 %v5066
    %5202 = vmatpush1.msra.mxu0 %v5065
    %5203 = vmatprep.subr.mxu0 %v5070
    %5204 = vmatpush1.msra.mxu0 %v5069
    %5205 = vmatprep.subr.mxu0 %v5074
    %5206 = vmatpush1.msra.mxu0 %v5073
    %5207 = vmatprep.subr.mxu0 %v5078
    %5208 = vmatpush1.msra.mxu0 %v5077
    %5209 = vmatprep.subr.mxu0 %v5082
    %5210 = vmatpush1.msra.mxu0 %v5081
    %5211 = vmatprep.subr.mxu0 %v5086
    %5212 = vmatpush1.msra.mxu0 %v5085
    %5213 = vmatprep.subr.mxu0 %v5090
    %5214 = vmatpush1.msra.mxu0 %v5089
    %5215 = vmatprep.subr.mxu0 %v5094
    %5216 = vmatpush1.msra.mxu0 %v5093
    %5217 = vmatprep.subr.mxu0 %v5098
    %5218 = vmatpush1.msra.mxu0 %v5097
    %5219 = vmatprep.subr.mxu0 %v5102
    %5220 = vmatpush1.msra.mxu0 %v5101
    %5221 = vmatprep.subr.mxu0 %v5106
    %5222 = vmatpush1.msra.mxu0 %v5105
    %5223 = vmatprep.subr.mxu0 %v5110
    %5224 = vmatpush1.msra.mxu0 %v5109
    %5225 = vmatprep.subr.mxu0 %v5114
    %5226 = vmatpush1.msra.mxu0 %v5113
    %5227 = vmatprep.subr.mxu0 %v5118
    %5228 = vmatpush1.msra.mxu0 %v5117
    %5229 = vmatprep.subr.mxu0 %v5122
    %5230 = vmatpush1.msra.mxu0 %v5121
    %5231 = vmatprep.subr.mxu0 %v5126
    %5232 = vmatpush1.msra.mxu0 %v5125
    %5233 = vmatprep.subr.mxu0 %v5130
    %5234 = vmatpush1.msra.mxu0 %v5129
    %5235 = vmatprep.subr.mxu0 %v5134
    %5236 = vmatpush1.msra.mxu0 %v5133
    %5237 = vmatprep.subr.mxu0 %v5138
    %5238 = vmatpush1.msra.mxu0 %v5137
    %5239 = vmatprep.subr.mxu0 %v5142
    %5240 = vmatpush1.msra.mxu0 %v5141
    %5241 = vmatprep.subr.mxu0 %v5146
    %5242 = vmatpush1.msra.mxu0 %v5145
    %5243 = vmatprep.subr.mxu0 %v5150
    %5244 = vmatpush1.msra.mxu0 %v5149
    %5245 = vmatprep.subr.mxu0 %v5154
    %5246 = vmatpush1.msra.mxu0 %v5153
    %5247 = vmatprep.subr.mxu0 %v5158
    %5248 = vmatpush1.msra.mxu0 %v5157
    %5249 = vmatprep.subr.mxu0 %v5162
    %5250 = vmatpush1.msra.mxu0 %v5161
    %5251 = vmatprep.mubr.f32.mxu0 %v4942
    %5252 = vmatmul.mubr.f32.gmra.mrb[0].mxu0 %v5033
    %v5253 = vpop.f32.mrb[0].mxu0
    %v5254 = vadd.f32 %v5170, %v5253
    %v5255 = vpop.f32.mrb[0].mxu0
    %v5256 = vadd.f32 %v5174, %v5255
    %5257 = vdwg.mxu0
    %5258 = vmatprep.subr.mxu0 %v5040
    %5259 = vmatpush1.msra.mxu0 %v5039
    %5260 = vmatprep.subr.mxu0 %v5044
    %5261 = vmatpush1.msra.mxu0 %v5043
    %5262 = vmatprep.subr.mxu0 %v5048
    %5263 = vmatpush1.msra.mxu0 %v5047
    %5264 = vmatprep.subr.mxu0 %v5052
    %5265 = vmatpush1.msra.mxu0 %v5051
    %5266 = vmatprep.subr.mxu0 %v5056
    %5267 = vmatpush1.msra.mxu0 %v5055
    %5268 = vmatprep.subr.mxu0 %v5060
    %5269 = vmatpush1.msra.mxu0 %v5059
    %5270 = vmatprep.subr.mxu0 %v5064
    %5271 = vmatpush1.msra.mxu0 %v5063
    %5272 = vmatprep.subr.mxu0 %v5068
    %5273 = vmatpush1.msra.mxu0 %v5067
    %5274 = vmatprep.subr.mxu0 %v5072
    %5275 = vmatpush1.msra.mxu0 %v5071
    %5276 = vmatprep.subr.mxu0 %v5076
    %5277 = vmatpush1.msra.mxu0 %v5075
    %5278 = vmatprep.subr.mxu0 %v5080
    %5279 = vmatpush1.msra.mxu0 %v5079
    %5280 = vmatprep.subr.mxu0 %v5084
    %5281 = vmatpush1.msra.mxu0 %v5083
    %5282 = vmatprep.subr.mxu0 %v5088
    %5283 = vmatpush1.msra.mxu0 %v5087
    %5284 = vmatprep.subr.mxu0 %v5092
    %5285 = vmatpush1.msra.mxu0 %v5091
    %5286 = vmatprep.subr.mxu0 %v5096
    %5287 = vmatpush1.msra.mxu0 %v5095
    %5288 = vmatprep.subr.mxu0 %v5100
    %5289 = vmatpush1.msra.mxu0 %v5099
    %5290 = vmatprep.subr.mxu0 %v5104
    %5291 = vmatpush1.msra.mxu0 %v5103
    %5292 = vmatprep.subr.mxu0 %v5108
    %5293 = vmatpush1.msra.mxu0 %v5107
    %5294 = vmatprep.subr.mxu0 %v5112
    %5295 = vmatpush1.msra.mxu0 %v5111
    %5296 = vmatprep.subr.mxu0 %v5116
    %5297 = vmatpush1.msra.mxu0 %v5115
    %5298 = vmatprep.subr.mxu0 %v5120
    %5299 = vmatpush1.msra.mxu0 %v5119
    %5300 = vmatprep.subr.mxu0 %v5124
    %5301 = vmatpush1.msra.mxu0 %v5123
    %5302 = vmatprep.subr.mxu0 %v5128
    %5303 = vmatpush1.msra.mxu0 %v5127
    %5304 = vmatprep.subr.mxu0 %v5132
    %5305 = vmatpush1.msra.mxu0 %v5131
    %5306 = vmatprep.subr.mxu0 %v5136
    %5307 = vmatpush1.msra.mxu0 %v5135
    %5308 = vmatprep.subr.mxu0 %v5140
    %5309 = vmatpush1.msra.mxu0 %v5139
    %5310 = vmatprep.subr.mxu0 %v5144
    %5311 = vmatpush1.msra.mxu0 %v5143
    %5312 = vmatprep.subr.mxu0 %v5148
    %5313 = vmatpush1.msra.mxu0 %v5147
    %5314 = vmatprep.subr.mxu0 %v5152
    %5315 = vmatpush1.msra.mxu0 %v5151
    %5316 = vmatprep.subr.mxu0 %v5156
    %5317 = vmatpush1.msra.mxu0 %v5155
    %5318 = vmatprep.subr.mxu0 %v5160
    %5319 = vmatpush1.msra.mxu0 %v5159
    %5320 = vmatprep.subr.mxu0 %v5164
    %5321 = vmatpush1.msra.mxu0 %v5163
    %5322 = vmatprep.mubr.f32.mxu0 %v4942
    %5323 = vmatmul.mubr.f32.gmra.mrb[0].mxu0 %v5033
    %v5324 = vpop.f32.mrb[0].mxu0
    %v5325 = vadd.f32 %v5178, %v5324
    %v5326 = vpop.f32.mrb[0].mxu0
    %v5327 = vadd.f32 %v5182, %v5326
    %5328 = vdwg.mxu0
    %v5329 = vxor.u32 %v5254, 2147483648
    %v5330 = vxor.u32 %v5256, 2147483648
    %v5331 = vxor.u32 %v5325, 2147483648
    %v5332 = vmul.f32 %v5329, 1.442695
    %v5333 = vpow.pop %v5332
    %v5334 = vmul.f32 %v5330, 1.442695
    %v5335 = vpow.pop %v5334
    %v5336 = vmul.f32 %v5331, 1.442695
    %v5337 = vpow.pop %v5336
    %v5338 = vadd.f32 %v5333, 1.0
    %v5339 = vadd.f32 %v5335, 1.0
    %v5340 = vadd.f32 %v5337, 1.0
    %v5341 = vrcp.pop %v5338
    %v5342 = vmul.f32 1.0, %v5341
    %v5343 = vrcp.pop %v5339
    %v5344 = vmul.f32 1.0, %v5343
    %v5345 = vrcp.pop %v5340
    %v5346 = vmul.f32 1.0, %v5345
    %v5347 = vtanh.pop %v5327
    %v5348 = vmul.f32 %v5344, %v4940
    %v5349 = vmul.f32 %v5342, %v5347
    %v5350 = vadd.f32 %v5348, %v5349
    %v5351 = vtanh.pop %v5350
    %v5352 = vmul.f32 %v5346, %v5351
    %v5353 = vld [vmem:[#allocation17] sm:$0xff]
    %v5354 = vld [vmem:[#allocation17 + $0x8] sm:$0xff]
    %v5355 = vld [vmem:[#allocation17 + $0x10] sm:$0xff]
    %v5356 = vld [vmem:[#allocation17 + $0x18] sm:$0xff]
    %v5357 = vld [vmem:[#allocation17 + $0x20] sm:$0xff]
    %v5358 = vld [vmem:[#allocation17 + $0x28] sm:$0xff]
    %v5359 = vld [vmem:[#allocation17 + $0x30] sm:$0xff]
    %v5360 = vld [vmem:[#allocation17 + $0x38] sm:$0xff]
    %v5361 = vld [vmem:[#allocation17 + $0x40] sm:$0xff]
    %v5362 = vld [vmem:[#allocation17 + $0x48] sm:$0xff]
    %v5363 = vld [vmem:[#allocation17 + $0x50] sm:$0xff]
    %v5364 = vld [vmem:[#allocation17 + $0x58] sm:$0xff]
    %v5365 = vld [vmem:[#allocation17 + $0x60] sm:$0xff]
    %v5366 = vld [vmem:[#allocation17 + $0x68] sm:$0xff]
    %v5367 = vld [vmem:[#allocation17 + $0x70] sm:$0xff]
    %v5368 = vld [vmem:[#allocation17 + $0x78] sm:$0xff]
    %v5369 = vld [vmem:[#allocation19] sm:$0x1]
    %v5371 = vlaneseq
    %v5372 = vshrl.u32 %v5371, 7
    %v5373 = vsub.s32 0, %v5372
    %v5374 = vrot.slane %v5369, %v5373
    %5376 = vmatprep.subr.mxu0 0.0
    %5377 = vmatpush1.msra.mxu0 %v5353
    %5378 = vmatprep.subr.mxu0 0.0
    %5379 = vmatpush1.msra.mxu0 %v5354
    %5380 = vmatprep.subr.mxu0 0.0
    %5381 = vmatpush1.msra.mxu0 %v5355
    %5382 = vmatprep.subr.mxu0 0.0
    %5383 = vmatpush1.msra.mxu0 %v5356
    %5384 = vmatprep.subr.mxu0 0.0
    %5385 = vmatpush1.msra.mxu0 %v5357
    %5386 = vmatprep.subr.mxu0 0.0
    %5387 = vmatpush1.msra.mxu0 %v5358
    %5388 = vmatprep.subr.mxu0 0.0
    %5389 = vmatpush1.msra.mxu0 %v5359
    %5390 = vmatprep.subr.mxu0 0.0
    %5391 = vmatpush1.msra.mxu0 %v5360
    %5392 = vmatprep.subr.mxu0 0.0
    %5393 = vmatpush1.msra.mxu0 %v5361
    %5394 = vmatprep.subr.mxu0 0.0
    %5395 = vmatpush1.msra.mxu0 %v5362
    %5396 = vmatprep.subr.mxu0 0.0
    %5397 = vmatpush1.msra.mxu0 %v5363
    %5398 = vmatprep.subr.mxu0 0.0
    %5399 = vmatpush1.msra.mxu0 %v5364
    %5400 = vmatprep.subr.mxu0 0.0
    %5401 = vmatpush1.msra.mxu0 %v5365
    %5402 = vmatprep.subr.mxu0 0.0
    %5403 = vmatpush1.msra.mxu0 %v5366
    %5404 = vmatprep.subr.mxu0 0.0
    %5405 = vmatpush1.msra.mxu0 %v5367
    %5406 = vmatprep.subr.mxu0 0.0
    %5407 = vmatpush1.msra.mxu0 %v5368
    %5408 = vmatprep.subr.mxu0 0.0
    %5409 = vmatpush1.msra.mxu0 0.0
    %5410 = vmatprep.subr.mxu0 0.0
    %5411 = vmatpush1.msra.mxu0 0.0
    %5412 = vmatprep.subr.mxu0 0.0
    %5413 = vmatpush1.msra.mxu0 0.0
    %5414 = vmatprep.subr.mxu0 0.0
    %5415 = vmatpush1.msra.mxu0 0.0
    %5416 = vmatprep.subr.mxu0 0.0
    %5417 = vmatpush1.msra.mxu0 0.0
    %5418 = vmatprep.subr.mxu0 0.0
    %5419 = vmatpush1.msra.mxu0 0.0
    %5420 = vmatprep.subr.mxu0 0.0
    %5421 = vmatpush1.msra.mxu0 0.0
    %5422 = vmatprep.subr.mxu0 0.0
    %5423 = vmatpush1.msra.mxu0 0.0
    %5424 = vmatprep.subr.mxu0 0.0
    %5425 = vmatpush1.msra.mxu0 0.0
    %5426 = vmatprep.subr.mxu0 0.0
    %5427 = vmatpush1.msra.mxu0 0.0
    %5428 = vmatprep.subr.mxu0 0.0
    %5429 = vmatpush1.msra.mxu0 0.0
    %5430 = vmatprep.subr.mxu0 0.0
    %5431 = vmatpush1.msra.mxu0 0.0
    %5432 = vmatprep.subr.mxu0 0.0
    %5433 = vmatpush1.msra.mxu0 0.0
    %5434 = vmatprep.subr.mxu0 0.0
    %5435 = vmatpush1.msra.mxu0 0.0
    %5436 = vmatprep.subr.mxu0 0.0
    %5437 = vmatpush1.msra.mxu0 0.0
    %5438 = vmatprep.subr.mxu0 0.0
    %5439 = vmatpush1.msra.mxu0 0.0
    %5440 = vmatprep.mubr.f32.mxu0 0.0
    %5441 = vmatmul.mubr.f32.gmra.mrb[0].mxu0 %v5352
    %v5442 = vpop.f32.mrb[0].mxu0
    %v5443 = vadd.f32 %v5374, %v5442
    %v5444 = vpop.f32.mrb[0].mxu0
    %5445 = vdwg.mxu0
    %s5446 = scalar_lea.vmem [#allocation20], 8
    %5447 = vst [vmem:[%s5446] sm:$0xff] %v5443
    %v5448 = vld [vmem:[#allocation14] sm:$0xff]
    %v5449 = vld [vmem:[#allocation14 + $0x8] sm:$0xff]
    %v5450 = vld [vmem:[#allocation14 + $0x10] sm:$0xff]
    %v5451 = vld [vmem:[#allocation14 + $0x18] sm:$0xff]
    %v5452 = vld [vmem:[#allocation14 + $0x20] sm:$0xff]
    %v5453 = vld [vmem:[#allocation14 + $0x28] sm:$0xff]
    %v5454 = vld [vmem:[#allocation14 + $0x30] sm:$0xff]
    %v5455 = vld [vmem:[#allocation14 + $0x38] sm:$0xff]
    %v5456 = vld [vmem:[#allocation14 + $0x40] sm:$0xff]
    %v5457 = vld [vmem:[#allocation14 + $0x48] sm:$0xff]
    %v5458 = vld [vmem:[#allocation14 + $0x50] sm:$0xff]
    %v5459 = vld [vmem:[#allocation14 + $0x58] sm:$0xff]
    %v5460 = vld [vmem:[#allocation14 + $0x60] sm:$0xff]
    %v5461 = vld [vmem:[#allocation14 + $0x68] sm:$0xff]
    %v5462 = vld [vmem:[#allocation14 + $0x70] sm:$0xff]
    %v5463 = vld [vmem:[#allocation14 + $0x78] sm:$0xff]
    %v5464 = vld [vmem:[#allocation14 + $0x80] sm:$0xff]
    %v5465 = vld [vmem:[#allocation14 + $0x88] sm:$0xff]
    %v5466 = vld [vmem:[#allocation14 + $0x90] sm:$0xff]
    %v5467 = vld [vmem:[#allocation14 + $0x98] sm:$0xff]
    %v5468 = vld [vmem:[#allocation14 + $0xa0] sm:$0xff]
    %v5469 = vld [vmem:[#allocation14 + $0xa8] sm:$0xff]
    %v5470 = vld [vmem:[#allocation14 + $0xb0] sm:$0xff]
    %v5471 = vld [vmem:[#allocation14 + $0xb8] sm:$0xff]
    %v5472 = vld [vmem:[#allocation14 + $0xc0] sm:$0xff]
    %v5473 = vld [vmem:[#allocation14 + $0xc8] sm:$0xff]
    %v5474 = vld [vmem:[#allocation14 + $0xd0] sm:$0xff]
    %v5475 = vld [vmem:[#allocation14 + $0xd8] sm:$0xff]
    %v5476 = vld [vmem:[#allocation14 + $0xe0] sm:$0xff]
    %v5477 = vld [vmem:[#allocation14 + $0xe8] sm:$0xff]
    %v5478 = vld [vmem:[#allocation14 + $0xf0] sm:$0xff]
    %v5479 = vld [vmem:[#allocation14 + $0xf8] sm:$0xff]
    %v5480 = vld [vmem:[#allocation14 + $0x100] sm:$0xff]
    %v5481 = vld [vmem:[#allocation14 + $0x108] sm:$0xff]
    %v5482 = vld [vmem:[#allocation14 + $0x110] sm:$0xff]
    %v5483 = vld [vmem:[#allocation14 + $0x118] sm:$0xff]
    %v5484 = vld [vmem:[#allocation14 + $0x120] sm:$0xff]
    %v5485 = vld [vmem:[#allocation14 + $0x128] sm:$0xff]
    %v5486 = vld [vmem:[#allocation14 + $0x130] sm:$0xff]
    %v5487 = vld [vmem:[#allocation14 + $0x138] sm:$0xff]
    %v5488 = vld [vmem:[#allocation14 + $0x140] sm:$0xff]
    %v5489 = vld [vmem:[#allocation14 + $0x148] sm:$0xff]
    %v5490 = vld [vmem:[#allocation14 + $0x150] sm:$0xff]
    %v5491 = vld [vmem:[#allocation14 + $0x158] sm:$0xff]
    %v5492 = vld [vmem:[#allocation14 + $0x160] sm:$0xff]
    %v5493 = vld [vmem:[#allocation14 + $0x168] sm:$0xff]
    %v5494 = vld [vmem:[#allocation14 + $0x170] sm:$0xff]
    %v5495 = vld [vmem:[#allocation14 + $0x178] sm:$0xff]
    %v5496 = vld [vmem:[#allocation14 + $0x180] sm:$0xff]
    %v5497 = vld [vmem:[#allocation14 + $0x188] sm:$0xff]
    %v5498 = vld [vmem:[#allocation14 + $0x190] sm:$0xff]
    %v5499 = vld [vmem:[#allocation14 + $0x198] sm:$0xff]
    %v5500 = vld [vmem:[#allocation14 + $0x1a0] sm:$0xff]
    %v5501 = vld [vmem:[#allocation14 + $0x1a8] sm:$0xff]
    %v5502 = vld [vmem:[#allocation14 + $0x1b0] sm:$0xff]
    %v5503 = vld [vmem:[#allocation14 + $0x1b8] sm:$0xff]
    %v5504 = vld [vmem:[#allocation14 + $0x1c0] sm:$0xff]
    %v5505 = vld [vmem:[#allocation14 + $0x1c8] sm:$0xff]
    %v5506 = vld [vmem:[#allocation14 + $0x1d0] sm:$0xff]
    %v5507 = vld [vmem:[#allocation14 + $0x1d8] sm:$0xff]
    %v5508 = vld [vmem:[#allocation14 + $0x1e0] sm:$0xff]
    %v5509 = vld [vmem:[#allocation14 + $0x1e8] sm:$0xff]
    %v5510 = vld [vmem:[#allocation14 + $0x1f0] sm:$0xff]
    %v5511 = vld [vmem:[#allocation14 + $0x1f8] sm:$0xff]
    %v5512 = vld [vmem:[#allocation14 + $0x200] sm:$0xff]
    %v5513 = vld [vmem:[#allocation14 + $0x208] sm:$0xff]
    %v5514 = vld [vmem:[#allocation14 + $0x210] sm:$0xff]
    %v5515 = vld [vmem:[#allocation14 + $0x218] sm:$0xff]
    %v5516 = vld [vmem:[#allocation14 + $0x220] sm:$0xff]
    %v5517 = vld [vmem:[#allocation14 + $0x228] sm:$0xff]
    %v5518 = vld [vmem:[#allocation14 + $0x230] sm:$0xff]
    %v5519 = vld [vmem:[#allocation14 + $0x238] sm:$0xff]
    %v5520 = vld [vmem:[#allocation14 + $0x240] sm:$0xff]
    %v5521 = vld [vmem:[#allocation14 + $0x248] sm:$0xff]
    %v5522 = vld [vmem:[#allocation14 + $0x250] sm:$0xff]
    %v5523 = vld [vmem:[#allocation14 + $0x258] sm:$0xff]
    %v5524 = vld [vmem:[#allocation14 + $0x260] sm:$0xff]
    %v5525 = vld [vmem:[#allocation14 + $0x268] sm:$0xff]
    %v5526 = vld [vmem:[#allocation14 + $0x270] sm:$0xff]
    %v5527 = vld [vmem:[#allocation14 + $0x278] sm:$0xff]
    %v5528 = vld [vmem:[#allocation14 + $0x280] sm:$0xff]
    %v5529 = vld [vmem:[#allocation14 + $0x288] sm:$0xff]
    %v5530 = vld [vmem:[#allocation14 + $0x290] sm:$0xff]
    %v5531 = vld [vmem:[#allocation14 + $0x298] sm:$0xff]
    %v5532 = vld [vmem:[#allocation14 + $0x2a0] sm:$0xff]
    %v5533 = vld [vmem:[#allocation14 + $0x2a8] sm:$0xff]
    %v5534 = vld [vmem:[#allocation14 + $0x2b0] sm:$0xff]
    %v5535 = vld [vmem:[#allocation14 + $0x2b8] sm:$0xff]
    %v5536 = vld [vmem:[#allocation14 + $0x2c0] sm:$0xff]
    %v5537 = vld [vmem:[#allocation14 + $0x2c8] sm:$0xff]
    %v5538 = vld [vmem:[#allocation14 + $0x2d0] sm:$0xff]
    %v5539 = vld [vmem:[#allocation14 + $0x2d8] sm:$0xff]
    %v5540 = vld [vmem:[#allocation14 + $0x2e0] sm:$0xff]
    %v5541 = vld [vmem:[#allocation14 + $0x2e8] sm:$0xff]
    %v5542 = vld [vmem:[#allocation14 + $0x2f0] sm:$0xff]
    %v5543 = vld [vmem:[#allocation14 + $0x2f8] sm:$0xff]
    %v5544 = vld [vmem:[#allocation14 + $0x300] sm:$0xff]
    %v5545 = vld [vmem:[#allocation14 + $0x308] sm:$0xff]
    %v5546 = vld [vmem:[#allocation14 + $0x310] sm:$0xff]
    %v5547 = vld [vmem:[#allocation14 + $0x318] sm:$0xff]
    %v5548 = vld [vmem:[#allocation14 + $0x320] sm:$0xff]
    %v5549 = vld [vmem:[#allocation14 + $0x328] sm:$0xff]
    %v5550 = vld [vmem:[#allocation14 + $0x330] sm:$0xff]
    %v5551 = vld [vmem:[#allocation14 + $0x338] sm:$0xff]
    %v5552 = vld [vmem:[#allocation14 + $0x340] sm:$0xff]
    %v5553 = vld [vmem:[#allocation14 + $0x348] sm:$0xff]
    %v5554 = vld [vmem:[#allocation14 + $0x350] sm:$0xff]
    %v5555 = vld [vmem:[#allocation14 + $0x358] sm:$0xff]
    %v5556 = vld [vmem:[#allocation14 + $0x360] sm:$0xff]
    %v5557 = vld [vmem:[#allocation14 + $0x368] sm:$0xff]
    %v5558 = vld [vmem:[#allocation14 + $0x370] sm:$0xff]
    %v5559 = vld [vmem:[#allocation14 + $0x378] sm:$0xff]
    %v5560 = vld [vmem:[#allocation14 + $0x380] sm:$0xff]
    %v5561 = vld [vmem:[#allocation14 + $0x388] sm:$0xff]
    %v5562 = vld [vmem:[#allocation14 + $0x390] sm:$0xff]
    %v5563 = vld [vmem:[#allocation14 + $0x398] sm:$0xff]
    %v5564 = vld [vmem:[#allocation14 + $0x3a0] sm:$0xff]
    %v5565 = vld [vmem:[#allocation14 + $0x3a8] sm:$0xff]
    %v5566 = vld [vmem:[#allocation14 + $0x3b0] sm:$0xff]
    %v5567 = vld [vmem:[#allocation14 + $0x3b8] sm:$0xff]
    %v5568 = vld [vmem:[#allocation14 + $0x3c0] sm:$0xff]
    %v5569 = vld [vmem:[#allocation14 + $0x3c8] sm:$0xff]
    %v5570 = vld [vmem:[#allocation14 + $0x3d0] sm:$0xff]
    %v5571 = vld [vmem:[#allocation14 + $0x3d8] sm:$0xff]
    %v5572 = vld [vmem:[#allocation14 + $0x3e0] sm:$0xff]
    %v5573 = vld [vmem:[#allocation14 + $0x3e8] sm:$0xff]
    %v5574 = vld [vmem:[#allocation14 + $0x3f0] sm:$0xff]
    %v5575 = vld [vmem:[#allocation14 + $0x3f8] sm:$0xff]
    %v5576 = vld [vmem:[#allocation16] sm:$0xf]
    %v5578 = vlaneseq
    %v5579 = vshrl.u32 %v5578, 7
    %v5580 = vsub.s32 0, %v5579
    %v5581 = vrot.slane %v5576, %v5580
    %v5582 = vlaneseq
    %v5583 = vshrl.u32 %v5582, 7
    %v5584 = vsub.s32 1, %v5583
    %v5585 = vrot.slane %v5576, %v5584
    %v5586 = vlaneseq
    %v5587 = vshrl.u32 %v5586, 7
    %v5588 = vsub.s32 2, %v5587
    %v5589 = vrot.slane %v5576, %v5588
    %v5590 = vlaneseq
    %v5591 = vshrl.u32 %v5590, 7
    %v5592 = vsub.s32 3, %v5591
    %v5593 = vrot.slane %v5576, %v5592
    %5598 = vmatprep.subr.mxu0 %v5449
    %5599 = vmatpush1.msra.mxu0 %v5448
    %5600 = vmatprep.subr.mxu0 %v5453
    %5601 = vmatpush1.msra.mxu0 %v5452
    %5602 = vmatprep.subr.mxu0 %v5457
    %5603 = vmatpush1.msra.mxu0 %v5456
    %5604 = vmatprep.subr.mxu0 %v5461
    %5605 = vmatpush1.msra.mxu0 %v5460
    %5606 = vmatprep.subr.mxu0 %v5465
    %5607 = vmatpush1.msra.mxu0 %v5464
    %5608 = vmatprep.subr.mxu0 %v5469
    %5609 = vmatpush1.msra.mxu0 %v5468
    %5610 = vmatprep.subr.mxu0 %v5473
    %5611 = vmatpush1.msra.mxu0 %v5472
    %5612 = vmatprep.subr.mxu0 %v5477
    %5613 = vmatpush1.msra.mxu0 %v5476
    %5614 = vmatprep.subr.mxu0 %v5481
    %5615 = vmatpush1.msra.mxu0 %v5480
    %5616 = vmatprep.subr.mxu0 %v5485
    %5617 = vmatpush1.msra.mxu0 %v5484
    %5618 = vmatprep.subr.mxu0 %v5489
    %5619 = vmatpush1.msra.mxu0 %v5488
    %5620 = vmatprep.subr.mxu0 %v5493
    %5621 = vmatpush1.msra.mxu0 %v5492
    %5622 = vmatprep.subr.mxu0 %v5497
    %5623 = vmatpush1.msra.mxu0 %v5496
    %5624 = vmatprep.subr.mxu0 %v5501
    %5625 = vmatpush1.msra.mxu0 %v5500
    %5626 = vmatprep.subr.mxu0 %v5505
    %5627 = vmatpush1.msra.mxu0 %v5504
    %5628 = vmatprep.subr.mxu0 %v5509
    %5629 = vmatpush1.msra.mxu0 %v5508
    %5630 = vmatprep.subr.mxu0 %v5513
    %5631 = vmatpush1.msra.mxu0 %v5512
    %5632 = vmatprep.subr.mxu0 %v5517
    %5633 = vmatpush1.msra.mxu0 %v5516
    %5634 = vmatprep.subr.mxu0 %v5521
    %5635 = vmatpush1.msra.mxu0 %v5520
    %5636 = vmatprep.subr.mxu0 %v5525
    %5637 = vmatpush1.msra.mxu0 %v5524
    %5638 = vmatprep.subr.mxu0 %v5529
    %5639 = vmatpush1.msra.mxu0 %v5528
    %5640 = vmatprep.subr.mxu0 %v5533
    %5641 = vmatpush1.msra.mxu0 %v5532
    %5642 = vmatprep.subr.mxu0 %v5537
    %5643 = vmatpush1.msra.mxu0 %v5536
    %5644 = vmatprep.subr.mxu0 %v5541
    %5645 = vmatpush1.msra.mxu0 %v5540
    %5646 = vmatprep.subr.mxu0 %v5545
    %5647 = vmatpush1.msra.mxu0 %v5544
    %5648 = vmatprep.subr.mxu0 %v5549
    %5649 = vmatpush1.msra.mxu0 %v5548
    %5650 = vmatprep.subr.mxu0 %v5553
    %5651 = vmatpush1.msra.mxu0 %v5552
    %5652 = vmatprep.subr.mxu0 %v5557
    %5653 = vmatpush1.msra.mxu0 %v5556
    %5654 = vmatprep.subr.mxu0 %v5561
    %5655 = vmatpush1.msra.mxu0 %v5560
    %5656 = vmatprep.subr.mxu0 %v5565
    %5657 = vmatpush1.msra.mxu0 %v5564
    %5658 = vmatprep.subr.mxu0 %v5569
    %5659 = vmatpush1.msra.mxu0 %v5568
    %5660 = vmatprep.subr.mxu0 %v5573
    %5661 = vmatpush1.msra.mxu0 %v5572
    %5662 = vmatprep.mubr.f32.mxu0 %v5352
    %5663 = vmatmul.mubr.f32.gmra.mrb[0].mxu0 %v5443
    %v5664 = vpop.f32.mrb[0].mxu0
    %v5665 = vadd.f32 %v5581, %v5664
    %v5666 = vpop.f32.mrb[0].mxu0
    %v5667 = vadd.f32 %v5585, %v5666
    %5668 = vdwg.mxu0
    %5669 = vmatprep.subr.mxu0 %v5451
    %5670 = vmatpush1.msra.mxu0 %v5450
    %5671 = vmatprep.subr.mxu0 %v5455
    %5672 = vmatpush1.msra.mxu0 %v5454
    %5673 = vmatprep.subr.mxu0 %v5459
    %5674 = vmatpush1.msra.mxu0 %v5458
    %5675 = vmatprep.subr.mxu0 %v5463
    %5676 = vmatpush1.msra.mxu0 %v5462
    %5677 = vmatprep.subr.mxu0 %v5467
    %5678 = vmatpush1.msra.mxu0 %v5466
    %5679 = vmatprep.subr.mxu0 %v5471
    %5680 = vmatpush1.msra.mxu0 %v5470
    %5681 = vmatprep.subr.mxu0 %v5475
    %5682 = vmatpush1.msra.mxu0 %v5474
    %5683 = vmatprep.subr.mxu0 %v5479
    %5684 = vmatpush1.msra.mxu0 %v5478
    %5685 = vmatprep.subr.mxu0 %v5483
    %5686 = vmatpush1.msra.mxu0 %v5482
    %5687 = vmatprep.subr.mxu0 %v5487
    %5688 = vmatpush1.msra.mxu0 %v5486
    %5689 = vmatprep.subr.mxu0 %v5491
    %5690 = vmatpush1.msra.mxu0 %v5490
    %5691 = vmatprep.subr.mxu0 %v5495
    %5692 = vmatpush1.msra.mxu0 %v5494
    %5693 = vmatprep.subr.mxu0 %v5499
    %5694 = vmatpush1.msra.mxu0 %v5498
    %5695 = vmatprep.subr.mxu0 %v5503
    %5696 = vmatpush1.msra.mxu0 %v5502
    %5697 = vmatprep.subr.mxu0 %v5507
    %5698 = vmatpush1.msra.mxu0 %v5506
    %5699 = vmatprep.subr.mxu0 %v5511
    %5700 = vmatpush1.msra.mxu0 %v5510
    %5701 = vmatprep.subr.mxu0 %v5515
    %5702 = vmatpush1.msra.mxu0 %v5514
    %5703 = vmatprep.subr.mxu0 %v5519
    %5704 = vmatpush1.msra.mxu0 %v5518
    %5705 = vmatprep.subr.mxu0 %v5523
    %5706 = vmatpush1.msra.mxu0 %v5522
    %5707 = vmatprep.subr.mxu0 %v5527
    %5708 = vmatpush1.msra.mxu0 %v5526
    %5709 = vmatprep.subr.mxu0 %v5531
    %5710 = vmatpush1.msra.mxu0 %v5530
    %5711 = vmatprep.subr.mxu0 %v5535
    %5712 = vmatpush1.msra.mxu0 %v5534
    %5713 = vmatprep.subr.mxu0 %v5539
    %5714 = vmatpush1.msra.mxu0 %v5538
    %5715 = vmatprep.subr.mxu0 %v5543
    %5716 = vmatpush1.msra.mxu0 %v5542
    %5717 = vmatprep.subr.mxu0 %v5547
    %5718 = vmatpush1.msra.mxu0 %v5546
    %5719 = vmatprep.subr.mxu0 %v5551
    %5720 = vmatpush1.msra.mxu0 %v5550
    %5721 = vmatprep.subr.mxu0 %v5555
    %5722 = vmatpush1.msra.mxu0 %v5554
    %5723 = vmatprep.subr.mxu0 %v5559
    %5724 = vmatpush1.msra.mxu0 %v5558
    %5725 = vmatprep.subr.mxu0 %v5563
    %5726 = vmatpush1.msra.mxu0 %v5562
    %5727 = vmatprep.subr.mxu0 %v5567
    %5728 = vmatpush1.msra.mxu0 %v5566
    %5729 = vmatprep.subr.mxu0 %v5571
    %5730 = vmatpush1.msra.mxu0 %v5570
    %5731 = vmatprep.subr.mxu0 %v5575
    %5732 = vmatpush1.msra.mxu0 %v5574
    %5733 = vmatprep.mubr.f32.mxu0 %v5352
    %5734 = vmatmul.mubr.f32.gmra.mrb[0].mxu0 %v5443
    %v5735 = vpop.f32.mrb[0].mxu0
    %v5736 = vadd.f32 %v5589, %v5735
    %v5737 = vpop.f32.mrb[0].mxu0
    %v5738 = vadd.f32 %v5593, %v5737
    %5739 = vdwg.mxu0
    %v5740 = vxor.u32 %v5665, 2147483648
    %v5741 = vxor.u32 %v5667, 2147483648
    %v5742 = vxor.u32 %v5736, 2147483648
    %v5743 = vmul.f32 %v5740, 1.442695
    %v5744 = vpow.pop %v5743
    %v5745 = vmul.f32 %v5741, 1.442695
    %v5746 = vpow.pop %v5745
    %v5747 = vmul.f32 %v5742, 1.442695
    %v5748 = vpow.pop %v5747
    %v5749 = vadd.f32 %v5744, 1.0
    %v5750 = vadd.f32 %v5746, 1.0
    %v5751 = vadd.f32 %v5748, 1.0
    %v5752 = vrcp.pop %v5749
    %v5753 = vmul.f32 1.0, %v5752
    %v5754 = vrcp.pop %v5750
    %v5755 = vmul.f32 1.0, %v5754
    %v5756 = vrcp.pop %v5751
    %v5757 = vmul.f32 1.0, %v5756
    %v5758 = vtanh.pop %v5738
    %v5759 = vmul.f32 %v5755, %v5350
    %v5760 = vmul.f32 %v5753, %v5758
    %v5761 = vadd.f32 %v5759, %v5760
    %v5762 = vtanh.pop %v5761
    %v5763 = vmul.f32 %v5757, %v5762
    %v5764 = vld [vmem:[#allocation17] sm:$0xff]
    %v5765 = vld [vmem:[#allocation17 + $0x8] sm:$0xff]
    %v5766 = vld [vmem:[#allocation17 + $0x10] sm:$0xff]
    %v5767 = vld [vmem:[#allocation17 + $0x18] sm:$0xff]
    %v5768 = vld [vmem:[#allocation17 + $0x20] sm:$0xff]
    %v5769 = vld [vmem:[#allocation17 + $0x28] sm:$0xff]
    %v5770 = vld [vmem:[#allocation17 + $0x30] sm:$0xff]
    %v5771 = vld [vmem:[#allocation17 + $0x38] sm:$0xff]
    %v5772 = vld [vmem:[#allocation17 + $0x40] sm:$0xff]
    %v5773 = vld [vmem:[#allocation17 + $0x48] sm:$0xff]
    %v5774 = vld [vmem:[#allocation17 + $0x50] sm:$0xff]
    %v5775 = vld [vmem:[#allocation17 + $0x58] sm:$0xff]
    %v5776 = vld [vmem:[#allocation17 + $0x60] sm:$0xff]
    %v5777 = vld [vmem:[#allocation17 + $0x68] sm:$0xff]
    %v5778 = vld [vmem:[#allocation17 + $0x70] sm:$0xff]
    %v5779 = vld [vmem:[#allocation17 + $0x78] sm:$0xff]
    %v5780 = vld [vmem:[#allocation19] sm:$0x1]
    %v5782 = vlaneseq
    %v5783 = vshrl.u32 %v5782, 7
    %v5784 = vsub.s32 0, %v5783
    %v5785 = vrot.slane %v5780, %v5784
    %5787 = vmatprep.subr.mxu0 0.0
    %5788 = vmatpush1.msra.mxu0 %v5764
    %5789 = vmatprep.subr.mxu0 0.0
    %5790 = vmatpush1.msra.mxu0 %v5765
    %5791 = vmatprep.subr.mxu0 0.0
    %5792 = vmatpush1.msra.mxu0 %v5766
    %5793 = vmatprep.subr.mxu0 0.0
    %5794 = vmatpush1.msra.mxu0 %v5767
    %5795 = vmatprep.subr.mxu0 0.0
    %5796 = vmatpush1.msra.mxu0 %v5768
    %5797 = vmatprep.subr.mxu0 0.0
    %5798 = vmatpush1.msra.mxu0 %v5769
    %5799 = vmatprep.subr.mxu0 0.0
    %5800 = vmatpush1.msra.mxu0 %v5770
    %5801 = vmatprep.subr.mxu0 0.0
    %5802 = vmatpush1.msra.mxu0 %v5771
    %5803 = vmatprep.subr.mxu0 0.0
    %5804 = vmatpush1.msra.mxu0 %v5772
    %5805 = vmatprep.subr.mxu0 0.0
    %5806 = vmatpush1.msra.mxu0 %v5773
    %5807 = vmatprep.subr.mxu0 0.0
    %5808 = vmatpush1.msra.mxu0 %v5774
    %5809 = vmatprep.subr.mxu0 0.0
    %5810 = vmatpush1.msra.mxu0 %v5775
    %5811 = vmatprep.subr.mxu0 0.0
    %5812 = vmatpush1.msra.mxu0 %v5776
    %5813 = vmatprep.subr.mxu0 0.0
    %5814 = vmatpush1.msra.mxu0 %v5777
    %5815 = vmatprep.subr.mxu0 0.0
    %5816 = vmatpush1.msra.mxu0 %v5778
    %5817 = vmatprep.subr.mxu0 0.0
    %5818 = vmatpush1.msra.mxu0 %v5779
    %5819 = vmatprep.subr.mxu0 0.0
    %5820 = vmatpush1.msra.mxu0 0.0
    %5821 = vmatprep.subr.mxu0 0.0
    %5822 = vmatpush1.msra.mxu0 0.0
    %5823 = vmatprep.subr.mxu0 0.0
    %5824 = vmatpush1.msra.mxu0 0.0
    %5825 = vmatprep.subr.mxu0 0.0
    %5826 = vmatpush1.msra.mxu0 0.0
    %5827 = vmatprep.subr.mxu0 0.0
    %5828 = vmatpush1.msra.mxu0 0.0
    %5829 = vmatprep.subr.mxu0 0.0
    %5830 = vmatpush1.msra.mxu0 0.0
    %5831 = vmatprep.subr.mxu0 0.0
    %5832 = vmatpush1.msra.mxu0 0.0
    %5833 = vmatprep.subr.mxu0 0.0
    %5834 = vmatpush1.msra.mxu0 0.0
    %5835 = vmatprep.subr.mxu0 0.0
    %5836 = vmatpush1.msra.mxu0 0.0
    %5837 = vmatprep.subr.mxu0 0.0
    %5838 = vmatpush1.msra.mxu0 0.0
    %5839 = vmatprep.subr.mxu0 0.0
    %5840 = vmatpush1.msra.mxu0 0.0
    %5841 = vmatprep.subr.mxu0 0.0
    %5842 = vmatpush1.msra.mxu0 0.0
    %5843 = vmatprep.subr.mxu0 0.0
    %5844 = vmatpush1.msra.mxu0 0.0
    %5845 = vmatprep.subr.mxu0 0.0
    %5846 = vmatpush1.msra.mxu0 0.0
    %5847 = vmatprep.subr.mxu0 0.0
    %5848 = vmatpush1.msra.mxu0 0.0
    %5849 = vmatprep.subr.mxu0 0.0
    %5850 = vmatpush1.msra.mxu0 0.0
    %5851 = vmatprep.mubr.f32.mxu0 0.0
    %5852 = vmatmul.mubr.f32.gmra.mrb[0].mxu0 %v5763
    %v5853 = vpop.f32.mrb[0].mxu0
    %v5854 = vadd.f32 %v5785, %v5853
    %v5855 = vpop.f32.mrb[0].mxu0
    %5856 = vdwg.mxu0
    %s5857 = scalar_lea.vmem [#allocation20], 16
    %5858 = vst [vmem:[%s5857] sm:$0xff] %v5854
    %v5859 = vld [vmem:[#allocation14] sm:$0xff]
    %v5860 = vld [vmem:[#allocation14 + $0x8] sm:$0xff]
    %v5861 = vld [vmem:[#allocation14 + $0x10] sm:$0xff]
    %v5862 = vld [vmem:[#allocation14 + $0x18] sm:$0xff]
    %v5863 = vld [vmem:[#allocation14 + $0x20] sm:$0xff]
    %v5864 = vld [vmem:[#allocation14 + $0x28] sm:$0xff]
    %v5865 = vld [vmem:[#allocation14 + $0x30] sm:$0xff]
    %v5866 = vld [vmem:[#allocation14 + $0x38] sm:$0xff]
    %v5867 = vld [vmem:[#allocation14 + $0x40] sm:$0xff]
    %v5868 = vld [vmem:[#allocation14 + $0x48] sm:$0xff]
    %v5869 = vld [vmem:[#allocation14 + $0x50] sm:$0xff]
    %v5870 = vld [vmem:[#allocation14 + $0x58] sm:$0xff]
    %v5871 = vld [vmem:[#allocation14 + $0x60] sm:$0xff]
    %v5872 = vld [vmem:[#allocation14 + $0x68] sm:$0xff]
    %v5873 = vld [vmem:[#allocation14 + $0x70] sm:$0xff]
    %v5874 = vld [vmem:[#allocation14 + $0x78] sm:$0xff]
    %v5875 = vld [vmem:[#allocation14 + $0x80] sm:$0xff]
    %v5876 = vld [vmem:[#allocation14 + $0x88] sm:$0xff]
    %v5877 = vld [vmem:[#allocation14 + $0x90] sm:$0xff]
    %v5878 = vld [vmem:[#allocation14 + $0x98] sm:$0xff]
    %v5879 = vld [vmem:[#allocation14 + $0xa0] sm:$0xff]
    %v5880 = vld [vmem:[#allocation14 + $0xa8] sm:$0xff]
    %v5881 = vld [vmem:[#allocation14 + $0xb0] sm:$0xff]
    %v5882 = vld [vmem:[#allocation14 + $0xb8] sm:$0xff]
    %v5883 = vld [vmem:[#allocation14 + $0xc0] sm:$0xff]
    %v5884 = vld [vmem:[#allocation14 + $0xc8] sm:$0xff]
    %v5885 = vld [vmem:[#allocation14 + $0xd0] sm:$0xff]
    %v5886 = vld [vmem:[#allocation14 + $0xd8] sm:$0xff]
    %v5887 = vld [vmem:[#allocation14 + $0xe0] sm:$0xff]
    %v5888 = vld [vmem:[#allocation14 + $0xe8] sm:$0xff]
    %v5889 = vld [vmem:[#allocation14 + $0xf0] sm:$0xff]
    %v5890 = vld [vmem:[#allocation14 + $0xf8] sm:$0xff]
    %v5891 = vld [vmem:[#allocation14 + $0x100] sm:$0xff]
    %v5892 = vld [vmem:[#allocation14 + $0x108] sm:$0xff]
    %v5893 = vld [vmem:[#allocation14 + $0x110] sm:$0xff]
    %v5894 = vld [vmem:[#allocation14 + $0x118] sm:$0xff]
    %v5895 = vld [vmem:[#allocation14 + $0x120] sm:$0xff]
    %v5896 = vld [vmem:[#allocation14 + $0x128] sm:$0xff]
    %v5897 = vld [vmem:[#allocation14 + $0x130] sm:$0xff]
    %v5898 = vld [vmem:[#allocation14 + $0x138] sm:$0xff]
    %v5899 = vld [vmem:[#allocation14 + $0x140] sm:$0xff]
    %v5900 = vld [vmem:[#allocation14 + $0x148] sm:$0xff]
    %v5901 = vld [vmem:[#allocation14 + $0x150] sm:$0xff]
    %v5902 = vld [vmem:[#allocation14 + $0x158] sm:$0xff]
    %v5903 = vld [vmem:[#allocation14 + $0x160] sm:$0xff]
    %v5904 = vld [vmem:[#allocation14 + $0x168] sm:$0xff]
    %v5905 = vld [vmem:[#allocation14 + $0x170] sm:$0xff]
    %v5906 = vld [vmem:[#allocation14 + $0x178] sm:$0xff]
    %v5907 = vld [vmem:[#allocation14 + $0x180] sm:$0xff]
    %v5908 = vld [vmem:[#allocation14 + $0x188] sm:$0xff]
    %v5909 = vld [vmem:[#allocation14 + $0x190] sm:$0xff]
    %v5910 = vld [vmem:[#allocation14 + $0x198] sm:$0xff]
    %v5911 = vld [vmem:[#allocation14 + $0x1a0] sm:$0xff]
    %v5912 = vld [vmem:[#allocation14 + $0x1a8] sm:$0xff]
    %v5913 = vld [vmem:[#allocation14 + $0x1b0] sm:$0xff]
    %v5914 = vld [vmem:[#allocation14 + $0x1b8] sm:$0xff]
    %v5915 = vld [vmem:[#allocation14 + $0x1c0] sm:$0xff]
    %v5916 = vld [vmem:[#allocation14 + $0x1c8] sm:$0xff]
    %v5917 = vld [vmem:[#allocation14 + $0x1d0] sm:$0xff]
    %v5918 = vld [vmem:[#allocation14 + $0x1d8] sm:$0xff]
    %v5919 = vld [vmem:[#allocation14 + $0x1e0] sm:$0xff]
    %v5920 = vld [vmem:[#allocation14 + $0x1e8] sm:$0xff]
    %v5921 = vld [vmem:[#allocation14 + $0x1f0] sm:$0xff]
    %v5922 = vld [vmem:[#allocation14 + $0x1f8] sm:$0xff]
    %v5923 = vld [vmem:[#allocation14 + $0x200] sm:$0xff]
    %v5924 = vld [vmem:[#allocation14 + $0x208] sm:$0xff]
    %v5925 = vld [vmem:[#allocation14 + $0x210] sm:$0xff]
    %v5926 = vld [vmem:[#allocation14 + $0x218] sm:$0xff]
    %v5927 = vld [vmem:[#allocation14 + $0x220] sm:$0xff]
    %v5928 = vld [vmem:[#allocation14 + $0x228] sm:$0xff]
    %v5929 = vld [vmem:[#allocation14 + $0x230] sm:$0xff]
    %v5930 = vld [vmem:[#allocation14 + $0x238] sm:$0xff]
    %v5931 = vld [vmem:[#allocation14 + $0x240] sm:$0xff]
    %v5932 = vld [vmem:[#allocation14 + $0x248] sm:$0xff]
    %v5933 = vld [vmem:[#allocation14 + $0x250] sm:$0xff]
    %v5934 = vld [vmem:[#allocation14 + $0x258] sm:$0xff]
    %v5935 = vld [vmem:[#allocation14 + $0x260] sm:$0xff]
    %v5936 = vld [vmem:[#allocation14 + $0x268] sm:$0xff]
    %v5937 = vld [vmem:[#allocation14 + $0x270] sm:$0xff]
    %v5938 = vld [vmem:[#allocation14 + $0x278] sm:$0xff]
    %v5939 = vld [vmem:[#allocation14 + $0x280] sm:$0xff]
    %v5940 = vld [vmem:[#allocation14 + $0x288] sm:$0xff]
    %v5941 = vld [vmem:[#allocation14 + $0x290] sm:$0xff]
    %v5942 = vld [vmem:[#allocation14 + $0x298] sm:$0xff]
    %v5943 = vld [vmem:[#allocation14 + $0x2a0] sm:$0xff]
    %v5944 = vld [vmem:[#allocation14 + $0x2a8] sm:$0xff]
    %v5945 = vld [vmem:[#allocation14 + $0x2b0] sm:$0xff]
    %v5946 = vld [vmem:[#allocation14 + $0x2b8] sm:$0xff]
    %v5947 = vld [vmem:[#allocation14 + $0x2c0] sm:$0xff]
    %v5948 = vld [vmem:[#allocation14 + $0x2c8] sm:$0xff]
    %v5949 = vld [vmem:[#allocation14 + $0x2d0] sm:$0xff]
    %v5950 = vld [vmem:[#allocation14 + $0x2d8] sm:$0xff]
    %v5951 = vld [vmem:[#allocation14 + $0x2e0] sm:$0xff]
    %v5952 = vld [vmem:[#allocation14 + $0x2e8] sm:$0xff]
    %v5953 = vld [vmem:[#allocation14 + $0x2f0] sm:$0xff]
    %v5954 = vld [vmem:[#allocation14 + $0x2f8] sm:$0xff]
    %v5955 = vld [vmem:[#allocation14 + $0x300] sm:$0xff]
    %v5956 = vld [vmem:[#allocation14 + $0x308] sm:$0xff]
    %v5957 = vld [vmem:[#allocation14 + $0x310] sm:$0xff]
    %v5958 = vld [vmem:[#allocation14 + $0x318] sm:$0xff]
    %v5959 = vld [vmem:[#allocation14 + $0x320] sm:$0xff]
    %v5960 = vld [vmem:[#allocation14 + $0x328] sm:$0xff]
    %v5961 = vld [vmem:[#allocation14 + $0x330] sm:$0xff]
    %v5962 = vld [vmem:[#allocation14 + $0x338] sm:$0xff]
    %v5963 = vld [vmem:[#allocation14 + $0x340] sm:$0xff]
    %v5964 = vld [vmem:[#allocation14 + $0x348] sm:$0xff]
    %v5965 = vld [vmem:[#allocation14 + $0x350] sm:$0xff]
    %v5966 = vld [vmem:[#allocation14 + $0x358] sm:$0xff]
    %v5967 = vld [vmem:[#allocation14 + $0x360] sm:$0xff]
    %v5968 = vld [vmem:[#allocation14 + $0x368] sm:$0xff]
    %v5969 = vld [vmem:[#allocation14 + $0x370] sm:$0xff]
    %v5970 = vld [vmem:[#allocation14 + $0x378] sm:$0xff]
    %v5971 = vld [vmem:[#allocation14 + $0x380] sm:$0xff]
    %v5972 = vld [vmem:[#allocation14 + $0x388] sm:$0xff]
    %v5973 = vld [vmem:[#allocation14 + $0x390] sm:$0xff]
    %v5974 = vld [vmem:[#allocation14 + $0x398] sm:$0xff]
    %v5975 = vld [vmem:[#allocation14 + $0x3a0] sm:$0xff]
    %v5976 = vld [vmem:[#allocation14 + $0x3a8] sm:$0xff]
    %v5977 = vld [vmem:[#allocation14 + $0x3b0] sm:$0xff]
    %v5978 = vld [vmem:[#allocation14 + $0x3b8] sm:$0xff]
    %v5979 = vld [vmem:[#allocation14 + $0x3c0] sm:$0xff]
    %v5980 = vld [vmem:[#allocation14 + $0x3c8] sm:$0xff]
    %v5981 = vld [vmem:[#allocation14 + $0x3d0] sm:$0xff]
    %v5982 = vld [vmem:[#allocation14 + $0x3d8] sm:$0xff]
    %v5983 = vld [vmem:[#allocation14 + $0x3e0] sm:$0xff]
    %v5984 = vld [vmem:[#allocation14 + $0x3e8] sm:$0xff]
    %v5985 = vld [vmem:[#allocation14 + $0x3f0] sm:$0xff]
    %v5986 = vld [vmem:[#allocation14 + $0x3f8] sm:$0xff]
    %v5987 = vld [vmem:[#allocation16] sm:$0xf]
    %v5989 = vlaneseq
    %v5990 = vshrl.u32 %v5989, 7
    %v5991 = vsub.s32 0, %v5990
    %v5992 = vrot.slane %v5987, %v5991
    %v5993 = vlaneseq
    %v5994 = vshrl.u32 %v5993, 7
    %v5995 = vsub.s32 1, %v5994
    %v5996 = vrot.slane %v5987, %v5995
    %v5997 = vlaneseq
    %v5998 = vshrl.u32 %v5997, 7
    %v5999 = vsub.s32 2, %v5998
    %v6000 = vrot.slane %v5987, %v5999
    %v6001 = vlaneseq
    %v6002 = vshrl.u32 %v6001, 7
    %v6003 = vsub.s32 3, %v6002
    %v6004 = vrot.slane %v5987, %v6003
    %6009 = vmatprep.subr.mxu0 %v5860
    %6010 = vmatpush1.msra.mxu0 %v5859
    %6011 = vmatprep.subr.mxu0 %v5864
    %6012 = vmatpush1.msra.mxu0 %v5863
    %6013 = vmatprep.subr.mxu0 %v5868
    %6014 = vmatpush1.msra.mxu0 %v5867
    %6015 = vmatprep.subr.mxu0 %v5872
    %6016 = vmatpush1.msra.mxu0 %v5871
    %6017 = vmatprep.subr.mxu0 %v5876
    %6018 = vmatpush1.msra.mxu0 %v5875
    %6019 = vmatprep.subr.mxu0 %v5880
    %6020 = vmatpush1.msra.mxu0 %v5879
    %6021 = vmatprep.subr.mxu0 %v5884
    %6022 = vmatpush1.msra.mxu0 %v5883
    %6023 = vmatprep.subr.mxu0 %v5888
    %6024 = vmatpush1.msra.mxu0 %v5887
    %6025 = vmatprep.subr.mxu0 %v5892
    %6026 = vmatpush1.msra.mxu0 %v5891
    %6027 = vmatprep.subr.mxu0 %v5896
    %6028 = vmatpush1.msra.mxu0 %v5895
    %6029 = vmatprep.subr.mxu0 %v5900
    %6030 = vmatpush1.msra.mxu0 %v5899
    %6031 = vmatprep.subr.mxu0 %v5904
    %6032 = vmatpush1.msra.mxu0 %v5903
    %6033 = vmatprep.subr.mxu0 %v5908
    %6034 = vmatpush1.msra.mxu0 %v5907
    %6035 = vmatprep.subr.mxu0 %v5912
    %6036 = vmatpush1.msra.mxu0 %v5911
    %6037 = vmatprep.subr.mxu0 %v5916
    %6038 = vmatpush1.msra.mxu0 %v5915
    %6039 = vmatprep.subr.mxu0 %v5920
    %6040 = vmatpush1.msra.mxu0 %v5919
    %6041 = vmatprep.subr.mxu0 %v5924
    %6042 = vmatpush1.msra.mxu0 %v5923
    %6043 = vmatprep.subr.mxu0 %v5928
    %6044 = vmatpush1.msra.mxu0 %v5927
    %6045 = vmatprep.subr.mxu0 %v5932
    %6046 = vmatpush1.msra.mxu0 %v5931
    %6047 = vmatprep.subr.mxu0 %v5936
    %6048 = vmatpush1.msra.mxu0 %v5935
    %6049 = vmatprep.subr.mxu0 %v5940
    %6050 = vmatpush1.msra.mxu0 %v5939
    %6051 = vmatprep.subr.mxu0 %v5944
    %6052 = vmatpush1.msra.mxu0 %v5943
    %6053 = vmatprep.subr.mxu0 %v5948
    %6054 = vmatpush1.msra.mxu0 %v5947
    %6055 = vmatprep.subr.mxu0 %v5952
    %6056 = vmatpush1.msra.mxu0 %v5951
    %6057 = vmatprep.subr.mxu0 %v5956
    %6058 = vmatpush1.msra.mxu0 %v5955
    %6059 = vmatprep.subr.mxu0 %v5960
    %6060 = vmatpush1.msra.mxu0 %v5959
    %6061 = vmatprep.subr.mxu0 %v5964
    %6062 = vmatpush1.msra.mxu0 %v5963
    %6063 = vmatprep.subr.mxu0 %v5968
    %6064 = vmatpush1.msra.mxu0 %v5967
    %6065 = vmatprep.subr.mxu0 %v5972
    %6066 = vmatpush1.msra.mxu0 %v5971
    %6067 = vmatprep.subr.mxu0 %v5976
    %6068 = vmatpush1.msra.mxu0 %v5975
    %6069 = vmatprep.subr.mxu0 %v5980
    %6070 = vmatpush1.msra.mxu0 %v5979
    %6071 = vmatprep.subr.mxu0 %v5984
    %6072 = vmatpush1.msra.mxu0 %v5983
    %6073 = vmatprep.mubr.f32.mxu0 %v5763
    %6074 = vmatmul.mubr.f32.gmra.mrb[0].mxu0 %v5854
    %v6075 = vpop.f32.mrb[0].mxu0
    %v6076 = vadd.f32 %v5992, %v6075
    %v6077 = vpop.f32.mrb[0].mxu0
    %v6078 = vadd.f32 %v5996, %v6077
    %6079 = vdwg.mxu0
    %6080 = vmatprep.subr.mxu0 %v5862
    %6081 = vmatpush1.msra.mxu0 %v5861
    %6082 = vmatprep.subr.mxu0 %v5866
    %6083 = vmatpush1.msra.mxu0 %v5865
    %6084 = vmatprep.subr.mxu0 %v5870
    %6085 = vmatpush1.msra.mxu0 %v5869
    %6086 = vmatprep.subr.mxu0 %v5874
    %6087 = vmatpush1.msra.mxu0 %v5873
    %6088 = vmatprep.subr.mxu0 %v5878
    %6089 = vmatpush1.msra.mxu0 %v5877
    %6090 = vmatprep.subr.mxu0 %v5882
    %6091 = vmatpush1.msra.mxu0 %v5881
    %6092 = vmatprep.subr.mxu0 %v5886
    %6093 = vmatpush1.msra.mxu0 %v5885
    %6094 = vmatprep.subr.mxu0 %v5890
    %6095 = vmatpush1.msra.mxu0 %v5889
    %6096 = vmatprep.subr.mxu0 %v5894
    %6097 = vmatpush1.msra.mxu0 %v5893
    %6098 = vmatprep.subr.mxu0 %v5898
    %6099 = vmatpush1.msra.mxu0 %v5897
    %6100 = vmatprep.subr.mxu0 %v5902
    %6101 = vmatpush1.msra.mxu0 %v5901
    %6102 = vmatprep.subr.mxu0 %v5906
    %6103 = vmatpush1.msra.mxu0 %v5905
    %6104 = vmatprep.subr.mxu0 %v5910
    %6105 = vmatpush1.msra.mxu0 %v5909
    %6106 = vmatprep.subr.mxu0 %v5914
    %6107 = vmatpush1.msra.mxu0 %v5913
    %6108 = vmatprep.subr.mxu0 %v5918
    %6109 = vmatpush1.msra.mxu0 %v5917
    %6110 = vmatprep.subr.mxu0 %v5922
    %6111 = vmatpush1.msra.mxu0 %v5921
    %6112 = vmatprep.subr.mxu0 %v5926
    %6113 = vmatpush1.msra.mxu0 %v5925
    %6114 = vmatprep.subr.mxu0 %v5930
    %6115 = vmatpush1.msra.mxu0 %v5929
    %6116 = vmatprep.subr.mxu0 %v5934
    %6117 = vmatpush1.msra.mxu0 %v5933
    %6118 = vmatprep.subr.mxu0 %v5938
    %6119 = vmatpush1.msra.mxu0 %v5937
    %6120 = vmatprep.subr.mxu0 %v5942
    %6121 = vmatpush1.msra.mxu0 %v5941
    %6122 = vmatprep.subr.mxu0 %v5946
    %6123 = vmatpush1.msra.mxu0 %v5945
    %6124 = vmatprep.subr.mxu0 %v5950
    %6125 = vmatpush1.msra.mxu0 %v5949
    %6126 = vmatprep.subr.mxu0 %v5954
    %6127 = vmatpush1.msra.mxu0 %v5953
    %6128 = vmatprep.subr.mxu0 %v5958
    %6129 = vmatpush1.msra.mxu0 %v5957
    %6130 = vmatprep.subr.mxu0 %v5962
    %6131 = vmatpush1.msra.mxu0 %v5961
    %6132 = vmatprep.subr.mxu0 %v5966
    %6133 = vmatpush1.msra.mxu0 %v5965
    %6134 = vmatprep.subr.mxu0 %v5970
    %6135 = vmatpush1.msra.mxu0 %v5969
    %6136 = vmatprep.subr.mxu0 %v5974
    %6137 = vmatpush1.msra.mxu0 %v5973
    %6138 = vmatprep.subr.mxu0 %v5978
    %6139 = vmatpush1.msra.mxu0 %v5977
    %6140 = vmatprep.subr.mxu0 %v5982
    %6141 = vmatpush1.msra.mxu0 %v5981
    %6142 = vmatprep.subr.mxu0 %v5986
    %6143 = vmatpush1.msra.mxu0 %v5985
    %6144 = vmatprep.mubr.f32.mxu0 %v5763
    %6145 = vmatmul.mubr.f32.gmra.mrb[0].mxu0 %v5854
    %v6146 = vpop.f32.mrb[0].mxu0
    %v6147 = vadd.f32 %v6000, %v6146
    %v6148 = vpop.f32.mrb[0].mxu0
    %v6149 = vadd.f32 %v6004, %v6148
    %6150 = vdwg.mxu0
    %v6151 = vxor.u32 %v6076, 2147483648
    %v6152 = vxor.u32 %v6078, 2147483648
    %v6153 = vxor.u32 %v6147, 2147483648
    %v6154 = vmul.f32 %v6151, 1.442695
    %v6155 = vpow.pop %v6154
    %v6156 = vmul.f32 %v6152, 1.442695
    %v6157 = vpow.pop %v6156
    %v6158 = vmul.f32 %v6153, 1.442695
    %v6159 = vpow.pop %v6158
    %v6160 = vadd.f32 %v6155, 1.0
    %v6161 = vadd.f32 %v6157, 1.0
    %v6162 = vadd.f32 %v6159, 1.0
    %v6163 = vrcp.pop %v6160
    %v6164 = vmul.f32 1.0, %v6163
    %v6165 = vrcp.pop %v6161
    %v6166 = vmul.f32 1.0, %v6165
    %v6167 = vrcp.pop %v6162
    %v6168 = vmul.f32 1.0, %v6167
    %v6169 = vtanh.pop %v6149
    %v6170 = vmul.f32 %v6166, %v5761
    %v6171 = vmul.f32 %v6164, %v6169
    %v6172 = vadd.f32 %v6170, %v6171
    %v6173 = vtanh.pop %v6172
    %v6174 = vmul.f32 %v6168, %v6173
    %v6175 = vld [vmem:[#allocation17] sm:$0xff]
    %v6176 = vld [vmem:[#allocation17 + $0x8] sm:$0xff]
    %v6177 = vld [vmem:[#allocation17 + $0x10] sm:$0xff]
    %v6178 = vld [vmem:[#allocation17 + $0x18] sm:$0xff]
    %v6179 = vld [vmem:[#allocation17 + $0x20] sm:$0xff]
    %v6180 = vld [vmem:[#allocation17 + $0x28] sm:$0xff]
    %v6181 = vld [vmem:[#allocation17 + $0x30] sm:$0xff]
    %v6182 = vld [vmem:[#allocation17 + $0x38] sm:$0xff]
    %v6183 = vld [vmem:[#allocation17 + $0x40] sm:$0xff]
    %v6184 = vld [vmem:[#allocation17 + $0x48] sm:$0xff]
    %v6185 = vld [vmem:[#allocation17 + $0x50] sm:$0xff]
    %v6186 = vld [vmem:[#allocation17 + $0x58] sm:$0xff]
    %v6187 = vld [vmem:[#allocation17 + $0x60] sm:$0xff]
    %v6188 = vld [vmem:[#allocation17 + $0x68] sm:$0xff]
    %v6189 = vld [vmem:[#allocation17 + $0x70] sm:$0xff]
    %v6190 = vld [vmem:[#allocation17 + $0x78] sm:$0xff]
    %v6191 = vld [vmem:[#allocation19] sm:$0x1]
    %v6193 = vlaneseq
    %v6194 = vshrl.u32 %v6193, 7
    %v6195 = vsub.s32 0, %v6194
    %v6196 = vrot.slane %v6191, %v6195
    %6198 = vmatprep.subr.mxu0 0.0
    %6199 = vmatpush1.msra.mxu0 %v6175
    %6200 = vmatprep.subr.mxu0 0.0
    %6201 = vmatpush1.msra.mxu0 %v6176
    %6202 = vmatprep.subr.mxu0 0.0
    %6203 = vmatpush1.msra.mxu0 %v6177
    %6204 = vmatprep.subr.mxu0 0.0
    %6205 = vmatpush1.msra.mxu0 %v6178
    %6206 = vmatprep.subr.mxu0 0.0
    %6207 = vmatpush1.msra.mxu0 %v6179
    %6208 = vmatprep.subr.mxu0 0.0
    %6209 = vmatpush1.msra.mxu0 %v6180
    %6210 = vmatprep.subr.mxu0 0.0
    %6211 = vmatpush1.msra.mxu0 %v6181
    %6212 = vmatprep.subr.mxu0 0.0
    %6213 = vmatpush1.msra.mxu0 %v6182
    %6214 = vmatprep.subr.mxu0 0.0
    %6215 = vmatpush1.msra.mxu0 %v6183
    %6216 = vmatprep.subr.mxu0 0.0
    %6217 = vmatpush1.msra.mxu0 %v6184
    %6218 = vmatprep.subr.mxu0 0.0
    %6219 = vmatpush1.msra.mxu0 %v6185
    %6220 = vmatprep.subr.mxu0 0.0
    %6221 = vmatpush1.msra.mxu0 %v6186
    %6222 = vmatprep.subr.mxu0 0.0
    %6223 = vmatpush1.msra.mxu0 %v6187
    %6224 = vmatprep.subr.mxu0 0.0
    %6225 = vmatpush1.msra.mxu0 %v6188
    %6226 = vmatprep.subr.mxu0 0.0
    %6227 = vmatpush1.msra.mxu0 %v6189
    %6228 = vmatprep.subr.mxu0 0.0
    %6229 = vmatpush1.msra.mxu0 %v6190
    %6230 = vmatprep.subr.mxu0 0.0
    %6231 = vmatpush1.msra.mxu0 0.0
    %6232 = vmatprep.subr.mxu0 0.0
    %6233 = vmatpush1.msra.mxu0 0.0
    %6234 = vmatprep.subr.mxu0 0.0
    %6235 = vmatpush1.msra.mxu0 0.0
    %6236 = vmatprep.subr.mxu0 0.0
    %6237 = vmatpush1.msra.mxu0 0.0
    %6238 = vmatprep.subr.mxu0 0.0
    %6239 = vmatpush1.msra.mxu0 0.0
    %6240 = vmatprep.subr.mxu0 0.0
    %6241 = vmatpush1.msra.mxu0 0.0
    %6242 = vmatprep.subr.mxu0 0.0
    %6243 = vmatpush1.msra.mxu0 0.0
    %6244 = vmatprep.subr.mxu0 0.0
    %6245 = vmatpush1.msra.mxu0 0.0
    %6246 = vmatprep.subr.mxu0 0.0
    %6247 = vmatpush1.msra.mxu0 0.0
    %6248 = vmatprep.subr.mxu0 0.0
    %6249 = vmatpush1.msra.mxu0 0.0
    %6250 = vmatprep.subr.mxu0 0.0
    %6251 = vmatpush1.msra.mxu0 0.0
    %6252 = vmatprep.subr.mxu0 0.0
    %6253 = vmatpush1.msra.mxu0 0.0
    %6254 = vmatprep.subr.mxu0 0.0
    %6255 = vmatpush1.msra.mxu0 0.0
    %6256 = vmatprep.subr.mxu0 0.0
    %6257 = vmatpush1.msra.mxu0 0.0
    %6258 = vmatprep.subr.mxu0 0.0
    %6259 = vmatpush1.msra.mxu0 0.0
    %6260 = vmatprep.subr.mxu0 0.0
    %6261 = vmatpush1.msra.mxu0 0.0
    %6262 = vmatprep.mubr.f32.mxu0 0.0
    %6263 = vmatmul.mubr.f32.gmra.mrb[0].mxu0 %v6174
    %v6264 = vpop.f32.mrb[0].mxu0
    %v6265 = vadd.f32 %v6196, %v6264
    %v6266 = vpop.f32.mrb[0].mxu0
    %6267 = vdwg.mxu0
    %s6268 = scalar_lea.vmem [#allocation20], 24
    %6269 = vst [vmem:[%s6268] sm:$0xff] %v6265
    %v6270 = vld [vmem:[#allocation14] sm:$0xff]
    %v6271 = vld [vmem:[#allocation14 + $0x8] sm:$0xff]
    %v6272 = vld [vmem:[#allocation14 + $0x10] sm:$0xff]
    %v6273 = vld [vmem:[#allocation14 + $0x18] sm:$0xff]
    %v6274 = vld [vmem:[#allocation14 + $0x20] sm:$0xff]
    %v6275 = vld [vmem:[#allocation14 + $0x28] sm:$0xff]
    %v6276 = vld [vmem:[#allocation14 + $0x30] sm:$0xff]
    %v6277 = vld [vmem:[#allocation14 + $0x38] sm:$0xff]
    %v6278 = vld [vmem:[#allocation14 + $0x40] sm:$0xff]
    %v6279 = vld [vmem:[#allocation14 + $0x48] sm:$0xff]
    %v6280 = vld [vmem:[#allocation14 + $0x50] sm:$0xff]
    %v6281 = vld [vmem:[#allocation14 + $0x58] sm:$0xff]
    %v6282 = vld [vmem:[#allocation14 + $0x60] sm:$0xff]
    %v6283 = vld [vmem:[#allocation14 + $0x68] sm:$0xff]
    %v6284 = vld [vmem:[#allocation14 + $0x70] sm:$0xff]
    %v6285 = vld [vmem:[#allocation14 + $0x78] sm:$0xff]
    %v6286 = vld [vmem:[#allocation14 + $0x80] sm:$0xff]
    %v6287 = vld [vmem:[#allocation14 + $0x88] sm:$0xff]
    %v6288 = vld [vmem:[#allocation14 + $0x90] sm:$0xff]
    %v6289 = vld [vmem:[#allocation14 + $0x98] sm:$0xff]
    %v6290 = vld [vmem:[#allocation14 + $0xa0] sm:$0xff]
    %v6291 = vld [vmem:[#allocation14 + $0xa8] sm:$0xff]
    %v6292 = vld [vmem:[#allocation14 + $0xb0] sm:$0xff]
    %v6293 = vld [vmem:[#allocation14 + $0xb8] sm:$0xff]
    %v6294 = vld [vmem:[#allocation14 + $0xc0] sm:$0xff]
    %v6295 = vld [vmem:[#allocation14 + $0xc8] sm:$0xff]
    %v6296 = vld [vmem:[#allocation14 + $0xd0] sm:$0xff]
    %v6297 = vld [vmem:[#allocation14 + $0xd8] sm:$0xff]
    %v6298 = vld [vmem:[#allocation14 + $0xe0] sm:$0xff]
    %v6299 = vld [vmem:[#allocation14 + $0xe8] sm:$0xff]
    %v6300 = vld [vmem:[#allocation14 + $0xf0] sm:$0xff]
    %v6301 = vld [vmem:[#allocation14 + $0xf8] sm:$0xff]
    %v6302 = vld [vmem:[#allocation14 + $0x100] sm:$0xff]
    %v6303 = vld [vmem:[#allocation14 + $0x108] sm:$0xff]
    %v6304 = vld [vmem:[#allocation14 + $0x110] sm:$0xff]
    %v6305 = vld [vmem:[#allocation14 + $0x118] sm:$0xff]
    %v6306 = vld [vmem:[#allocation14 + $0x120] sm:$0xff]
    %v6307 = vld [vmem:[#allocation14 + $0x128] sm:$0xff]
    %v6308 = vld [vmem:[#allocation14 + $0x130] sm:$0xff]
    %v6309 = vld [vmem:[#allocation14 + $0x138] sm:$0xff]
    %v6310 = vld [vmem:[#allocation14 + $0x140] sm:$0xff]
    %v6311 = vld [vmem:[#allocation14 + $0x148] sm:$0xff]
    %v6312 = vld [vmem:[#allocation14 + $0x150] sm:$0xff]
    %v6313 = vld [vmem:[#allocation14 + $0x158] sm:$0xff]
    %v6314 = vld [vmem:[#allocation14 + $0x160] sm:$0xff]
    %v6315 = vld [vmem:[#allocation14 + $0x168] sm:$0xff]
    %v6316 = vld [vmem:[#allocation14 + $0x170] sm:$0xff]
    %v6317 = vld [vmem:[#allocation14 + $0x178] sm:$0xff]
    %v6318 = vld [vmem:[#allocation14 + $0x180] sm:$0xff]
    %v6319 = vld [vmem:[#allocation14 + $0x188] sm:$0xff]
    %v6320 = vld [vmem:[#allocation14 + $0x190] sm:$0xff]
    %v6321 = vld [vmem:[#allocation14 + $0x198] sm:$0xff]
    %v6322 = vld [vmem:[#allocation14 + $0x1a0] sm:$0xff]
    %v6323 = vld [vmem:[#allocation14 + $0x1a8] sm:$0xff]
    %v6324 = vld [vmem:[#allocation14 + $0x1b0] sm:$0xff]
    %v6325 = vld [vmem:[#allocation14 + $0x1b8] sm:$0xff]
    %v6326 = vld [vmem:[#allocation14 + $0x1c0] sm:$0xff]
    %v6327 = vld [vmem:[#allocation14 + $0x1c8] sm:$0xff]
    %v6328 = vld [vmem:[#allocation14 + $0x1d0] sm:$0xff]
    %v6329 = vld [vmem:[#allocation14 + $0x1d8] sm:$0xff]
    %v6330 = vld [vmem:[#allocation14 + $0x1e0] sm:$0xff]
    %v6331 = vld [vmem:[#allocation14 + $0x1e8] sm:$0xff]
    %v6332 = vld [vmem:[#allocation14 + $0x1f0] sm:$0xff]
    %v6333 = vld [vmem:[#allocation14 + $0x1f8] sm:$0xff]
    %v6334 = vld [vmem:[#allocation14 + $0x200] sm:$0xff]
    %v6335 = vld [vmem:[#allocation14 + $0x208] sm:$0xff]
    %v6336 = vld [vmem:[#allocation14 + $0x210] sm:$0xff]
    %v6337 = vld [vmem:[#allocation14 + $0x218] sm:$0xff]
    %v6338 = vld [vmem:[#allocation14 + $0x220] sm:$0xff]
    %v6339 = vld [vmem:[#allocation14 + $0x228] sm:$0xff]
    %v6340 = vld [vmem:[#allocation14 + $0x230] sm:$0xff]
    %v6341 = vld [vmem:[#allocation14 + $0x238] sm:$0xff]
    %v6342 = vld [vmem:[#allocation14 + $0x240] sm:$0xff]
    %v6343 = vld [vmem:[#allocation14 + $0x248] sm:$0xff]
    %v6344 = vld [vmem:[#allocation14 + $0x250] sm:$0xff]
    %v6345 = vld [vmem:[#allocation14 + $0x258] sm:$0xff]
    %v6346 = vld [vmem:[#allocation14 + $0x260] sm:$0xff]
    %v6347 = vld [vmem:[#allocation14 + $0x268] sm:$0xff]
    %v6348 = vld [vmem:[#allocation14 + $0x270] sm:$0xff]
    %v6349 = vld [vmem:[#allocation14 + $0x278] sm:$0xff]
    %v6350 = vld [vmem:[#allocation14 + $0x280] sm:$0xff]
    %v6351 = vld [vmem:[#allocation14 + $0x288] sm:$0xff]
    %v6352 = vld [vmem:[#allocation14 + $0x290] sm:$0xff]
    %v6353 = vld [vmem:[#allocation14 + $0x298] sm:$0xff]
    %v6354 = vld [vmem:[#allocation14 + $0x2a0] sm:$0xff]
    %v6355 = vld [vmem:[#allocation14 + $0x2a8] sm:$0xff]
    %v6356 = vld [vmem:[#allocation14 + $0x2b0] sm:$0xff]
    %v6357 = vld [vmem:[#allocation14 + $0x2b8] sm:$0xff]
    %v6358 = vld [vmem:[#allocation14 + $0x2c0] sm:$0xff]
    %v6359 = vld [vmem:[#allocation14 + $0x2c8] sm:$0xff]
    %v6360 = vld [vmem:[#allocation14 + $0x2d0] sm:$0xff]
    %v6361 = vld [vmem:[#allocation14 + $0x2d8] sm:$0xff]
    %v6362 = vld [vmem:[#allocation14 + $0x2e0] sm:$0xff]
    %v6363 = vld [vmem:[#allocation14 + $0x2e8] sm:$0xff]
    %v6364 = vld [vmem:[#allocation14 + $0x2f0] sm:$0xff]
    %v6365 = vld [vmem:[#allocation14 + $0x2f8] sm:$0xff]
    %v6366 = vld [vmem:[#allocation14 + $0x300] sm:$0xff]
    %v6367 = vld [vmem:[#allocation14 + $0x308] sm:$0xff]
    %v6368 = vld [vmem:[#allocation14 + $0x310] sm:$0xff]
    %v6369 = vld [vmem:[#allocation14 + $0x318] sm:$0xff]
    %v6370 = vld [vmem:[#allocation14 + $0x320] sm:$0xff]
    %v6371 = vld [vmem:[#allocation14 + $0x328] sm:$0xff]
    %v6372 = vld [vmem:[#allocation14 + $0x330] sm:$0xff]
    %v6373 = vld [vmem:[#allocation14 + $0x338] sm:$0xff]
    %v6374 = vld [vmem:[#allocation14 + $0x340] sm:$0xff]
    %v6375 = vld [vmem:[#allocation14 + $0x348] sm:$0xff]
    %v6376 = vld [vmem:[#allocation14 + $0x350] sm:$0xff]
    %v6377 = vld [vmem:[#allocation14 + $0x358] sm:$0xff]
    %v6378 = vld [vmem:[#allocation14 + $0x360] sm:$0xff]
    %v6379 = vld [vmem:[#allocation14 + $0x368] sm:$0xff]
    %v6380 = vld [vmem:[#allocation14 + $0x370] sm:$0xff]
    %v6381 = vld [vmem:[#allocation14 + $0x378] sm:$0xff]
    %v6382 = vld [vmem:[#allocation14 + $0x380] sm:$0xff]
    %v6383 = vld [vmem:[#allocation14 + $0x388] sm:$0xff]
    %v6384 = vld [vmem:[#allocation14 + $0x390] sm:$0xff]
    %v6385 = vld [vmem:[#allocation14 + $0x398] sm:$0xff]
    %v6386 = vld [vmem:[#allocation14 + $0x3a0] sm:$0xff]
    %v6387 = vld [vmem:[#allocation14 + $0x3a8] sm:$0xff]
    %v6388 = vld [vmem:[#allocation14 + $0x3b0] sm:$0xff]
    %v6389 = vld [vmem:[#allocation14 + $0x3b8] sm:$0xff]
    %v6390 = vld [vmem:[#allocation14 + $0x3c0] sm:$0xff]
    %v6391 = vld [vmem:[#allocation14 + $0x3c8] sm:$0xff]
    %v6392 = vld [vmem:[#allocation14 + $0x3d0] sm:$0xff]
    %v6393 = vld [vmem:[#allocation14 + $0x3d8] sm:$0xff]
    %v6394 = vld [vmem:[#allocation14 + $0x3e0] sm:$0xff]
    %v6395 = vld [vmem:[#allocation14 + $0x3e8] sm:$0xff]
    %v6396 = vld [vmem:[#allocation14 + $0x3f0] sm:$0xff]
    %v6397 = vld [vmem:[#allocation14 + $0x3f8] sm:$0xff]
    %v6398 = vld [vmem:[#allocation16] sm:$0xf]
    %v6400 = vlaneseq
    %v6401 = vshrl.u32 %v6400, 7
    %v6402 = vsub.s32 0, %v6401
    %v6403 = vrot.slane %v6398, %v6402
    %v6404 = vlaneseq
    %v6405 = vshrl.u32 %v6404, 7
    %v6406 = vsub.s32 1, %v6405
    %v6407 = vrot.slane %v6398, %v6406
    %v6408 = vlaneseq
    %v6409 = vshrl.u32 %v6408, 7
    %v6410 = vsub.s32 2, %v6409
    %v6411 = vrot.slane %v6398, %v6410
    %v6412 = vlaneseq
    %v6413 = vshrl.u32 %v6412, 7
    %v6414 = vsub.s32 3, %v6413
    %v6415 = vrot.slane %v6398, %v6414
    %6420 = vmatprep.subr.mxu0 %v6271
    %6421 = vmatpush1.msra.mxu0 %v6270
    %6422 = vmatprep.subr.mxu0 %v6275
    %6423 = vmatpush1.msra.mxu0 %v6274
    %6424 = vmatprep.subr.mxu0 %v6279
    %6425 = vmatpush1.msra.mxu0 %v6278
    %6426 = vmatprep.subr.mxu0 %v6283
    %6427 = vmatpush1.msra.mxu0 %v6282
    %6428 = vmatprep.subr.mxu0 %v6287
    %6429 = vmatpush1.msra.mxu0 %v6286
    %6430 = vmatprep.subr.mxu0 %v6291
    %6431 = vmatpush1.msra.mxu0 %v6290
    %6432 = vmatprep.subr.mxu0 %v6295
    %6433 = vmatpush1.msra.mxu0 %v6294
    %6434 = vmatprep.subr.mxu0 %v6299
    %6435 = vmatpush1.msra.mxu0 %v6298
    %6436 = vmatprep.subr.mxu0 %v6303
    %6437 = vmatpush1.msra.mxu0 %v6302
    %6438 = vmatprep.subr.mxu0 %v6307
    %6439 = vmatpush1.msra.mxu0 %v6306
    %6440 = vmatprep.subr.mxu0 %v6311
    %6441 = vmatpush1.msra.mxu0 %v6310
    %6442 = vmatprep.subr.mxu0 %v6315
    %6443 = vmatpush1.msra.mxu0 %v6314
    %6444 = vmatprep.subr.mxu0 %v6319
    %6445 = vmatpush1.msra.mxu0 %v6318
    %6446 = vmatprep.subr.mxu0 %v6323
    %6447 = vmatpush1.msra.mxu0 %v6322
    %6448 = vmatprep.subr.mxu0 %v6327
    %6449 = vmatpush1.msra.mxu0 %v6326
    %6450 = vmatprep.subr.mxu0 %v6331
    %6451 = vmatpush1.msra.mxu0 %v6330
    %6452 = vmatprep.subr.mxu0 %v6335
    %6453 = vmatpush1.msra.mxu0 %v6334
    %6454 = vmatprep.subr.mxu0 %v6339
    %6455 = vmatpush1.msra.mxu0 %v6338
    %6456 = vmatprep.subr.mxu0 %v6343
    %6457 = vmatpush1.msra.mxu0 %v6342
    %6458 = vmatprep.subr.mxu0 %v6347
    %6459 = vmatpush1.msra.mxu0 %v6346
    %6460 = vmatprep.subr.mxu0 %v6351
    %6461 = vmatpush1.msra.mxu0 %v6350
    %6462 = vmatprep.subr.mxu0 %v6355
    %6463 = vmatpush1.msra.mxu0 %v6354
    %6464 = vmatprep.subr.mxu0 %v6359
    %6465 = vmatpush1.msra.mxu0 %v6358
    %6466 = vmatprep.subr.mxu0 %v6363
    %6467 = vmatpush1.msra.mxu0 %v6362
    %6468 = vmatprep.subr.mxu0 %v6367
    %6469 = vmatpush1.msra.mxu0 %v6366
    %6470 = vmatprep.subr.mxu0 %v6371
    %6471 = vmatpush1.msra.mxu0 %v6370
    %6472 = vmatprep.subr.mxu0 %v6375
    %6473 = vmatpush1.msra.mxu0 %v6374
    %6474 = vmatprep.subr.mxu0 %v6379
    %6475 = vmatpush1.msra.mxu0 %v6378
    %6476 = vmatprep.subr.mxu0 %v6383
    %6477 = vmatpush1.msra.mxu0 %v6382
    %6478 = vmatprep.subr.mxu0 %v6387
    %6479 = vmatpush1.msra.mxu0 %v6386
    %6480 = vmatprep.subr.mxu0 %v6391
    %6481 = vmatpush1.msra.mxu0 %v6390
    %6482 = vmatprep.subr.mxu0 %v6395
    %6483 = vmatpush1.msra.mxu0 %v6394
    %6484 = vmatprep.mubr.f32.mxu0 %v6174
    %6485 = vmatmul.mubr.f32.gmra.mrb[0].mxu0 %v6265
    %v6486 = vpop.f32.mrb[0].mxu0
    %v6487 = vadd.f32 %v6403, %v6486
    %v6488 = vpop.f32.mrb[0].mxu0
    %v6489 = vadd.f32 %v6407, %v6488
    %6490 = vdwg.mxu0
    %6491 = vmatprep.subr.mxu0 %v6273
    %6492 = vmatpush1.msra.mxu0 %v6272
    %6493 = vmatprep.subr.mxu0 %v6277
    %6494 = vmatpush1.msra.mxu0 %v6276
    %6495 = vmatprep.subr.mxu0 %v6281
    %6496 = vmatpush1.msra.mxu0 %v6280
    %6497 = vmatprep.subr.mxu0 %v6285
    %6498 = vmatpush1.msra.mxu0 %v6284
    %6499 = vmatprep.subr.mxu0 %v6289
    %6500 = vmatpush1.msra.mxu0 %v6288
    %6501 = vmatprep.subr.mxu0 %v6293
    %6502 = vmatpush1.msra.mxu0 %v6292
    %6503 = vmatprep.subr.mxu0 %v6297
    %6504 = vmatpush1.msra.mxu0 %v6296
    %6505 = vmatprep.subr.mxu0 %v6301
    %6506 = vmatpush1.msra.mxu0 %v6300
    %6507 = vmatprep.subr.mxu0 %v6305
    %6508 = vmatpush1.msra.mxu0 %v6304
    %6509 = vmatprep.subr.mxu0 %v6309
    %6510 = vmatpush1.msra.mxu0 %v6308
    %6511 = vmatprep.subr.mxu0 %v6313
    %6512 = vmatpush1.msra.mxu0 %v6312
    %6513 = vmatprep.subr.mxu0 %v6317
    %6514 = vmatpush1.msra.mxu0 %v6316
    %6515 = vmatprep.subr.mxu0 %v6321
    %6516 = vmatpush1.msra.mxu0 %v6320
    %6517 = vmatprep.subr.mxu0 %v6325
    %6518 = vmatpush1.msra.mxu0 %v6324
    %6519 = vmatprep.subr.mxu0 %v6329
    %6520 = vmatpush1.msra.mxu0 %v6328
    %6521 = vmatprep.subr.mxu0 %v6333
    %6522 = vmatpush1.msra.mxu0 %v6332
    %6523 = vmatprep.subr.mxu0 %v6337
    %6524 = vmatpush1.msra.mxu0 %v6336
    %6525 = vmatprep.subr.mxu0 %v6341
    %6526 = vmatpush1.msra.mxu0 %v6340
    %6527 = vmatprep.subr.mxu0 %v6345
    %6528 = vmatpush1.msra.mxu0 %v6344
    %6529 = vmatprep.subr.mxu0 %v6349
    %6530 = vmatpush1.msra.mxu0 %v6348
    %6531 = vmatprep.subr.mxu0 %v6353
    %6532 = vmatpush1.msra.mxu0 %v6352
    %6533 = vmatprep.subr.mxu0 %v6357
    %6534 = vmatpush1.msra.mxu0 %v6356
    %6535 = vmatprep.subr.mxu0 %v6361
    %6536 = vmatpush1.msra.mxu0 %v6360
    %6537 = vmatprep.subr.mxu0 %v6365
    %6538 = vmatpush1.msra.mxu0 %v6364
    %6539 = vmatprep.subr.mxu0 %v6369
    %6540 = vmatpush1.msra.mxu0 %v6368
    %6541 = vmatprep.subr.mxu0 %v6373
    %6542 = vmatpush1.msra.mxu0 %v6372
    %6543 = vmatprep.subr.mxu0 %v6377
    %6544 = vmatpush1.msra.mxu0 %v6376
    %6545 = vmatprep.subr.mxu0 %v6381
    %6546 = vmatpush1.msra.mxu0 %v6380
    %6547 = vmatprep.subr.mxu0 %v6385
    %6548 = vmatpush1.msra.mxu0 %v6384
    %6549 = vmatprep.subr.mxu0 %v6389
    %6550 = vmatpush1.msra.mxu0 %v6388
    %6551 = vmatprep.subr.mxu0 %v6393
    %6552 = vmatpush1.msra.mxu0 %v6392
    %6553 = vmatprep.subr.mxu0 %v6397
    %6554 = vmatpush1.msra.mxu0 %v6396
    %6555 = vmatprep.mubr.f32.mxu0 %v6174
    %6556 = vmatmul.mubr.f32.gmra.mrb[0].mxu0 %v6265
    %v6557 = vpop.f32.mrb[0].mxu0
    %v6558 = vadd.f32 %v6411, %v6557
    %v6559 = vpop.f32.mrb[0].mxu0
    %v6560 = vadd.f32 %v6415, %v6559
    %6561 = vdwg.mxu0
    %v6562 = vxor.u32 %v6487, 2147483648
    %v6563 = vxor.u32 %v6489, 2147483648
    %v6564 = vxor.u32 %v6558, 2147483648
    %v6565 = vmul.f32 %v6562, 1.442695
    %v6566 = vpow.pop %v6565
    %v6567 = vmul.f32 %v6563, 1.442695
    %v6568 = vpow.pop %v6567
    %v6569 = vmul.f32 %v6564, 1.442695
    %v6570 = vpow.pop %v6569
    %v6571 = vadd.f32 %v6566, 1.0
    %v6572 = vadd.f32 %v6568, 1.0
    %v6573 = vadd.f32 %v6570, 1.0
    %v6574 = vrcp.pop %v6571
    %v6575 = vmul.f32 1.0, %v6574
    %v6576 = vrcp.pop %v6572
    %v6577 = vmul.f32 1.0, %v6576
    %v6578 = vrcp.pop %v6573
    %v6579 = vmul.f32 1.0, %v6578
    %v6580 = vtanh.pop %v6560
    %v6581 = vmul.f32 %v6577, %v6172
    %v6582 = vmul.f32 %v6575, %v6580
    %v6583 = vadd.f32 %v6581, %v6582
    %v6584 = vtanh.pop %v6583
    %v6585 = vmul.f32 %v6579, %v6584
    %v6586 = vld [vmem:[#allocation17] sm:$0xff]
    %v6587 = vld [vmem:[#allocation17 + $0x8] sm:$0xff]
    %v6588 = vld [vmem:[#allocation17 + $0x10] sm:$0xff]
    %v6589 = vld [vmem:[#allocation17 + $0x18] sm:$0xff]
    %v6590 = vld [vmem:[#allocation17 + $0x20] sm:$0xff]
    %v6591 = vld [vmem:[#allocation17 + $0x28] sm:$0xff]
    %v6592 = vld [vmem:[#allocation17 + $0x30] sm:$0xff]
    %v6593 = vld [vmem:[#allocation17 + $0x38] sm:$0xff]
    %v6594 = vld [vmem:[#allocation17 + $0x40] sm:$0xff]
    %v6595 = vld [vmem:[#allocation17 + $0x48] sm:$0xff]
    %v6596 = vld [vmem:[#allocation17 + $0x50] sm:$0xff]
    %v6597 = vld [vmem:[#allocation17 + $0x58] sm:$0xff]
    %v6598 = vld [vmem:[#allocation17 + $0x60] sm:$0xff]
    %v6599 = vld [vmem:[#allocation17 + $0x68] sm:$0xff]
    %v6600 = vld [vmem:[#allocation17 + $0x70] sm:$0xff]
    %v6601 = vld [vmem:[#allocation17 + $0x78] sm:$0xff]
    %v6602 = vld [vmem:[#allocation19] sm:$0x1]
    %v6604 = vlaneseq
    %v6605 = vshrl.u32 %v6604, 7
    %v6606 = vsub.s32 0, %v6605
    %v6607 = vrot.slane %v6602, %v6606
    %6609 = vmatprep.subr.mxu0 0.0
    %6610 = vmatpush1.msra.mxu0 %v6586
    %6611 = vmatprep.subr.mxu0 0.0
    %6612 = vmatpush1.msra.mxu0 %v6587
    %6613 = vmatprep.subr.mxu0 0.0
    %6614 = vmatpush1.msra.mxu0 %v6588
    %6615 = vmatprep.subr.mxu0 0.0
    %6616 = vmatpush1.msra.mxu0 %v6589
    %6617 = vmatprep.subr.mxu0 0.0
    %6618 = vmatpush1.msra.mxu0 %v6590
    %6619 = vmatprep.subr.mxu0 0.0
    %6620 = vmatpush1.msra.mxu0 %v6591
    %6621 = vmatprep.subr.mxu0 0.0
    %6622 = vmatpush1.msra.mxu0 %v6592
    %6623 = vmatprep.subr.mxu0 0.0
    %6624 = vmatpush1.msra.mxu0 %v6593
    %6625 = vmatprep.subr.mxu0 0.0
    %6626 = vmatpush1.msra.mxu0 %v6594
    %6627 = vmatprep.subr.mxu0 0.0
    %6628 = vmatpush1.msra.mxu0 %v6595
    %6629 = vmatprep.subr.mxu0 0.0
    %6630 = vmatpush1.msra.mxu0 %v6596
    %6631 = vmatprep.subr.mxu0 0.0
    %6632 = vmatpush1.msra.mxu0 %v6597
    %6633 = vmatprep.subr.mxu0 0.0
    %6634 = vmatpush1.msra.mxu0 %v6598
    %6635 = vmatprep.subr.mxu0 0.0
    %6636 = vmatpush1.msra.mxu0 %v6599
    %6637 = vmatprep.subr.mxu0 0.0
    %6638 = vmatpush1.msra.mxu0 %v6600
    %6639 = vmatprep.subr.mxu0 0.0
    %6640 = vmatpush1.msra.mxu0 %v6601
    %6641 = vmatprep.subr.mxu0 0.0
    %6642 = vmatpush1.msra.mxu0 0.0
    %6643 = vmatprep.subr.mxu0 0.0
    %6644 = vmatpush1.msra.mxu0 0.0
    %6645 = vmatprep.subr.mxu0 0.0
    %6646 = vmatpush1.msra.mxu0 0.0
    %6647 = vmatprep.subr.mxu0 0.0
    %6648 = vmatpush1.msra.mxu0 0.0
    %6649 = vmatprep.subr.mxu0 0.0
    %6650 = vmatpush1.msra.mxu0 0.0
    %6651 = vmatprep.subr.mxu0 0.0
    %6652 = vmatpush1.msra.mxu0 0.0
    %6653 = vmatprep.subr.mxu0 0.0
    %6654 = vmatpush1.msra.mxu0 0.0
    %6655 = vmatprep.subr.mxu0 0.0
    %6656 = vmatpush1.msra.mxu0 0.0
    %6657 = vmatprep.subr.mxu0 0.0
    %6658 = vmatpush1.msra.mxu0 0.0
    %6659 = vmatprep.subr.mxu0 0.0
    %6660 = vmatpush1.msra.mxu0 0.0
    %6661 = vmatprep.subr.mxu0 0.0
    %6662 = vmatpush1.msra.mxu0 0.0
    %6663 = vmatprep.subr.mxu0 0.0
    %6664 = vmatpush1.msra.mxu0 0.0
    %6665 = vmatprep.subr.mxu0 0.0
    %6666 = vmatpush1.msra.mxu0 0.0
    %6667 = vmatprep.subr.mxu0 0.0
    %6668 = vmatpush1.msra.mxu0 0.0
    %6669 = vmatprep.subr.mxu0 0.0
    %6670 = vmatpush1.msra.mxu0 0.0
    %6671 = vmatprep.subr.mxu0 0.0
    %6672 = vmatpush1.msra.mxu0 0.0
    %6673 = vmatprep.mubr.f32.mxu0 0.0
    %6674 = vmatmul.mubr.f32.gmra.mrb[0].mxu0 %v6585
    %v6675 = vpop.f32.mrb[0].mxu0
    %v6676 = vadd.f32 %v6607, %v6675
    %v6677 = vpop.f32.mrb[0].mxu0
    %6678 = vdwg.mxu0
    %s6679 = scalar_lea.vmem [#allocation20], 32
    %6680 = vst [vmem:[%s6679] sm:$0xff] %v6676
    %v6681 = vld [vmem:[#allocation14] sm:$0xff]
    %v6682 = vld [vmem:[#allocation14 + $0x8] sm:$0xff]
    %v6683 = vld [vmem:[#allocation14 + $0x10] sm:$0xff]
    %v6684 = vld [vmem:[#allocation14 + $0x18] sm:$0xff]
    %v6685 = vld [vmem:[#allocation14 + $0x20] sm:$0xff]
    %v6686 = vld [vmem:[#allocation14 + $0x28] sm:$0xff]
    %v6687 = vld [vmem:[#allocation14 + $0x30] sm:$0xff]
    %v6688 = vld [vmem:[#allocation14 + $0x38] sm:$0xff]
    %v6689 = vld [vmem:[#allocation14 + $0x40] sm:$0xff]
    %v6690 = vld [vmem:[#allocation14 + $0x48] sm:$0xff]
    %v6691 = vld [vmem:[#allocation14 + $0x50] sm:$0xff]
    %v6692 = vld [vmem:[#allocation14 + $0x58] sm:$0xff]
    %v6693 = vld [vmem:[#allocation14 + $0x60] sm:$0xff]
    %v6694 = vld [vmem:[#allocation14 + $0x68] sm:$0xff]
    %v6695 = vld [vmem:[#allocation14 + $0x70] sm:$0xff]
    %v6696 = vld [vmem:[#allocation14 + $0x78] sm:$0xff]
    %v6697 = vld [vmem:[#allocation14 + $0x80] sm:$0xff]
    %v6698 = vld [vmem:[#allocation14 + $0x88] sm:$0xff]
    %v6699 = vld [vmem:[#allocation14 + $0x90] sm:$0xff]
    %v6700 = vld [vmem:[#allocation14 + $0x98] sm:$0xff]
    %v6701 = vld [vmem:[#allocation14 + $0xa0] sm:$0xff]
    %v6702 = vld [vmem:[#allocation14 + $0xa8] sm:$0xff]
    %v6703 = vld [vmem:[#allocation14 + $0xb0] sm:$0xff]
    %v6704 = vld [vmem:[#allocation14 + $0xb8] sm:$0xff]
    %v6705 = vld [vmem:[#allocation14 + $0xc0] sm:$0xff]
    %v6706 = vld [vmem:[#allocation14 + $0xc8] sm:$0xff]
    %v6707 = vld [vmem:[#allocation14 + $0xd0] sm:$0xff]
    %v6708 = vld [vmem:[#allocation14 + $0xd8] sm:$0xff]
    %v6709 = vld [vmem:[#allocation14 + $0xe0] sm:$0xff]
    %v6710 = vld [vmem:[#allocation14 + $0xe8] sm:$0xff]
    %v6711 = vld [vmem:[#allocation14 + $0xf0] sm:$0xff]
    %v6712 = vld [vmem:[#allocation14 + $0xf8] sm:$0xff]
    %v6713 = vld [vmem:[#allocation14 + $0x100] sm:$0xff]
    %v6714 = vld [vmem:[#allocation14 + $0x108] sm:$0xff]
    %v6715 = vld [vmem:[#allocation14 + $0x110] sm:$0xff]
    %v6716 = vld [vmem:[#allocation14 + $0x118] sm:$0xff]
    %v6717 = vld [vmem:[#allocation14 + $0x120] sm:$0xff]
    %v6718 = vld [vmem:[#allocation14 + $0x128] sm:$0xff]
    %v6719 = vld [vmem:[#allocation14 + $0x130] sm:$0xff]
    %v6720 = vld [vmem:[#allocation14 + $0x138] sm:$0xff]
    %v6721 = vld [vmem:[#allocation14 + $0x140] sm:$0xff]
    %v6722 = vld [vmem:[#allocation14 + $0x148] sm:$0xff]
    %v6723 = vld [vmem:[#allocation14 + $0x150] sm:$0xff]
    %v6724 = vld [vmem:[#allocation14 + $0x158] sm:$0xff]
    %v6725 = vld [vmem:[#allocation14 + $0x160] sm:$0xff]
    %v6726 = vld [vmem:[#allocation14 + $0x168] sm:$0xff]
    %v6727 = vld [vmem:[#allocation14 + $0x170] sm:$0xff]
    %v6728 = vld [vmem:[#allocation14 + $0x178] sm:$0xff]
    %v6729 = vld [vmem:[#allocation14 + $0x180] sm:$0xff]
    %v6730 = vld [vmem:[#allocation14 + $0x188] sm:$0xff]
    %v6731 = vld [vmem:[#allocation14 + $0x190] sm:$0xff]
    %v6732 = vld [vmem:[#allocation14 + $0x198] sm:$0xff]
    %v6733 = vld [vmem:[#allocation14 + $0x1a0] sm:$0xff]
    %v6734 = vld [vmem:[#allocation14 + $0x1a8] sm:$0xff]
    %v6735 = vld [vmem:[#allocation14 + $0x1b0] sm:$0xff]
    %v6736 = vld [vmem:[#allocation14 + $0x1b8] sm:$0xff]
    %v6737 = vld [vmem:[#allocation14 + $0x1c0] sm:$0xff]
    %v6738 = vld [vmem:[#allocation14 + $0x1c8] sm:$0xff]
    %v6739 = vld [vmem:[#allocation14 + $0x1d0] sm:$0xff]
    %v6740 = vld [vmem:[#allocation14 + $0x1d8] sm:$0xff]
    %v6741 = vld [vmem:[#allocation14 + $0x1e0] sm:$0xff]
    %v6742 = vld [vmem:[#allocation14 + $0x1e8] sm:$0xff]
    %v6743 = vld [vmem:[#allocation14 + $0x1f0] sm:$0xff]
    %v6744 = vld [vmem:[#allocation14 + $0x1f8] sm:$0xff]
    %v6745 = vld [vmem:[#allocation14 + $0x200] sm:$0xff]
    %v6746 = vld [vmem:[#allocation14 + $0x208] sm:$0xff]
    %v6747 = vld [vmem:[#allocation14 + $0x210] sm:$0xff]
    %v6748 = vld [vmem:[#allocation14 + $0x218] sm:$0xff]
    %v6749 = vld [vmem:[#allocation14 + $0x220] sm:$0xff]
    %v6750 = vld [vmem:[#allocation14 + $0x228] sm:$0xff]
    %v6751 = vld [vmem:[#allocation14 + $0x230] sm:$0xff]
    %v6752 = vld [vmem:[#allocation14 + $0x238] sm:$0xff]
    %v6753 = vld [vmem:[#allocation14 + $0x240] sm:$0xff]
    %v6754 = vld [vmem:[#allocation14 + $0x248] sm:$0xff]
    %v6755 = vld [vmem:[#allocation14 + $0x250] sm:$0xff]
    %v6756 = vld [vmem:[#allocation14 + $0x258] sm:$0xff]
    %v6757 = vld [vmem:[#allocation14 + $0x260] sm:$0xff]
    %v6758 = vld [vmem:[#allocation14 + $0x268] sm:$0xff]
    %v6759 = vld [vmem:[#allocation14 + $0x270] sm:$0xff]
    %v6760 = vld [vmem:[#allocation14 + $0x278] sm:$0xff]
    %v6761 = vld [vmem:[#allocation14 + $0x280] sm:$0xff]
    %v6762 = vld [vmem:[#allocation14 + $0x288] sm:$0xff]
    %v6763 = vld [vmem:[#allocation14 + $0x290] sm:$0xff]
    %v6764 = vld [vmem:[#allocation14 + $0x298] sm:$0xff]
    %v6765 = vld [vmem:[#allocation14 + $0x2a0] sm:$0xff]
    %v6766 = vld [vmem:[#allocation14 + $0x2a8] sm:$0xff]
    %v6767 = vld [vmem:[#allocation14 + $0x2b0] sm:$0xff]
    %v6768 = vld [vmem:[#allocation14 + $0x2b8] sm:$0xff]
    %v6769 = vld [vmem:[#allocation14 + $0x2c0] sm:$0xff]
    %v6770 = vld [vmem:[#allocation14 + $0x2c8] sm:$0xff]
    %v6771 = vld [vmem:[#allocation14 + $0x2d0] sm:$0xff]
    %v6772 = vld [vmem:[#allocation14 + $0x2d8] sm:$0xff]
    %v6773 = vld [vmem:[#allocation14 + $0x2e0] sm:$0xff]
    %v6774 = vld [vmem:[#allocation14 + $0x2e8] sm:$0xff]
    %v6775 = vld [vmem:[#allocation14 + $0x2f0] sm:$0xff]
    %v6776 = vld [vmem:[#allocation14 + $0x2f8] sm:$0xff]
    %v6777 = vld [vmem:[#allocation14 + $0x300] sm:$0xff]
    %v6778 = vld [vmem:[#allocation14 + $0x308] sm:$0xff]
    %v6779 = vld [vmem:[#allocation14 + $0x310] sm:$0xff]
    %v6780 = vld [vmem:[#allocation14 + $0x318] sm:$0xff]
    %v6781 = vld [vmem:[#allocation14 + $0x320] sm:$0xff]
    %v6782 = vld [vmem:[#allocation14 + $0x328] sm:$0xff]
    %v6783 = vld [vmem:[#allocation14 + $0x330] sm:$0xff]
    %v6784 = vld [vmem:[#allocation14 + $0x338] sm:$0xff]
    %v6785 = vld [vmem:[#allocation14 + $0x340] sm:$0xff]
    %v6786 = vld [vmem:[#allocation14 + $0x348] sm:$0xff]
    %v6787 = vld [vmem:[#allocation14 + $0x350] sm:$0xff]
    %v6788 = vld [vmem:[#allocation14 + $0x358] sm:$0xff]
    %v6789 = vld [vmem:[#allocation14 + $0x360] sm:$0xff]
    %v6790 = vld [vmem:[#allocation14 + $0x368] sm:$0xff]
    %v6791 = vld [vmem:[#allocation14 + $0x370] sm:$0xff]
    %v6792 = vld [vmem:[#allocation14 + $0x378] sm:$0xff]
    %v6793 = vld [vmem:[#allocation14 + $0x380] sm:$0xff]
    %v6794 = vld [vmem:[#allocation14 + $0x388] sm:$0xff]
    %v6795 = vld [vmem:[#allocation14 + $0x390] sm:$0xff]
    %v6796 = vld [vmem:[#allocation14 + $0x398] sm:$0xff]
    %v6797 = vld [vmem:[#allocation14 + $0x3a0] sm:$0xff]
    %v6798 = vld [vmem:[#allocation14 + $0x3a8] sm:$0xff]
    %v6799 = vld [vmem:[#allocation14 + $0x3b0] sm:$0xff]
    %v6800 = vld [vmem:[#allocation14 + $0x3b8] sm:$0xff]
    %v6801 = vld [vmem:[#allocation14 + $0x3c0] sm:$0xff]
    %v6802 = vld [vmem:[#allocation14 + $0x3c8] sm:$0xff]
    %v6803 = vld [vmem:[#allocation14 + $0x3d0] sm:$0xff]
    %v6804 = vld [vmem:[#allocation14 + $0x3d8] sm:$0xff]
    %v6805 = vld [vmem:[#allocation14 + $0x3e0] sm:$0xff]
    %v6806 = vld [vmem:[#allocation14 + $0x3e8] sm:$0xff]
    %v6807 = vld [vmem:[#allocation14 + $0x3f0] sm:$0xff]
    %v6808 = vld [vmem:[#allocation14 + $0x3f8] sm:$0xff]
    %v6809 = vld [vmem:[#allocation16] sm:$0xf]
    %v6811 = vlaneseq
    %v6812 = vshrl.u32 %v6811, 7
    %v6813 = vsub.s32 0, %v6812
    %v6814 = vrot.slane %v6809, %v6813
    %v6815 = vlaneseq
    %v6816 = vshrl.u32 %v6815, 7
    %v6817 = vsub.s32 1, %v6816
    %v6818 = vrot.slane %v6809, %v6817
    %v6819 = vlaneseq
    %v6820 = vshrl.u32 %v6819, 7
    %v6821 = vsub.s32 2, %v6820
    %v6822 = vrot.slane %v6809, %v6821
    %v6823 = vlaneseq
    %v6824 = vshrl.u32 %v6823, 7
    %v6825 = vsub.s32 3, %v6824
    %v6826 = vrot.slane %v6809, %v6825
    %6831 = vmatprep.subr.mxu0 %v6682
    %6832 = vmatpush1.msra.mxu0 %v6681
    %6833 = vmatprep.subr.mxu0 %v6686
    %6834 = vmatpush1.msra.mxu0 %v6685
    %6835 = vmatprep.subr.mxu0 %v6690
    %6836 = vmatpush1.msra.mxu0 %v6689
    %6837 = vmatprep.subr.mxu0 %v6694
    %6838 = vmatpush1.msra.mxu0 %v6693
    %6839 = vmatprep.subr.mxu0 %v6698
    %6840 = vmatpush1.msra.mxu0 %v6697
    %6841 = vmatprep.subr.mxu0 %v6702
    %6842 = vmatpush1.msra.mxu0 %v6701
    %6843 = vmatprep.subr.mxu0 %v6706
    %6844 = vmatpush1.msra.mxu0 %v6705
    %6845 = vmatprep.subr.mxu0 %v6710
    %6846 = vmatpush1.msra.mxu0 %v6709
    %6847 = vmatprep.subr.mxu0 %v6714
    %6848 = vmatpush1.msra.mxu0 %v6713
    %6849 = vmatprep.subr.mxu0 %v6718
    %6850 = vmatpush1.msra.mxu0 %v6717
    %6851 = vmatprep.subr.mxu0 %v6722
    %6852 = vmatpush1.msra.mxu0 %v6721
    %6853 = vmatprep.subr.mxu0 %v6726
    %6854 = vmatpush1.msra.mxu0 %v6725
    %6855 = vmatprep.subr.mxu0 %v6730
    %6856 = vmatpush1.msra.mxu0 %v6729
    %6857 = vmatprep.subr.mxu0 %v6734
    %6858 = vmatpush1.msra.mxu0 %v6733
    %6859 = vmatprep.subr.mxu0 %v6738
    %6860 = vmatpush1.msra.mxu0 %v6737
    %6861 = vmatprep.subr.mxu0 %v6742
    %6862 = vmatpush1.msra.mxu0 %v6741
    %6863 = vmatprep.subr.mxu0 %v6746
    %6864 = vmatpush1.msra.mxu0 %v6745
    %6865 = vmatprep.subr.mxu0 %v6750
    %6866 = vmatpush1.msra.mxu0 %v6749
    %6867 = vmatprep.subr.mxu0 %v6754
    %6868 = vmatpush1.msra.mxu0 %v6753
    %6869 = vmatprep.subr.mxu0 %v6758
    %6870 = vmatpush1.msra.mxu0 %v6757
    %6871 = vmatprep.subr.mxu0 %v6762
    %6872 = vmatpush1.msra.mxu0 %v6761
    %6873 = vmatprep.subr.mxu0 %v6766
    %6874 = vmatpush1.msra.mxu0 %v6765
    %6875 = vmatprep.subr.mxu0 %v6770
    %6876 = vmatpush1.msra.mxu0 %v6769
    %6877 = vmatprep.subr.mxu0 %v6774
    %6878 = vmatpush1.msra.mxu0 %v6773
    %6879 = vmatprep.subr.mxu0 %v6778
    %6880 = vmatpush1.msra.mxu0 %v6777
    %6881 = vmatprep.subr.mxu0 %v6782
    %6882 = vmatpush1.msra.mxu0 %v6781
    %6883 = vmatprep.subr.mxu0 %v6786
    %6884 = vmatpush1.msra.mxu0 %v6785
    %6885 = vmatprep.subr.mxu0 %v6790
    %6886 = vmatpush1.msra.mxu0 %v6789
    %6887 = vmatprep.subr.mxu0 %v6794
    %6888 = vmatpush1.msra.mxu0 %v6793
    %6889 = vmatprep.subr.mxu0 %v6798
    %6890 = vmatpush1.msra.mxu0 %v6797
    %6891 = vmatprep.subr.mxu0 %v6802
    %6892 = vmatpush1.msra.mxu0 %v6801
    %6893 = vmatprep.subr.mxu0 %v6806
    %6894 = vmatpush1.msra.mxu0 %v6805
    %6895 = vmatprep.mubr.f32.mxu0 %v6585
    %6896 = vmatmul.mubr.f32.gmra.mrb[0].mxu0 %v6676
    %v6897 = vpop.f32.mrb[0].mxu0
    %v6898 = vadd.f32 %v6814, %v6897
    %v6899 = vpop.f32.mrb[0].mxu0
    %v6900 = vadd.f32 %v6818, %v6899
    %6901 = vdwg.mxu0
    %6902 = vmatprep.subr.mxu0 %v6684
    %6903 = vmatpush1.msra.mxu0 %v6683
    %6904 = vmatprep.subr.mxu0 %v6688
    %6905 = vmatpush1.msra.mxu0 %v6687
    %6906 = vmatprep.subr.mxu0 %v6692
    %6907 = vmatpush1.msra.mxu0 %v6691
    %6908 = vmatprep.subr.mxu0 %v6696
    %6909 = vmatpush1.msra.mxu0 %v6695
    %6910 = vmatprep.subr.mxu0 %v6700
    %6911 = vmatpush1.msra.mxu0 %v6699
    %6912 = vmatprep.subr.mxu0 %v6704
    %6913 = vmatpush1.msra.mxu0 %v6703
    %6914 = vmatprep.subr.mxu0 %v6708
    %6915 = vmatpush1.msra.mxu0 %v6707
    %6916 = vmatprep.subr.mxu0 %v6712
    %6917 = vmatpush1.msra.mxu0 %v6711
    %6918 = vmatprep.subr.mxu0 %v6716
    %6919 = vmatpush1.msra.mxu0 %v6715
    %6920 = vmatprep.subr.mxu0 %v6720
    %6921 = vmatpush1.msra.mxu0 %v6719
    %6922 = vmatprep.subr.mxu0 %v6724
    %6923 = vmatpush1.msra.mxu0 %v6723
    %6924 = vmatprep.subr.mxu0 %v6728
    %6925 = vmatpush1.msra.mxu0 %v6727
    %6926 = vmatprep.subr.mxu0 %v6732
    %6927 = vmatpush1.msra.mxu0 %v6731
    %6928 = vmatprep.subr.mxu0 %v6736
    %6929 = vmatpush1.msra.mxu0 %v6735
    %6930 = vmatprep.subr.mxu0 %v6740
    %6931 = vmatpush1.msra.mxu0 %v6739
    %6932 = vmatprep.subr.mxu0 %v6744
    %6933 = vmatpush1.msra.mxu0 %v6743
    %6934 = vmatprep.subr.mxu0 %v6748
    %6935 = vmatpush1.msra.mxu0 %v6747
    %6936 = vmatprep.subr.mxu0 %v6752
    %6937 = vmatpush1.msra.mxu0 %v6751
    %6938 = vmatprep.subr.mxu0 %v6756
    %6939 = vmatpush1.msra.mxu0 %v6755
    %6940 = vmatprep.subr.mxu0 %v6760
    %6941 = vmatpush1.msra.mxu0 %v6759
    %6942 = vmatprep.subr.mxu0 %v6764
    %6943 = vmatpush1.msra.mxu0 %v6763
    %6944 = vmatprep.subr.mxu0 %v6768
    %6945 = vmatpush1.msra.mxu0 %v6767
    %6946 = vmatprep.subr.mxu0 %v6772
    %6947 = vmatpush1.msra.mxu0 %v6771
    %6948 = vmatprep.subr.mxu0 %v6776
    %6949 = vmatpush1.msra.mxu0 %v6775
    %6950 = vmatprep.subr.mxu0 %v6780
    %6951 = vmatpush1.msra.mxu0 %v6779
    %6952 = vmatprep.subr.mxu0 %v6784
    %6953 = vmatpush1.msra.mxu0 %v6783
    %6954 = vmatprep.subr.mxu0 %v6788
    %6955 = vmatpush1.msra.mxu0 %v6787
    %6956 = vmatprep.subr.mxu0 %v6792
    %6957 = vmatpush1.msra.mxu0 %v6791
    %6958 = vmatprep.subr.mxu0 %v6796
    %6959 = vmatpush1.msra.mxu0 %v6795
    %6960 = vmatprep.subr.mxu0 %v6800
    %6961 = vmatpush1.msra.mxu0 %v6799
    %6962 = vmatprep.subr.mxu0 %v6804
    %6963 = vmatpush1.msra.mxu0 %v6803
    %6964 = vmatprep.subr.mxu0 %v6808
    %6965 = vmatpush1.msra.mxu0 %v6807
    %6966 = vmatprep.mubr.f32.mxu0 %v6585
    %6967 = vmatmul.mubr.f32.gmra.mrb[0].mxu0 %v6676
    %v6968 = vpop.f32.mrb[0].mxu0
    %v6969 = vadd.f32 %v6822, %v6968
    %v6970 = vpop.f32.mrb[0].mxu0
    %v6971 = vadd.f32 %v6826, %v6970
    %6972 = vdwg.mxu0
    %v6973 = vxor.u32 %v6898, 2147483648
    %v6974 = vxor.u32 %v6900, 2147483648
    %v6975 = vxor.u32 %v6969, 2147483648
    %v6976 = vmul.f32 %v6973, 1.442695
    %v6977 = vpow.pop %v6976
    %v6978 = vmul.f32 %v6974, 1.442695
    %v6979 = vpow.pop %v6978
    %v6980 = vmul.f32 %v6975, 1.442695
    %v6981 = vpow.pop %v6980
    %v6982 = vadd.f32 %v6977, 1.0
    %v6983 = vadd.f32 %v6979, 1.0
    %v6984 = vadd.f32 %v6981, 1.0
    %v6985 = vrcp.pop %v6982
    %v6986 = vmul.f32 1.0, %v6985
    %v6987 = vrcp.pop %v6983
    %v6988 = vmul.f32 1.0, %v6987
    %v6989 = vrcp.pop %v6984
    %v6990 = vmul.f32 1.0, %v6989
    %v6991 = vtanh.pop %v6971
    %v6992 = vmul.f32 %v6988, %v6583
    %v6993 = vmul.f32 %v6986, %v6991
    %v6994 = vadd.f32 %v6992, %v6993
    %v6995 = vtanh.pop %v6994
    %v6996 = vmul.f32 %v6990, %v6995
    %v6997 = vld [vmem:[#allocation17] sm:$0xff]
    %v6998 = vld [vmem:[#allocation17 + $0x8] sm:$0xff]
    %v6999 = vld [vmem:[#allocation17 + $0x10] sm:$0xff]
    %v7000 = vld [vmem:[#allocation17 + $0x18] sm:$0xff]
    %v7001 = vld [vmem:[#allocation17 + $0x20] sm:$0xff]
    %v7002 = vld [vmem:[#allocation17 + $0x28] sm:$0xff]
    %v7003 = vld [vmem:[#allocation17 + $0x30] sm:$0xff]
    %v7004 = vld [vmem:[#allocation17 + $0x38] sm:$0xff]
    %v7005 = vld [vmem:[#allocation17 + $0x40] sm:$0xff]
    %v7006 = vld [vmem:[#allocation17 + $0x48] sm:$0xff]
    %v7007 = vld [vmem:[#allocation17 + $0x50] sm:$0xff]
    %v7008 = vld [vmem:[#allocation17 + $0x58] sm:$0xff]
    %v7009 = vld [vmem:[#allocation17 + $0x60] sm:$0xff]
    %v7010 = vld [vmem:[#allocation17 + $0x68] sm:$0xff]
    %v7011 = vld [vmem:[#allocation17 + $0x70] sm:$0xff]
    %v7012 = vld [vmem:[#allocation17 + $0x78] sm:$0xff]
    %v7013 = vld [vmem:[#allocation19] sm:$0x1]
    %v7015 = vlaneseq
    %v7016 = vshrl.u32 %v7015, 7
    %v7017 = vsub.s32 0, %v7016
    %v7018 = vrot.slane %v7013, %v7017
    %7020 = vmatprep.subr.mxu0 0.0
    %7021 = vmatpush1.msra.mxu0 %v6997
    %7022 = vmatprep.subr.mxu0 0.0
    %7023 = vmatpush1.msra.mxu0 %v6998
    %7024 = vmatprep.subr.mxu0 0.0
    %7025 = vmatpush1.msra.mxu0 %v6999
    %7026 = vmatprep.subr.mxu0 0.0
    %7027 = vmatpush1.msra.mxu0 %v7000
    %7028 = vmatprep.subr.mxu0 0.0
    %7029 = vmatpush1.msra.mxu0 %v7001
    %7030 = vmatprep.subr.mxu0 0.0
    %7031 = vmatpush1.msra.mxu0 %v7002
    %7032 = vmatprep.subr.mxu0 0.0
    %7033 = vmatpush1.msra.mxu0 %v7003
    %7034 = vmatprep.subr.mxu0 0.0
    %7035 = vmatpush1.msra.mxu0 %v7004
    %7036 = vmatprep.subr.mxu0 0.0
    %7037 = vmatpush1.msra.mxu0 %v7005
    %7038 = vmatprep.subr.mxu0 0.0
    %7039 = vmatpush1.msra.mxu0 %v7006
    %7040 = vmatprep.subr.mxu0 0.0
    %7041 = vmatpush1.msra.mxu0 %v7007
    %7042 = vmatprep.subr.mxu0 0.0
    %7043 = vmatpush1.msra.mxu0 %v7008
    %7044 = vmatprep.subr.mxu0 0.0
    %7045 = vmatpush1.msra.mxu0 %v7009
    %7046 = vmatprep.subr.mxu0 0.0
    %7047 = vmatpush1.msra.mxu0 %v7010
    %7048 = vmatprep.subr.mxu0 0.0
    %7049 = vmatpush1.msra.mxu0 %v7011
    %7050 = vmatprep.subr.mxu0 0.0
    %7051 = vmatpush1.msra.mxu0 %v7012
    %7052 = vmatprep.subr.mxu0 0.0
    %7053 = vmatpush1.msra.mxu0 0.0
    %7054 = vmatprep.subr.mxu0 0.0
    %7055 = vmatpush1.msra.mxu0 0.0
    %7056 = vmatprep.subr.mxu0 0.0
    %7057 = vmatpush1.msra.mxu0 0.0
    %7058 = vmatprep.subr.mxu0 0.0
    %7059 = vmatpush1.msra.mxu0 0.0
    %7060 = vmatprep.subr.mxu0 0.0
    %7061 = vmatpush1.msra.mxu0 0.0
    %7062 = vmatprep.subr.mxu0 0.0
    %7063 = vmatpush1.msra.mxu0 0.0
    %7064 = vmatprep.subr.mxu0 0.0
    %7065 = vmatpush1.msra.mxu0 0.0
    %7066 = vmatprep.subr.mxu0 0.0
    %7067 = vmatpush1.msra.mxu0 0.0
    %7068 = vmatprep.subr.mxu0 0.0
    %7069 = vmatpush1.msra.mxu0 0.0
    %7070 = vmatprep.subr.mxu0 0.0
    %7071 = vmatpush1.msra.mxu0 0.0
    %7072 = vmatprep.subr.mxu0 0.0
    %7073 = vmatpush1.msra.mxu0 0.0
    %7074 = vmatprep.subr.mxu0 0.0
    %7075 = vmatpush1.msra.mxu0 0.0
    %7076 = vmatprep.subr.mxu0 0.0
    %7077 = vmatpush1.msra.mxu0 0.0
    %7078 = vmatprep.subr.mxu0 0.0
    %7079 = vmatpush1.msra.mxu0 0.0
    %7080 = vmatprep.subr.mxu0 0.0
    %7081 = vmatpush1.msra.mxu0 0.0
    %7082 = vmatprep.subr.mxu0 0.0
    %7083 = vmatpush1.msra.mxu0 0.0
    %7084 = vmatprep.mubr.f32.mxu0 0.0
    %7085 = vmatmul.mubr.f32.gmra.mrb[0].mxu0 %v6996
    %v7086 = vpop.f32.mrb[0].mxu0
    %v7087 = vadd.f32 %v7018, %v7086
    %v7088 = vpop.f32.mrb[0].mxu0
    %7089 = vdwg.mxu0
    %s7090 = scalar_lea.vmem [#allocation20], 40
    %7091 = vst [vmem:[%s7090] sm:$0xff] %v7087
    // Predicated region
    $region90: #{lstm_autoencoder_forward.1} parent=1 // pred_check
      _
    $region91: #{lstm_autoencoder_forward.1} parent=1 // pred_check_branch
      %7093 = sbr.rel (0) target = $region93
    $region92: #{lstm_autoencoder_forward.1} parent=1 // pred_region
      %s7095 = ssub.s32 768, 768
      %7096 = vsyncadd [#allocation4], %s7095
      %s7097 = sshll.u32 [#allocation20], 4
      %s7098 = int_to_ptr.vmem [resolvable:$true] %s7097
      %7103 = dma.vmem_to_hbm [thread:$0]  %s7098, 768, %s11, [#allocation4], 128, 128, 8
    $region93: #{lstm_autoencoder_forward.1} parent=1 // pred_fallthru
      _
    // Predicated region
    $region94: #{lstm_autoencoder_forward.1} parent=1 // pred_check
      _
    $region95: #{lstm_autoencoder_forward.1} parent=1 // pred_check_branch
      %7105 = sbr.rel (0) target = $region97
    $region96: #{lstm_autoencoder_forward.1} parent=1 // pred_region
      %7106 = dma.done [#allocation4], 768
    $region97: #{lstm_autoencoder_forward.1} parent=1 // pred_fallthru
      _
    %7107 = vsyncpa [#allocation3], 1
    %7108 = vsyncpa [#allocation6], 1
    %7109 = vsyncpa [#allocation9], 1
    %7110 = vsyncpa [#allocation12], 1
    %7111 = vsyncpa [#allocation15], 1
    %7112 = vsyncpa [#allocation18], 1
    %7113 = vsyncpa [#allocation4], 1

</llo_original>
